<compile_context>
chip_gen: v7x
topology: tpu7x:2x2x1
jax: 0.10.0
libtpu: 0.0.40
codegen_flags: <defaults>
</compile_context>

<pallas_src>
import jax
import jax.numpy as jnp
import numpy as np
from jax import lax
from jax.experimental import pallas as pl
from jax.experimental.pallas import tpu as pltpu

NUM_EMB = 20    # NearestEmbed(num_embeddings=20, ...)
EMB_DIM = 4000  # NearestEmbed(..., embeddings_dim=4000)


def _vq_kernel(x_ref, emb_ref, esq_ref, zq_ref, idx_ref):
    """One grid step == one batch row.

    x_ref:   (1, C, D) f32   current batch row, all channels
    emb_ref: (K, D)    f32   lane-dense codebook (resident across the grid)
    esq_ref: (1, K)    f32   precomputed ||e_k||^2
    zq_ref:  (1, 1, D) f32   quantized output row
    idx_ref: (1, 1, 1) i32   argmin index
    """
    K = emb_ref.shape[0]
    e = emb_ref[...]                                       # (K, D) lane-dense

    # torch.sum(x, dim=1) for this batch row: one sublane reduction over C.
    s = jnp.sum(x_ref[...], axis=1)                        # (1, D)

    # Distance cross term s . e_k : single MXU contraction over D.
    # Precision pinned so near-tied distances match the f32 torch reference.
    cross = lax.dot_general(
        s, e, (((1,), (1,)), ((), ())),
        preferred_element_type=jnp.float32,
        precision=lax.Precision.HIGHEST)                   # (1, K)

    # ||s - e_k||^2 = ||s||^2 - 2 s.e_k + ||e_k||^2 ; ||s||^2 is argmin-invariant.
    dist2 = esq_ref[...] - 2.0 * cross                     # (1, K)

    # First-index argmin (matches torch .min(-1) tie-breaking), clamped in range.
    lane = lax.broadcasted_iota(jnp.int32, dist2.shape, 1)
    min_val = jnp.min(dist2, axis=-1, keepdims=True)       # (1, 1)
    idx = jnp.min(jnp.where(dist2 == min_val, lane, K),
                  axis=-1, keepdims=True)                  # (1, 1)
    idx = jnp.minimum(idx, K - 1)                          # NaN / degenerate guard

    # Exact row copy z_q = e[idx]: mask/select + sublane-sum (bit-exact, XLU only).
    row = lax.broadcasted_iota(jnp.int32, (K, 1), 0)       # (K, 1)
    sel = row == idx                                       # (K, 1) broadcast compare
    zq = jnp.sum(jnp.where(sel, e, 0.0), axis=0, keepdims=True)  # (1, D)

    zq_ref[...] = zq.reshape(zq_ref.shape)
    idx_ref[...] = idx.astype(jnp.int32).reshape(idx_ref.shape)


def prepare_codebook(emb_weight):
    """ONE-TIME (model-load) codebook preprocessing.

    torch layout (D, K) -> lane-dense (K, D), plus precomputed ||e_k||^2 (1, K).
    Cache the results and pass them to every forward call so the per-call jitted
    path never pays the HBM transpose / reduce fusion.
    """
    emb_kd = jnp.asarray(emb_weight).T                     # (K, D) lane-dense
    e_sq = jnp.sum(emb_kd * emb_kd, axis=1)[None, :]       # (1, K)
    return emb_kd, e_sq


@jax.jit
def nearest_embed_forward(x, emb_kd, e_sq):
    """x: (B, C, D) f32, emb_kd: (K, D) f32 lane-dense, e_sq: (1, K) f32.

    Returns (z_q (B, D) f32, argmin (B,) i32) — forward of NearestEmbed applied to
    torch.sum(x, dim=1).
    """
    B, C, D = x.shape
    K = emb_kd.shape[0]

    cost = pl.CostEstimate(
        flops=B * C * D + 2 * B * D * K + B * K * D,
        transcendentals=0,
        bytes_accessed=4 * (B * C * D + K * D + K + B * D + B),
    )

    zq, idx = pl.pallas_call(
        _vq_kernel,
        grid=(B,),
        in_specs=[
            pl.BlockSpec((1, C, D), lambda b: (b, 0, 0)),   # one batch row per step
            pl.BlockSpec((K, D), lambda b: (0, 0)),         # codebook: resident
            pl.BlockSpec((1, K), lambda b: (0, 0)),         # ||e_k||^2: resident
        ],
        out_specs=(
            pl.BlockSpec((1, 1, D), lambda b: (b, 0, 0)),
            pl.BlockSpec((1, 1, 1), lambda b: (b, 0, 0)),
        ),
        out_shape=(
            jax.ShapeDtypeStruct((B, 1, D), jnp.float32),
            jax.ShapeDtypeStruct((B, 1, 1), jnp.int32),
        ),
        cost_estimate=cost,
        compiler_params=pltpu.CompilerParams(
            dimension_semantics=("parallel",)),   # one batch row per TC on v7x
    )(x, emb_kd, e_sq)

    return zq.reshape(B, D), idx.reshape(B)


def quantized_model_forward(x, emb_kd, e_sq):
    """Mirrors quantizedModel.forward.

    emb  = cookbook(sum(x, 1).detach())          -> (result, argmin)
    z_q  = cookbook(sum(x, 1), weight_sg=True)   -> (result, argmin)
    Forward values of both are identical (detach / weight_sg only change gradients),
    so a single kernel call serves both.
    """
    zq, argmin = nearest_embed_forward(x, emb_kd, e_sq)
    z_q = (zq, argmin)
    emb = (zq, argmin)
    # TODO(synk): self.classifier = torch.load('.../parkinsonsNet-rest_mpower-rest.pth')
    # is an external checkpoint whose Sequential children cannot be reconstructed
    # in-script; `output` therefore falls through as z_q (the torch loop body never
    # runs without that file). Fusing that classifier matmul into this pallas_call is
    # the remaining launch-overhead amortization opportunity.
    output = z_q
    return z_q, emb, output


if __name__ == "__main__":
    key = jax.random.PRNGKey(0)
    kx, kw = jax.random.split(key)

    B, C, D, K = 2, 3, EMB_DIM, NUM_EMB
    x = jax.random.normal(kx, (B, C, D), dtype=jnp.float32)
    # Deterministic stand-in for nn.Parameter(torch.rand(4000, 20)): uniform [0, 1).
    emb_weight = jax.random.uniform(kw, (D, K), dtype=jnp.float32)

    # One-time (model-load) preprocessing — deliberately OUTSIDE the per-call path.
    emb_kd, e_sq = prepare_codebook(emb_weight)
    emb_kd = jax.block_until_ready(emb_kd)
    e_sq = jax.block_until_ready(e_sq)

    z_q, emb, output = quantized_model_forward(x, emb_kd, e_sq)
    zq_val = jax.block_until_ready(z_q[0])
    argmin_val = jax.block_until_ready(z_q[1])

    # Pure-JAX reference with exact torch semantics (norm over dim 1, min over last).
    s = jnp.sum(x, axis=1)                                                   # (B, D)
    dist = jnp.linalg.norm(s[:, :, None] - emb_weight[None, :, :], axis=1)   # (B, K)
    ref_idx = jnp.argmin(dist, axis=-1)                                      # (B,)
    ref_zq = emb_weight.T[ref_idx]                                           # (B, D)

    np.testing.assert_array_equal(np.asarray(argmin_val), np.asarray(ref_idx))
    np.testing.assert_allclose(np.asarray(zq_val), np.asarray(ref_zq),
                               rtol=1e-6, atol=1e-6)

    print("KERNEL_OK")
</pallas_src>

<mosaic_0001>
module attributes {stable_mosaic.version = 11 : i64} {
  func.func @_vq_kernel(%arg0: i32, %arg1: memref<1x3x4000xf32, #tpu.memory_space<vmem>>, %arg2: memref<20x4000xf32, #tpu.memory_space<vmem>>, %arg3: memref<1x20xf32, #tpu.memory_space<vmem>>, %arg4: memref<1x1x4000xf32, #tpu.memory_space<vmem>>, %arg5: memref<1x1x1xi32, #tpu.memory_space<vmem>>) attributes {dimension_semantics = [#tpu.dimension_semantics<parallel>], iteration_bounds = array<i64: 2>, scalar_prefetch = 0 : i64, scratch_operands = 0 : i64, tpu.core_type = #tpu.core_type<tc>, window_params = [{transform_indices = @transform_0, window_bounds = array<i64: 1, 3, 4000>}, {pipeline_mode = #tpu.pipeline_mode<synchronous>, transform_indices = @transform_1, window_bounds = array<i64: 20, 4000>}, {pipeline_mode = #tpu.pipeline_mode<synchronous>, transform_indices = @transform_2, window_bounds = array<i64: 1, 20>}, {transform_indices = @transform_3, window_bounds = array<i64: 1, 1, 4000>}, {transform_indices = @transform_4, window_bounds = array<i64: 1, 1, 1>}]} {
    %c0 = arith.constant 0 : index
    %c0_0 = arith.constant 0 : index
    %0 = vector.load %arg2[%c0, %c0_0] : memref<20x4000xf32, #tpu.memory_space<vmem>>, vector<20x4000xf32>
    %c0_1 = arith.constant 0 : index
    %c0_2 = arith.constant 0 : index
    %c0_3 = arith.constant 0 : index
    %1 = vector.load %arg1[%c0_1, %c0_2, %c0_3] : memref<1x3x4000xf32, #tpu.memory_space<vmem>>, vector<1x3x4000xf32>
    %cst = arith.constant dense<0.000000e+00> : vector<1x4000xf32>
    %2 = vector.multi_reduction <add>, %1, %cst [1] : vector<1x3x4000xf32> to vector<1x4000xf32>
    %cst_4 = arith.constant dense<0.000000e+00> : vector<1x20xf32>
    %3 = tpu.matmul %2, %0, %cst_4 {dimension_numbers = #tpu.dot_dimension_numbers<[1], [1], [0], [0], [0, 0, 1, 0], [], []>, precision = #tpu.contract_precision<fp32>} : vector<1x4000xf32>, vector<20x4000xf32>, vector<1x20xf32> -> vector<1x20xf32>
    %c0_5 = arith.constant 0 : index
    %c0_6 = arith.constant 0 : index
    %4 = vector.load %arg3[%c0_5, %c0_6] : memref<1x20xf32, #tpu.memory_space<vmem>>, vector<1x20xf32>
    %cst_7 = arith.constant 2.000000e+00 : f32
    %5 = vector.broadcast %cst_7 : f32 to vector<1x20xf32>
    %6 = arith.mulf %5, %3 : vector<1x20xf32>
    %7 = arith.subf %4, %6 : vector<1x20xf32>
    %8 = tpu.iota {dimensions = array<i32: 1>} : vector<1x20xi32>
    %cst_8 = arith.constant dense<0x7F800000> : vector<1xf32>
    %9 = vector.multi_reduction <minimumf>, %7, %cst_8 [1] : vector<1x20xf32> to vector<1xf32>
    %10 = vector.shape_cast %9 : vector<1xf32> to vector<1x1xf32>
    %11 = vector.broadcast %10 : vector<1x1xf32> to vector<1x20xf32>
    %12 = arith.cmpf oeq, %7, %11 : vector<1x20xf32>
    %c20_i32 = arith.constant 20 : i32
    %13 = vector.broadcast %c20_i32 : i32 to vector<1x20xi32>
    %14 = arith.select %12, %8, %13 : vector<1x20xi1>, vector<1x20xi32>
    %cst_9 = arith.constant dense<2147483647> : vector<1xi32>
    %15 = vector.multi_reduction <minsi>, %14, %cst_9 [1] : vector<1x20xi32> to vector<1xi32>
    %16 = vector.shape_cast %15 : vector<1xi32> to vector<1x1xi32>
    %c19_i32 = arith.constant 19 : i32
    %17 = vector.broadcast %c19_i32 : i32 to vector<1x1xi32>
    %18 = arith.minsi %16, %17 : vector<1x1xi32>
    %19 = tpu.iota {dimensions = array<i32: 0>} : vector<20x1xi32>
    %20 = vector.broadcast %18 : vector<1x1xi32> to vector<20x1xi32>
    %21 = arith.cmpi eq, %19, %20 : vector<20x1xi32>
    %cst_10 = arith.constant 0.000000e+00 : f32
    %22 = vector.shape_cast %21 : vector<20x1xi1> to vector<20x1xi1>
    %23 = vector.broadcast %22 : vector<20x1xi1> to vector<20x4000xi1>
    %24 = vector.broadcast %cst_10 : f32 to vector<20x4000xf32>
    %25 = arith.select %23, %0, %24 : vector<20x4000xi1>, vector<20x4000xf32>
    %cst_11 = arith.constant dense<0.000000e+00> : vector<4000xf32>
    %26 = vector.multi_reduction <add>, %25, %cst_11 [0] : vector<20x4000xf32> to vector<4000xf32>
    %27 = vector.shape_cast %26 : vector<4000xf32> to vector<1x4000xf32>
    %28 = vector.shape_cast %27 : vector<1x4000xf32> to vector<1x1x4000xf32>
    %c0_12 = arith.constant 0 : index
    %c0_13 = arith.constant 0 : index
    %c0_14 = arith.constant 0 : index
    %29 = vector.load %arg4[%c0_12, %c0_13, %c0_14] : memref<1x1x4000xf32, #tpu.memory_space<vmem>>, vector<1x1x4000xf32>
    tpu.vector_store %arg4[%c0_12, %c0_13, %c0_14], %28 {strides = array<i32>} : memref<1x1x4000xf32, #tpu.memory_space<vmem>>, vector<1x1x4000xf32>,
    %30 = vector.shape_cast %18 : vector<1x1xi32> to vector<1x1x1xi32>
    %c0_15 = arith.constant 0 : index
    %c0_16 = arith.constant 0 : index
    %c0_17 = arith.constant 0 : index
    %31 = vector.load %arg5[%c0_15, %c0_16, %c0_17] : memref<1x1x1xi32, #tpu.memory_space<vmem>>, vector<1x1x1xi32>
    tpu.vector_store %arg5[%c0_15, %c0_16, %c0_17], %30 {strides = array<i32>} : memref<1x1x1xi32, #tpu.memory_space<vmem>>, vector<1x1x1xi32>,
    return
  }
  func.func @transform_0(%arg0: i32) -> (i32, i32, i32) {
    %c0_i32 = arith.constant 0 : i32
    %c0_i32_0 = arith.constant 0 : i32
    %c0_i32_1 = arith.constant 0 : i32
    return %arg0, %c0_i32, %c0_i32_0 : i32, i32, i32
  }
  func.func @transform_1(%arg0: i32) -> (i32, i32) {
    %c0_i32 = arith.constant 0 : i32
    %c0_i32_0 = arith.constant 0 : i32
    %c0_i32_1 = arith.constant 0 : i32
    return %c0_i32, %c0_i32_0 : i32, i32
  }
  func.func @transform_2(%arg0: i32) -> (i32, i32) {
    %c0_i32 = arith.constant 0 : i32
    %c0_i32_0 = arith.constant 0 : i32
    %c0_i32_1 = arith.constant 0 : i32
    return %c0_i32, %c0_i32_0 : i32, i32
  }
  func.func @transform_3(%arg0: i32) -> (i32, i32, i32) {
    %c0_i32 = arith.constant 0 : i32
    %c0_i32_0 = arith.constant 0 : i32
    %c0_i32_1 = arith.constant 0 : i32
    return %arg0, %c0_i32, %c0_i32_0 : i32, i32, i32
  }
  func.func @transform_4(%arg0: i32) -> (i32, i32, i32) {
    %c0_i32 = arith.constant 0 : i32
    %c0_i32_0 = arith.constant 0 : i32
    %c0_i32_1 = arith.constant 0 : i32
    return %arg0, %c0_i32, %c0_i32_0 : i32, i32, i32
  }
}

</mosaic_0001>

<llo_original>
// kernel: nearest_embed_forward.1
$region0: #{nearest_embed_forward.1}
  #allocation0 [shape = 'u32[]', space=smem, size = 0x4, offset = 0x4, fixed_abs, tag = 'smem constant byte address 0x4 - core index']
  #allocation1 [shape = 'u32[144,128]{1,0:T(1,128)}', space=vmem, size = 0x12000, scoped, tag = 'internal scratch']
  %s0 = inlined_call_operand.vmem [shape: f32[2,3,4000], index: 0, kind: input, shape index: {}]
  %s1 = inlined_call_operand.hbm [shape: f32[20,4000], index: 1, kind: input, shape index: {}]
  %s2 = inlined_call_operand.vmem [shape: f32[1,20], index: 2, kind: input, shape index: {}]
  %s3 = inlined_call_operand.vmem [shape: f32[2,1,4000], index: 3, kind: output, shape index: {0}]
  %s4 = inlined_call_operand.vmem [shape: s32[2,1,1], index: 4, kind: output, shape index: {1}]
  %5 = xla_tuple %s3, %s4
  %s6 = sld [smem:[#allocation0]]
  $region57: #{nearest_embed_forward.1} parent=0
    _
  %s8 = ssub.s32 1, %s6
  %s9 = scalar_select 0, %s8, %s6
  $region1: #{nearest_embed_forward.1} parent=0
    #allocation2 [shape = 'u8[393216]{0}', space=vmem, size = 0x60000, scoped, tag = 'input window, operand 1, single buffered']
    #allocation3 [shape = 's32[2]{0}', space=sflag, size = 0x8, scoped, tag = 'scoped memory for nearest_embed_forward.1']
    %10 = vsyncpa [#allocation3], 0
    loop: start=0, step=1, limit=4
    $region2: #{nearest_embed_forward.1} parent=1 // loop_pre_header
      _
    $region3: #{nearest_embed_forward.1} parent=1 // loop_header
      %s12 = sphi 0, %s16
      %p13 = scmp.ge.s32.totalorder %s12, 4
      %s22 = sphi 0, %s24
      %s25 = sphi 0, %s22
      %s26 = sphi 0, %s25
      %s42 = sphi 0, %s26
      %s46 = sphi 0, %s46
      %s48 = sphi 0, %s46
      %s49 = sphi 0, %s48
      %s63 = sphi 0, %s49
      %s67 = sphi 0, %s67
      %s69 = sphi 0, %s67
      %s70 = sphi 0, %s69
      %s84 = sphi 0, %s70
      %s90 = sphi 0, %s92
      %s93 = sphi 0, %s90
      %s94 = sphi 0, %s93
      %s110 = sphi 0, %s94
      %s116 = sphi 0, %s118
      %s119 = sphi 0, %s116
      %s120 = sphi 0, %s119
      %s136 = sphi 0, %s120
    $region4: #{nearest_embed_forward.1} parent=1 // loop_header_branch
      %15 = sbr.rel (%p13) target = $region8
    $region5: #{nearest_embed_forward.1} parent=1 // loop_body
      %s17 = ssub.s32 %s12, 1
      %s18 = ssub.s32 %s12, 2
      %s19 = sadd.s32 %s12, 1
      %s20 = ssub.s32 %s12, %s19
      %p21 = scmp.eq.s32.totalorder %s20, 0
      %s23 = sadd.s32 %s22, 1
      %s24 = scalar_select %p21, %s22, %s23
      %p27 = pneg %p21
      %p28 = scmp.eq.s32.totalorder %s12, 1
      %p29 = por %p27, %p28
      %p30 = scmp.ne.s32.totalorder %s22, %s25
      %p31 = scmp.eq.s32.totalorder %s12, 0
      %p32 = por %p30, %p31
      %p33 = scmp.ne.s32.totalorder %s22, %s25
      %p34 = scmp.eq.s32.totalorder %s17, 1
      %p35 = por %p33, %p34
      %p36 = scmp.ne.s32.totalorder %s25, %s26
      %p37 = scmp.eq.s32.totalorder %s17, 0
      %p38 = por %p36, %p37
      %p39 = scmp.ne.s32.totalorder %s25, %s26
      %p40 = scmp.eq.s32.totalorder %s18, 1
      %p41 = por %p39, %p40
      %p43 = scmp.ne.s32.totalorder %s26, %s42
      %p44 = scmp.eq.s32.totalorder %s18, 0
      %p45 = por %p43, %p44
      %s47 = sadd.s32 %s46, 1
      %p50 = scmp.eq.s32.totalorder %s12, 1
      %p51 = scmp.ne.s32.totalorder %s46, %s48
      %p52 = scmp.eq.s32.totalorder %s12, 0
      %p53 = por %p51, %p52
      %p54 = scmp.ne.s32.totalorder %s46, %s48
      %p55 = scmp.eq.s32.totalorder %s17, 1
      %p56 = por %p54, %p55
      %p57 = scmp.ne.s32.totalorder %s48, %s49
      %p58 = scmp.eq.s32.totalorder %s17, 0
      %p59 = por %p57, %p58
      %p60 = scmp.ne.s32.totalorder %s48, %s49
      %p61 = scmp.eq.s32.totalorder %s18, 1
      %p62 = por %p60, %p61
      %p64 = scmp.ne.s32.totalorder %s49, %s63
      %p65 = scmp.eq.s32.totalorder %s18, 0
      %p66 = por %p64, %p65
      %s68 = sadd.s32 %s67, 1
      %p71 = scmp.eq.s32.totalorder %s12, 1
      %p72 = scmp.ne.s32.totalorder %s67, %s69
      %p73 = scmp.eq.s32.totalorder %s12, 0
      %p74 = por %p72, %p73
      %p75 = scmp.ne.s32.totalorder %s67, %s69
      %p76 = scmp.eq.s32.totalorder %s17, 1
      %p77 = por %p75, %p76
      %p78 = scmp.ne.s32.totalorder %s69, %s70
      %p79 = scmp.eq.s32.totalorder %s17, 0
      %p80 = por %p78, %p79
      %p81 = scmp.ne.s32.totalorder %s69, %s70
      %p82 = scmp.eq.s32.totalorder %s18, 1
      %p83 = por %p81, %p82
      %p85 = scmp.ne.s32.totalorder %s70, %s84
      %p86 = scmp.eq.s32.totalorder %s18, 0
      %p87 = por %p85, %p86
      %s88 = ssub.s32 %s12, %s19
      %p89 = scmp.eq.s32.totalorder %s88, 0
      %s91 = sadd.s32 %s90, 1
      %s92 = scalar_select %p89, %s90, %s91
      %p95 = pneg %p89
      %p96 = scmp.eq.s32.totalorder %s12, 1
      %p97 = por %p95, %p96
      %p98 = scmp.ne.s32.totalorder %s90, %s93
      %p99 = scmp.eq.s32.totalorder %s12, 0
      %p100 = por %p98, %p99
      %p101 = scmp.ne.s32.totalorder %s90, %s93
      %p102 = scmp.eq.s32.totalorder %s17, 1
      %p103 = por %p101, %p102
      %p104 = scmp.ne.s32.totalorder %s93, %s94
      %p105 = scmp.eq.s32.totalorder %s17, 0
      %p106 = por %p104, %p105
      %p107 = scmp.ne.s32.totalorder %s93, %s94
      %p108 = scmp.eq.s32.totalorder %s18, 1
      %p109 = por %p107, %p108
      %p111 = scmp.ne.s32.totalorder %s94, %s110
      %p112 = scmp.eq.s32.totalorder %s18, 0
      %p113 = por %p111, %p112
      %s114 = ssub.s32 %s12, %s19
      %p115 = scmp.eq.s32.totalorder %s114, 0
      %s117 = sadd.s32 %s116, 1
      %s118 = scalar_select %p115, %s116, %s117
      %p121 = pneg %p115
      %p122 = scmp.eq.s32.totalorder %s12, 1
      %p123 = por %p121, %p122
      %p124 = scmp.ne.s32.totalorder %s116, %s119
      %p125 = scmp.eq.s32.totalorder %s12, 0
      %p126 = por %p124, %p125
      %p127 = scmp.ne.s32.totalorder %s116, %s119
      %p128 = scmp.eq.s32.totalorder %s17, 1
      %p129 = por %p127, %p128
      %p130 = scmp.ne.s32.totalorder %s119, %s120
      %p131 = scmp.eq.s32.totalorder %s17, 0
      %p132 = por %p130, %p131
      %p133 = scmp.ne.s32.totalorder %s119, %s120
      %p134 = scmp.eq.s32.totalorder %s18, 1
      %p135 = por %p133, %p134
      %p137 = scmp.ne.s32.totalorder %s120, %s136
      %p138 = scmp.eq.s32.totalorder %s18, 0
      %p139 = por %p137, %p138
      %p140 = scmp.le.s32.totalorder 1, %s12
      %p141 = scmp.lt.s32.totalorder %s12, 3
      %p142 = pnand %p140, %p141
      %p143 = pneg %p142
      // Predicated region
      $region9: #{nearest_embed_forward.1} parent=5 // pred_check
        _
      $region10: #{nearest_embed_forward.1} parent=5 // pred_check_branch
        %145 = sbr.rel (%p142) target = $region12
      $region11: #{nearest_embed_forward.1} parent=5 // pred_region
        %s146 = ssub.s32 %s12, 1
        // Predicated region
        $region13: #{nearest_embed_forward.1} parent=11 // pred_check
          %p147 = pneg %p59
        $region14: #{nearest_embed_forward.1} parent=11 // pred_check_branch
          %149 = sbr.rel (%p147) target = $region16
        $region15: #{nearest_embed_forward.1} parent=11 // pred_region
          %s151 = ssub.s32 12288, 12288
          %152 = vsyncadd [#allocation3], %s151
          %s153 = sshll.u32 [#allocation2], 4
          %s154 = int_to_ptr.vmem [resolvable:$true] %s153
          %159 = dma.hbm_to_vmem [thread:$0]  %s1, 12288, %s154, [#allocation3], 4096, 4096, 256
        $region16: #{nearest_embed_forward.1} parent=11 // pred_fallthru
          _
        // Predicated region
        $region17: #{nearest_embed_forward.1} parent=11 // pred_check
          %p160 = pneg %p80
        $region18: #{nearest_embed_forward.1} parent=11 // pred_check_branch
          %162 = sbr.rel (%p160) target = $region20
        $region19: #{nearest_embed_forward.1} parent=11 // pred_region
          _
        $region20: #{nearest_embed_forward.1} parent=11 // pred_fallthru
          _
      $region12: #{nearest_embed_forward.1} parent=5 // pred_fallthru
        _
      %p163 = scmp.lt.s32.totalorder %s12, 2
      // Predicated region
      $region21: #{nearest_embed_forward.1} parent=5 // pred_check
        %p164 = pneg %p163
      $region22: #{nearest_embed_forward.1} parent=5 // pred_check_branch
        %166 = sbr.rel (%p164) target = $region24
      $region23: #{nearest_embed_forward.1} parent=5 // pred_region
        // Predicated region
        $region25: #{nearest_embed_forward.1} parent=23 // pred_check
          %p167 = pneg %p32
        $region26: #{nearest_embed_forward.1} parent=23 // pred_check_branch
          %169 = sbr.rel (%p167) target = $region28
        $region27: #{nearest_embed_forward.1} parent=23 // pred_region
          %p170 = scmp.lt.s32.totalorder %s12, 1
          %s171 = scalar_select %p170, %s12, 1
          %s172 = smul.addr %s171, 32
          %s173 = smul.addr %s172, 4
          %s174 = scalar_lea.vmem %s0, %s173
        $region28: #{nearest_embed_forward.1} parent=23 // pred_fallthru
          _
      $region24: #{nearest_embed_forward.1} parent=5 // pred_fallthru
        _
      %p175 = scmp.le.s32.totalorder 1, %s12
      %p176 = scmp.lt.s32.totalorder %s12, 3
      %p177 = pnand %p175, %p176
      %p178 = pneg %p177
      // Predicated region
      $region29: #{nearest_embed_forward.1} parent=5 // pred_check
        _
      $region30: #{nearest_embed_forward.1} parent=5 // pred_check_branch
        %180 = sbr.rel (%p177) target = $region32
      $region31: #{nearest_embed_forward.1} parent=5 // pred_region
        %s181 = ssub.s32 %s12, 1
        // Predicated region
        $region33: #{nearest_embed_forward.1} parent=31 // pred_check
          %p182 = pneg %p59
        $region34: #{nearest_embed_forward.1} parent=31 // pred_check_branch
          %184 = sbr.rel (%p182) target = $region36
        $region35: #{nearest_embed_forward.1} parent=31 // pred_region
          %185 = dma.done [#allocation3], 12288
        $region36: #{nearest_embed_forward.1} parent=31 // pred_fallthru
          _
        %p186 = scmp.lt.s32.totalorder %s17, 1
        %s187 = scalar_select %p186, %s17, 1
        %s188 = smul.addr %s187, 32
        %s189 = smul.addr %s188, 4
        %s190 = scalar_lea.vmem %s0, %s189
        %p191 = pneg %p38
        %p192 = pneg %p35
        %p193 = pneg %p59
        %p194 = pneg %p56
        %p195 = pneg %p80
        %p196 = pneg %p77
        %p197 = pneg %p106
        %p198 = pneg %p103
        %p199 = scmp.lt.s32.totalorder %s17, 1
        %s200 = scalar_select %p199, %s17, 1
        %s201 = smul.addr %s200, 32
        %s202 = scalar_lea.vmem %s3, %s201
        %p203 = pneg %p132
        %p204 = pneg %p129
        %p205 = scmp.lt.s32.totalorder %s17, 1
        %s206 = scalar_select %p205, %s17, 1
        %s207 = scalar_lea.vmem %s4, %s206
        %p208 = scmp.lt.s32.totalorder %s17, 1
        %s209 = scalar_select %p208, %s17, 1
        %s210 = smul.addr %s209, 32
        %s211 = smul.addr %s210, 4
        %s212 = scalar_lea.vmem %s0, %s211
        %p213 = scmp.lt.s32.totalorder %s17, 1
        %s214 = scalar_select %p213, %s17, 1
        %s215 = smul.addr %s214, 32
        %s216 = scalar_lea.vmem %s3, %s215
        %p217 = scmp.lt.s32.totalorder %s17, 1
        %s218 = scalar_select %p217, %s17, 1
        %s219 = scalar_lea.vmem %s4, %s218
        %v220 = vld [vmem:[#allocation2] sm:$0xff]
        %v221 = vld [vmem:[#allocation2 + $0x8] sm:$0xff]
        %v222 = vld [vmem:[#allocation2 + $0x10] sm:$0xff]
        %v223 = vld [vmem:[#allocation2 + $0x18] sm:$0xff]
        %v224 = vld [vmem:[#allocation2 + $0x20] sm:$0xff]
        %v225 = vld [vmem:[#allocation2 + $0x28] sm:$0xff]
        %v226 = vld [vmem:[#allocation2 + $0x30] sm:$0xff]
        %v227 = vld [vmem:[#allocation2 + $0x38] sm:$0xff]
        %v228 = vld [vmem:[#allocation2 + $0x40] sm:$0xff]
        %v229 = vld [vmem:[#allocation2 + $0x48] sm:$0xff]
        %v230 = vld [vmem:[#allocation2 + $0x50] sm:$0xff]
        %v231 = vld [vmem:[#allocation2 + $0x58] sm:$0xff]
        %v232 = vld [vmem:[#allocation2 + $0x60] sm:$0xff]
        %v233 = vld [vmem:[#allocation2 + $0x68] sm:$0xff]
        %v234 = vld [vmem:[#allocation2 + $0x70] sm:$0xff]
        %v235 = vld [vmem:[#allocation2 + $0x78] sm:$0xff]
        %v236 = vld [vmem:[#allocation2 + $0x80] sm:$0xff]
        %v237 = vld [vmem:[#allocation2 + $0x88] sm:$0xff]
        %v238 = vld [vmem:[#allocation2 + $0x90] sm:$0xff]
        %v239 = vld [vmem:[#allocation2 + $0x98] sm:$0xff]
        %v240 = vld [vmem:[#allocation2 + $0xa0] sm:$0xff]
        %v241 = vld [vmem:[#allocation2 + $0xa8] sm:$0xff]
        %v242 = vld [vmem:[#allocation2 + $0xb0] sm:$0xff]
        %v243 = vld [vmem:[#allocation2 + $0xb8] sm:$0xff]
        %v244 = vld [vmem:[#allocation2 + $0xc0] sm:$0xff]
        %v245 = vld [vmem:[#allocation2 + $0xc8] sm:$0xff]
        %v246 = vld [vmem:[#allocation2 + $0xd0] sm:$0xff]
        %v247 = vld [vmem:[#allocation2 + $0xd8] sm:$0xff]
        %v248 = vld [vmem:[#allocation2 + $0xe0] sm:$0xff]
        %v249 = vld [vmem:[#allocation2 + $0xe8] sm:$0xff]
        %v250 = vld [vmem:[#allocation2 + $0xf0] sm:$0xff]
        %v251 = vld [vmem:[#allocation2 + $0xf8] sm:$0xff]
        %v252 = vld [vmem:[#allocation2 + $0x100] sm:$0xff]
        %v253 = vld [vmem:[#allocation2 + $0x108] sm:$0xff]
        %v254 = vld [vmem:[#allocation2 + $0x110] sm:$0xff]
        %v255 = vld [vmem:[#allocation2 + $0x118] sm:$0xff]
        %v256 = vld [vmem:[#allocation2 + $0x120] sm:$0xff]
        %v257 = vld [vmem:[#allocation2 + $0x128] sm:$0xff]
        %v258 = vld [vmem:[#allocation2 + $0x130] sm:$0xff]
        %v259 = vld [vmem:[#allocation2 + $0x138] sm:$0xff]
        %v260 = vld [vmem:[#allocation2 + $0x140] sm:$0xff]
        %v261 = vld [vmem:[#allocation2 + $0x148] sm:$0xff]
        %v262 = vld [vmem:[#allocation2 + $0x150] sm:$0xff]
        %v263 = vld [vmem:[#allocation2 + $0x158] sm:$0xff]
        %v264 = vld [vmem:[#allocation2 + $0x160] sm:$0xff]
        %v265 = vld [vmem:[#allocation2 + $0x168] sm:$0xff]
        %v266 = vld [vmem:[#allocation2 + $0x170] sm:$0xff]
        %v267 = vld [vmem:[#allocation2 + $0x178] sm:$0xff]
        %v268 = vld [vmem:[#allocation2 + $0x180] sm:$0xff]
        %v269 = vld [vmem:[#allocation2 + $0x188] sm:$0xff]
        %v270 = vld [vmem:[#allocation2 + $0x190] sm:$0xff]
        %v271 = vld [vmem:[#allocation2 + $0x198] sm:$0xff]
        %v272 = vld [vmem:[#allocation2 + $0x1a0] sm:$0xff]
        %v273 = vld [vmem:[#allocation2 + $0x1a8] sm:$0xff]
        %v274 = vld [vmem:[#allocation2 + $0x1b0] sm:$0xff]
        %v275 = vld [vmem:[#allocation2 + $0x1b8] sm:$0xff]
        %v276 = vld [vmem:[#allocation2 + $0x1c0] sm:$0xff]
        %v277 = vld [vmem:[#allocation2 + $0x1c8] sm:$0xff]
        %v278 = vld [vmem:[#allocation2 + $0x1d0] sm:$0xff]
        %v279 = vld [vmem:[#allocation2 + $0x1d8] sm:$0xff]
        %v280 = vld [vmem:[#allocation2 + $0x1e0] sm:$0xff]
        %v281 = vld [vmem:[#allocation2 + $0x1e8] sm:$0xff]
        %v282 = vld [vmem:[#allocation2 + $0x1f0] sm:$0xff]
        %v283 = vld [vmem:[#allocation2 + $0x1f8] sm:$0xff]
        %v284 = vld [vmem:[#allocation2 + $0x200] sm:$0xf]
        %v285 = vld [vmem:[#allocation2 + $0x208] sm:$0xf]
        %v286 = vld [vmem:[#allocation2 + $0x210] sm:$0xf]
        %v287 = vld [vmem:[#allocation2 + $0x218] sm:$0xf]
        %v288 = vld [vmem:[#allocation2 + $0x220] sm:$0xf]
        %v289 = vld [vmem:[#allocation2 + $0x228] sm:$0xf]
        %v290 = vld [vmem:[#allocation2 + $0x230] sm:$0xf]
        %v291 = vld [vmem:[#allocation2 + $0x238] sm:$0xf]
        %v292 = vld [vmem:[#allocation2 + $0x240] sm:$0xf]
        %v293 = vld [vmem:[#allocation2 + $0x248] sm:$0xf]
        %v294 = vld [vmem:[#allocation2 + $0x250] sm:$0xf]
        %v295 = vld [vmem:[#allocation2 + $0x258] sm:$0xf]
        %v296 = vld [vmem:[#allocation2 + $0x260] sm:$0xf]
        %v297 = vld [vmem:[#allocation2 + $0x268] sm:$0xf]
        %v298 = vld [vmem:[#allocation2 + $0x270] sm:$0xf]
        %v299 = vld [vmem:[#allocation2 + $0x278] sm:$0xf]
        %v300 = vld [vmem:[#allocation2 + $0x280] sm:$0xf]
        %v301 = vld [vmem:[#allocation2 + $0x288] sm:$0xf]
        %v302 = vld [vmem:[#allocation2 + $0x290] sm:$0xf]
        %v303 = vld [vmem:[#allocation2 + $0x298] sm:$0xf]
        %v304 = vld [vmem:[#allocation2 + $0x2a0] sm:$0xf]
        %v305 = vld [vmem:[#allocation2 + $0x2a8] sm:$0xf]
        %v306 = vld [vmem:[#allocation2 + $0x2b0] sm:$0xf]
        %v307 = vld [vmem:[#allocation2 + $0x2b8] sm:$0xf]
        %v308 = vld [vmem:[#allocation2 + $0x2c0] sm:$0xf]
        %v309 = vld [vmem:[#allocation2 + $0x2c8] sm:$0xf]
        %v310 = vld [vmem:[#allocation2 + $0x2d0] sm:$0xf]
        %v311 = vld [vmem:[#allocation2 + $0x2d8] sm:$0xf]
        %v312 = vld [vmem:[#allocation2 + $0x2e0] sm:$0xf]
        %v313 = vld [vmem:[#allocation2 + $0x2e8] sm:$0xf]
        %v314 = vld [vmem:[#allocation2 + $0x2f0] sm:$0xf]
        %v315 = vld [vmem:[#allocation2 + $0x2f8] sm:$0xf]
        %v316 = vld [vmem:[%s212] sm:$0x77]
        %v317 = vld [vmem:[%s212 + $0x8] sm:$0x77]
        %v318 = vld [vmem:[%s212 + $0x10] sm:$0x77]
        %v319 = vld [vmem:[%s212 + $0x18] sm:$0x77]
        %v320 = vld [vmem:[%s212 + $0x20] sm:$0x77]
        %v321 = vld [vmem:[%s212 + $0x28] sm:$0x77]
        %v322 = vld [vmem:[%s212 + $0x30] sm:$0x77]
        %v323 = vld [vmem:[%s212 + $0x38] sm:$0x77]
        %v324 = vld [vmem:[%s212 + $0x40] sm:$0x77]
        %v325 = vld [vmem:[%s212 + $0x48] sm:$0x77]
        %v326 = vld [vmem:[%s212 + $0x50] sm:$0x77]
        %v327 = vld [vmem:[%s212 + $0x58] sm:$0x77]
        %v328 = vld [vmem:[%s212 + $0x60] sm:$0x77]
        %v329 = vld [vmem:[%s212 + $0x68] sm:$0x77]
        %v330 = vld [vmem:[%s212 + $0x70] sm:$0x77]
        %v331 = vld [vmem:[%s212 + $0x78] sm:$0x77]
        %v348 = vcombine.high %v316, %v316
        %v349 = vcombine.high %v317, %v317
        %v350 = vcombine.high %v318, %v318
        %v351 = vcombine.high %v319, %v319
        %v352 = vcombine.high %v320, %v320
        %v353 = vcombine.high %v321, %v321
        %v354 = vcombine.high %v322, %v322
        %v355 = vcombine.high %v323, %v323
        %v356 = vcombine.high %v324, %v324
        %v357 = vcombine.high %v325, %v325
        %v358 = vcombine.high %v326, %v326
        %v359 = vcombine.high %v327, %v327
        %v360 = vcombine.high %v328, %v328
        %v361 = vcombine.high %v329, %v329
        %v362 = vcombine.high %v330, %v330
        %v363 = vcombine.high %v331, %v331
        %vm380 = vcmask 1042432
        %v381 = vsel %vm380, %v316, 0.0
        %v382 = vrot.slane %v381, 4
        %v383 = vadd.f32 %v381, %v382
        %v384 = vrot.slane %v383, 2
        %v385 = vadd.f32 %v383, %v384
        %v386 = vrot.slane %v385, 1
        %v387 = vadd.f32 %v385, %v386
        %v388 = vsel %vm380, %v348, 0.0
        %v389 = vrot.slane %v388, 4
        %v390 = vadd.f32 %v388, %v389
        %v391 = vrot.slane %v390, 2
        %v392 = vadd.f32 %v390, %v391
        %v393 = vrot.slane %v392, 1
        %v394 = vadd.f32 %v392, %v393
        %v395 = vsel %vm380, %v317, 0.0
        %v396 = vrot.slane %v395, 4
        %v397 = vadd.f32 %v395, %v396
        %v398 = vrot.slane %v397, 2
        %v399 = vadd.f32 %v397, %v398
        %v400 = vrot.slane %v399, 1
        %v401 = vadd.f32 %v399, %v400
        %v402 = vsel %vm380, %v349, 0.0
        %v403 = vrot.slane %v402, 4
        %v404 = vadd.f32 %v402, %v403
        %v405 = vrot.slane %v404, 2
        %v406 = vadd.f32 %v404, %v405
        %v407 = vrot.slane %v406, 1
        %v408 = vadd.f32 %v406, %v407
        %v409 = vsel %vm380, %v318, 0.0
        %v410 = vrot.slane %v409, 4
        %v411 = vadd.f32 %v409, %v410
        %v412 = vrot.slane %v411, 2
        %v413 = vadd.f32 %v411, %v412
        %v414 = vrot.slane %v413, 1
        %v415 = vadd.f32 %v413, %v414
        %v416 = vsel %vm380, %v350, 0.0
        %v417 = vrot.slane %v416, 4
        %v418 = vadd.f32 %v416, %v417
        %v419 = vrot.slane %v418, 2
        %v420 = vadd.f32 %v418, %v419
        %v421 = vrot.slane %v420, 1
        %v422 = vadd.f32 %v420, %v421
        %v423 = vsel %vm380, %v319, 0.0
        %v424 = vrot.slane %v423, 4
        %v425 = vadd.f32 %v423, %v424
        %v426 = vrot.slane %v425, 2
        %v427 = vadd.f32 %v425, %v426
        %v428 = vrot.slane %v427, 1
        %v429 = vadd.f32 %v427, %v428
        %v430 = vsel %vm380, %v351, 0.0
        %v431 = vrot.slane %v430, 4
        %v432 = vadd.f32 %v430, %v431
        %v433 = vrot.slane %v432, 2
        %v434 = vadd.f32 %v432, %v433
        %v435 = vrot.slane %v434, 1
        %v436 = vadd.f32 %v434, %v435
        %v437 = vsel %vm380, %v320, 0.0
        %v438 = vrot.slane %v437, 4
        %v439 = vadd.f32 %v437, %v438
        %v440 = vrot.slane %v439, 2
        %v441 = vadd.f32 %v439, %v440
        %v442 = vrot.slane %v441, 1
        %v443 = vadd.f32 %v441, %v442
        %v444 = vsel %vm380, %v352, 0.0
        %v445 = vrot.slane %v444, 4
        %v446 = vadd.f32 %v444, %v445
        %v447 = vrot.slane %v446, 2
        %v448 = vadd.f32 %v446, %v447
        %v449 = vrot.slane %v448, 1
        %v450 = vadd.f32 %v448, %v449
        %v451 = vsel %vm380, %v321, 0.0
        %v452 = vrot.slane %v451, 4
        %v453 = vadd.f32 %v451, %v452
        %v454 = vrot.slane %v453, 2
        %v455 = vadd.f32 %v453, %v454
        %v456 = vrot.slane %v455, 1
        %v457 = vadd.f32 %v455, %v456
        %v458 = vsel %vm380, %v353, 0.0
        %v459 = vrot.slane %v458, 4
        %v460 = vadd.f32 %v458, %v459
        %v461 = vrot.slane %v460, 2
        %v462 = vadd.f32 %v460, %v461
        %v463 = vrot.slane %v462, 1
        %v464 = vadd.f32 %v462, %v463
        %v465 = vsel %vm380, %v322, 0.0
        %v466 = vrot.slane %v465, 4
        %v467 = vadd.f32 %v465, %v466
        %v468 = vrot.slane %v467, 2
        %v469 = vadd.f32 %v467, %v468
        %v470 = vrot.slane %v469, 1
        %v471 = vadd.f32 %v469, %v470
        %v472 = vsel %vm380, %v354, 0.0
        %v473 = vrot.slane %v472, 4
        %v474 = vadd.f32 %v472, %v473
        %v475 = vrot.slane %v474, 2
        %v476 = vadd.f32 %v474, %v475
        %v477 = vrot.slane %v476, 1
        %v478 = vadd.f32 %v476, %v477
        %v479 = vsel %vm380, %v323, 0.0
        %v480 = vrot.slane %v479, 4
        %v481 = vadd.f32 %v479, %v480
        %v482 = vrot.slane %v481, 2
        %v483 = vadd.f32 %v481, %v482
        %v484 = vrot.slane %v483, 1
        %v485 = vadd.f32 %v483, %v484
        %v486 = vsel %vm380, %v355, 0.0
        %v487 = vrot.slane %v486, 4
        %v488 = vadd.f32 %v486, %v487
        %v489 = vrot.slane %v488, 2
        %v490 = vadd.f32 %v488, %v489
        %v491 = vrot.slane %v490, 1
        %v492 = vadd.f32 %v490, %v491
        %v493 = vsel %vm380, %v324, 0.0
        %v494 = vrot.slane %v493, 4
        %v495 = vadd.f32 %v493, %v494
        %v496 = vrot.slane %v495, 2
        %v497 = vadd.f32 %v495, %v496
        %v498 = vrot.slane %v497, 1
        %v499 = vadd.f32 %v497, %v498
        %v500 = vsel %vm380, %v356, 0.0
        %v501 = vrot.slane %v500, 4
        %v502 = vadd.f32 %v500, %v501
        %v503 = vrot.slane %v502, 2
        %v504 = vadd.f32 %v502, %v503
        %v505 = vrot.slane %v504, 1
        %v506 = vadd.f32 %v504, %v505
        %v507 = vsel %vm380, %v325, 0.0
        %v508 = vrot.slane %v507, 4
        %v509 = vadd.f32 %v507, %v508
        %v510 = vrot.slane %v509, 2
        %v511 = vadd.f32 %v509, %v510
        %v512 = vrot.slane %v511, 1
        %v513 = vadd.f32 %v511, %v512
        %v514 = vsel %vm380, %v357, 0.0
        %v515 = vrot.slane %v514, 4
        %v516 = vadd.f32 %v514, %v515
        %v517 = vrot.slane %v516, 2
        %v518 = vadd.f32 %v516, %v517
        %v519 = vrot.slane %v518, 1
        %v520 = vadd.f32 %v518, %v519
        %v521 = vsel %vm380, %v326, 0.0
        %v522 = vrot.slane %v521, 4
        %v523 = vadd.f32 %v521, %v522
        %v524 = vrot.slane %v523, 2
        %v525 = vadd.f32 %v523, %v524
        %v526 = vrot.slane %v525, 1
        %v527 = vadd.f32 %v525, %v526
        %v528 = vsel %vm380, %v358, 0.0
        %v529 = vrot.slane %v528, 4
        %v530 = vadd.f32 %v528, %v529
        %v531 = vrot.slane %v530, 2
        %v532 = vadd.f32 %v530, %v531
        %v533 = vrot.slane %v532, 1
        %v534 = vadd.f32 %v532, %v533
        %v535 = vsel %vm380, %v327, 0.0
        %v536 = vrot.slane %v535, 4
        %v537 = vadd.f32 %v535, %v536
        %v538 = vrot.slane %v537, 2
        %v539 = vadd.f32 %v537, %v538
        %v540 = vrot.slane %v539, 1
        %v541 = vadd.f32 %v539, %v540
        %v542 = vsel %vm380, %v359, 0.0
        %v543 = vrot.slane %v542, 4
        %v544 = vadd.f32 %v542, %v543
        %v545 = vrot.slane %v544, 2
        %v546 = vadd.f32 %v544, %v545
        %v547 = vrot.slane %v546, 1
        %v548 = vadd.f32 %v546, %v547
        %v549 = vsel %vm380, %v328, 0.0
        %v550 = vrot.slane %v549, 4
        %v551 = vadd.f32 %v549, %v550
        %v552 = vrot.slane %v551, 2
        %v553 = vadd.f32 %v551, %v552
        %v554 = vrot.slane %v553, 1
        %v555 = vadd.f32 %v553, %v554
        %v556 = vsel %vm380, %v360, 0.0
        %v557 = vrot.slane %v556, 4
        %v558 = vadd.f32 %v556, %v557
        %v559 = vrot.slane %v558, 2
        %v560 = vadd.f32 %v558, %v559
        %v561 = vrot.slane %v560, 1
        %v562 = vadd.f32 %v560, %v561
        %v563 = vsel %vm380, %v329, 0.0
        %v564 = vrot.slane %v563, 4
        %v565 = vadd.f32 %v563, %v564
        %v566 = vrot.slane %v565, 2
        %v567 = vadd.f32 %v565, %v566
        %v568 = vrot.slane %v567, 1
        %v569 = vadd.f32 %v567, %v568
        %v570 = vsel %vm380, %v361, 0.0
        %v571 = vrot.slane %v570, 4
        %v572 = vadd.f32 %v570, %v571
        %v573 = vrot.slane %v572, 2
        %v574 = vadd.f32 %v572, %v573
        %v575 = vrot.slane %v574, 1
        %v576 = vadd.f32 %v574, %v575
        %v577 = vsel %vm380, %v330, 0.0
        %v578 = vrot.slane %v577, 4
        %v579 = vadd.f32 %v577, %v578
        %v580 = vrot.slane %v579, 2
        %v581 = vadd.f32 %v579, %v580
        %v582 = vrot.slane %v581, 1
        %v583 = vadd.f32 %v581, %v582
        %v584 = vsel %vm380, %v362, 0.0
        %v585 = vrot.slane %v584, 4
        %v586 = vadd.f32 %v584, %v585
        %v587 = vrot.slane %v586, 2
        %v588 = vadd.f32 %v586, %v587
        %v589 = vrot.slane %v588, 1
        %v590 = vadd.f32 %v588, %v589
        %v591 = vsel %vm380, %v331, 0.0
        %v592 = vrot.slane %v591, 4
        %v593 = vadd.f32 %v591, %v592
        %v594 = vrot.slane %v593, 2
        %v595 = vadd.f32 %v593, %v594
        %v596 = vrot.slane %v595, 1
        %v597 = vadd.f32 %v595, %v596
        %vm598 = vcmask 256000
        %v599 = vsel %vm598, %v363, 0.0
        %v600 = vrot.slane %v599, 4
        %v601 = vadd.f32 %v599, %v600
        %v602 = vrot.slane %v601, 2
        %v603 = vadd.f32 %v601, %v602
        %v604 = vrot.slane %v603, 1
        %v605 = vadd.f32 %v603, %v604
        %vm606 = vcmask 261120
        %v608 = vsel %vm606, %v605, 0
        %v611 = vsel %vm606, %v251, 0
        %v614 = vsel %vm606, %v283, 0
        %v617 = vsel %vm606, %v315, 0
        %v619 = vand.u32 %v221, 4294901760
        %620 = vmatprep.subr.mxu0 %v619
        %v621 = vand.u32 %v220, 4294901760
        %622 = vmatpush1.xpose.msra.mxu0 %v621
        %v623 = vand.u32 %v253, 4294901760
        %624 = vmatprep.subr.mxu0 %v623
        %v625 = vand.u32 %v252, 4294901760
        %626 = vmatpush1.xpose.msra.mxu0 %v625
        %v627 = vand.u32 %v285, 4294901760
        %628 = vmatprep.subr.mxu0 %v627
        %v629 = vand.u32 %v284, 4294901760
        %630 = vmatpush1.xpose.msra.mxu0 %v629
        %631 = vmatprep.subr.mxu0 0.0
        %632 = vmatpush1.xpose.msra.mxu0 0.0
        %633 = vmatprep.subr.mxu0 0.0
        %634 = vmatpush1.xpose.msra.mxu0 0.0
        %635 = vmatprep.subr.mxu0 0.0
        %636 = vmatpush1.xpose.msra.mxu0 0.0
        %637 = vmatprep.subr.mxu0 0.0
        %638 = vmatpush1.xpose.msra.mxu0 0.0
        %639 = vmatprep.subr.mxu0 0.0
        %640 = vmatpush1.xpose.msra.mxu0 0.0
        %641 = vmatprep.subr.mxu0 0.0
        %642 = vmatpush1.xpose.msra.mxu0 0.0
        %643 = vmatprep.subr.mxu0 0.0
        %644 = vmatpush1.xpose.msra.mxu0 0.0
        %645 = vmatprep.subr.mxu0 0.0
        %646 = vmatpush1.xpose.msra.mxu0 0.0
        %647 = vmatprep.subr.mxu0 0.0
        %648 = vmatpush1.xpose.msra.mxu0 0.0
        %649 = vmatprep.subr.mxu0 0.0
        %650 = vmatpush1.xpose.msra.mxu0 0.0
        %651 = vmatprep.subr.mxu0 0.0
        %652 = vmatpush1.xpose.msra.mxu0 0.0
        %653 = vmatprep.subr.mxu0 0.0
        %654 = vmatpush1.xpose.msra.mxu0 0.0
        %655 = vmatprep.subr.mxu0 0.0
        %656 = vmatpush1.xpose.msra.mxu0 0.0
        %657 = vmatprep.subr.mxu0 0.0
        %658 = vmatpush1.xpose.msra.mxu0 0.0
        %659 = vmatprep.subr.mxu0 0.0
        %660 = vmatpush1.xpose.msra.mxu0 0.0
        %661 = vmatprep.subr.mxu0 0.0
        %662 = vmatpush1.xpose.msra.mxu0 0.0
        %663 = vmatprep.subr.mxu0 0.0
        %664 = vmatpush1.xpose.msra.mxu0 0.0
        %665 = vmatprep.subr.mxu0 0.0
        %666 = vmatpush1.xpose.msra.mxu0 0.0
        %667 = vmatprep.subr.mxu0 0.0
        %668 = vmatpush1.xpose.msra.mxu0 0.0
        %669 = vmatprep.subr.mxu0 0.0
        %670 = vmatpush1.xpose.msra.mxu0 0.0
        %671 = vmatprep.subr.mxu0 0.0
        %672 = vmatpush1.xpose.msra.mxu0 0.0
        %673 = vmatprep.subr.mxu0 0.0
        %674 = vmatpush1.xpose.msra.mxu0 0.0
        %675 = vmatprep.subr.mxu0 0.0
        %676 = vmatpush1.xpose.msra.mxu0 0.0
        %677 = vmatprep.subr.mxu0 0.0
        %678 = vmatpush1.xpose.msra.mxu0 0.0
        %679 = vmatprep.subr.mxu0 0.0
        %680 = vmatpush1.xpose.msra.mxu0 0.0
        %681 = vmatprep.subr.mxu0 0.0
        %682 = vmatpush1.xpose.msra.mxu0 0.0
        %683 = vmatprep.subr.mxu0 0.0
        %684 = vmatpush1.xpose.msra.mxu0 0.0
        %685 = vmatprep.subr.mxu0 0.0
        %686 = vmatpush1.xpose.msra.mxu0 0.0
        %687 = vmatprep.subr.mxu0 0.0
        %688 = vmatpush1.xpose.msra.mxu0 0.0
        %v689 = vand.u32 %v394, 4294901760
        %v690 = vsub.f32 %v394, %v689
        %v691 = vand.u32 %v690, 4294901760
        %v692 = vsub.f32 %v690, %v691
        %v693 = vand.u32 %v692, 4294901760
        %694 = vmatprep.mubr.f32.mxu0 %v693
        %v695 = vand.u32 %v387, 4294901760
        %v696 = vsub.f32 %v387, %v695
        %v697 = vand.u32 %v696, 4294901760
        %v698 = vsub.f32 %v696, %v697
        %v699 = vand.u32 %v698, 4294901760
        %700 = vmatmul.mubr.f32.gmra.mrb[0].mxu0 %v699
        %v701 = vpop.f32.mrb[0].mxu0
        %v702 = vadd.f32 0.0, %v701
        %v703 = vpop.f32.mrb[0].mxu0
        %704 = vdwg.mxu0
        %v705 = vand.u32 %v221, 4294901760
        %v706 = vsub.f32 %v221, %v705
        %v707 = vand.u32 %v706, 4294901760
        %v708 = vsub.f32 %v706, %v707
        %v709 = vand.u32 %v708, 4294901760
        %710 = vmatprep.subr.mxu0 %v709
        %v711 = vand.u32 %v220, 4294901760
        %v712 = vsub.f32 %v220, %v711
        %v713 = vand.u32 %v712, 4294901760
        %v714 = vsub.f32 %v712, %v713
        %v715 = vand.u32 %v714, 4294901760
        %716 = vmatpush1.xpose.msra.mxu0 %v715
        %v717 = vand.u32 %v253, 4294901760
        %v718 = vsub.f32 %v253, %v717
        %v719 = vand.u32 %v718, 4294901760
        %v720 = vsub.f32 %v718, %v719
        %v721 = vand.u32 %v720, 4294901760
        %722 = vmatprep.subr.mxu0 %v721
        %v723 = vand.u32 %v252, 4294901760
        %v724 = vsub.f32 %v252, %v723
        %v725 = vand.u32 %v724, 4294901760
        %v726 = vsub.f32 %v724, %v725
        %v727 = vand.u32 %v726, 4294901760
        %728 = vmatpush1.xpose.msra.mxu0 %v727
        %v729 = vand.u32 %v285, 4294901760
        %v730 = vsub.f32 %v285, %v729
        %v731 = vand.u32 %v730, 4294901760
        %v732 = vsub.f32 %v730, %v731
        %v733 = vand.u32 %v732, 4294901760
        %734 = vmatprep.subr.mxu0 %v733
        %v735 = vand.u32 %v284, 4294901760
        %v736 = vsub.f32 %v284, %v735
        %v737 = vand.u32 %v736, 4294901760
        %v738 = vsub.f32 %v736, %v737
        %v739 = vand.u32 %v738, 4294901760
        %740 = vmatpush1.xpose.msra.mxu0 %v739
        %741 = vmatprep.subr.mxu0 0.0
        %742 = vmatpush1.xpose.msra.mxu0 0.0
        %743 = vmatprep.subr.mxu0 0.0
        %744 = vmatpush1.xpose.msra.mxu0 0.0
        %745 = vmatprep.subr.mxu0 0.0
        %746 = vmatpush1.xpose.msra.mxu0 0.0
        %747 = vmatprep.subr.mxu0 0.0
        %748 = vmatpush1.xpose.msra.mxu0 0.0
        %749 = vmatprep.subr.mxu0 0.0
        %750 = vmatpush1.xpose.msra.mxu0 0.0
        %751 = vmatprep.subr.mxu0 0.0
        %752 = vmatpush1.xpose.msra.mxu0 0.0
        %753 = vmatprep.subr.mxu0 0.0
        %754 = vmatpush1.xpose.msra.mxu0 0.0
        %755 = vmatprep.subr.mxu0 0.0
        %756 = vmatpush1.xpose.msra.mxu0 0.0
        %757 = vmatprep.subr.mxu0 0.0
        %758 = vmatpush1.xpose.msra.mxu0 0.0
        %759 = vmatprep.subr.mxu0 0.0
        %760 = vmatpush1.xpose.msra.mxu0 0.0
        %761 = vmatprep.subr.mxu0 0.0
        %762 = vmatpush1.xpose.msra.mxu0 0.0
        %763 = vmatprep.subr.mxu0 0.0
        %764 = vmatpush1.xpose.msra.mxu0 0.0
        %765 = vmatprep.subr.mxu0 0.0
        %766 = vmatpush1.xpose.msra.mxu0 0.0
        %767 = vmatprep.subr.mxu0 0.0
        %768 = vmatpush1.xpose.msra.mxu0 0.0
        %769 = vmatprep.subr.mxu0 0.0
        %770 = vmatpush1.xpose.msra.mxu0 0.0
        %771 = vmatprep.subr.mxu0 0.0
        %772 = vmatpush1.xpose.msra.mxu0 0.0
        %773 = vmatprep.subr.mxu0 0.0
        %774 = vmatpush1.xpose.msra.mxu0 0.0
        %775 = vmatprep.subr.mxu0 0.0
        %776 = vmatpush1.xpose.msra.mxu0 0.0
        %777 = vmatprep.subr.mxu0 0.0
        %778 = vmatpush1.xpose.msra.mxu0 0.0
        %779 = vmatprep.subr.mxu0 0.0
        %780 = vmatpush1.xpose.msra.mxu0 0.0
        %781 = vmatprep.subr.mxu0 0.0
        %782 = vmatpush1.xpose.msra.mxu0 0.0
        %783 = vmatprep.subr.mxu0 0.0
        %784 = vmatpush1.xpose.msra.mxu0 0.0
        %785 = vmatprep.subr.mxu0 0.0
        %786 = vmatpush1.xpose.msra.mxu0 0.0
        %787 = vmatprep.subr.mxu0 0.0
        %788 = vmatpush1.xpose.msra.mxu0 0.0
        %789 = vmatprep.subr.mxu0 0.0
        %790 = vmatpush1.xpose.msra.mxu0 0.0
        %791 = vmatprep.subr.mxu0 0.0
        %792 = vmatpush1.xpose.msra.mxu0 0.0
        %793 = vmatprep.subr.mxu0 0.0
        %794 = vmatpush1.xpose.msra.mxu0 0.0
        %795 = vmatprep.subr.mxu0 0.0
        %796 = vmatpush1.xpose.msra.mxu0 0.0
        %797 = vmatprep.subr.mxu0 0.0
        %798 = vmatpush1.xpose.msra.mxu0 0.0
        %v799 = vand.u32 %v394, 4294901760
        %800 = vmatprep.mubr.f32.mxu0 %v799
        %v801 = vand.u32 %v387, 4294901760
        %802 = vmatmul.mubr.f32.gmra.mrb[0].mxu0 %v801
        %v803 = vpop.f32.mrb[0].mxu0
        %v804 = vadd.f32 %v702, %v803
        %v805 = vpop.f32.mrb[0].mxu0
        %806 = vdwg.mxu0
        %v807 = vand.u32 %v221, 4294901760
        %v808 = vsub.f32 %v221, %v807
        %809 = vmatprep.subr.mxu0 %v808
        %v810 = vand.u32 %v220, 4294901760
        %v811 = vsub.f32 %v220, %v810
        %812 = vmatpush1.xpose.msra.mxu0 %v811
        %v813 = vand.u32 %v253, 4294901760
        %v814 = vsub.f32 %v253, %v813
        %815 = vmatprep.subr.mxu0 %v814
        %v816 = vand.u32 %v252, 4294901760
        %v817 = vsub.f32 %v252, %v816
        %818 = vmatpush1.xpose.msra.mxu0 %v817
        %v819 = vand.u32 %v285, 4294901760
        %v820 = vsub.f32 %v285, %v819
        %821 = vmatprep.subr.mxu0 %v820
        %v822 = vand.u32 %v284, 4294901760
        %v823 = vsub.f32 %v284, %v822
        %824 = vmatpush1.xpose.msra.mxu0 %v823
        %825 = vmatprep.subr.mxu0 0.0
        %826 = vmatpush1.xpose.msra.mxu0 0.0
        %827 = vmatprep.subr.mxu0 0.0
        %828 = vmatpush1.xpose.msra.mxu0 0.0
        %829 = vmatprep.subr.mxu0 0.0
        %830 = vmatpush1.xpose.msra.mxu0 0.0
        %831 = vmatprep.subr.mxu0 0.0
        %832 = vmatpush1.xpose.msra.mxu0 0.0
        %833 = vmatprep.subr.mxu0 0.0
        %834 = vmatpush1.xpose.msra.mxu0 0.0
        %835 = vmatprep.subr.mxu0 0.0
        %836 = vmatpush1.xpose.msra.mxu0 0.0
        %837 = vmatprep.subr.mxu0 0.0
        %838 = vmatpush1.xpose.msra.mxu0 0.0
        %839 = vmatprep.subr.mxu0 0.0
        %840 = vmatpush1.xpose.msra.mxu0 0.0
        %841 = vmatprep.subr.mxu0 0.0
        %842 = vmatpush1.xpose.msra.mxu0 0.0
        %843 = vmatprep.subr.mxu0 0.0
        %844 = vmatpush1.xpose.msra.mxu0 0.0
        %845 = vmatprep.subr.mxu0 0.0
        %846 = vmatpush1.xpose.msra.mxu0 0.0
        %847 = vmatprep.subr.mxu0 0.0
        %848 = vmatpush1.xpose.msra.mxu0 0.0
        %849 = vmatprep.subr.mxu0 0.0
        %850 = vmatpush1.xpose.msra.mxu0 0.0
        %851 = vmatprep.subr.mxu0 0.0
        %852 = vmatpush1.xpose.msra.mxu0 0.0
        %853 = vmatprep.subr.mxu0 0.0
        %854 = vmatpush1.xpose.msra.mxu0 0.0
        %855 = vmatprep.subr.mxu0 0.0
        %856 = vmatpush1.xpose.msra.mxu0 0.0
        %857 = vmatprep.subr.mxu0 0.0
        %858 = vmatpush1.xpose.msra.mxu0 0.0
        %859 = vmatprep.subr.mxu0 0.0
        %860 = vmatpush1.xpose.msra.mxu0 0.0
        %861 = vmatprep.subr.mxu0 0.0
        %862 = vmatpush1.xpose.msra.mxu0 0.0
        %863 = vmatprep.subr.mxu0 0.0
        %864 = vmatpush1.xpose.msra.mxu0 0.0
        %865 = vmatprep.subr.mxu0 0.0
        %866 = vmatpush1.xpose.msra.mxu0 0.0
        %867 = vmatprep.subr.mxu0 0.0
        %868 = vmatpush1.xpose.msra.mxu0 0.0
        %869 = vmatprep.subr.mxu0 0.0
        %870 = vmatpush1.xpose.msra.mxu0 0.0
        %871 = vmatprep.subr.mxu0 0.0
        %872 = vmatpush1.xpose.msra.mxu0 0.0
        %873 = vmatprep.subr.mxu0 0.0
        %874 = vmatpush1.xpose.msra.mxu0 0.0
        %875 = vmatprep.subr.mxu0 0.0
        %876 = vmatpush1.xpose.msra.mxu0 0.0
        %877 = vmatprep.subr.mxu0 0.0
        %878 = vmatpush1.xpose.msra.mxu0 0.0
        %879 = vmatprep.subr.mxu0 0.0
        %880 = vmatpush1.xpose.msra.mxu0 0.0
        %881 = vmatprep.subr.mxu0 0.0
        %882 = vmatpush1.xpose.msra.mxu0 0.0
        %v883 = vand.u32 %v394, 4294901760
        %v884 = vsub.f32 %v394, %v883
        %885 = vmatprep.mubr.f32.mxu0 %v884
        %v886 = vand.u32 %v387, 4294901760
        %v887 = vsub.f32 %v387, %v886
        %888 = vmatmul.mubr.f32.gmra.mrb[0].mxu0 %v887
        %v889 = vpop.f32.mrb[0].mxu0
        %v890 = vadd.f32 %v804, %v889
        %v891 = vpop.f32.mrb[0].mxu0
        %892 = vdwg.mxu0
        %v893 = vand.u32 %v221, 4294901760
        %894 = vmatprep.subr.mxu0 %v893
        %v895 = vand.u32 %v220, 4294901760
        %896 = vmatpush1.xpose.msra.mxu0 %v895
        %v897 = vand.u32 %v253, 4294901760
        %898 = vmatprep.subr.mxu0 %v897
        %v899 = vand.u32 %v252, 4294901760
        %900 = vmatpush1.xpose.msra.mxu0 %v899
        %v901 = vand.u32 %v285, 4294901760
        %902 = vmatprep.subr.mxu0 %v901
        %v903 = vand.u32 %v284, 4294901760
        %904 = vmatpush1.xpose.msra.mxu0 %v903
        %905 = vmatprep.subr.mxu0 0.0
        %906 = vmatpush1.xpose.msra.mxu0 0.0
        %907 = vmatprep.subr.mxu0 0.0
        %908 = vmatpush1.xpose.msra.mxu0 0.0
        %909 = vmatprep.subr.mxu0 0.0
        %910 = vmatpush1.xpose.msra.mxu0 0.0
        %911 = vmatprep.subr.mxu0 0.0
        %912 = vmatpush1.xpose.msra.mxu0 0.0
        %913 = vmatprep.subr.mxu0 0.0
        %914 = vmatpush1.xpose.msra.mxu0 0.0
        %915 = vmatprep.subr.mxu0 0.0
        %916 = vmatpush1.xpose.msra.mxu0 0.0
        %917 = vmatprep.subr.mxu0 0.0
        %918 = vmatpush1.xpose.msra.mxu0 0.0
        %919 = vmatprep.subr.mxu0 0.0
        %920 = vmatpush1.xpose.msra.mxu0 0.0
        %921 = vmatprep.subr.mxu0 0.0
        %922 = vmatpush1.xpose.msra.mxu0 0.0
        %923 = vmatprep.subr.mxu0 0.0
        %924 = vmatpush1.xpose.msra.mxu0 0.0
        %925 = vmatprep.subr.mxu0 0.0
        %926 = vmatpush1.xpose.msra.mxu0 0.0
        %927 = vmatprep.subr.mxu0 0.0
        %928 = vmatpush1.xpose.msra.mxu0 0.0
        %929 = vmatprep.subr.mxu0 0.0
        %930 = vmatpush1.xpose.msra.mxu0 0.0
        %931 = vmatprep.subr.mxu0 0.0
        %932 = vmatpush1.xpose.msra.mxu0 0.0
        %933 = vmatprep.subr.mxu0 0.0
        %934 = vmatpush1.xpose.msra.mxu0 0.0
        %935 = vmatprep.subr.mxu0 0.0
        %936 = vmatpush1.xpose.msra.mxu0 0.0
        %937 = vmatprep.subr.mxu0 0.0
        %938 = vmatpush1.xpose.msra.mxu0 0.0
        %939 = vmatprep.subr.mxu0 0.0
        %940 = vmatpush1.xpose.msra.mxu0 0.0
        %941 = vmatprep.subr.mxu0 0.0
        %942 = vmatpush1.xpose.msra.mxu0 0.0
        %943 = vmatprep.subr.mxu0 0.0
        %944 = vmatpush1.xpose.msra.mxu0 0.0
        %945 = vmatprep.subr.mxu0 0.0
        %946 = vmatpush1.xpose.msra.mxu0 0.0
        %947 = vmatprep.subr.mxu0 0.0
        %948 = vmatpush1.xpose.msra.mxu0 0.0
        %949 = vmatprep.subr.mxu0 0.0
        %950 = vmatpush1.xpose.msra.mxu0 0.0
        %951 = vmatprep.subr.mxu0 0.0
        %952 = vmatpush1.xpose.msra.mxu0 0.0
        %953 = vmatprep.subr.mxu0 0.0
        %954 = vmatpush1.xpose.msra.mxu0 0.0
        %955 = vmatprep.subr.mxu0 0.0
        %956 = vmatpush1.xpose.msra.mxu0 0.0
        %957 = vmatprep.subr.mxu0 0.0
        %958 = vmatpush1.xpose.msra.mxu0 0.0
        %959 = vmatprep.subr.mxu0 0.0
        %960 = vmatpush1.xpose.msra.mxu0 0.0
        %961 = vmatprep.subr.mxu0 0.0
        %962 = vmatpush1.xpose.msra.mxu0 0.0
        %v963 = vand.u32 %v394, 4294901760
        %v964 = vsub.f32 %v394, %v963
        %v965 = vand.u32 %v964, 4294901760
        %966 = vmatprep.mubr.f32.mxu0 %v965
        %v967 = vand.u32 %v387, 4294901760
        %v968 = vsub.f32 %v387, %v967
        %v969 = vand.u32 %v968, 4294901760
        %970 = vmatmul.mubr.f32.gmra.mrb[0].mxu0 %v969
        %v971 = vpop.f32.mrb[0].mxu0
        %v972 = vadd.f32 %v890, %v971
        %v973 = vpop.f32.mrb[0].mxu0
        %974 = vdwg.mxu0
        %v975 = vand.u32 %v221, 4294901760
        %v976 = vsub.f32 %v221, %v975
        %v977 = vand.u32 %v976, 4294901760
        %978 = vmatprep.subr.mxu0 %v977
        %v979 = vand.u32 %v220, 4294901760
        %v980 = vsub.f32 %v220, %v979
        %v981 = vand.u32 %v980, 4294901760
        %982 = vmatpush1.xpose.msra.mxu0 %v981
        %v983 = vand.u32 %v253, 4294901760
        %v984 = vsub.f32 %v253, %v983
        %v985 = vand.u32 %v984, 4294901760
        %986 = vmatprep.subr.mxu0 %v985
        %v987 = vand.u32 %v252, 4294901760
        %v988 = vsub.f32 %v252, %v987
        %v989 = vand.u32 %v988, 4294901760
        %990 = vmatpush1.xpose.msra.mxu0 %v989
        %v991 = vand.u32 %v285, 4294901760
        %v992 = vsub.f32 %v285, %v991
        %v993 = vand.u32 %v992, 4294901760
        %994 = vmatprep.subr.mxu0 %v993
        %v995 = vand.u32 %v284, 4294901760
        %v996 = vsub.f32 %v284, %v995
        %v997 = vand.u32 %v996, 4294901760
        %998 = vmatpush1.xpose.msra.mxu0 %v997
        %999 = vmatprep.subr.mxu0 0.0
        %1000 = vmatpush1.xpose.msra.mxu0 0.0
        %1001 = vmatprep.subr.mxu0 0.0
        %1002 = vmatpush1.xpose.msra.mxu0 0.0
        %1003 = vmatprep.subr.mxu0 0.0
        %1004 = vmatpush1.xpose.msra.mxu0 0.0
        %1005 = vmatprep.subr.mxu0 0.0
        %1006 = vmatpush1.xpose.msra.mxu0 0.0
        %1007 = vmatprep.subr.mxu0 0.0
        %1008 = vmatpush1.xpose.msra.mxu0 0.0
        %1009 = vmatprep.subr.mxu0 0.0
        %1010 = vmatpush1.xpose.msra.mxu0 0.0
        %1011 = vmatprep.subr.mxu0 0.0
        %1012 = vmatpush1.xpose.msra.mxu0 0.0
        %1013 = vmatprep.subr.mxu0 0.0
        %1014 = vmatpush1.xpose.msra.mxu0 0.0
        %1015 = vmatprep.subr.mxu0 0.0
        %1016 = vmatpush1.xpose.msra.mxu0 0.0
        %1017 = vmatprep.subr.mxu0 0.0
        %1018 = vmatpush1.xpose.msra.mxu0 0.0
        %1019 = vmatprep.subr.mxu0 0.0
        %1020 = vmatpush1.xpose.msra.mxu0 0.0
        %1021 = vmatprep.subr.mxu0 0.0
        %1022 = vmatpush1.xpose.msra.mxu0 0.0
        %1023 = vmatprep.subr.mxu0 0.0
        %1024 = vmatpush1.xpose.msra.mxu0 0.0
        %1025 = vmatprep.subr.mxu0 0.0
        %1026 = vmatpush1.xpose.msra.mxu0 0.0
        %1027 = vmatprep.subr.mxu0 0.0
        %1028 = vmatpush1.xpose.msra.mxu0 0.0
        %1029 = vmatprep.subr.mxu0 0.0
        %1030 = vmatpush1.xpose.msra.mxu0 0.0
        %1031 = vmatprep.subr.mxu0 0.0
        %1032 = vmatpush1.xpose.msra.mxu0 0.0
        %1033 = vmatprep.subr.mxu0 0.0
        %1034 = vmatpush1.xpose.msra.mxu0 0.0
        %1035 = vmatprep.subr.mxu0 0.0
        %1036 = vmatpush1.xpose.msra.mxu0 0.0
        %1037 = vmatprep.subr.mxu0 0.0
        %1038 = vmatpush1.xpose.msra.mxu0 0.0
        %1039 = vmatprep.subr.mxu0 0.0
        %1040 = vmatpush1.xpose.msra.mxu0 0.0
        %1041 = vmatprep.subr.mxu0 0.0
        %1042 = vmatpush1.xpose.msra.mxu0 0.0
        %1043 = vmatprep.subr.mxu0 0.0
        %1044 = vmatpush1.xpose.msra.mxu0 0.0
        %1045 = vmatprep.subr.mxu0 0.0
        %1046 = vmatpush1.xpose.msra.mxu0 0.0
        %1047 = vmatprep.subr.mxu0 0.0
        %1048 = vmatpush1.xpose.msra.mxu0 0.0
        %1049 = vmatprep.subr.mxu0 0.0
        %1050 = vmatpush1.xpose.msra.mxu0 0.0
        %1051 = vmatprep.subr.mxu0 0.0
        %1052 = vmatpush1.xpose.msra.mxu0 0.0
        %1053 = vmatprep.subr.mxu0 0.0
        %1054 = vmatpush1.xpose.msra.mxu0 0.0
        %1055 = vmatprep.subr.mxu0 0.0
        %1056 = vmatpush1.xpose.msra.mxu0 0.0
        %v1057 = vand.u32 %v394, 4294901760
        %1058 = vmatprep.mubr.f32.mxu0 %v1057
        %v1059 = vand.u32 %v387, 4294901760
        %1060 = vmatmul.mubr.f32.gmra.mrb[0].mxu0 %v1059
        %v1061 = vpop.f32.mrb[0].mxu0
        %v1062 = vadd.f32 %v972, %v1061
        %v1063 = vpop.f32.mrb[0].mxu0
        %1064 = vdwg.mxu0
        %v1065 = vand.u32 %v221, 4294901760
        %1066 = vmatprep.subr.mxu0 %v1065
        %v1067 = vand.u32 %v220, 4294901760
        %1068 = vmatpush1.xpose.msra.mxu0 %v1067
        %v1069 = vand.u32 %v253, 4294901760
        %1070 = vmatprep.subr.mxu0 %v1069
        %v1071 = vand.u32 %v252, 4294901760
        %1072 = vmatpush1.xpose.msra.mxu0 %v1071
        %v1073 = vand.u32 %v285, 4294901760
        %1074 = vmatprep.subr.mxu0 %v1073
        %v1075 = vand.u32 %v284, 4294901760
        %1076 = vmatpush1.xpose.msra.mxu0 %v1075
        %1077 = vmatprep.subr.mxu0 0.0
        %1078 = vmatpush1.xpose.msra.mxu0 0.0
        %1079 = vmatprep.subr.mxu0 0.0
        %1080 = vmatpush1.xpose.msra.mxu0 0.0
        %1081 = vmatprep.subr.mxu0 0.0
        %1082 = vmatpush1.xpose.msra.mxu0 0.0
        %1083 = vmatprep.subr.mxu0 0.0
        %1084 = vmatpush1.xpose.msra.mxu0 0.0
        %1085 = vmatprep.subr.mxu0 0.0
        %1086 = vmatpush1.xpose.msra.mxu0 0.0
        %1087 = vmatprep.subr.mxu0 0.0
        %1088 = vmatpush1.xpose.msra.mxu0 0.0
        %1089 = vmatprep.subr.mxu0 0.0
        %1090 = vmatpush1.xpose.msra.mxu0 0.0
        %1091 = vmatprep.subr.mxu0 0.0
        %1092 = vmatpush1.xpose.msra.mxu0 0.0
        %1093 = vmatprep.subr.mxu0 0.0
        %1094 = vmatpush1.xpose.msra.mxu0 0.0
        %1095 = vmatprep.subr.mxu0 0.0
        %1096 = vmatpush1.xpose.msra.mxu0 0.0
        %1097 = vmatprep.subr.mxu0 0.0
        %1098 = vmatpush1.xpose.msra.mxu0 0.0
        %1099 = vmatprep.subr.mxu0 0.0
        %1100 = vmatpush1.xpose.msra.mxu0 0.0
        %1101 = vmatprep.subr.mxu0 0.0
        %1102 = vmatpush1.xpose.msra.mxu0 0.0
        %1103 = vmatprep.subr.mxu0 0.0
        %1104 = vmatpush1.xpose.msra.mxu0 0.0
        %1105 = vmatprep.subr.mxu0 0.0
        %1106 = vmatpush1.xpose.msra.mxu0 0.0
        %1107 = vmatprep.subr.mxu0 0.0
        %1108 = vmatpush1.xpose.msra.mxu0 0.0
        %1109 = vmatprep.subr.mxu0 0.0
        %1110 = vmatpush1.xpose.msra.mxu0 0.0
        %1111 = vmatprep.subr.mxu0 0.0
        %1112 = vmatpush1.xpose.msra.mxu0 0.0
        %1113 = vmatprep.subr.mxu0 0.0
        %1114 = vmatpush1.xpose.msra.mxu0 0.0
        %1115 = vmatprep.subr.mxu0 0.0
        %1116 = vmatpush1.xpose.msra.mxu0 0.0
        %1117 = vmatprep.subr.mxu0 0.0
        %1118 = vmatpush1.xpose.msra.mxu0 0.0
        %1119 = vmatprep.subr.mxu0 0.0
        %1120 = vmatpush1.xpose.msra.mxu0 0.0
        %1121 = vmatprep.subr.mxu0 0.0
        %1122 = vmatpush1.xpose.msra.mxu0 0.0
        %1123 = vmatprep.subr.mxu0 0.0
        %1124 = vmatpush1.xpose.msra.mxu0 0.0
        %1125 = vmatprep.subr.mxu0 0.0
        %1126 = vmatpush1.xpose.msra.mxu0 0.0
        %1127 = vmatprep.subr.mxu0 0.0
        %1128 = vmatpush1.xpose.msra.mxu0 0.0
        %1129 = vmatprep.subr.mxu0 0.0
        %1130 = vmatpush1.xpose.msra.mxu0 0.0
        %1131 = vmatprep.subr.mxu0 0.0
        %1132 = vmatpush1.xpose.msra.mxu0 0.0
        %1133 = vmatprep.subr.mxu0 0.0
        %1134 = vmatpush1.xpose.msra.mxu0 0.0
        %v1135 = vand.u32 %v394, 4294901760
        %1136 = vmatprep.mubr.f32.mxu0 %v1135
        %v1137 = vand.u32 %v387, 4294901760
        %1138 = vmatmul.mubr.f32.gmra.mrb[0].mxu0 %v1137
        %v1139 = vpop.f32.mrb[0].mxu0
        %v1140 = vadd.f32 %v1062, %v1139
        %v1141 = vpop.f32.mrb[0].mxu0
        %1142 = vdwg.mxu0
        %v1143 = vand.u32 %v223, 4294901760
        %1144 = vmatprep.subr.mxu0 %v1143
        %v1145 = vand.u32 %v222, 4294901760
        %1146 = vmatpush1.xpose.msra.mxu0 %v1145
        %v1147 = vand.u32 %v255, 4294901760
        %1148 = vmatprep.subr.mxu0 %v1147
        %v1149 = vand.u32 %v254, 4294901760
        %1150 = vmatpush1.xpose.msra.mxu0 %v1149
        %v1151 = vand.u32 %v287, 4294901760
        %1152 = vmatprep.subr.mxu0 %v1151
        %v1153 = vand.u32 %v286, 4294901760
        %1154 = vmatpush1.xpose.msra.mxu0 %v1153
        %1155 = vmatprep.subr.mxu0 0.0
        %1156 = vmatpush1.xpose.msra.mxu0 0.0
        %1157 = vmatprep.subr.mxu0 0.0
        %1158 = vmatpush1.xpose.msra.mxu0 0.0
        %1159 = vmatprep.subr.mxu0 0.0
        %1160 = vmatpush1.xpose.msra.mxu0 0.0
        %1161 = vmatprep.subr.mxu0 0.0
        %1162 = vmatpush1.xpose.msra.mxu0 0.0
        %1163 = vmatprep.subr.mxu0 0.0
        %1164 = vmatpush1.xpose.msra.mxu0 0.0
        %1165 = vmatprep.subr.mxu0 0.0
        %1166 = vmatpush1.xpose.msra.mxu0 0.0
        %1167 = vmatprep.subr.mxu0 0.0
        %1168 = vmatpush1.xpose.msra.mxu0 0.0
        %1169 = vmatprep.subr.mxu0 0.0
        %1170 = vmatpush1.xpose.msra.mxu0 0.0
        %1171 = vmatprep.subr.mxu0 0.0
        %1172 = vmatpush1.xpose.msra.mxu0 0.0
        %1173 = vmatprep.subr.mxu0 0.0
        %1174 = vmatpush1.xpose.msra.mxu0 0.0
        %1175 = vmatprep.subr.mxu0 0.0
        %1176 = vmatpush1.xpose.msra.mxu0 0.0
        %1177 = vmatprep.subr.mxu0 0.0
        %1178 = vmatpush1.xpose.msra.mxu0 0.0
        %1179 = vmatprep.subr.mxu0 0.0
        %1180 = vmatpush1.xpose.msra.mxu0 0.0
        %1181 = vmatprep.subr.mxu0 0.0
        %1182 = vmatpush1.xpose.msra.mxu0 0.0
        %1183 = vmatprep.subr.mxu0 0.0
        %1184 = vmatpush1.xpose.msra.mxu0 0.0
        %1185 = vmatprep.subr.mxu0 0.0
        %1186 = vmatpush1.xpose.msra.mxu0 0.0
        %1187 = vmatprep.subr.mxu0 0.0
        %1188 = vmatpush1.xpose.msra.mxu0 0.0
        %1189 = vmatprep.subr.mxu0 0.0
        %1190 = vmatpush1.xpose.msra.mxu0 0.0
        %1191 = vmatprep.subr.mxu0 0.0
        %1192 = vmatpush1.xpose.msra.mxu0 0.0
        %1193 = vmatprep.subr.mxu0 0.0
        %1194 = vmatpush1.xpose.msra.mxu0 0.0
        %1195 = vmatprep.subr.mxu0 0.0
        %1196 = vmatpush1.xpose.msra.mxu0 0.0
        %1197 = vmatprep.subr.mxu0 0.0
        %1198 = vmatpush1.xpose.msra.mxu0 0.0
        %1199 = vmatprep.subr.mxu0 0.0
        %1200 = vmatpush1.xpose.msra.mxu0 0.0
        %1201 = vmatprep.subr.mxu0 0.0
        %1202 = vmatpush1.xpose.msra.mxu0 0.0
        %1203 = vmatprep.subr.mxu0 0.0
        %1204 = vmatpush1.xpose.msra.mxu0 0.0
        %1205 = vmatprep.subr.mxu0 0.0
        %1206 = vmatpush1.xpose.msra.mxu0 0.0
        %1207 = vmatprep.subr.mxu0 0.0
        %1208 = vmatpush1.xpose.msra.mxu0 0.0
        %1209 = vmatprep.subr.mxu0 0.0
        %1210 = vmatpush1.xpose.msra.mxu0 0.0
        %1211 = vmatprep.subr.mxu0 0.0
        %1212 = vmatpush1.xpose.msra.mxu0 0.0
        %v1213 = vand.u32 %v408, 4294901760
        %v1214 = vsub.f32 %v408, %v1213
        %v1215 = vand.u32 %v1214, 4294901760
        %v1216 = vsub.f32 %v1214, %v1215
        %v1217 = vand.u32 %v1216, 4294901760
        %1218 = vmatprep.mubr.f32.mxu0 %v1217
        %v1219 = vand.u32 %v401, 4294901760
        %v1220 = vsub.f32 %v401, %v1219
        %v1221 = vand.u32 %v1220, 4294901760
        %v1222 = vsub.f32 %v1220, %v1221
        %v1223 = vand.u32 %v1222, 4294901760
        %1224 = vmatmul.mubr.f32.gmra.mrb[0].mxu0 %v1223
        %v1225 = vpop.f32.mrb[0].mxu0
        %v1226 = vadd.f32 %v1140, %v1225
        %v1227 = vpop.f32.mrb[0].mxu0
        %1228 = vdwg.mxu0
        %v1229 = vand.u32 %v223, 4294901760
        %v1230 = vsub.f32 %v223, %v1229
        %v1231 = vand.u32 %v1230, 4294901760
        %v1232 = vsub.f32 %v1230, %v1231
        %v1233 = vand.u32 %v1232, 4294901760
        %1234 = vmatprep.subr.mxu0 %v1233
        %v1235 = vand.u32 %v222, 4294901760
        %v1236 = vsub.f32 %v222, %v1235
        %v1237 = vand.u32 %v1236, 4294901760
        %v1238 = vsub.f32 %v1236, %v1237
        %v1239 = vand.u32 %v1238, 4294901760
        %1240 = vmatpush1.xpose.msra.mxu0 %v1239
        %v1241 = vand.u32 %v255, 4294901760
        %v1242 = vsub.f32 %v255, %v1241
        %v1243 = vand.u32 %v1242, 4294901760
        %v1244 = vsub.f32 %v1242, %v1243
        %v1245 = vand.u32 %v1244, 4294901760
        %1246 = vmatprep.subr.mxu0 %v1245
        %v1247 = vand.u32 %v254, 4294901760
        %v1248 = vsub.f32 %v254, %v1247
        %v1249 = vand.u32 %v1248, 4294901760
        %v1250 = vsub.f32 %v1248, %v1249
        %v1251 = vand.u32 %v1250, 4294901760
        %1252 = vmatpush1.xpose.msra.mxu0 %v1251
        %v1253 = vand.u32 %v287, 4294901760
        %v1254 = vsub.f32 %v287, %v1253
        %v1255 = vand.u32 %v1254, 4294901760
        %v1256 = vsub.f32 %v1254, %v1255
        %v1257 = vand.u32 %v1256, 4294901760
        %1258 = vmatprep.subr.mxu0 %v1257
        %v1259 = vand.u32 %v286, 4294901760
        %v1260 = vsub.f32 %v286, %v1259
        %v1261 = vand.u32 %v1260, 4294901760
        %v1262 = vsub.f32 %v1260, %v1261
        %v1263 = vand.u32 %v1262, 4294901760
        %1264 = vmatpush1.xpose.msra.mxu0 %v1263
        %1265 = vmatprep.subr.mxu0 0.0
        %1266 = vmatpush1.xpose.msra.mxu0 0.0
        %1267 = vmatprep.subr.mxu0 0.0
        %1268 = vmatpush1.xpose.msra.mxu0 0.0
        %1269 = vmatprep.subr.mxu0 0.0
        %1270 = vmatpush1.xpose.msra.mxu0 0.0
        %1271 = vmatprep.subr.mxu0 0.0
        %1272 = vmatpush1.xpose.msra.mxu0 0.0
        %1273 = vmatprep.subr.mxu0 0.0
        %1274 = vmatpush1.xpose.msra.mxu0 0.0
        %1275 = vmatprep.subr.mxu0 0.0
        %1276 = vmatpush1.xpose.msra.mxu0 0.0
        %1277 = vmatprep.subr.mxu0 0.0
        %1278 = vmatpush1.xpose.msra.mxu0 0.0
        %1279 = vmatprep.subr.mxu0 0.0
        %1280 = vmatpush1.xpose.msra.mxu0 0.0
        %1281 = vmatprep.subr.mxu0 0.0
        %1282 = vmatpush1.xpose.msra.mxu0 0.0
        %1283 = vmatprep.subr.mxu0 0.0
        %1284 = vmatpush1.xpose.msra.mxu0 0.0
        %1285 = vmatprep.subr.mxu0 0.0
        %1286 = vmatpush1.xpose.msra.mxu0 0.0
        %1287 = vmatprep.subr.mxu0 0.0
        %1288 = vmatpush1.xpose.msra.mxu0 0.0
        %1289 = vmatprep.subr.mxu0 0.0
        %1290 = vmatpush1.xpose.msra.mxu0 0.0
        %1291 = vmatprep.subr.mxu0 0.0
        %1292 = vmatpush1.xpose.msra.mxu0 0.0
        %1293 = vmatprep.subr.mxu0 0.0
        %1294 = vmatpush1.xpose.msra.mxu0 0.0
        %1295 = vmatprep.subr.mxu0 0.0
        %1296 = vmatpush1.xpose.msra.mxu0 0.0
        %1297 = vmatprep.subr.mxu0 0.0
        %1298 = vmatpush1.xpose.msra.mxu0 0.0
        %1299 = vmatprep.subr.mxu0 0.0
        %1300 = vmatpush1.xpose.msra.mxu0 0.0
        %1301 = vmatprep.subr.mxu0 0.0
        %1302 = vmatpush1.xpose.msra.mxu0 0.0
        %1303 = vmatprep.subr.mxu0 0.0
        %1304 = vmatpush1.xpose.msra.mxu0 0.0
        %1305 = vmatprep.subr.mxu0 0.0
        %1306 = vmatpush1.xpose.msra.mxu0 0.0
        %1307 = vmatprep.subr.mxu0 0.0
        %1308 = vmatpush1.xpose.msra.mxu0 0.0
        %1309 = vmatprep.subr.mxu0 0.0
        %1310 = vmatpush1.xpose.msra.mxu0 0.0
        %1311 = vmatprep.subr.mxu0 0.0
        %1312 = vmatpush1.xpose.msra.mxu0 0.0
        %1313 = vmatprep.subr.mxu0 0.0
        %1314 = vmatpush1.xpose.msra.mxu0 0.0
        %1315 = vmatprep.subr.mxu0 0.0
        %1316 = vmatpush1.xpose.msra.mxu0 0.0
        %1317 = vmatprep.subr.mxu0 0.0
        %1318 = vmatpush1.xpose.msra.mxu0 0.0
        %1319 = vmatprep.subr.mxu0 0.0
        %1320 = vmatpush1.xpose.msra.mxu0 0.0
        %1321 = vmatprep.subr.mxu0 0.0
        %1322 = vmatpush1.xpose.msra.mxu0 0.0
        %v1323 = vand.u32 %v408, 4294901760
        %1324 = vmatprep.mubr.f32.mxu0 %v1323
        %v1325 = vand.u32 %v401, 4294901760
        %1326 = vmatmul.mubr.f32.gmra.mrb[0].mxu0 %v1325
        %v1327 = vpop.f32.mrb[0].mxu0
        %v1328 = vadd.f32 %v1226, %v1327
        %v1329 = vpop.f32.mrb[0].mxu0
        %1330 = vdwg.mxu0
        %v1331 = vand.u32 %v223, 4294901760
        %v1332 = vsub.f32 %v223, %v1331
        %1333 = vmatprep.subr.mxu0 %v1332
        %v1334 = vand.u32 %v222, 4294901760
        %v1335 = vsub.f32 %v222, %v1334
        %1336 = vmatpush1.xpose.msra.mxu0 %v1335
        %v1337 = vand.u32 %v255, 4294901760
        %v1338 = vsub.f32 %v255, %v1337
        %1339 = vmatprep.subr.mxu0 %v1338
        %v1340 = vand.u32 %v254, 4294901760
        %v1341 = vsub.f32 %v254, %v1340
        %1342 = vmatpush1.xpose.msra.mxu0 %v1341
        %v1343 = vand.u32 %v287, 4294901760
        %v1344 = vsub.f32 %v287, %v1343
        %1345 = vmatprep.subr.mxu0 %v1344
        %v1346 = vand.u32 %v286, 4294901760
        %v1347 = vsub.f32 %v286, %v1346
        %1348 = vmatpush1.xpose.msra.mxu0 %v1347
        %1349 = vmatprep.subr.mxu0 0.0
        %1350 = vmatpush1.xpose.msra.mxu0 0.0
        %1351 = vmatprep.subr.mxu0 0.0
        %1352 = vmatpush1.xpose.msra.mxu0 0.0
        %1353 = vmatprep.subr.mxu0 0.0
        %1354 = vmatpush1.xpose.msra.mxu0 0.0
        %1355 = vmatprep.subr.mxu0 0.0
        %1356 = vmatpush1.xpose.msra.mxu0 0.0
        %1357 = vmatprep.subr.mxu0 0.0
        %1358 = vmatpush1.xpose.msra.mxu0 0.0
        %1359 = vmatprep.subr.mxu0 0.0
        %1360 = vmatpush1.xpose.msra.mxu0 0.0
        %1361 = vmatprep.subr.mxu0 0.0
        %1362 = vmatpush1.xpose.msra.mxu0 0.0
        %1363 = vmatprep.subr.mxu0 0.0
        %1364 = vmatpush1.xpose.msra.mxu0 0.0
        %1365 = vmatprep.subr.mxu0 0.0
        %1366 = vmatpush1.xpose.msra.mxu0 0.0
        %1367 = vmatprep.subr.mxu0 0.0
        %1368 = vmatpush1.xpose.msra.mxu0 0.0
        %1369 = vmatprep.subr.mxu0 0.0
        %1370 = vmatpush1.xpose.msra.mxu0 0.0
        %1371 = vmatprep.subr.mxu0 0.0
        %1372 = vmatpush1.xpose.msra.mxu0 0.0
        %1373 = vmatprep.subr.mxu0 0.0
        %1374 = vmatpush1.xpose.msra.mxu0 0.0
        %1375 = vmatprep.subr.mxu0 0.0
        %1376 = vmatpush1.xpose.msra.mxu0 0.0
        %1377 = vmatprep.subr.mxu0 0.0
        %1378 = vmatpush1.xpose.msra.mxu0 0.0
        %1379 = vmatprep.subr.mxu0 0.0
        %1380 = vmatpush1.xpose.msra.mxu0 0.0
        %1381 = vmatprep.subr.mxu0 0.0
        %1382 = vmatpush1.xpose.msra.mxu0 0.0
        %1383 = vmatprep.subr.mxu0 0.0
        %1384 = vmatpush1.xpose.msra.mxu0 0.0
        %1385 = vmatprep.subr.mxu0 0.0
        %1386 = vmatpush1.xpose.msra.mxu0 0.0
        %1387 = vmatprep.subr.mxu0 0.0
        %1388 = vmatpush1.xpose.msra.mxu0 0.0
        %1389 = vmatprep.subr.mxu0 0.0
        %1390 = vmatpush1.xpose.msra.mxu0 0.0
        %1391 = vmatprep.subr.mxu0 0.0
        %1392 = vmatpush1.xpose.msra.mxu0 0.0
        %1393 = vmatprep.subr.mxu0 0.0
        %1394 = vmatpush1.xpose.msra.mxu0 0.0
        %1395 = vmatprep.subr.mxu0 0.0
        %1396 = vmatpush1.xpose.msra.mxu0 0.0
        %1397 = vmatprep.subr.mxu0 0.0
        %1398 = vmatpush1.xpose.msra.mxu0 0.0
        %1399 = vmatprep.subr.mxu0 0.0
        %1400 = vmatpush1.xpose.msra.mxu0 0.0
        %1401 = vmatprep.subr.mxu0 0.0
        %1402 = vmatpush1.xpose.msra.mxu0 0.0
        %1403 = vmatprep.subr.mxu0 0.0
        %1404 = vmatpush1.xpose.msra.mxu0 0.0
        %1405 = vmatprep.subr.mxu0 0.0
        %1406 = vmatpush1.xpose.msra.mxu0 0.0
        %v1407 = vand.u32 %v408, 4294901760
        %v1408 = vsub.f32 %v408, %v1407
        %1409 = vmatprep.mubr.f32.mxu0 %v1408
        %v1410 = vand.u32 %v401, 4294901760
        %v1411 = vsub.f32 %v401, %v1410
        %1412 = vmatmul.mubr.f32.gmra.mrb[0].mxu0 %v1411
        %v1413 = vpop.f32.mrb[0].mxu0
        %v1414 = vadd.f32 %v1328, %v1413
        %v1415 = vpop.f32.mrb[0].mxu0
        %1416 = vdwg.mxu0
        %v1417 = vand.u32 %v223, 4294901760
        %1418 = vmatprep.subr.mxu0 %v1417
        %v1419 = vand.u32 %v222, 4294901760
        %1420 = vmatpush1.xpose.msra.mxu0 %v1419
        %v1421 = vand.u32 %v255, 4294901760
        %1422 = vmatprep.subr.mxu0 %v1421
        %v1423 = vand.u32 %v254, 4294901760
        %1424 = vmatpush1.xpose.msra.mxu0 %v1423
        %v1425 = vand.u32 %v287, 4294901760
        %1426 = vmatprep.subr.mxu0 %v1425
        %v1427 = vand.u32 %v286, 4294901760
        %1428 = vmatpush1.xpose.msra.mxu0 %v1427
        %1429 = vmatprep.subr.mxu0 0.0
        %1430 = vmatpush1.xpose.msra.mxu0 0.0
        %1431 = vmatprep.subr.mxu0 0.0
        %1432 = vmatpush1.xpose.msra.mxu0 0.0
        %1433 = vmatprep.subr.mxu0 0.0
        %1434 = vmatpush1.xpose.msra.mxu0 0.0
        %1435 = vmatprep.subr.mxu0 0.0
        %1436 = vmatpush1.xpose.msra.mxu0 0.0
        %1437 = vmatprep.subr.mxu0 0.0
        %1438 = vmatpush1.xpose.msra.mxu0 0.0
        %1439 = vmatprep.subr.mxu0 0.0
        %1440 = vmatpush1.xpose.msra.mxu0 0.0
        %1441 = vmatprep.subr.mxu0 0.0
        %1442 = vmatpush1.xpose.msra.mxu0 0.0
        %1443 = vmatprep.subr.mxu0 0.0
        %1444 = vmatpush1.xpose.msra.mxu0 0.0
        %1445 = vmatprep.subr.mxu0 0.0
        %1446 = vmatpush1.xpose.msra.mxu0 0.0
        %1447 = vmatprep.subr.mxu0 0.0
        %1448 = vmatpush1.xpose.msra.mxu0 0.0
        %1449 = vmatprep.subr.mxu0 0.0
        %1450 = vmatpush1.xpose.msra.mxu0 0.0
        %1451 = vmatprep.subr.mxu0 0.0
        %1452 = vmatpush1.xpose.msra.mxu0 0.0
        %1453 = vmatprep.subr.mxu0 0.0
        %1454 = vmatpush1.xpose.msra.mxu0 0.0
        %1455 = vmatprep.subr.mxu0 0.0
        %1456 = vmatpush1.xpose.msra.mxu0 0.0
        %1457 = vmatprep.subr.mxu0 0.0
        %1458 = vmatpush1.xpose.msra.mxu0 0.0
        %1459 = vmatprep.subr.mxu0 0.0
        %1460 = vmatpush1.xpose.msra.mxu0 0.0
        %1461 = vmatprep.subr.mxu0 0.0
        %1462 = vmatpush1.xpose.msra.mxu0 0.0
        %1463 = vmatprep.subr.mxu0 0.0
        %1464 = vmatpush1.xpose.msra.mxu0 0.0
        %1465 = vmatprep.subr.mxu0 0.0
        %1466 = vmatpush1.xpose.msra.mxu0 0.0
        %1467 = vmatprep.subr.mxu0 0.0
        %1468 = vmatpush1.xpose.msra.mxu0 0.0
        %1469 = vmatprep.subr.mxu0 0.0
        %1470 = vmatpush1.xpose.msra.mxu0 0.0
        %1471 = vmatprep.subr.mxu0 0.0
        %1472 = vmatpush1.xpose.msra.mxu0 0.0
        %1473 = vmatprep.subr.mxu0 0.0
        %1474 = vmatpush1.xpose.msra.mxu0 0.0
        %1475 = vmatprep.subr.mxu0 0.0
        %1476 = vmatpush1.xpose.msra.mxu0 0.0
        %1477 = vmatprep.subr.mxu0 0.0
        %1478 = vmatpush1.xpose.msra.mxu0 0.0
        %1479 = vmatprep.subr.mxu0 0.0
        %1480 = vmatpush1.xpose.msra.mxu0 0.0
        %1481 = vmatprep.subr.mxu0 0.0
        %1482 = vmatpush1.xpose.msra.mxu0 0.0
        %1483 = vmatprep.subr.mxu0 0.0
        %1484 = vmatpush1.xpose.msra.mxu0 0.0
        %1485 = vmatprep.subr.mxu0 0.0
        %1486 = vmatpush1.xpose.msra.mxu0 0.0
        %v1487 = vand.u32 %v408, 4294901760
        %v1488 = vsub.f32 %v408, %v1487
        %v1489 = vand.u32 %v1488, 4294901760
        %1490 = vmatprep.mubr.f32.mxu0 %v1489
        %v1491 = vand.u32 %v401, 4294901760
        %v1492 = vsub.f32 %v401, %v1491
        %v1493 = vand.u32 %v1492, 4294901760
        %1494 = vmatmul.mubr.f32.gmra.mrb[0].mxu0 %v1493
        %v1495 = vpop.f32.mrb[0].mxu0
        %v1496 = vadd.f32 %v1414, %v1495
        %v1497 = vpop.f32.mrb[0].mxu0
        %1498 = vdwg.mxu0
        %v1499 = vand.u32 %v223, 4294901760
        %v1500 = vsub.f32 %v223, %v1499
        %v1501 = vand.u32 %v1500, 4294901760
        %1502 = vmatprep.subr.mxu0 %v1501
        %v1503 = vand.u32 %v222, 4294901760
        %v1504 = vsub.f32 %v222, %v1503
        %v1505 = vand.u32 %v1504, 4294901760
        %1506 = vmatpush1.xpose.msra.mxu0 %v1505
        %v1507 = vand.u32 %v255, 4294901760
        %v1508 = vsub.f32 %v255, %v1507
        %v1509 = vand.u32 %v1508, 4294901760
        %1510 = vmatprep.subr.mxu0 %v1509
        %v1511 = vand.u32 %v254, 4294901760
        %v1512 = vsub.f32 %v254, %v1511
        %v1513 = vand.u32 %v1512, 4294901760
        %1514 = vmatpush1.xpose.msra.mxu0 %v1513
        %v1515 = vand.u32 %v287, 4294901760
        %v1516 = vsub.f32 %v287, %v1515
        %v1517 = vand.u32 %v1516, 4294901760
        %1518 = vmatprep.subr.mxu0 %v1517
        %v1519 = vand.u32 %v286, 4294901760
        %v1520 = vsub.f32 %v286, %v1519
        %v1521 = vand.u32 %v1520, 4294901760
        %1522 = vmatpush1.xpose.msra.mxu0 %v1521
        %1523 = vmatprep.subr.mxu0 0.0
        %1524 = vmatpush1.xpose.msra.mxu0 0.0
        %1525 = vmatprep.subr.mxu0 0.0
        %1526 = vmatpush1.xpose.msra.mxu0 0.0
        %1527 = vmatprep.subr.mxu0 0.0
        %1528 = vmatpush1.xpose.msra.mxu0 0.0
        %1529 = vmatprep.subr.mxu0 0.0
        %1530 = vmatpush1.xpose.msra.mxu0 0.0
        %1531 = vmatprep.subr.mxu0 0.0
        %1532 = vmatpush1.xpose.msra.mxu0 0.0
        %1533 = vmatprep.subr.mxu0 0.0
        %1534 = vmatpush1.xpose.msra.mxu0 0.0
        %1535 = vmatprep.subr.mxu0 0.0
        %1536 = vmatpush1.xpose.msra.mxu0 0.0
        %1537 = vmatprep.subr.mxu0 0.0
        %1538 = vmatpush1.xpose.msra.mxu0 0.0
        %1539 = vmatprep.subr.mxu0 0.0
        %1540 = vmatpush1.xpose.msra.mxu0 0.0
        %1541 = vmatprep.subr.mxu0 0.0
        %1542 = vmatpush1.xpose.msra.mxu0 0.0
        %1543 = vmatprep.subr.mxu0 0.0
        %1544 = vmatpush1.xpose.msra.mxu0 0.0
        %1545 = vmatprep.subr.mxu0 0.0
        %1546 = vmatpush1.xpose.msra.mxu0 0.0
        %1547 = vmatprep.subr.mxu0 0.0
        %1548 = vmatpush1.xpose.msra.mxu0 0.0
        %1549 = vmatprep.subr.mxu0 0.0
        %1550 = vmatpush1.xpose.msra.mxu0 0.0
        %1551 = vmatprep.subr.mxu0 0.0
        %1552 = vmatpush1.xpose.msra.mxu0 0.0
        %1553 = vmatprep.subr.mxu0 0.0
        %1554 = vmatpush1.xpose.msra.mxu0 0.0
        %1555 = vmatprep.subr.mxu0 0.0
        %1556 = vmatpush1.xpose.msra.mxu0 0.0
        %1557 = vmatprep.subr.mxu0 0.0
        %1558 = vmatpush1.xpose.msra.mxu0 0.0
        %1559 = vmatprep.subr.mxu0 0.0
        %1560 = vmatpush1.xpose.msra.mxu0 0.0
        %1561 = vmatprep.subr.mxu0 0.0
        %1562 = vmatpush1.xpose.msra.mxu0 0.0
        %1563 = vmatprep.subr.mxu0 0.0
        %1564 = vmatpush1.xpose.msra.mxu0 0.0
        %1565 = vmatprep.subr.mxu0 0.0
        %1566 = vmatpush1.xpose.msra.mxu0 0.0
        %1567 = vmatprep.subr.mxu0 0.0
        %1568 = vmatpush1.xpose.msra.mxu0 0.0
        %1569 = vmatprep.subr.mxu0 0.0
        %1570 = vmatpush1.xpose.msra.mxu0 0.0
        %1571 = vmatprep.subr.mxu0 0.0
        %1572 = vmatpush1.xpose.msra.mxu0 0.0
        %1573 = vmatprep.subr.mxu0 0.0
        %1574 = vmatpush1.xpose.msra.mxu0 0.0
        %1575 = vmatprep.subr.mxu0 0.0
        %1576 = vmatpush1.xpose.msra.mxu0 0.0
        %1577 = vmatprep.subr.mxu0 0.0
        %1578 = vmatpush1.xpose.msra.mxu0 0.0
        %1579 = vmatprep.subr.mxu0 0.0
        %1580 = vmatpush1.xpose.msra.mxu0 0.0
        %v1581 = vand.u32 %v408, 4294901760
        %1582 = vmatprep.mubr.f32.mxu0 %v1581
        %v1583 = vand.u32 %v401, 4294901760
        %1584 = vmatmul.mubr.f32.gmra.mrb[0].mxu0 %v1583
        %v1585 = vpop.f32.mrb[0].mxu0
        %v1586 = vadd.f32 %v1496, %v1585
        %v1587 = vpop.f32.mrb[0].mxu0
        %1588 = vdwg.mxu0
        %v1589 = vand.u32 %v223, 4294901760
        %1590 = vmatprep.subr.mxu0 %v1589
        %v1591 = vand.u32 %v222, 4294901760
        %1592 = vmatpush1.xpose.msra.mxu0 %v1591
        %v1593 = vand.u32 %v255, 4294901760
        %1594 = vmatprep.subr.mxu0 %v1593
        %v1595 = vand.u32 %v254, 4294901760
        %1596 = vmatpush1.xpose.msra.mxu0 %v1595
        %v1597 = vand.u32 %v287, 4294901760
        %1598 = vmatprep.subr.mxu0 %v1597
        %v1599 = vand.u32 %v286, 4294901760
        %1600 = vmatpush1.xpose.msra.mxu0 %v1599
        %1601 = vmatprep.subr.mxu0 0.0
        %1602 = vmatpush1.xpose.msra.mxu0 0.0
        %1603 = vmatprep.subr.mxu0 0.0
        %1604 = vmatpush1.xpose.msra.mxu0 0.0
        %1605 = vmatprep.subr.mxu0 0.0
        %1606 = vmatpush1.xpose.msra.mxu0 0.0
        %1607 = vmatprep.subr.mxu0 0.0
        %1608 = vmatpush1.xpose.msra.mxu0 0.0
        %1609 = vmatprep.subr.mxu0 0.0
        %1610 = vmatpush1.xpose.msra.mxu0 0.0
        %1611 = vmatprep.subr.mxu0 0.0
        %1612 = vmatpush1.xpose.msra.mxu0 0.0
        %1613 = vmatprep.subr.mxu0 0.0
        %1614 = vmatpush1.xpose.msra.mxu0 0.0
        %1615 = vmatprep.subr.mxu0 0.0
        %1616 = vmatpush1.xpose.msra.mxu0 0.0
        %1617 = vmatprep.subr.mxu0 0.0
        %1618 = vmatpush1.xpose.msra.mxu0 0.0
        %1619 = vmatprep.subr.mxu0 0.0
        %1620 = vmatpush1.xpose.msra.mxu0 0.0
        %1621 = vmatprep.subr.mxu0 0.0
        %1622 = vmatpush1.xpose.msra.mxu0 0.0
        %1623 = vmatprep.subr.mxu0 0.0
        %1624 = vmatpush1.xpose.msra.mxu0 0.0
        %1625 = vmatprep.subr.mxu0 0.0
        %1626 = vmatpush1.xpose.msra.mxu0 0.0
        %1627 = vmatprep.subr.mxu0 0.0
        %1628 = vmatpush1.xpose.msra.mxu0 0.0
        %1629 = vmatprep.subr.mxu0 0.0
        %1630 = vmatpush1.xpose.msra.mxu0 0.0
        %1631 = vmatprep.subr.mxu0 0.0
        %1632 = vmatpush1.xpose.msra.mxu0 0.0
        %1633 = vmatprep.subr.mxu0 0.0
        %1634 = vmatpush1.xpose.msra.mxu0 0.0
        %1635 = vmatprep.subr.mxu0 0.0
        %1636 = vmatpush1.xpose.msra.mxu0 0.0
        %1637 = vmatprep.subr.mxu0 0.0
        %1638 = vmatpush1.xpose.msra.mxu0 0.0
        %1639 = vmatprep.subr.mxu0 0.0
        %1640 = vmatpush1.xpose.msra.mxu0 0.0
        %1641 = vmatprep.subr.mxu0 0.0
        %1642 = vmatpush1.xpose.msra.mxu0 0.0
        %1643 = vmatprep.subr.mxu0 0.0
        %1644 = vmatpush1.xpose.msra.mxu0 0.0
        %1645 = vmatprep.subr.mxu0 0.0
        %1646 = vmatpush1.xpose.msra.mxu0 0.0
        %1647 = vmatprep.subr.mxu0 0.0
        %1648 = vmatpush1.xpose.msra.mxu0 0.0
        %1649 = vmatprep.subr.mxu0 0.0
        %1650 = vmatpush1.xpose.msra.mxu0 0.0
        %1651 = vmatprep.subr.mxu0 0.0
        %1652 = vmatpush1.xpose.msra.mxu0 0.0
        %1653 = vmatprep.subr.mxu0 0.0
        %1654 = vmatpush1.xpose.msra.mxu0 0.0
        %1655 = vmatprep.subr.mxu0 0.0
        %1656 = vmatpush1.xpose.msra.mxu0 0.0
        %1657 = vmatprep.subr.mxu0 0.0
        %1658 = vmatpush1.xpose.msra.mxu0 0.0
        %v1659 = vand.u32 %v408, 4294901760
        %1660 = vmatprep.mubr.f32.mxu0 %v1659
        %v1661 = vand.u32 %v401, 4294901760
        %1662 = vmatmul.mubr.f32.gmra.mrb[0].mxu0 %v1661
        %v1663 = vpop.f32.mrb[0].mxu0
        %v1664 = vadd.f32 %v1586, %v1663
        %v1665 = vpop.f32.mrb[0].mxu0
        %1666 = vdwg.mxu0
        %v1667 = vand.u32 %v225, 4294901760
        %1668 = vmatprep.subr.mxu0 %v1667
        %v1669 = vand.u32 %v224, 4294901760
        %1670 = vmatpush1.xpose.msra.mxu0 %v1669
        %v1671 = vand.u32 %v257, 4294901760
        %1672 = vmatprep.subr.mxu0 %v1671
        %v1673 = vand.u32 %v256, 4294901760
        %1674 = vmatpush1.xpose.msra.mxu0 %v1673
        %v1675 = vand.u32 %v289, 4294901760
        %1676 = vmatprep.subr.mxu0 %v1675
        %v1677 = vand.u32 %v288, 4294901760
        %1678 = vmatpush1.xpose.msra.mxu0 %v1677
        %1679 = vmatprep.subr.mxu0 0.0
        %1680 = vmatpush1.xpose.msra.mxu0 0.0
        %1681 = vmatprep.subr.mxu0 0.0
        %1682 = vmatpush1.xpose.msra.mxu0 0.0
        %1683 = vmatprep.subr.mxu0 0.0
        %1684 = vmatpush1.xpose.msra.mxu0 0.0
        %1685 = vmatprep.subr.mxu0 0.0
        %1686 = vmatpush1.xpose.msra.mxu0 0.0
        %1687 = vmatprep.subr.mxu0 0.0
        %1688 = vmatpush1.xpose.msra.mxu0 0.0
        %1689 = vmatprep.subr.mxu0 0.0
        %1690 = vmatpush1.xpose.msra.mxu0 0.0
        %1691 = vmatprep.subr.mxu0 0.0
        %1692 = vmatpush1.xpose.msra.mxu0 0.0
        %1693 = vmatprep.subr.mxu0 0.0
        %1694 = vmatpush1.xpose.msra.mxu0 0.0
        %1695 = vmatprep.subr.mxu0 0.0
        %1696 = vmatpush1.xpose.msra.mxu0 0.0
        %1697 = vmatprep.subr.mxu0 0.0
        %1698 = vmatpush1.xpose.msra.mxu0 0.0
        %1699 = vmatprep.subr.mxu0 0.0
        %1700 = vmatpush1.xpose.msra.mxu0 0.0
        %1701 = vmatprep.subr.mxu0 0.0
        %1702 = vmatpush1.xpose.msra.mxu0 0.0
        %1703 = vmatprep.subr.mxu0 0.0
        %1704 = vmatpush1.xpose.msra.mxu0 0.0
        %1705 = vmatprep.subr.mxu0 0.0
        %1706 = vmatpush1.xpose.msra.mxu0 0.0
        %1707 = vmatprep.subr.mxu0 0.0
        %1708 = vmatpush1.xpose.msra.mxu0 0.0
        %1709 = vmatprep.subr.mxu0 0.0
        %1710 = vmatpush1.xpose.msra.mxu0 0.0
        %1711 = vmatprep.subr.mxu0 0.0
        %1712 = vmatpush1.xpose.msra.mxu0 0.0
        %1713 = vmatprep.subr.mxu0 0.0
        %1714 = vmatpush1.xpose.msra.mxu0 0.0
        %1715 = vmatprep.subr.mxu0 0.0
        %1716 = vmatpush1.xpose.msra.mxu0 0.0
        %1717 = vmatprep.subr.mxu0 0.0
        %1718 = vmatpush1.xpose.msra.mxu0 0.0
        %1719 = vmatprep.subr.mxu0 0.0
        %1720 = vmatpush1.xpose.msra.mxu0 0.0
        %1721 = vmatprep.subr.mxu0 0.0
        %1722 = vmatpush1.xpose.msra.mxu0 0.0
        %1723 = vmatprep.subr.mxu0 0.0
        %1724 = vmatpush1.xpose.msra.mxu0 0.0
        %1725 = vmatprep.subr.mxu0 0.0
        %1726 = vmatpush1.xpose.msra.mxu0 0.0
        %1727 = vmatprep.subr.mxu0 0.0
        %1728 = vmatpush1.xpose.msra.mxu0 0.0
        %1729 = vmatprep.subr.mxu0 0.0
        %1730 = vmatpush1.xpose.msra.mxu0 0.0
        %1731 = vmatprep.subr.mxu0 0.0
        %1732 = vmatpush1.xpose.msra.mxu0 0.0
        %1733 = vmatprep.subr.mxu0 0.0
        %1734 = vmatpush1.xpose.msra.mxu0 0.0
        %1735 = vmatprep.subr.mxu0 0.0
        %1736 = vmatpush1.xpose.msra.mxu0 0.0
        %v1737 = vand.u32 %v422, 4294901760
        %v1738 = vsub.f32 %v422, %v1737
        %v1739 = vand.u32 %v1738, 4294901760
        %v1740 = vsub.f32 %v1738, %v1739
        %v1741 = vand.u32 %v1740, 4294901760
        %1742 = vmatprep.mubr.f32.mxu0 %v1741
        %v1743 = vand.u32 %v415, 4294901760
        %v1744 = vsub.f32 %v415, %v1743
        %v1745 = vand.u32 %v1744, 4294901760
        %v1746 = vsub.f32 %v1744, %v1745
        %v1747 = vand.u32 %v1746, 4294901760
        %1748 = vmatmul.mubr.f32.gmra.mrb[0].mxu0 %v1747
        %v1749 = vpop.f32.mrb[0].mxu0
        %v1750 = vadd.f32 %v1664, %v1749
        %v1751 = vpop.f32.mrb[0].mxu0
        %1752 = vdwg.mxu0
        %v1753 = vand.u32 %v225, 4294901760
        %v1754 = vsub.f32 %v225, %v1753
        %v1755 = vand.u32 %v1754, 4294901760
        %v1756 = vsub.f32 %v1754, %v1755
        %v1757 = vand.u32 %v1756, 4294901760
        %1758 = vmatprep.subr.mxu0 %v1757
        %v1759 = vand.u32 %v224, 4294901760
        %v1760 = vsub.f32 %v224, %v1759
        %v1761 = vand.u32 %v1760, 4294901760
        %v1762 = vsub.f32 %v1760, %v1761
        %v1763 = vand.u32 %v1762, 4294901760
        %1764 = vmatpush1.xpose.msra.mxu0 %v1763
        %v1765 = vand.u32 %v257, 4294901760
        %v1766 = vsub.f32 %v257, %v1765
        %v1767 = vand.u32 %v1766, 4294901760
        %v1768 = vsub.f32 %v1766, %v1767
        %v1769 = vand.u32 %v1768, 4294901760
        %1770 = vmatprep.subr.mxu0 %v1769
        %v1771 = vand.u32 %v256, 4294901760
        %v1772 = vsub.f32 %v256, %v1771
        %v1773 = vand.u32 %v1772, 4294901760
        %v1774 = vsub.f32 %v1772, %v1773
        %v1775 = vand.u32 %v1774, 4294901760
        %1776 = vmatpush1.xpose.msra.mxu0 %v1775
        %v1777 = vand.u32 %v289, 4294901760
        %v1778 = vsub.f32 %v289, %v1777
        %v1779 = vand.u32 %v1778, 4294901760
        %v1780 = vsub.f32 %v1778, %v1779
        %v1781 = vand.u32 %v1780, 4294901760
        %1782 = vmatprep.subr.mxu0 %v1781
        %v1783 = vand.u32 %v288, 4294901760
        %v1784 = vsub.f32 %v288, %v1783
        %v1785 = vand.u32 %v1784, 4294901760
        %v1786 = vsub.f32 %v1784, %v1785
        %v1787 = vand.u32 %v1786, 4294901760
        %1788 = vmatpush1.xpose.msra.mxu0 %v1787
        %1789 = vmatprep.subr.mxu0 0.0
        %1790 = vmatpush1.xpose.msra.mxu0 0.0
        %1791 = vmatprep.subr.mxu0 0.0
        %1792 = vmatpush1.xpose.msra.mxu0 0.0
        %1793 = vmatprep.subr.mxu0 0.0
        %1794 = vmatpush1.xpose.msra.mxu0 0.0
        %1795 = vmatprep.subr.mxu0 0.0
        %1796 = vmatpush1.xpose.msra.mxu0 0.0
        %1797 = vmatprep.subr.mxu0 0.0
        %1798 = vmatpush1.xpose.msra.mxu0 0.0
        %1799 = vmatprep.subr.mxu0 0.0
        %1800 = vmatpush1.xpose.msra.mxu0 0.0
        %1801 = vmatprep.subr.mxu0 0.0
        %1802 = vmatpush1.xpose.msra.mxu0 0.0
        %1803 = vmatprep.subr.mxu0 0.0
        %1804 = vmatpush1.xpose.msra.mxu0 0.0
        %1805 = vmatprep.subr.mxu0 0.0
        %1806 = vmatpush1.xpose.msra.mxu0 0.0
        %1807 = vmatprep.subr.mxu0 0.0
        %1808 = vmatpush1.xpose.msra.mxu0 0.0
        %1809 = vmatprep.subr.mxu0 0.0
        %1810 = vmatpush1.xpose.msra.mxu0 0.0
        %1811 = vmatprep.subr.mxu0 0.0
        %1812 = vmatpush1.xpose.msra.mxu0 0.0
        %1813 = vmatprep.subr.mxu0 0.0
        %1814 = vmatpush1.xpose.msra.mxu0 0.0
        %1815 = vmatprep.subr.mxu0 0.0
        %1816 = vmatpush1.xpose.msra.mxu0 0.0
        %1817 = vmatprep.subr.mxu0 0.0
        %1818 = vmatpush1.xpose.msra.mxu0 0.0
        %1819 = vmatprep.subr.mxu0 0.0
        %1820 = vmatpush1.xpose.msra.mxu0 0.0
        %1821 = vmatprep.subr.mxu0 0.0
        %1822 = vmatpush1.xpose.msra.mxu0 0.0
        %1823 = vmatprep.subr.mxu0 0.0
        %1824 = vmatpush1.xpose.msra.mxu0 0.0
        %1825 = vmatprep.subr.mxu0 0.0
        %1826 = vmatpush1.xpose.msra.mxu0 0.0
        %1827 = vmatprep.subr.mxu0 0.0
        %1828 = vmatpush1.xpose.msra.mxu0 0.0
        %1829 = vmatprep.subr.mxu0 0.0
        %1830 = vmatpush1.xpose.msra.mxu0 0.0
        %1831 = vmatprep.subr.mxu0 0.0
        %1832 = vmatpush1.xpose.msra.mxu0 0.0
        %1833 = vmatprep.subr.mxu0 0.0
        %1834 = vmatpush1.xpose.msra.mxu0 0.0
        %1835 = vmatprep.subr.mxu0 0.0
        %1836 = vmatpush1.xpose.msra.mxu0 0.0
        %1837 = vmatprep.subr.mxu0 0.0
        %1838 = vmatpush1.xpose.msra.mxu0 0.0
        %1839 = vmatprep.subr.mxu0 0.0
        %1840 = vmatpush1.xpose.msra.mxu0 0.0
        %1841 = vmatprep.subr.mxu0 0.0
        %1842 = vmatpush1.xpose.msra.mxu0 0.0
        %1843 = vmatprep.subr.mxu0 0.0
        %1844 = vmatpush1.xpose.msra.mxu0 0.0
        %1845 = vmatprep.subr.mxu0 0.0
        %1846 = vmatpush1.xpose.msra.mxu0 0.0
        %v1847 = vand.u32 %v422, 4294901760
        %1848 = vmatprep.mubr.f32.mxu0 %v1847
        %v1849 = vand.u32 %v415, 4294901760
        %1850 = vmatmul.mubr.f32.gmra.mrb[0].mxu0 %v1849
        %v1851 = vpop.f32.mrb[0].mxu0
        %v1852 = vadd.f32 %v1750, %v1851
        %v1853 = vpop.f32.mrb[0].mxu0
        %1854 = vdwg.mxu0
        %v1855 = vand.u32 %v225, 4294901760
        %v1856 = vsub.f32 %v225, %v1855
        %1857 = vmatprep.subr.mxu0 %v1856
        %v1858 = vand.u32 %v224, 4294901760
        %v1859 = vsub.f32 %v224, %v1858
        %1860 = vmatpush1.xpose.msra.mxu0 %v1859
        %v1861 = vand.u32 %v257, 4294901760
        %v1862 = vsub.f32 %v257, %v1861
        %1863 = vmatprep.subr.mxu0 %v1862
        %v1864 = vand.u32 %v256, 4294901760
        %v1865 = vsub.f32 %v256, %v1864
        %1866 = vmatpush1.xpose.msra.mxu0 %v1865
        %v1867 = vand.u32 %v289, 4294901760
        %v1868 = vsub.f32 %v289, %v1867
        %1869 = vmatprep.subr.mxu0 %v1868
        %v1870 = vand.u32 %v288, 4294901760
        %v1871 = vsub.f32 %v288, %v1870
        %1872 = vmatpush1.xpose.msra.mxu0 %v1871
        %1873 = vmatprep.subr.mxu0 0.0
        %1874 = vmatpush1.xpose.msra.mxu0 0.0
        %1875 = vmatprep.subr.mxu0 0.0
        %1876 = vmatpush1.xpose.msra.mxu0 0.0
        %1877 = vmatprep.subr.mxu0 0.0
        %1878 = vmatpush1.xpose.msra.mxu0 0.0
        %1879 = vmatprep.subr.mxu0 0.0
        %1880 = vmatpush1.xpose.msra.mxu0 0.0
        %1881 = vmatprep.subr.mxu0 0.0
        %1882 = vmatpush1.xpose.msra.mxu0 0.0
        %1883 = vmatprep.subr.mxu0 0.0
        %1884 = vmatpush1.xpose.msra.mxu0 0.0
        %1885 = vmatprep.subr.mxu0 0.0
        %1886 = vmatpush1.xpose.msra.mxu0 0.0
        %1887 = vmatprep.subr.mxu0 0.0
        %1888 = vmatpush1.xpose.msra.mxu0 0.0
        %1889 = vmatprep.subr.mxu0 0.0
        %1890 = vmatpush1.xpose.msra.mxu0 0.0
        %1891 = vmatprep.subr.mxu0 0.0
        %1892 = vmatpush1.xpose.msra.mxu0 0.0
        %1893 = vmatprep.subr.mxu0 0.0
        %1894 = vmatpush1.xpose.msra.mxu0 0.0
        %1895 = vmatprep.subr.mxu0 0.0
        %1896 = vmatpush1.xpose.msra.mxu0 0.0
        %1897 = vmatprep.subr.mxu0 0.0
        %1898 = vmatpush1.xpose.msra.mxu0 0.0
        %1899 = vmatprep.subr.mxu0 0.0
        %1900 = vmatpush1.xpose.msra.mxu0 0.0
        %1901 = vmatprep.subr.mxu0 0.0
        %1902 = vmatpush1.xpose.msra.mxu0 0.0
        %1903 = vmatprep.subr.mxu0 0.0
        %1904 = vmatpush1.xpose.msra.mxu0 0.0
        %1905 = vmatprep.subr.mxu0 0.0
        %1906 = vmatpush1.xpose.msra.mxu0 0.0
        %1907 = vmatprep.subr.mxu0 0.0
        %1908 = vmatpush1.xpose.msra.mxu0 0.0
        %1909 = vmatprep.subr.mxu0 0.0
        %1910 = vmatpush1.xpose.msra.mxu0 0.0
        %1911 = vmatprep.subr.mxu0 0.0
        %1912 = vmatpush1.xpose.msra.mxu0 0.0
        %1913 = vmatprep.subr.mxu0 0.0
        %1914 = vmatpush1.xpose.msra.mxu0 0.0
        %1915 = vmatprep.subr.mxu0 0.0
        %1916 = vmatpush1.xpose.msra.mxu0 0.0
        %1917 = vmatprep.subr.mxu0 0.0
        %1918 = vmatpush1.xpose.msra.mxu0 0.0
        %1919 = vmatprep.subr.mxu0 0.0
        %1920 = vmatpush1.xpose.msra.mxu0 0.0
        %1921 = vmatprep.subr.mxu0 0.0
        %1922 = vmatpush1.xpose.msra.mxu0 0.0
        %1923 = vmatprep.subr.mxu0 0.0
        %1924 = vmatpush1.xpose.msra.mxu0 0.0
        %1925 = vmatprep.subr.mxu0 0.0
        %1926 = vmatpush1.xpose.msra.mxu0 0.0
        %1927 = vmatprep.subr.mxu0 0.0
        %1928 = vmatpush1.xpose.msra.mxu0 0.0
        %1929 = vmatprep.subr.mxu0 0.0
        %1930 = vmatpush1.xpose.msra.mxu0 0.0
        %v1931 = vand.u32 %v422, 4294901760
        %v1932 = vsub.f32 %v422, %v1931
        %1933 = vmatprep.mubr.f32.mxu0 %v1932
        %v1934 = vand.u32 %v415, 4294901760
        %v1935 = vsub.f32 %v415, %v1934
        %1936 = vmatmul.mubr.f32.gmra.mrb[0].mxu0 %v1935
        %v1937 = vpop.f32.mrb[0].mxu0
        %v1938 = vadd.f32 %v1852, %v1937
        %v1939 = vpop.f32.mrb[0].mxu0
        %1940 = vdwg.mxu0
        %v1941 = vand.u32 %v225, 4294901760
        %1942 = vmatprep.subr.mxu0 %v1941
        %v1943 = vand.u32 %v224, 4294901760
        %1944 = vmatpush1.xpose.msra.mxu0 %v1943
        %v1945 = vand.u32 %v257, 4294901760
        %1946 = vmatprep.subr.mxu0 %v1945
        %v1947 = vand.u32 %v256, 4294901760
        %1948 = vmatpush1.xpose.msra.mxu0 %v1947
        %v1949 = vand.u32 %v289, 4294901760
        %1950 = vmatprep.subr.mxu0 %v1949
        %v1951 = vand.u32 %v288, 4294901760
        %1952 = vmatpush1.xpose.msra.mxu0 %v1951
        %1953 = vmatprep.subr.mxu0 0.0
        %1954 = vmatpush1.xpose.msra.mxu0 0.0
        %1955 = vmatprep.subr.mxu0 0.0
        %1956 = vmatpush1.xpose.msra.mxu0 0.0
        %1957 = vmatprep.subr.mxu0 0.0
        %1958 = vmatpush1.xpose.msra.mxu0 0.0
        %1959 = vmatprep.subr.mxu0 0.0
        %1960 = vmatpush1.xpose.msra.mxu0 0.0
        %1961 = vmatprep.subr.mxu0 0.0
        %1962 = vmatpush1.xpose.msra.mxu0 0.0
        %1963 = vmatprep.subr.mxu0 0.0
        %1964 = vmatpush1.xpose.msra.mxu0 0.0
        %1965 = vmatprep.subr.mxu0 0.0
        %1966 = vmatpush1.xpose.msra.mxu0 0.0
        %1967 = vmatprep.subr.mxu0 0.0
        %1968 = vmatpush1.xpose.msra.mxu0 0.0
        %1969 = vmatprep.subr.mxu0 0.0
        %1970 = vmatpush1.xpose.msra.mxu0 0.0
        %1971 = vmatprep.subr.mxu0 0.0
        %1972 = vmatpush1.xpose.msra.mxu0 0.0
        %1973 = vmatprep.subr.mxu0 0.0
        %1974 = vmatpush1.xpose.msra.mxu0 0.0
        %1975 = vmatprep.subr.mxu0 0.0
        %1976 = vmatpush1.xpose.msra.mxu0 0.0
        %1977 = vmatprep.subr.mxu0 0.0
        %1978 = vmatpush1.xpose.msra.mxu0 0.0
        %1979 = vmatprep.subr.mxu0 0.0
        %1980 = vmatpush1.xpose.msra.mxu0 0.0
        %1981 = vmatprep.subr.mxu0 0.0
        %1982 = vmatpush1.xpose.msra.mxu0 0.0
        %1983 = vmatprep.subr.mxu0 0.0
        %1984 = vmatpush1.xpose.msra.mxu0 0.0
        %1985 = vmatprep.subr.mxu0 0.0
        %1986 = vmatpush1.xpose.msra.mxu0 0.0
        %1987 = vmatprep.subr.mxu0 0.0
        %1988 = vmatpush1.xpose.msra.mxu0 0.0
        %1989 = vmatprep.subr.mxu0 0.0
        %1990 = vmatpush1.xpose.msra.mxu0 0.0
        %1991 = vmatprep.subr.mxu0 0.0
        %1992 = vmatpush1.xpose.msra.mxu0 0.0
        %1993 = vmatprep.subr.mxu0 0.0
        %1994 = vmatpush1.xpose.msra.mxu0 0.0
        %1995 = vmatprep.subr.mxu0 0.0
        %1996 = vmatpush1.xpose.msra.mxu0 0.0
        %1997 = vmatprep.subr.mxu0 0.0
        %1998 = vmatpush1.xpose.msra.mxu0 0.0
        %1999 = vmatprep.subr.mxu0 0.0
        %2000 = vmatpush1.xpose.msra.mxu0 0.0
        %2001 = vmatprep.subr.mxu0 0.0
        %2002 = vmatpush1.xpose.msra.mxu0 0.0
        %2003 = vmatprep.subr.mxu0 0.0
        %2004 = vmatpush1.xpose.msra.mxu0 0.0
        %2005 = vmatprep.subr.mxu0 0.0
        %2006 = vmatpush1.xpose.msra.mxu0 0.0
        %2007 = vmatprep.subr.mxu0 0.0
        %2008 = vmatpush1.xpose.msra.mxu0 0.0
        %2009 = vmatprep.subr.mxu0 0.0
        %2010 = vmatpush1.xpose.msra.mxu0 0.0
        %v2011 = vand.u32 %v422, 4294901760
        %v2012 = vsub.f32 %v422, %v2011
        %v2013 = vand.u32 %v2012, 4294901760
        %2014 = vmatprep.mubr.f32.mxu0 %v2013
        %v2015 = vand.u32 %v415, 4294901760
        %v2016 = vsub.f32 %v415, %v2015
        %v2017 = vand.u32 %v2016, 4294901760
        %2018 = vmatmul.mubr.f32.gmra.mrb[0].mxu0 %v2017
        %v2019 = vpop.f32.mrb[0].mxu0
        %v2020 = vadd.f32 %v1938, %v2019
        %v2021 = vpop.f32.mrb[0].mxu0
        %2022 = vdwg.mxu0
        %v2023 = vand.u32 %v225, 4294901760
        %v2024 = vsub.f32 %v225, %v2023
        %v2025 = vand.u32 %v2024, 4294901760
        %2026 = vmatprep.subr.mxu0 %v2025
        %v2027 = vand.u32 %v224, 4294901760
        %v2028 = vsub.f32 %v224, %v2027
        %v2029 = vand.u32 %v2028, 4294901760
        %2030 = vmatpush1.xpose.msra.mxu0 %v2029
        %v2031 = vand.u32 %v257, 4294901760
        %v2032 = vsub.f32 %v257, %v2031
        %v2033 = vand.u32 %v2032, 4294901760
        %2034 = vmatprep.subr.mxu0 %v2033
        %v2035 = vand.u32 %v256, 4294901760
        %v2036 = vsub.f32 %v256, %v2035
        %v2037 = vand.u32 %v2036, 4294901760
        %2038 = vmatpush1.xpose.msra.mxu0 %v2037
        %v2039 = vand.u32 %v289, 4294901760
        %v2040 = vsub.f32 %v289, %v2039
        %v2041 = vand.u32 %v2040, 4294901760
        %2042 = vmatprep.subr.mxu0 %v2041
        %v2043 = vand.u32 %v288, 4294901760
        %v2044 = vsub.f32 %v288, %v2043
        %v2045 = vand.u32 %v2044, 4294901760
        %2046 = vmatpush1.xpose.msra.mxu0 %v2045
        %2047 = vmatprep.subr.mxu0 0.0
        %2048 = vmatpush1.xpose.msra.mxu0 0.0
        %2049 = vmatprep.subr.mxu0 0.0
        %2050 = vmatpush1.xpose.msra.mxu0 0.0
        %2051 = vmatprep.subr.mxu0 0.0
        %2052 = vmatpush1.xpose.msra.mxu0 0.0
        %2053 = vmatprep.subr.mxu0 0.0
        %2054 = vmatpush1.xpose.msra.mxu0 0.0
        %2055 = vmatprep.subr.mxu0 0.0
        %2056 = vmatpush1.xpose.msra.mxu0 0.0
        %2057 = vmatprep.subr.mxu0 0.0
        %2058 = vmatpush1.xpose.msra.mxu0 0.0
        %2059 = vmatprep.subr.mxu0 0.0
        %2060 = vmatpush1.xpose.msra.mxu0 0.0
        %2061 = vmatprep.subr.mxu0 0.0
        %2062 = vmatpush1.xpose.msra.mxu0 0.0
        %2063 = vmatprep.subr.mxu0 0.0
        %2064 = vmatpush1.xpose.msra.mxu0 0.0
        %2065 = vmatprep.subr.mxu0 0.0
        %2066 = vmatpush1.xpose.msra.mxu0 0.0
        %2067 = vmatprep.subr.mxu0 0.0
        %2068 = vmatpush1.xpose.msra.mxu0 0.0
        %2069 = vmatprep.subr.mxu0 0.0
        %2070 = vmatpush1.xpose.msra.mxu0 0.0
        %2071 = vmatprep.subr.mxu0 0.0
        %2072 = vmatpush1.xpose.msra.mxu0 0.0
        %2073 = vmatprep.subr.mxu0 0.0
        %2074 = vmatpush1.xpose.msra.mxu0 0.0
        %2075 = vmatprep.subr.mxu0 0.0
        %2076 = vmatpush1.xpose.msra.mxu0 0.0
        %2077 = vmatprep.subr.mxu0 0.0
        %2078 = vmatpush1.xpose.msra.mxu0 0.0
        %2079 = vmatprep.subr.mxu0 0.0
        %2080 = vmatpush1.xpose.msra.mxu0 0.0
        %2081 = vmatprep.subr.mxu0 0.0
        %2082 = vmatpush1.xpose.msra.mxu0 0.0
        %2083 = vmatprep.subr.mxu0 0.0
        %2084 = vmatpush1.xpose.msra.mxu0 0.0
        %2085 = vmatprep.subr.mxu0 0.0
        %2086 = vmatpush1.xpose.msra.mxu0 0.0
        %2087 = vmatprep.subr.mxu0 0.0
        %2088 = vmatpush1.xpose.msra.mxu0 0.0
        %2089 = vmatprep.subr.mxu0 0.0
        %2090 = vmatpush1.xpose.msra.mxu0 0.0
        %2091 = vmatprep.subr.mxu0 0.0
        %2092 = vmatpush1.xpose.msra.mxu0 0.0
        %2093 = vmatprep.subr.mxu0 0.0
        %2094 = vmatpush1.xpose.msra.mxu0 0.0
        %2095 = vmatprep.subr.mxu0 0.0
        %2096 = vmatpush1.xpose.msra.mxu0 0.0
        %2097 = vmatprep.subr.mxu0 0.0
        %2098 = vmatpush1.xpose.msra.mxu0 0.0
        %2099 = vmatprep.subr.mxu0 0.0
        %2100 = vmatpush1.xpose.msra.mxu0 0.0
        %2101 = vmatprep.subr.mxu0 0.0
        %2102 = vmatpush1.xpose.msra.mxu0 0.0
        %2103 = vmatprep.subr.mxu0 0.0
        %2104 = vmatpush1.xpose.msra.mxu0 0.0
        %v2105 = vand.u32 %v422, 4294901760
        %2106 = vmatprep.mubr.f32.mxu0 %v2105
        %v2107 = vand.u32 %v415, 4294901760
        %2108 = vmatmul.mubr.f32.gmra.mrb[0].mxu0 %v2107
        %v2109 = vpop.f32.mrb[0].mxu0
        %v2110 = vadd.f32 %v2020, %v2109
        %v2111 = vpop.f32.mrb[0].mxu0
        %2112 = vdwg.mxu0
        %v2113 = vand.u32 %v225, 4294901760
        %2114 = vmatprep.subr.mxu0 %v2113
        %v2115 = vand.u32 %v224, 4294901760
        %2116 = vmatpush1.xpose.msra.mxu0 %v2115
        %v2117 = vand.u32 %v257, 4294901760
        %2118 = vmatprep.subr.mxu0 %v2117
        %v2119 = vand.u32 %v256, 4294901760
        %2120 = vmatpush1.xpose.msra.mxu0 %v2119
        %v2121 = vand.u32 %v289, 4294901760
        %2122 = vmatprep.subr.mxu0 %v2121
        %v2123 = vand.u32 %v288, 4294901760
        %2124 = vmatpush1.xpose.msra.mxu0 %v2123
        %2125 = vmatprep.subr.mxu0 0.0
        %2126 = vmatpush1.xpose.msra.mxu0 0.0
        %2127 = vmatprep.subr.mxu0 0.0
        %2128 = vmatpush1.xpose.msra.mxu0 0.0
        %2129 = vmatprep.subr.mxu0 0.0
        %2130 = vmatpush1.xpose.msra.mxu0 0.0
        %2131 = vmatprep.subr.mxu0 0.0
        %2132 = vmatpush1.xpose.msra.mxu0 0.0
        %2133 = vmatprep.subr.mxu0 0.0
        %2134 = vmatpush1.xpose.msra.mxu0 0.0
        %2135 = vmatprep.subr.mxu0 0.0
        %2136 = vmatpush1.xpose.msra.mxu0 0.0
        %2137 = vmatprep.subr.mxu0 0.0
        %2138 = vmatpush1.xpose.msra.mxu0 0.0
        %2139 = vmatprep.subr.mxu0 0.0
        %2140 = vmatpush1.xpose.msra.mxu0 0.0
        %2141 = vmatprep.subr.mxu0 0.0
        %2142 = vmatpush1.xpose.msra.mxu0 0.0
        %2143 = vmatprep.subr.mxu0 0.0
        %2144 = vmatpush1.xpose.msra.mxu0 0.0
        %2145 = vmatprep.subr.mxu0 0.0
        %2146 = vmatpush1.xpose.msra.mxu0 0.0
        %2147 = vmatprep.subr.mxu0 0.0
        %2148 = vmatpush1.xpose.msra.mxu0 0.0
        %2149 = vmatprep.subr.mxu0 0.0
        %2150 = vmatpush1.xpose.msra.mxu0 0.0
        %2151 = vmatprep.subr.mxu0 0.0
        %2152 = vmatpush1.xpose.msra.mxu0 0.0
        %2153 = vmatprep.subr.mxu0 0.0
        %2154 = vmatpush1.xpose.msra.mxu0 0.0
        %2155 = vmatprep.subr.mxu0 0.0
        %2156 = vmatpush1.xpose.msra.mxu0 0.0
        %2157 = vmatprep.subr.mxu0 0.0
        %2158 = vmatpush1.xpose.msra.mxu0 0.0
        %2159 = vmatprep.subr.mxu0 0.0
        %2160 = vmatpush1.xpose.msra.mxu0 0.0
        %2161 = vmatprep.subr.mxu0 0.0
        %2162 = vmatpush1.xpose.msra.mxu0 0.0
        %2163 = vmatprep.subr.mxu0 0.0
        %2164 = vmatpush1.xpose.msra.mxu0 0.0
        %2165 = vmatprep.subr.mxu0 0.0
        %2166 = vmatpush1.xpose.msra.mxu0 0.0
        %2167 = vmatprep.subr.mxu0 0.0
        %2168 = vmatpush1.xpose.msra.mxu0 0.0
        %2169 = vmatprep.subr.mxu0 0.0
        %2170 = vmatpush1.xpose.msra.mxu0 0.0
        %2171 = vmatprep.subr.mxu0 0.0
        %2172 = vmatpush1.xpose.msra.mxu0 0.0
        %2173 = vmatprep.subr.mxu0 0.0
        %2174 = vmatpush1.xpose.msra.mxu0 0.0
        %2175 = vmatprep.subr.mxu0 0.0
        %2176 = vmatpush1.xpose.msra.mxu0 0.0
        %2177 = vmatprep.subr.mxu0 0.0
        %2178 = vmatpush1.xpose.msra.mxu0 0.0
        %2179 = vmatprep.subr.mxu0 0.0
        %2180 = vmatpush1.xpose.msra.mxu0 0.0
        %2181 = vmatprep.subr.mxu0 0.0
        %2182 = vmatpush1.xpose.msra.mxu0 0.0
        %v2183 = vand.u32 %v422, 4294901760
        %2184 = vmatprep.mubr.f32.mxu0 %v2183
        %v2185 = vand.u32 %v415, 4294901760
        %2186 = vmatmul.mubr.f32.gmra.mrb[0].mxu0 %v2185
        %v2187 = vpop.f32.mrb[0].mxu0
        %v2188 = vadd.f32 %v2110, %v2187
        %v2189 = vpop.f32.mrb[0].mxu0
        %2190 = vdwg.mxu0
        %v2191 = vand.u32 %v227, 4294901760
        %2192 = vmatprep.subr.mxu0 %v2191
        %v2193 = vand.u32 %v226, 4294901760
        %2194 = vmatpush1.xpose.msra.mxu0 %v2193
        %v2195 = vand.u32 %v259, 4294901760
        %2196 = vmatprep.subr.mxu0 %v2195
        %v2197 = vand.u32 %v258, 4294901760
        %2198 = vmatpush1.xpose.msra.mxu0 %v2197
        %v2199 = vand.u32 %v291, 4294901760
        %2200 = vmatprep.subr.mxu0 %v2199
        %v2201 = vand.u32 %v290, 4294901760
        %2202 = vmatpush1.xpose.msra.mxu0 %v2201
        %2203 = vmatprep.subr.mxu0 0.0
        %2204 = vmatpush1.xpose.msra.mxu0 0.0
        %2205 = vmatprep.subr.mxu0 0.0
        %2206 = vmatpush1.xpose.msra.mxu0 0.0
        %2207 = vmatprep.subr.mxu0 0.0
        %2208 = vmatpush1.xpose.msra.mxu0 0.0
        %2209 = vmatprep.subr.mxu0 0.0
        %2210 = vmatpush1.xpose.msra.mxu0 0.0
        %2211 = vmatprep.subr.mxu0 0.0
        %2212 = vmatpush1.xpose.msra.mxu0 0.0
        %2213 = vmatprep.subr.mxu0 0.0
        %2214 = vmatpush1.xpose.msra.mxu0 0.0
        %2215 = vmatprep.subr.mxu0 0.0
        %2216 = vmatpush1.xpose.msra.mxu0 0.0
        %2217 = vmatprep.subr.mxu0 0.0
        %2218 = vmatpush1.xpose.msra.mxu0 0.0
        %2219 = vmatprep.subr.mxu0 0.0
        %2220 = vmatpush1.xpose.msra.mxu0 0.0
        %2221 = vmatprep.subr.mxu0 0.0
        %2222 = vmatpush1.xpose.msra.mxu0 0.0
        %2223 = vmatprep.subr.mxu0 0.0
        %2224 = vmatpush1.xpose.msra.mxu0 0.0
        %2225 = vmatprep.subr.mxu0 0.0
        %2226 = vmatpush1.xpose.msra.mxu0 0.0
        %2227 = vmatprep.subr.mxu0 0.0
        %2228 = vmatpush1.xpose.msra.mxu0 0.0
        %2229 = vmatprep.subr.mxu0 0.0
        %2230 = vmatpush1.xpose.msra.mxu0 0.0
        %2231 = vmatprep.subr.mxu0 0.0
        %2232 = vmatpush1.xpose.msra.mxu0 0.0
        %2233 = vmatprep.subr.mxu0 0.0
        %2234 = vmatpush1.xpose.msra.mxu0 0.0
        %2235 = vmatprep.subr.mxu0 0.0
        %2236 = vmatpush1.xpose.msra.mxu0 0.0
        %2237 = vmatprep.subr.mxu0 0.0
        %2238 = vmatpush1.xpose.msra.mxu0 0.0
        %2239 = vmatprep.subr.mxu0 0.0
        %2240 = vmatpush1.xpose.msra.mxu0 0.0
        %2241 = vmatprep.subr.mxu0 0.0
        %2242 = vmatpush1.xpose.msra.mxu0 0.0
        %2243 = vmatprep.subr.mxu0 0.0
        %2244 = vmatpush1.xpose.msra.mxu0 0.0
        %2245 = vmatprep.subr.mxu0 0.0
        %2246 = vmatpush1.xpose.msra.mxu0 0.0
        %2247 = vmatprep.subr.mxu0 0.0
        %2248 = vmatpush1.xpose.msra.mxu0 0.0
        %2249 = vmatprep.subr.mxu0 0.0
        %2250 = vmatpush1.xpose.msra.mxu0 0.0
        %2251 = vmatprep.subr.mxu0 0.0
        %2252 = vmatpush1.xpose.msra.mxu0 0.0
        %2253 = vmatprep.subr.mxu0 0.0
        %2254 = vmatpush1.xpose.msra.mxu0 0.0
        %2255 = vmatprep.subr.mxu0 0.0
        %2256 = vmatpush1.xpose.msra.mxu0 0.0
        %2257 = vmatprep.subr.mxu0 0.0
        %2258 = vmatpush1.xpose.msra.mxu0 0.0
        %2259 = vmatprep.subr.mxu0 0.0
        %2260 = vmatpush1.xpose.msra.mxu0 0.0
        %v2261 = vand.u32 %v436, 4294901760
        %v2262 = vsub.f32 %v436, %v2261
        %v2263 = vand.u32 %v2262, 4294901760
        %v2264 = vsub.f32 %v2262, %v2263
        %v2265 = vand.u32 %v2264, 4294901760
        %2266 = vmatprep.mubr.f32.mxu0 %v2265
        %v2267 = vand.u32 %v429, 4294901760
        %v2268 = vsub.f32 %v429, %v2267
        %v2269 = vand.u32 %v2268, 4294901760
        %v2270 = vsub.f32 %v2268, %v2269
        %v2271 = vand.u32 %v2270, 4294901760
        %2272 = vmatmul.mubr.f32.gmra.mrb[0].mxu0 %v2271
        %v2273 = vpop.f32.mrb[0].mxu0
        %v2274 = vadd.f32 %v2188, %v2273
        %v2275 = vpop.f32.mrb[0].mxu0
        %2276 = vdwg.mxu0
        %v2277 = vand.u32 %v227, 4294901760
        %v2278 = vsub.f32 %v227, %v2277
        %v2279 = vand.u32 %v2278, 4294901760
        %v2280 = vsub.f32 %v2278, %v2279
        %v2281 = vand.u32 %v2280, 4294901760
        %2282 = vmatprep.subr.mxu0 %v2281
        %v2283 = vand.u32 %v226, 4294901760
        %v2284 = vsub.f32 %v226, %v2283
        %v2285 = vand.u32 %v2284, 4294901760
        %v2286 = vsub.f32 %v2284, %v2285
        %v2287 = vand.u32 %v2286, 4294901760
        %2288 = vmatpush1.xpose.msra.mxu0 %v2287
        %v2289 = vand.u32 %v259, 4294901760
        %v2290 = vsub.f32 %v259, %v2289
        %v2291 = vand.u32 %v2290, 4294901760
        %v2292 = vsub.f32 %v2290, %v2291
        %v2293 = vand.u32 %v2292, 4294901760
        %2294 = vmatprep.subr.mxu0 %v2293
        %v2295 = vand.u32 %v258, 4294901760
        %v2296 = vsub.f32 %v258, %v2295
        %v2297 = vand.u32 %v2296, 4294901760
        %v2298 = vsub.f32 %v2296, %v2297
        %v2299 = vand.u32 %v2298, 4294901760
        %2300 = vmatpush1.xpose.msra.mxu0 %v2299
        %v2301 = vand.u32 %v291, 4294901760
        %v2302 = vsub.f32 %v291, %v2301
        %v2303 = vand.u32 %v2302, 4294901760
        %v2304 = vsub.f32 %v2302, %v2303
        %v2305 = vand.u32 %v2304, 4294901760
        %2306 = vmatprep.subr.mxu0 %v2305
        %v2307 = vand.u32 %v290, 4294901760
        %v2308 = vsub.f32 %v290, %v2307
        %v2309 = vand.u32 %v2308, 4294901760
        %v2310 = vsub.f32 %v2308, %v2309
        %v2311 = vand.u32 %v2310, 4294901760
        %2312 = vmatpush1.xpose.msra.mxu0 %v2311
        %2313 = vmatprep.subr.mxu0 0.0
        %2314 = vmatpush1.xpose.msra.mxu0 0.0
        %2315 = vmatprep.subr.mxu0 0.0
        %2316 = vmatpush1.xpose.msra.mxu0 0.0
        %2317 = vmatprep.subr.mxu0 0.0
        %2318 = vmatpush1.xpose.msra.mxu0 0.0
        %2319 = vmatprep.subr.mxu0 0.0
        %2320 = vmatpush1.xpose.msra.mxu0 0.0
        %2321 = vmatprep.subr.mxu0 0.0
        %2322 = vmatpush1.xpose.msra.mxu0 0.0
        %2323 = vmatprep.subr.mxu0 0.0
        %2324 = vmatpush1.xpose.msra.mxu0 0.0
        %2325 = vmatprep.subr.mxu0 0.0
        %2326 = vmatpush1.xpose.msra.mxu0 0.0
        %2327 = vmatprep.subr.mxu0 0.0
        %2328 = vmatpush1.xpose.msra.mxu0 0.0
        %2329 = vmatprep.subr.mxu0 0.0
        %2330 = vmatpush1.xpose.msra.mxu0 0.0
        %2331 = vmatprep.subr.mxu0 0.0
        %2332 = vmatpush1.xpose.msra.mxu0 0.0
        %2333 = vmatprep.subr.mxu0 0.0
        %2334 = vmatpush1.xpose.msra.mxu0 0.0
        %2335 = vmatprep.subr.mxu0 0.0
        %2336 = vmatpush1.xpose.msra.mxu0 0.0
        %2337 = vmatprep.subr.mxu0 0.0
        %2338 = vmatpush1.xpose.msra.mxu0 0.0
        %2339 = vmatprep.subr.mxu0 0.0
        %2340 = vmatpush1.xpose.msra.mxu0 0.0
        %2341 = vmatprep.subr.mxu0 0.0
        %2342 = vmatpush1.xpose.msra.mxu0 0.0
        %2343 = vmatprep.subr.mxu0 0.0
        %2344 = vmatpush1.xpose.msra.mxu0 0.0
        %2345 = vmatprep.subr.mxu0 0.0
        %2346 = vmatpush1.xpose.msra.mxu0 0.0
        %2347 = vmatprep.subr.mxu0 0.0
        %2348 = vmatpush1.xpose.msra.mxu0 0.0
        %2349 = vmatprep.subr.mxu0 0.0
        %2350 = vmatpush1.xpose.msra.mxu0 0.0
        %2351 = vmatprep.subr.mxu0 0.0
        %2352 = vmatpush1.xpose.msra.mxu0 0.0
        %2353 = vmatprep.subr.mxu0 0.0
        %2354 = vmatpush1.xpose.msra.mxu0 0.0
        %2355 = vmatprep.subr.mxu0 0.0
        %2356 = vmatpush1.xpose.msra.mxu0 0.0
        %2357 = vmatprep.subr.mxu0 0.0
        %2358 = vmatpush1.xpose.msra.mxu0 0.0
        %2359 = vmatprep.subr.mxu0 0.0
        %2360 = vmatpush1.xpose.msra.mxu0 0.0
        %2361 = vmatprep.subr.mxu0 0.0
        %2362 = vmatpush1.xpose.msra.mxu0 0.0
        %2363 = vmatprep.subr.mxu0 0.0
        %2364 = vmatpush1.xpose.msra.mxu0 0.0
        %2365 = vmatprep.subr.mxu0 0.0
        %2366 = vmatpush1.xpose.msra.mxu0 0.0
        %2367 = vmatprep.subr.mxu0 0.0
        %2368 = vmatpush1.xpose.msra.mxu0 0.0
        %2369 = vmatprep.subr.mxu0 0.0
        %2370 = vmatpush1.xpose.msra.mxu0 0.0
        %v2371 = vand.u32 %v436, 4294901760
        %2372 = vmatprep.mubr.f32.mxu0 %v2371
        %v2373 = vand.u32 %v429, 4294901760
        %2374 = vmatmul.mubr.f32.gmra.mrb[0].mxu0 %v2373
        %v2375 = vpop.f32.mrb[0].mxu0
        %v2376 = vadd.f32 %v2274, %v2375
        %v2377 = vpop.f32.mrb[0].mxu0
        %2378 = vdwg.mxu0
        %v2379 = vand.u32 %v227, 4294901760
        %v2380 = vsub.f32 %v227, %v2379
        %2381 = vmatprep.subr.mxu0 %v2380
        %v2382 = vand.u32 %v226, 4294901760
        %v2383 = vsub.f32 %v226, %v2382
        %2384 = vmatpush1.xpose.msra.mxu0 %v2383
        %v2385 = vand.u32 %v259, 4294901760
        %v2386 = vsub.f32 %v259, %v2385
        %2387 = vmatprep.subr.mxu0 %v2386
        %v2388 = vand.u32 %v258, 4294901760
        %v2389 = vsub.f32 %v258, %v2388
        %2390 = vmatpush1.xpose.msra.mxu0 %v2389
        %v2391 = vand.u32 %v291, 4294901760
        %v2392 = vsub.f32 %v291, %v2391
        %2393 = vmatprep.subr.mxu0 %v2392
        %v2394 = vand.u32 %v290, 4294901760
        %v2395 = vsub.f32 %v290, %v2394
        %2396 = vmatpush1.xpose.msra.mxu0 %v2395
        %2397 = vmatprep.subr.mxu0 0.0
        %2398 = vmatpush1.xpose.msra.mxu0 0.0
        %2399 = vmatprep.subr.mxu0 0.0
        %2400 = vmatpush1.xpose.msra.mxu0 0.0
        %2401 = vmatprep.subr.mxu0 0.0
        %2402 = vmatpush1.xpose.msra.mxu0 0.0
        %2403 = vmatprep.subr.mxu0 0.0
        %2404 = vmatpush1.xpose.msra.mxu0 0.0
        %2405 = vmatprep.subr.mxu0 0.0
        %2406 = vmatpush1.xpose.msra.mxu0 0.0
        %2407 = vmatprep.subr.mxu0 0.0
        %2408 = vmatpush1.xpose.msra.mxu0 0.0
        %2409 = vmatprep.subr.mxu0 0.0
        %2410 = vmatpush1.xpose.msra.mxu0 0.0
        %2411 = vmatprep.subr.mxu0 0.0
        %2412 = vmatpush1.xpose.msra.mxu0 0.0
        %2413 = vmatprep.subr.mxu0 0.0
        %2414 = vmatpush1.xpose.msra.mxu0 0.0
        %2415 = vmatprep.subr.mxu0 0.0
        %2416 = vmatpush1.xpose.msra.mxu0 0.0
        %2417 = vmatprep.subr.mxu0 0.0
        %2418 = vmatpush1.xpose.msra.mxu0 0.0
        %2419 = vmatprep.subr.mxu0 0.0
        %2420 = vmatpush1.xpose.msra.mxu0 0.0
        %2421 = vmatprep.subr.mxu0 0.0
        %2422 = vmatpush1.xpose.msra.mxu0 0.0
        %2423 = vmatprep.subr.mxu0 0.0
        %2424 = vmatpush1.xpose.msra.mxu0 0.0
        %2425 = vmatprep.subr.mxu0 0.0
        %2426 = vmatpush1.xpose.msra.mxu0 0.0
        %2427 = vmatprep.subr.mxu0 0.0
        %2428 = vmatpush1.xpose.msra.mxu0 0.0
        %2429 = vmatprep.subr.mxu0 0.0
        %2430 = vmatpush1.xpose.msra.mxu0 0.0
        %2431 = vmatprep.subr.mxu0 0.0
        %2432 = vmatpush1.xpose.msra.mxu0 0.0
        %2433 = vmatprep.subr.mxu0 0.0
        %2434 = vmatpush1.xpose.msra.mxu0 0.0
        %2435 = vmatprep.subr.mxu0 0.0
        %2436 = vmatpush1.xpose.msra.mxu0 0.0
        %2437 = vmatprep.subr.mxu0 0.0
        %2438 = vmatpush1.xpose.msra.mxu0 0.0
        %2439 = vmatprep.subr.mxu0 0.0
        %2440 = vmatpush1.xpose.msra.mxu0 0.0
        %2441 = vmatprep.subr.mxu0 0.0
        %2442 = vmatpush1.xpose.msra.mxu0 0.0
        %2443 = vmatprep.subr.mxu0 0.0
        %2444 = vmatpush1.xpose.msra.mxu0 0.0
        %2445 = vmatprep.subr.mxu0 0.0
        %2446 = vmatpush1.xpose.msra.mxu0 0.0
        %2447 = vmatprep.subr.mxu0 0.0
        %2448 = vmatpush1.xpose.msra.mxu0 0.0
        %2449 = vmatprep.subr.mxu0 0.0
        %2450 = vmatpush1.xpose.msra.mxu0 0.0
        %2451 = vmatprep.subr.mxu0 0.0
        %2452 = vmatpush1.xpose.msra.mxu0 0.0
        %2453 = vmatprep.subr.mxu0 0.0
        %2454 = vmatpush1.xpose.msra.mxu0 0.0
        %v2455 = vand.u32 %v436, 4294901760
        %v2456 = vsub.f32 %v436, %v2455
        %2457 = vmatprep.mubr.f32.mxu0 %v2456
        %v2458 = vand.u32 %v429, 4294901760
        %v2459 = vsub.f32 %v429, %v2458
        %2460 = vmatmul.mubr.f32.gmra.mrb[0].mxu0 %v2459
        %v2461 = vpop.f32.mrb[0].mxu0
        %v2462 = vadd.f32 %v2376, %v2461
        %v2463 = vpop.f32.mrb[0].mxu0
        %2464 = vdwg.mxu0
        %v2465 = vand.u32 %v227, 4294901760
        %2466 = vmatprep.subr.mxu0 %v2465
        %v2467 = vand.u32 %v226, 4294901760
        %2468 = vmatpush1.xpose.msra.mxu0 %v2467
        %v2469 = vand.u32 %v259, 4294901760
        %2470 = vmatprep.subr.mxu0 %v2469
        %v2471 = vand.u32 %v258, 4294901760
        %2472 = vmatpush1.xpose.msra.mxu0 %v2471
        %v2473 = vand.u32 %v291, 4294901760
        %2474 = vmatprep.subr.mxu0 %v2473
        %v2475 = vand.u32 %v290, 4294901760
        %2476 = vmatpush1.xpose.msra.mxu0 %v2475
        %2477 = vmatprep.subr.mxu0 0.0
        %2478 = vmatpush1.xpose.msra.mxu0 0.0
        %2479 = vmatprep.subr.mxu0 0.0
        %2480 = vmatpush1.xpose.msra.mxu0 0.0
        %2481 = vmatprep.subr.mxu0 0.0
        %2482 = vmatpush1.xpose.msra.mxu0 0.0
        %2483 = vmatprep.subr.mxu0 0.0
        %2484 = vmatpush1.xpose.msra.mxu0 0.0
        %2485 = vmatprep.subr.mxu0 0.0
        %2486 = vmatpush1.xpose.msra.mxu0 0.0
        %2487 = vmatprep.subr.mxu0 0.0
        %2488 = vmatpush1.xpose.msra.mxu0 0.0
        %2489 = vmatprep.subr.mxu0 0.0
        %2490 = vmatpush1.xpose.msra.mxu0 0.0
        %2491 = vmatprep.subr.mxu0 0.0
        %2492 = vmatpush1.xpose.msra.mxu0 0.0
        %2493 = vmatprep.subr.mxu0 0.0
        %2494 = vmatpush1.xpose.msra.mxu0 0.0
        %2495 = vmatprep.subr.mxu0 0.0
        %2496 = vmatpush1.xpose.msra.mxu0 0.0
        %2497 = vmatprep.subr.mxu0 0.0
        %2498 = vmatpush1.xpose.msra.mxu0 0.0
        %2499 = vmatprep.subr.mxu0 0.0
        %2500 = vmatpush1.xpose.msra.mxu0 0.0
        %2501 = vmatprep.subr.mxu0 0.0
        %2502 = vmatpush1.xpose.msra.mxu0 0.0
        %2503 = vmatprep.subr.mxu0 0.0
        %2504 = vmatpush1.xpose.msra.mxu0 0.0
        %2505 = vmatprep.subr.mxu0 0.0
        %2506 = vmatpush1.xpose.msra.mxu0 0.0
        %2507 = vmatprep.subr.mxu0 0.0
        %2508 = vmatpush1.xpose.msra.mxu0 0.0
        %2509 = vmatprep.subr.mxu0 0.0
        %2510 = vmatpush1.xpose.msra.mxu0 0.0
        %2511 = vmatprep.subr.mxu0 0.0
        %2512 = vmatpush1.xpose.msra.mxu0 0.0
        %2513 = vmatprep.subr.mxu0 0.0
        %2514 = vmatpush1.xpose.msra.mxu0 0.0
        %2515 = vmatprep.subr.mxu0 0.0
        %2516 = vmatpush1.xpose.msra.mxu0 0.0
        %2517 = vmatprep.subr.mxu0 0.0
        %2518 = vmatpush1.xpose.msra.mxu0 0.0
        %2519 = vmatprep.subr.mxu0 0.0
        %2520 = vmatpush1.xpose.msra.mxu0 0.0
        %2521 = vmatprep.subr.mxu0 0.0
        %2522 = vmatpush1.xpose.msra.mxu0 0.0
        %2523 = vmatprep.subr.mxu0 0.0
        %2524 = vmatpush1.xpose.msra.mxu0 0.0
        %2525 = vmatprep.subr.mxu0 0.0
        %2526 = vmatpush1.xpose.msra.mxu0 0.0
        %2527 = vmatprep.subr.mxu0 0.0
        %2528 = vmatpush1.xpose.msra.mxu0 0.0
        %2529 = vmatprep.subr.mxu0 0.0
        %2530 = vmatpush1.xpose.msra.mxu0 0.0
        %2531 = vmatprep.subr.mxu0 0.0
        %2532 = vmatpush1.xpose.msra.mxu0 0.0
        %2533 = vmatprep.subr.mxu0 0.0
        %2534 = vmatpush1.xpose.msra.mxu0 0.0
        %v2535 = vand.u32 %v436, 4294901760
        %v2536 = vsub.f32 %v436, %v2535
        %v2537 = vand.u32 %v2536, 4294901760
        %2538 = vmatprep.mubr.f32.mxu0 %v2537
        %v2539 = vand.u32 %v429, 4294901760
        %v2540 = vsub.f32 %v429, %v2539
        %v2541 = vand.u32 %v2540, 4294901760
        %2542 = vmatmul.mubr.f32.gmra.mrb[0].mxu0 %v2541
        %v2543 = vpop.f32.mrb[0].mxu0
        %v2544 = vadd.f32 %v2462, %v2543
        %v2545 = vpop.f32.mrb[0].mxu0
        %2546 = vdwg.mxu0
        %v2547 = vand.u32 %v227, 4294901760
        %v2548 = vsub.f32 %v227, %v2547
        %v2549 = vand.u32 %v2548, 4294901760
        %2550 = vmatprep.subr.mxu0 %v2549
        %v2551 = vand.u32 %v226, 4294901760
        %v2552 = vsub.f32 %v226, %v2551
        %v2553 = vand.u32 %v2552, 4294901760
        %2554 = vmatpush1.xpose.msra.mxu0 %v2553
        %v2555 = vand.u32 %v259, 4294901760
        %v2556 = vsub.f32 %v259, %v2555
        %v2557 = vand.u32 %v2556, 4294901760
        %2558 = vmatprep.subr.mxu0 %v2557
        %v2559 = vand.u32 %v258, 4294901760
        %v2560 = vsub.f32 %v258, %v2559
        %v2561 = vand.u32 %v2560, 4294901760
        %2562 = vmatpush1.xpose.msra.mxu0 %v2561
        %v2563 = vand.u32 %v291, 4294901760
        %v2564 = vsub.f32 %v291, %v2563
        %v2565 = vand.u32 %v2564, 4294901760
        %2566 = vmatprep.subr.mxu0 %v2565
        %v2567 = vand.u32 %v290, 4294901760
        %v2568 = vsub.f32 %v290, %v2567
        %v2569 = vand.u32 %v2568, 4294901760
        %2570 = vmatpush1.xpose.msra.mxu0 %v2569
        %2571 = vmatprep.subr.mxu0 0.0
        %2572 = vmatpush1.xpose.msra.mxu0 0.0
        %2573 = vmatprep.subr.mxu0 0.0
        %2574 = vmatpush1.xpose.msra.mxu0 0.0
        %2575 = vmatprep.subr.mxu0 0.0
        %2576 = vmatpush1.xpose.msra.mxu0 0.0
        %2577 = vmatprep.subr.mxu0 0.0
        %2578 = vmatpush1.xpose.msra.mxu0 0.0
        %2579 = vmatprep.subr.mxu0 0.0
        %2580 = vmatpush1.xpose.msra.mxu0 0.0
        %2581 = vmatprep.subr.mxu0 0.0
        %2582 = vmatpush1.xpose.msra.mxu0 0.0
        %2583 = vmatprep.subr.mxu0 0.0
        %2584 = vmatpush1.xpose.msra.mxu0 0.0
        %2585 = vmatprep.subr.mxu0 0.0
        %2586 = vmatpush1.xpose.msra.mxu0 0.0
        %2587 = vmatprep.subr.mxu0 0.0
        %2588 = vmatpush1.xpose.msra.mxu0 0.0
        %2589 = vmatprep.subr.mxu0 0.0
        %2590 = vmatpush1.xpose.msra.mxu0 0.0
        %2591 = vmatprep.subr.mxu0 0.0
        %2592 = vmatpush1.xpose.msra.mxu0 0.0
        %2593 = vmatprep.subr.mxu0 0.0
        %2594 = vmatpush1.xpose.msra.mxu0 0.0
        %2595 = vmatprep.subr.mxu0 0.0
        %2596 = vmatpush1.xpose.msra.mxu0 0.0
        %2597 = vmatprep.subr.mxu0 0.0
        %2598 = vmatpush1.xpose.msra.mxu0 0.0
        %2599 = vmatprep.subr.mxu0 0.0
        %2600 = vmatpush1.xpose.msra.mxu0 0.0
        %2601 = vmatprep.subr.mxu0 0.0
        %2602 = vmatpush1.xpose.msra.mxu0 0.0
        %2603 = vmatprep.subr.mxu0 0.0
        %2604 = vmatpush1.xpose.msra.mxu0 0.0
        %2605 = vmatprep.subr.mxu0 0.0
        %2606 = vmatpush1.xpose.msra.mxu0 0.0
        %2607 = vmatprep.subr.mxu0 0.0
        %2608 = vmatpush1.xpose.msra.mxu0 0.0
        %2609 = vmatprep.subr.mxu0 0.0
        %2610 = vmatpush1.xpose.msra.mxu0 0.0
        %2611 = vmatprep.subr.mxu0 0.0
        %2612 = vmatpush1.xpose.msra.mxu0 0.0
        %2613 = vmatprep.subr.mxu0 0.0
        %2614 = vmatpush1.xpose.msra.mxu0 0.0
        %2615 = vmatprep.subr.mxu0 0.0
        %2616 = vmatpush1.xpose.msra.mxu0 0.0
        %2617 = vmatprep.subr.mxu0 0.0
        %2618 = vmatpush1.xpose.msra.mxu0 0.0
        %2619 = vmatprep.subr.mxu0 0.0
        %2620 = vmatpush1.xpose.msra.mxu0 0.0
        %2621 = vmatprep.subr.mxu0 0.0
        %2622 = vmatpush1.xpose.msra.mxu0 0.0
        %2623 = vmatprep.subr.mxu0 0.0
        %2624 = vmatpush1.xpose.msra.mxu0 0.0
        %2625 = vmatprep.subr.mxu0 0.0
        %2626 = vmatpush1.xpose.msra.mxu0 0.0
        %2627 = vmatprep.subr.mxu0 0.0
        %2628 = vmatpush1.xpose.msra.mxu0 0.0
        %v2629 = vand.u32 %v436, 4294901760
        %2630 = vmatprep.mubr.f32.mxu0 %v2629
        %v2631 = vand.u32 %v429, 4294901760
        %2632 = vmatmul.mubr.f32.gmra.mrb[0].mxu0 %v2631
        %v2633 = vpop.f32.mrb[0].mxu0
        %v2634 = vadd.f32 %v2544, %v2633
        %v2635 = vpop.f32.mrb[0].mxu0
        %2636 = vdwg.mxu0
        %v2637 = vand.u32 %v227, 4294901760
        %2638 = vmatprep.subr.mxu0 %v2637
        %v2639 = vand.u32 %v226, 4294901760
        %2640 = vmatpush1.xpose.msra.mxu0 %v2639
        %v2641 = vand.u32 %v259, 4294901760
        %2642 = vmatprep.subr.mxu0 %v2641
        %v2643 = vand.u32 %v258, 4294901760
        %2644 = vmatpush1.xpose.msra.mxu0 %v2643
        %v2645 = vand.u32 %v291, 4294901760
        %2646 = vmatprep.subr.mxu0 %v2645
        %v2647 = vand.u32 %v290, 4294901760
        %2648 = vmatpush1.xpose.msra.mxu0 %v2647
        %2649 = vmatprep.subr.mxu0 0.0
        %2650 = vmatpush1.xpose.msra.mxu0 0.0
        %2651 = vmatprep.subr.mxu0 0.0
        %2652 = vmatpush1.xpose.msra.mxu0 0.0
        %2653 = vmatprep.subr.mxu0 0.0
        %2654 = vmatpush1.xpose.msra.mxu0 0.0
        %2655 = vmatprep.subr.mxu0 0.0
        %2656 = vmatpush1.xpose.msra.mxu0 0.0
        %2657 = vmatprep.subr.mxu0 0.0
        %2658 = vmatpush1.xpose.msra.mxu0 0.0
        %2659 = vmatprep.subr.mxu0 0.0
        %2660 = vmatpush1.xpose.msra.mxu0 0.0
        %2661 = vmatprep.subr.mxu0 0.0
        %2662 = vmatpush1.xpose.msra.mxu0 0.0
        %2663 = vmatprep.subr.mxu0 0.0
        %2664 = vmatpush1.xpose.msra.mxu0 0.0
        %2665 = vmatprep.subr.mxu0 0.0
        %2666 = vmatpush1.xpose.msra.mxu0 0.0
        %2667 = vmatprep.subr.mxu0 0.0
        %2668 = vmatpush1.xpose.msra.mxu0 0.0
        %2669 = vmatprep.subr.mxu0 0.0
        %2670 = vmatpush1.xpose.msra.mxu0 0.0
        %2671 = vmatprep.subr.mxu0 0.0
        %2672 = vmatpush1.xpose.msra.mxu0 0.0
        %2673 = vmatprep.subr.mxu0 0.0
        %2674 = vmatpush1.xpose.msra.mxu0 0.0
        %2675 = vmatprep.subr.mxu0 0.0
        %2676 = vmatpush1.xpose.msra.mxu0 0.0
        %2677 = vmatprep.subr.mxu0 0.0
        %2678 = vmatpush1.xpose.msra.mxu0 0.0
        %2679 = vmatprep.subr.mxu0 0.0
        %2680 = vmatpush1.xpose.msra.mxu0 0.0
        %2681 = vmatprep.subr.mxu0 0.0
        %2682 = vmatpush1.xpose.msra.mxu0 0.0
        %2683 = vmatprep.subr.mxu0 0.0
        %2684 = vmatpush1.xpose.msra.mxu0 0.0
        %2685 = vmatprep.subr.mxu0 0.0
        %2686 = vmatpush1.xpose.msra.mxu0 0.0
        %2687 = vmatprep.subr.mxu0 0.0
        %2688 = vmatpush1.xpose.msra.mxu0 0.0
        %2689 = vmatprep.subr.mxu0 0.0
        %2690 = vmatpush1.xpose.msra.mxu0 0.0
        %2691 = vmatprep.subr.mxu0 0.0
        %2692 = vmatpush1.xpose.msra.mxu0 0.0
        %2693 = vmatprep.subr.mxu0 0.0
        %2694 = vmatpush1.xpose.msra.mxu0 0.0
        %2695 = vmatprep.subr.mxu0 0.0
        %2696 = vmatpush1.xpose.msra.mxu0 0.0
        %2697 = vmatprep.subr.mxu0 0.0
        %2698 = vmatpush1.xpose.msra.mxu0 0.0
        %2699 = vmatprep.subr.mxu0 0.0
        %2700 = vmatpush1.xpose.msra.mxu0 0.0
        %2701 = vmatprep.subr.mxu0 0.0
        %2702 = vmatpush1.xpose.msra.mxu0 0.0
        %2703 = vmatprep.subr.mxu0 0.0
        %2704 = vmatpush1.xpose.msra.mxu0 0.0
        %2705 = vmatprep.subr.mxu0 0.0
        %2706 = vmatpush1.xpose.msra.mxu0 0.0
        %v2707 = vand.u32 %v436, 4294901760
        %2708 = vmatprep.mubr.f32.mxu0 %v2707
        %v2709 = vand.u32 %v429, 4294901760
        %2710 = vmatmul.mubr.f32.gmra.mrb[0].mxu0 %v2709
        %v2711 = vpop.f32.mrb[0].mxu0
        %v2712 = vadd.f32 %v2634, %v2711
        %v2713 = vpop.f32.mrb[0].mxu0
        %2714 = vdwg.mxu0
        %v2715 = vand.u32 %v229, 4294901760
        %2716 = vmatprep.subr.mxu0 %v2715
        %v2717 = vand.u32 %v228, 4294901760
        %2718 = vmatpush1.xpose.msra.mxu0 %v2717
        %v2719 = vand.u32 %v261, 4294901760
        %2720 = vmatprep.subr.mxu0 %v2719
        %v2721 = vand.u32 %v260, 4294901760
        %2722 = vmatpush1.xpose.msra.mxu0 %v2721
        %v2723 = vand.u32 %v293, 4294901760
        %2724 = vmatprep.subr.mxu0 %v2723
        %v2725 = vand.u32 %v292, 4294901760
        %2726 = vmatpush1.xpose.msra.mxu0 %v2725
        %2727 = vmatprep.subr.mxu0 0.0
        %2728 = vmatpush1.xpose.msra.mxu0 0.0
        %2729 = vmatprep.subr.mxu0 0.0
        %2730 = vmatpush1.xpose.msra.mxu0 0.0
        %2731 = vmatprep.subr.mxu0 0.0
        %2732 = vmatpush1.xpose.msra.mxu0 0.0
        %2733 = vmatprep.subr.mxu0 0.0
        %2734 = vmatpush1.xpose.msra.mxu0 0.0
        %2735 = vmatprep.subr.mxu0 0.0
        %2736 = vmatpush1.xpose.msra.mxu0 0.0
        %2737 = vmatprep.subr.mxu0 0.0
        %2738 = vmatpush1.xpose.msra.mxu0 0.0
        %2739 = vmatprep.subr.mxu0 0.0
        %2740 = vmatpush1.xpose.msra.mxu0 0.0
        %2741 = vmatprep.subr.mxu0 0.0
        %2742 = vmatpush1.xpose.msra.mxu0 0.0
        %2743 = vmatprep.subr.mxu0 0.0
        %2744 = vmatpush1.xpose.msra.mxu0 0.0
        %2745 = vmatprep.subr.mxu0 0.0
        %2746 = vmatpush1.xpose.msra.mxu0 0.0
        %2747 = vmatprep.subr.mxu0 0.0
        %2748 = vmatpush1.xpose.msra.mxu0 0.0
        %2749 = vmatprep.subr.mxu0 0.0
        %2750 = vmatpush1.xpose.msra.mxu0 0.0
        %2751 = vmatprep.subr.mxu0 0.0
        %2752 = vmatpush1.xpose.msra.mxu0 0.0
        %2753 = vmatprep.subr.mxu0 0.0
        %2754 = vmatpush1.xpose.msra.mxu0 0.0
        %2755 = vmatprep.subr.mxu0 0.0
        %2756 = vmatpush1.xpose.msra.mxu0 0.0
        %2757 = vmatprep.subr.mxu0 0.0
        %2758 = vmatpush1.xpose.msra.mxu0 0.0
        %2759 = vmatprep.subr.mxu0 0.0
        %2760 = vmatpush1.xpose.msra.mxu0 0.0
        %2761 = vmatprep.subr.mxu0 0.0
        %2762 = vmatpush1.xpose.msra.mxu0 0.0
        %2763 = vmatprep.subr.mxu0 0.0
        %2764 = vmatpush1.xpose.msra.mxu0 0.0
        %2765 = vmatprep.subr.mxu0 0.0
        %2766 = vmatpush1.xpose.msra.mxu0 0.0
        %2767 = vmatprep.subr.mxu0 0.0
        %2768 = vmatpush1.xpose.msra.mxu0 0.0
        %2769 = vmatprep.subr.mxu0 0.0
        %2770 = vmatpush1.xpose.msra.mxu0 0.0
        %2771 = vmatprep.subr.mxu0 0.0
        %2772 = vmatpush1.xpose.msra.mxu0 0.0
        %2773 = vmatprep.subr.mxu0 0.0
        %2774 = vmatpush1.xpose.msra.mxu0 0.0
        %2775 = vmatprep.subr.mxu0 0.0
        %2776 = vmatpush1.xpose.msra.mxu0 0.0
        %2777 = vmatprep.subr.mxu0 0.0
        %2778 = vmatpush1.xpose.msra.mxu0 0.0
        %2779 = vmatprep.subr.mxu0 0.0
        %2780 = vmatpush1.xpose.msra.mxu0 0.0
        %2781 = vmatprep.subr.mxu0 0.0
        %2782 = vmatpush1.xpose.msra.mxu0 0.0
        %2783 = vmatprep.subr.mxu0 0.0
        %2784 = vmatpush1.xpose.msra.mxu0 0.0
        %v2785 = vand.u32 %v450, 4294901760
        %v2786 = vsub.f32 %v450, %v2785
        %v2787 = vand.u32 %v2786, 4294901760
        %v2788 = vsub.f32 %v2786, %v2787
        %v2789 = vand.u32 %v2788, 4294901760
        %2790 = vmatprep.mubr.f32.mxu0 %v2789
        %v2791 = vand.u32 %v443, 4294901760
        %v2792 = vsub.f32 %v443, %v2791
        %v2793 = vand.u32 %v2792, 4294901760
        %v2794 = vsub.f32 %v2792, %v2793
        %v2795 = vand.u32 %v2794, 4294901760
        %2796 = vmatmul.mubr.f32.gmra.mrb[0].mxu0 %v2795
        %v2797 = vpop.f32.mrb[0].mxu0
        %v2798 = vadd.f32 %v2712, %v2797
        %v2799 = vpop.f32.mrb[0].mxu0
        %2800 = vdwg.mxu0
        %v2801 = vand.u32 %v229, 4294901760
        %v2802 = vsub.f32 %v229, %v2801
        %v2803 = vand.u32 %v2802, 4294901760
        %v2804 = vsub.f32 %v2802, %v2803
        %v2805 = vand.u32 %v2804, 4294901760
        %2806 = vmatprep.subr.mxu0 %v2805
        %v2807 = vand.u32 %v228, 4294901760
        %v2808 = vsub.f32 %v228, %v2807
        %v2809 = vand.u32 %v2808, 4294901760
        %v2810 = vsub.f32 %v2808, %v2809
        %v2811 = vand.u32 %v2810, 4294901760
        %2812 = vmatpush1.xpose.msra.mxu0 %v2811
        %v2813 = vand.u32 %v261, 4294901760
        %v2814 = vsub.f32 %v261, %v2813
        %v2815 = vand.u32 %v2814, 4294901760
        %v2816 = vsub.f32 %v2814, %v2815
        %v2817 = vand.u32 %v2816, 4294901760
        %2818 = vmatprep.subr.mxu0 %v2817
        %v2819 = vand.u32 %v260, 4294901760
        %v2820 = vsub.f32 %v260, %v2819
        %v2821 = vand.u32 %v2820, 4294901760
        %v2822 = vsub.f32 %v2820, %v2821
        %v2823 = vand.u32 %v2822, 4294901760
        %2824 = vmatpush1.xpose.msra.mxu0 %v2823
        %v2825 = vand.u32 %v293, 4294901760
        %v2826 = vsub.f32 %v293, %v2825
        %v2827 = vand.u32 %v2826, 4294901760
        %v2828 = vsub.f32 %v2826, %v2827
        %v2829 = vand.u32 %v2828, 4294901760
        %2830 = vmatprep.subr.mxu0 %v2829
        %v2831 = vand.u32 %v292, 4294901760
        %v2832 = vsub.f32 %v292, %v2831
        %v2833 = vand.u32 %v2832, 4294901760
        %v2834 = vsub.f32 %v2832, %v2833
        %v2835 = vand.u32 %v2834, 4294901760
        %2836 = vmatpush1.xpose.msra.mxu0 %v2835
        %2837 = vmatprep.subr.mxu0 0.0
        %2838 = vmatpush1.xpose.msra.mxu0 0.0
        %2839 = vmatprep.subr.mxu0 0.0
        %2840 = vmatpush1.xpose.msra.mxu0 0.0
        %2841 = vmatprep.subr.mxu0 0.0
        %2842 = vmatpush1.xpose.msra.mxu0 0.0
        %2843 = vmatprep.subr.mxu0 0.0
        %2844 = vmatpush1.xpose.msra.mxu0 0.0
        %2845 = vmatprep.subr.mxu0 0.0
        %2846 = vmatpush1.xpose.msra.mxu0 0.0
        %2847 = vmatprep.subr.mxu0 0.0
        %2848 = vmatpush1.xpose.msra.mxu0 0.0
        %2849 = vmatprep.subr.mxu0 0.0
        %2850 = vmatpush1.xpose.msra.mxu0 0.0
        %2851 = vmatprep.subr.mxu0 0.0
        %2852 = vmatpush1.xpose.msra.mxu0 0.0
        %2853 = vmatprep.subr.mxu0 0.0
        %2854 = vmatpush1.xpose.msra.mxu0 0.0
        %2855 = vmatprep.subr.mxu0 0.0
        %2856 = vmatpush1.xpose.msra.mxu0 0.0
        %2857 = vmatprep.subr.mxu0 0.0
        %2858 = vmatpush1.xpose.msra.mxu0 0.0
        %2859 = vmatprep.subr.mxu0 0.0
        %2860 = vmatpush1.xpose.msra.mxu0 0.0
        %2861 = vmatprep.subr.mxu0 0.0
        %2862 = vmatpush1.xpose.msra.mxu0 0.0
        %2863 = vmatprep.subr.mxu0 0.0
        %2864 = vmatpush1.xpose.msra.mxu0 0.0
        %2865 = vmatprep.subr.mxu0 0.0
        %2866 = vmatpush1.xpose.msra.mxu0 0.0
        %2867 = vmatprep.subr.mxu0 0.0
        %2868 = vmatpush1.xpose.msra.mxu0 0.0
        %2869 = vmatprep.subr.mxu0 0.0
        %2870 = vmatpush1.xpose.msra.mxu0 0.0
        %2871 = vmatprep.subr.mxu0 0.0
        %2872 = vmatpush1.xpose.msra.mxu0 0.0
        %2873 = vmatprep.subr.mxu0 0.0
        %2874 = vmatpush1.xpose.msra.mxu0 0.0
        %2875 = vmatprep.subr.mxu0 0.0
        %2876 = vmatpush1.xpose.msra.mxu0 0.0
        %2877 = vmatprep.subr.mxu0 0.0
        %2878 = vmatpush1.xpose.msra.mxu0 0.0
        %2879 = vmatprep.subr.mxu0 0.0
        %2880 = vmatpush1.xpose.msra.mxu0 0.0
        %2881 = vmatprep.subr.mxu0 0.0
        %2882 = vmatpush1.xpose.msra.mxu0 0.0
        %2883 = vmatprep.subr.mxu0 0.0
        %2884 = vmatpush1.xpose.msra.mxu0 0.0
        %2885 = vmatprep.subr.mxu0 0.0
        %2886 = vmatpush1.xpose.msra.mxu0 0.0
        %2887 = vmatprep.subr.mxu0 0.0
        %2888 = vmatpush1.xpose.msra.mxu0 0.0
        %2889 = vmatprep.subr.mxu0 0.0
        %2890 = vmatpush1.xpose.msra.mxu0 0.0
        %2891 = vmatprep.subr.mxu0 0.0
        %2892 = vmatpush1.xpose.msra.mxu0 0.0
        %2893 = vmatprep.subr.mxu0 0.0
        %2894 = vmatpush1.xpose.msra.mxu0 0.0
        %v2895 = vand.u32 %v450, 4294901760
        %2896 = vmatprep.mubr.f32.mxu0 %v2895
        %v2897 = vand.u32 %v443, 4294901760
        %2898 = vmatmul.mubr.f32.gmra.mrb[0].mxu0 %v2897
        %v2899 = vpop.f32.mrb[0].mxu0
        %v2900 = vadd.f32 %v2798, %v2899
        %v2901 = vpop.f32.mrb[0].mxu0
        %2902 = vdwg.mxu0
        %v2903 = vand.u32 %v229, 4294901760
        %v2904 = vsub.f32 %v229, %v2903
        %2905 = vmatprep.subr.mxu0 %v2904
        %v2906 = vand.u32 %v228, 4294901760
        %v2907 = vsub.f32 %v228, %v2906
        %2908 = vmatpush1.xpose.msra.mxu0 %v2907
        %v2909 = vand.u32 %v261, 4294901760
        %v2910 = vsub.f32 %v261, %v2909
        %2911 = vmatprep.subr.mxu0 %v2910
        %v2912 = vand.u32 %v260, 4294901760
        %v2913 = vsub.f32 %v260, %v2912
        %2914 = vmatpush1.xpose.msra.mxu0 %v2913
        %v2915 = vand.u32 %v293, 4294901760
        %v2916 = vsub.f32 %v293, %v2915
        %2917 = vmatprep.subr.mxu0 %v2916
        %v2918 = vand.u32 %v292, 4294901760
        %v2919 = vsub.f32 %v292, %v2918
        %2920 = vmatpush1.xpose.msra.mxu0 %v2919
        %2921 = vmatprep.subr.mxu0 0.0
        %2922 = vmatpush1.xpose.msra.mxu0 0.0
        %2923 = vmatprep.subr.mxu0 0.0
        %2924 = vmatpush1.xpose.msra.mxu0 0.0
        %2925 = vmatprep.subr.mxu0 0.0
        %2926 = vmatpush1.xpose.msra.mxu0 0.0
        %2927 = vmatprep.subr.mxu0 0.0
        %2928 = vmatpush1.xpose.msra.mxu0 0.0
        %2929 = vmatprep.subr.mxu0 0.0
        %2930 = vmatpush1.xpose.msra.mxu0 0.0
        %2931 = vmatprep.subr.mxu0 0.0
        %2932 = vmatpush1.xpose.msra.mxu0 0.0
        %2933 = vmatprep.subr.mxu0 0.0
        %2934 = vmatpush1.xpose.msra.mxu0 0.0
        %2935 = vmatprep.subr.mxu0 0.0
        %2936 = vmatpush1.xpose.msra.mxu0 0.0
        %2937 = vmatprep.subr.mxu0 0.0
        %2938 = vmatpush1.xpose.msra.mxu0 0.0
        %2939 = vmatprep.subr.mxu0 0.0
        %2940 = vmatpush1.xpose.msra.mxu0 0.0
        %2941 = vmatprep.subr.mxu0 0.0
        %2942 = vmatpush1.xpose.msra.mxu0 0.0
        %2943 = vmatprep.subr.mxu0 0.0
        %2944 = vmatpush1.xpose.msra.mxu0 0.0
        %2945 = vmatprep.subr.mxu0 0.0
        %2946 = vmatpush1.xpose.msra.mxu0 0.0
        %2947 = vmatprep.subr.mxu0 0.0
        %2948 = vmatpush1.xpose.msra.mxu0 0.0
        %2949 = vmatprep.subr.mxu0 0.0
        %2950 = vmatpush1.xpose.msra.mxu0 0.0
        %2951 = vmatprep.subr.mxu0 0.0
        %2952 = vmatpush1.xpose.msra.mxu0 0.0
        %2953 = vmatprep.subr.mxu0 0.0
        %2954 = vmatpush1.xpose.msra.mxu0 0.0
        %2955 = vmatprep.subr.mxu0 0.0
        %2956 = vmatpush1.xpose.msra.mxu0 0.0
        %2957 = vmatprep.subr.mxu0 0.0
        %2958 = vmatpush1.xpose.msra.mxu0 0.0
        %2959 = vmatprep.subr.mxu0 0.0
        %2960 = vmatpush1.xpose.msra.mxu0 0.0
        %2961 = vmatprep.subr.mxu0 0.0
        %2962 = vmatpush1.xpose.msra.mxu0 0.0
        %2963 = vmatprep.subr.mxu0 0.0
        %2964 = vmatpush1.xpose.msra.mxu0 0.0
        %2965 = vmatprep.subr.mxu0 0.0
        %2966 = vmatpush1.xpose.msra.mxu0 0.0
        %2967 = vmatprep.subr.mxu0 0.0
        %2968 = vmatpush1.xpose.msra.mxu0 0.0
        %2969 = vmatprep.subr.mxu0 0.0
        %2970 = vmatpush1.xpose.msra.mxu0 0.0
        %2971 = vmatprep.subr.mxu0 0.0
        %2972 = vmatpush1.xpose.msra.mxu0 0.0
        %2973 = vmatprep.subr.mxu0 0.0
        %2974 = vmatpush1.xpose.msra.mxu0 0.0
        %2975 = vmatprep.subr.mxu0 0.0
        %2976 = vmatpush1.xpose.msra.mxu0 0.0
        %2977 = vmatprep.subr.mxu0 0.0
        %2978 = vmatpush1.xpose.msra.mxu0 0.0
        %v2979 = vand.u32 %v450, 4294901760
        %v2980 = vsub.f32 %v450, %v2979
        %2981 = vmatprep.mubr.f32.mxu0 %v2980
        %v2982 = vand.u32 %v443, 4294901760
        %v2983 = vsub.f32 %v443, %v2982
        %2984 = vmatmul.mubr.f32.gmra.mrb[0].mxu0 %v2983
        %v2985 = vpop.f32.mrb[0].mxu0
        %v2986 = vadd.f32 %v2900, %v2985
        %v2987 = vpop.f32.mrb[0].mxu0
        %2988 = vdwg.mxu0
        %v2989 = vand.u32 %v229, 4294901760
        %2990 = vmatprep.subr.mxu0 %v2989
        %v2991 = vand.u32 %v228, 4294901760
        %2992 = vmatpush1.xpose.msra.mxu0 %v2991
        %v2993 = vand.u32 %v261, 4294901760
        %2994 = vmatprep.subr.mxu0 %v2993
        %v2995 = vand.u32 %v260, 4294901760
        %2996 = vmatpush1.xpose.msra.mxu0 %v2995
        %v2997 = vand.u32 %v293, 4294901760
        %2998 = vmatprep.subr.mxu0 %v2997
        %v2999 = vand.u32 %v292, 4294901760
        %3000 = vmatpush1.xpose.msra.mxu0 %v2999
        %3001 = vmatprep.subr.mxu0 0.0
        %3002 = vmatpush1.xpose.msra.mxu0 0.0
        %3003 = vmatprep.subr.mxu0 0.0
        %3004 = vmatpush1.xpose.msra.mxu0 0.0
        %3005 = vmatprep.subr.mxu0 0.0
        %3006 = vmatpush1.xpose.msra.mxu0 0.0
        %3007 = vmatprep.subr.mxu0 0.0
        %3008 = vmatpush1.xpose.msra.mxu0 0.0
        %3009 = vmatprep.subr.mxu0 0.0
        %3010 = vmatpush1.xpose.msra.mxu0 0.0
        %3011 = vmatprep.subr.mxu0 0.0
        %3012 = vmatpush1.xpose.msra.mxu0 0.0
        %3013 = vmatprep.subr.mxu0 0.0
        %3014 = vmatpush1.xpose.msra.mxu0 0.0
        %3015 = vmatprep.subr.mxu0 0.0
        %3016 = vmatpush1.xpose.msra.mxu0 0.0
        %3017 = vmatprep.subr.mxu0 0.0
        %3018 = vmatpush1.xpose.msra.mxu0 0.0
        %3019 = vmatprep.subr.mxu0 0.0
        %3020 = vmatpush1.xpose.msra.mxu0 0.0
        %3021 = vmatprep.subr.mxu0 0.0
        %3022 = vmatpush1.xpose.msra.mxu0 0.0
        %3023 = vmatprep.subr.mxu0 0.0
        %3024 = vmatpush1.xpose.msra.mxu0 0.0
        %3025 = vmatprep.subr.mxu0 0.0
        %3026 = vmatpush1.xpose.msra.mxu0 0.0
        %3027 = vmatprep.subr.mxu0 0.0
        %3028 = vmatpush1.xpose.msra.mxu0 0.0
        %3029 = vmatprep.subr.mxu0 0.0
        %3030 = vmatpush1.xpose.msra.mxu0 0.0
        %3031 = vmatprep.subr.mxu0 0.0
        %3032 = vmatpush1.xpose.msra.mxu0 0.0
        %3033 = vmatprep.subr.mxu0 0.0
        %3034 = vmatpush1.xpose.msra.mxu0 0.0
        %3035 = vmatprep.subr.mxu0 0.0
        %3036 = vmatpush1.xpose.msra.mxu0 0.0
        %3037 = vmatprep.subr.mxu0 0.0
        %3038 = vmatpush1.xpose.msra.mxu0 0.0
        %3039 = vmatprep.subr.mxu0 0.0
        %3040 = vmatpush1.xpose.msra.mxu0 0.0
        %3041 = vmatprep.subr.mxu0 0.0
        %3042 = vmatpush1.xpose.msra.mxu0 0.0
        %3043 = vmatprep.subr.mxu0 0.0
        %3044 = vmatpush1.xpose.msra.mxu0 0.0
        %3045 = vmatprep.subr.mxu0 0.0
        %3046 = vmatpush1.xpose.msra.mxu0 0.0
        %3047 = vmatprep.subr.mxu0 0.0
        %3048 = vmatpush1.xpose.msra.mxu0 0.0
        %3049 = vmatprep.subr.mxu0 0.0
        %3050 = vmatpush1.xpose.msra.mxu0 0.0
        %3051 = vmatprep.subr.mxu0 0.0
        %3052 = vmatpush1.xpose.msra.mxu0 0.0
        %3053 = vmatprep.subr.mxu0 0.0
        %3054 = vmatpush1.xpose.msra.mxu0 0.0
        %3055 = vmatprep.subr.mxu0 0.0
        %3056 = vmatpush1.xpose.msra.mxu0 0.0
        %3057 = vmatprep.subr.mxu0 0.0
        %3058 = vmatpush1.xpose.msra.mxu0 0.0
        %v3059 = vand.u32 %v450, 4294901760
        %v3060 = vsub.f32 %v450, %v3059
        %v3061 = vand.u32 %v3060, 4294901760
        %3062 = vmatprep.mubr.f32.mxu0 %v3061
        %v3063 = vand.u32 %v443, 4294901760
        %v3064 = vsub.f32 %v443, %v3063
        %v3065 = vand.u32 %v3064, 4294901760
        %3066 = vmatmul.mubr.f32.gmra.mrb[0].mxu0 %v3065
        %v3067 = vpop.f32.mrb[0].mxu0
        %v3068 = vadd.f32 %v2986, %v3067
        %v3069 = vpop.f32.mrb[0].mxu0
        %3070 = vdwg.mxu0
        %v3071 = vand.u32 %v229, 4294901760
        %v3072 = vsub.f32 %v229, %v3071
        %v3073 = vand.u32 %v3072, 4294901760
        %3074 = vmatprep.subr.mxu0 %v3073
        %v3075 = vand.u32 %v228, 4294901760
        %v3076 = vsub.f32 %v228, %v3075
        %v3077 = vand.u32 %v3076, 4294901760
        %3078 = vmatpush1.xpose.msra.mxu0 %v3077
        %v3079 = vand.u32 %v261, 4294901760
        %v3080 = vsub.f32 %v261, %v3079
        %v3081 = vand.u32 %v3080, 4294901760
        %3082 = vmatprep.subr.mxu0 %v3081
        %v3083 = vand.u32 %v260, 4294901760
        %v3084 = vsub.f32 %v260, %v3083
        %v3085 = vand.u32 %v3084, 4294901760
        %3086 = vmatpush1.xpose.msra.mxu0 %v3085
        %v3087 = vand.u32 %v293, 4294901760
        %v3088 = vsub.f32 %v293, %v3087
        %v3089 = vand.u32 %v3088, 4294901760
        %3090 = vmatprep.subr.mxu0 %v3089
        %v3091 = vand.u32 %v292, 4294901760
        %v3092 = vsub.f32 %v292, %v3091
        %v3093 = vand.u32 %v3092, 4294901760
        %3094 = vmatpush1.xpose.msra.mxu0 %v3093
        %3095 = vmatprep.subr.mxu0 0.0
        %3096 = vmatpush1.xpose.msra.mxu0 0.0
        %3097 = vmatprep.subr.mxu0 0.0
        %3098 = vmatpush1.xpose.msra.mxu0 0.0
        %3099 = vmatprep.subr.mxu0 0.0
        %3100 = vmatpush1.xpose.msra.mxu0 0.0
        %3101 = vmatprep.subr.mxu0 0.0
        %3102 = vmatpush1.xpose.msra.mxu0 0.0
        %3103 = vmatprep.subr.mxu0 0.0
        %3104 = vmatpush1.xpose.msra.mxu0 0.0
        %3105 = vmatprep.subr.mxu0 0.0
        %3106 = vmatpush1.xpose.msra.mxu0 0.0
        %3107 = vmatprep.subr.mxu0 0.0
        %3108 = vmatpush1.xpose.msra.mxu0 0.0
        %3109 = vmatprep.subr.mxu0 0.0
        %3110 = vmatpush1.xpose.msra.mxu0 0.0
        %3111 = vmatprep.subr.mxu0 0.0
        %3112 = vmatpush1.xpose.msra.mxu0 0.0
        %3113 = vmatprep.subr.mxu0 0.0
        %3114 = vmatpush1.xpose.msra.mxu0 0.0
        %3115 = vmatprep.subr.mxu0 0.0
        %3116 = vmatpush1.xpose.msra.mxu0 0.0
        %3117 = vmatprep.subr.mxu0 0.0
        %3118 = vmatpush1.xpose.msra.mxu0 0.0
        %3119 = vmatprep.subr.mxu0 0.0
        %3120 = vmatpush1.xpose.msra.mxu0 0.0
        %3121 = vmatprep.subr.mxu0 0.0
        %3122 = vmatpush1.xpose.msra.mxu0 0.0
        %3123 = vmatprep.subr.mxu0 0.0
        %3124 = vmatpush1.xpose.msra.mxu0 0.0
        %3125 = vmatprep.subr.mxu0 0.0
        %3126 = vmatpush1.xpose.msra.mxu0 0.0
        %3127 = vmatprep.subr.mxu0 0.0
        %3128 = vmatpush1.xpose.msra.mxu0 0.0
        %3129 = vmatprep.subr.mxu0 0.0
        %3130 = vmatpush1.xpose.msra.mxu0 0.0
        %3131 = vmatprep.subr.mxu0 0.0
        %3132 = vmatpush1.xpose.msra.mxu0 0.0
        %3133 = vmatprep.subr.mxu0 0.0
        %3134 = vmatpush1.xpose.msra.mxu0 0.0
        %3135 = vmatprep.subr.mxu0 0.0
        %3136 = vmatpush1.xpose.msra.mxu0 0.0
        %3137 = vmatprep.subr.mxu0 0.0
        %3138 = vmatpush1.xpose.msra.mxu0 0.0
        %3139 = vmatprep.subr.mxu0 0.0
        %3140 = vmatpush1.xpose.msra.mxu0 0.0
        %3141 = vmatprep.subr.mxu0 0.0
        %3142 = vmatpush1.xpose.msra.mxu0 0.0
        %3143 = vmatprep.subr.mxu0 0.0
        %3144 = vmatpush1.xpose.msra.mxu0 0.0
        %3145 = vmatprep.subr.mxu0 0.0
        %3146 = vmatpush1.xpose.msra.mxu0 0.0
        %3147 = vmatprep.subr.mxu0 0.0
        %3148 = vmatpush1.xpose.msra.mxu0 0.0
        %3149 = vmatprep.subr.mxu0 0.0
        %3150 = vmatpush1.xpose.msra.mxu0 0.0
        %3151 = vmatprep.subr.mxu0 0.0
        %3152 = vmatpush1.xpose.msra.mxu0 0.0
        %v3153 = vand.u32 %v450, 4294901760
        %3154 = vmatprep.mubr.f32.mxu0 %v3153
        %v3155 = vand.u32 %v443, 4294901760
        %3156 = vmatmul.mubr.f32.gmra.mrb[0].mxu0 %v3155
        %v3157 = vpop.f32.mrb[0].mxu0
        %v3158 = vadd.f32 %v3068, %v3157
        %v3159 = vpop.f32.mrb[0].mxu0
        %3160 = vdwg.mxu0
        %v3161 = vand.u32 %v229, 4294901760
        %3162 = vmatprep.subr.mxu0 %v3161
        %v3163 = vand.u32 %v228, 4294901760
        %3164 = vmatpush1.xpose.msra.mxu0 %v3163
        %v3165 = vand.u32 %v261, 4294901760
        %3166 = vmatprep.subr.mxu0 %v3165
        %v3167 = vand.u32 %v260, 4294901760
        %3168 = vmatpush1.xpose.msra.mxu0 %v3167
        %v3169 = vand.u32 %v293, 4294901760
        %3170 = vmatprep.subr.mxu0 %v3169
        %v3171 = vand.u32 %v292, 4294901760
        %3172 = vmatpush1.xpose.msra.mxu0 %v3171
        %3173 = vmatprep.subr.mxu0 0.0
        %3174 = vmatpush1.xpose.msra.mxu0 0.0
        %3175 = vmatprep.subr.mxu0 0.0
        %3176 = vmatpush1.xpose.msra.mxu0 0.0
        %3177 = vmatprep.subr.mxu0 0.0
        %3178 = vmatpush1.xpose.msra.mxu0 0.0
        %3179 = vmatprep.subr.mxu0 0.0
        %3180 = vmatpush1.xpose.msra.mxu0 0.0
        %3181 = vmatprep.subr.mxu0 0.0
        %3182 = vmatpush1.xpose.msra.mxu0 0.0
        %3183 = vmatprep.subr.mxu0 0.0
        %3184 = vmatpush1.xpose.msra.mxu0 0.0
        %3185 = vmatprep.subr.mxu0 0.0
        %3186 = vmatpush1.xpose.msra.mxu0 0.0
        %3187 = vmatprep.subr.mxu0 0.0
        %3188 = vmatpush1.xpose.msra.mxu0 0.0
        %3189 = vmatprep.subr.mxu0 0.0
        %3190 = vmatpush1.xpose.msra.mxu0 0.0
        %3191 = vmatprep.subr.mxu0 0.0
        %3192 = vmatpush1.xpose.msra.mxu0 0.0
        %3193 = vmatprep.subr.mxu0 0.0
        %3194 = vmatpush1.xpose.msra.mxu0 0.0
        %3195 = vmatprep.subr.mxu0 0.0
        %3196 = vmatpush1.xpose.msra.mxu0 0.0
        %3197 = vmatprep.subr.mxu0 0.0
        %3198 = vmatpush1.xpose.msra.mxu0 0.0
        %3199 = vmatprep.subr.mxu0 0.0
        %3200 = vmatpush1.xpose.msra.mxu0 0.0
        %3201 = vmatprep.subr.mxu0 0.0
        %3202 = vmatpush1.xpose.msra.mxu0 0.0
        %3203 = vmatprep.subr.mxu0 0.0
        %3204 = vmatpush1.xpose.msra.mxu0 0.0
        %3205 = vmatprep.subr.mxu0 0.0
        %3206 = vmatpush1.xpose.msra.mxu0 0.0
        %3207 = vmatprep.subr.mxu0 0.0
        %3208 = vmatpush1.xpose.msra.mxu0 0.0
        %3209 = vmatprep.subr.mxu0 0.0
        %3210 = vmatpush1.xpose.msra.mxu0 0.0
        %3211 = vmatprep.subr.mxu0 0.0
        %3212 = vmatpush1.xpose.msra.mxu0 0.0
        %3213 = vmatprep.subr.mxu0 0.0
        %3214 = vmatpush1.xpose.msra.mxu0 0.0
        %3215 = vmatprep.subr.mxu0 0.0
        %3216 = vmatpush1.xpose.msra.mxu0 0.0
        %3217 = vmatprep.subr.mxu0 0.0
        %3218 = vmatpush1.xpose.msra.mxu0 0.0
        %3219 = vmatprep.subr.mxu0 0.0
        %3220 = vmatpush1.xpose.msra.mxu0 0.0
        %3221 = vmatprep.subr.mxu0 0.0
        %3222 = vmatpush1.xpose.msra.mxu0 0.0
        %3223 = vmatprep.subr.mxu0 0.0
        %3224 = vmatpush1.xpose.msra.mxu0 0.0
        %3225 = vmatprep.subr.mxu0 0.0
        %3226 = vmatpush1.xpose.msra.mxu0 0.0
        %3227 = vmatprep.subr.mxu0 0.0
        %3228 = vmatpush1.xpose.msra.mxu0 0.0
        %3229 = vmatprep.subr.mxu0 0.0
        %3230 = vmatpush1.xpose.msra.mxu0 0.0
        %v3231 = vand.u32 %v450, 4294901760
        %3232 = vmatprep.mubr.f32.mxu0 %v3231
        %v3233 = vand.u32 %v443, 4294901760
        %3234 = vmatmul.mubr.f32.gmra.mrb[0].mxu0 %v3233
        %v3235 = vpop.f32.mrb[0].mxu0
        %v3236 = vadd.f32 %v3158, %v3235
        %v3237 = vpop.f32.mrb[0].mxu0
        %3238 = vdwg.mxu0
        %v3239 = vand.u32 %v231, 4294901760
        %3240 = vmatprep.subr.mxu0 %v3239
        %v3241 = vand.u32 %v230, 4294901760
        %3242 = vmatpush1.xpose.msra.mxu0 %v3241
        %v3243 = vand.u32 %v263, 4294901760
        %3244 = vmatprep.subr.mxu0 %v3243
        %v3245 = vand.u32 %v262, 4294901760
        %3246 = vmatpush1.xpose.msra.mxu0 %v3245
        %v3247 = vand.u32 %v295, 4294901760
        %3248 = vmatprep.subr.mxu0 %v3247
        %v3249 = vand.u32 %v294, 4294901760
        %3250 = vmatpush1.xpose.msra.mxu0 %v3249
        %3251 = vmatprep.subr.mxu0 0.0
        %3252 = vmatpush1.xpose.msra.mxu0 0.0
        %3253 = vmatprep.subr.mxu0 0.0
        %3254 = vmatpush1.xpose.msra.mxu0 0.0
        %3255 = vmatprep.subr.mxu0 0.0
        %3256 = vmatpush1.xpose.msra.mxu0 0.0
        %3257 = vmatprep.subr.mxu0 0.0
        %3258 = vmatpush1.xpose.msra.mxu0 0.0
        %3259 = vmatprep.subr.mxu0 0.0
        %3260 = vmatpush1.xpose.msra.mxu0 0.0
        %3261 = vmatprep.subr.mxu0 0.0
        %3262 = vmatpush1.xpose.msra.mxu0 0.0
        %3263 = vmatprep.subr.mxu0 0.0
        %3264 = vmatpush1.xpose.msra.mxu0 0.0
        %3265 = vmatprep.subr.mxu0 0.0
        %3266 = vmatpush1.xpose.msra.mxu0 0.0
        %3267 = vmatprep.subr.mxu0 0.0
        %3268 = vmatpush1.xpose.msra.mxu0 0.0
        %3269 = vmatprep.subr.mxu0 0.0
        %3270 = vmatpush1.xpose.msra.mxu0 0.0
        %3271 = vmatprep.subr.mxu0 0.0
        %3272 = vmatpush1.xpose.msra.mxu0 0.0
        %3273 = vmatprep.subr.mxu0 0.0
        %3274 = vmatpush1.xpose.msra.mxu0 0.0
        %3275 = vmatprep.subr.mxu0 0.0
        %3276 = vmatpush1.xpose.msra.mxu0 0.0
        %3277 = vmatprep.subr.mxu0 0.0
        %3278 = vmatpush1.xpose.msra.mxu0 0.0
        %3279 = vmatprep.subr.mxu0 0.0
        %3280 = vmatpush1.xpose.msra.mxu0 0.0
        %3281 = vmatprep.subr.mxu0 0.0
        %3282 = vmatpush1.xpose.msra.mxu0 0.0
        %3283 = vmatprep.subr.mxu0 0.0
        %3284 = vmatpush1.xpose.msra.mxu0 0.0
        %3285 = vmatprep.subr.mxu0 0.0
        %3286 = vmatpush1.xpose.msra.mxu0 0.0
        %3287 = vmatprep.subr.mxu0 0.0
        %3288 = vmatpush1.xpose.msra.mxu0 0.0
        %3289 = vmatprep.subr.mxu0 0.0
        %3290 = vmatpush1.xpose.msra.mxu0 0.0
        %3291 = vmatprep.subr.mxu0 0.0
        %3292 = vmatpush1.xpose.msra.mxu0 0.0
        %3293 = vmatprep.subr.mxu0 0.0
        %3294 = vmatpush1.xpose.msra.mxu0 0.0
        %3295 = vmatprep.subr.mxu0 0.0
        %3296 = vmatpush1.xpose.msra.mxu0 0.0
        %3297 = vmatprep.subr.mxu0 0.0
        %3298 = vmatpush1.xpose.msra.mxu0 0.0
        %3299 = vmatprep.subr.mxu0 0.0
        %3300 = vmatpush1.xpose.msra.mxu0 0.0
        %3301 = vmatprep.subr.mxu0 0.0
        %3302 = vmatpush1.xpose.msra.mxu0 0.0
        %3303 = vmatprep.subr.mxu0 0.0
        %3304 = vmatpush1.xpose.msra.mxu0 0.0
        %3305 = vmatprep.subr.mxu0 0.0
        %3306 = vmatpush1.xpose.msra.mxu0 0.0
        %3307 = vmatprep.subr.mxu0 0.0
        %3308 = vmatpush1.xpose.msra.mxu0 0.0
        %v3309 = vand.u32 %v464, 4294901760
        %v3310 = vsub.f32 %v464, %v3309
        %v3311 = vand.u32 %v3310, 4294901760
        %v3312 = vsub.f32 %v3310, %v3311
        %v3313 = vand.u32 %v3312, 4294901760
        %3314 = vmatprep.mubr.f32.mxu0 %v3313
        %v3315 = vand.u32 %v457, 4294901760
        %v3316 = vsub.f32 %v457, %v3315
        %v3317 = vand.u32 %v3316, 4294901760
        %v3318 = vsub.f32 %v3316, %v3317
        %v3319 = vand.u32 %v3318, 4294901760
        %3320 = vmatmul.mubr.f32.gmra.mrb[0].mxu0 %v3319
        %v3321 = vpop.f32.mrb[0].mxu0
        %v3322 = vadd.f32 %v3236, %v3321
        %v3323 = vpop.f32.mrb[0].mxu0
        %3324 = vdwg.mxu0
        %v3325 = vand.u32 %v231, 4294901760
        %v3326 = vsub.f32 %v231, %v3325
        %v3327 = vand.u32 %v3326, 4294901760
        %v3328 = vsub.f32 %v3326, %v3327
        %v3329 = vand.u32 %v3328, 4294901760
        %3330 = vmatprep.subr.mxu0 %v3329
        %v3331 = vand.u32 %v230, 4294901760
        %v3332 = vsub.f32 %v230, %v3331
        %v3333 = vand.u32 %v3332, 4294901760
        %v3334 = vsub.f32 %v3332, %v3333
        %v3335 = vand.u32 %v3334, 4294901760
        %3336 = vmatpush1.xpose.msra.mxu0 %v3335
        %v3337 = vand.u32 %v263, 4294901760
        %v3338 = vsub.f32 %v263, %v3337
        %v3339 = vand.u32 %v3338, 4294901760
        %v3340 = vsub.f32 %v3338, %v3339
        %v3341 = vand.u32 %v3340, 4294901760
        %3342 = vmatprep.subr.mxu0 %v3341
        %v3343 = vand.u32 %v262, 4294901760
        %v3344 = vsub.f32 %v262, %v3343
        %v3345 = vand.u32 %v3344, 4294901760
        %v3346 = vsub.f32 %v3344, %v3345
        %v3347 = vand.u32 %v3346, 4294901760
        %3348 = vmatpush1.xpose.msra.mxu0 %v3347
        %v3349 = vand.u32 %v295, 4294901760
        %v3350 = vsub.f32 %v295, %v3349
        %v3351 = vand.u32 %v3350, 4294901760
        %v3352 = vsub.f32 %v3350, %v3351
        %v3353 = vand.u32 %v3352, 4294901760
        %3354 = vmatprep.subr.mxu0 %v3353
        %v3355 = vand.u32 %v294, 4294901760
        %v3356 = vsub.f32 %v294, %v3355
        %v3357 = vand.u32 %v3356, 4294901760
        %v3358 = vsub.f32 %v3356, %v3357
        %v3359 = vand.u32 %v3358, 4294901760
        %3360 = vmatpush1.xpose.msra.mxu0 %v3359
        %3361 = vmatprep.subr.mxu0 0.0
        %3362 = vmatpush1.xpose.msra.mxu0 0.0
        %3363 = vmatprep.subr.mxu0 0.0
        %3364 = vmatpush1.xpose.msra.mxu0 0.0
        %3365 = vmatprep.subr.mxu0 0.0
        %3366 = vmatpush1.xpose.msra.mxu0 0.0
        %3367 = vmatprep.subr.mxu0 0.0
        %3368 = vmatpush1.xpose.msra.mxu0 0.0
        %3369 = vmatprep.subr.mxu0 0.0
        %3370 = vmatpush1.xpose.msra.mxu0 0.0
        %3371 = vmatprep.subr.mxu0 0.0
        %3372 = vmatpush1.xpose.msra.mxu0 0.0
        %3373 = vmatprep.subr.mxu0 0.0
        %3374 = vmatpush1.xpose.msra.mxu0 0.0
        %3375 = vmatprep.subr.mxu0 0.0
        %3376 = vmatpush1.xpose.msra.mxu0 0.0
        %3377 = vmatprep.subr.mxu0 0.0
        %3378 = vmatpush1.xpose.msra.mxu0 0.0
        %3379 = vmatprep.subr.mxu0 0.0
        %3380 = vmatpush1.xpose.msra.mxu0 0.0
        %3381 = vmatprep.subr.mxu0 0.0
        %3382 = vmatpush1.xpose.msra.mxu0 0.0
        %3383 = vmatprep.subr.mxu0 0.0
        %3384 = vmatpush1.xpose.msra.mxu0 0.0
        %3385 = vmatprep.subr.mxu0 0.0
        %3386 = vmatpush1.xpose.msra.mxu0 0.0
        %3387 = vmatprep.subr.mxu0 0.0
        %3388 = vmatpush1.xpose.msra.mxu0 0.0
        %3389 = vmatprep.subr.mxu0 0.0
        %3390 = vmatpush1.xpose.msra.mxu0 0.0
        %3391 = vmatprep.subr.mxu0 0.0
        %3392 = vmatpush1.xpose.msra.mxu0 0.0
        %3393 = vmatprep.subr.mxu0 0.0
        %3394 = vmatpush1.xpose.msra.mxu0 0.0
        %3395 = vmatprep.subr.mxu0 0.0
        %3396 = vmatpush1.xpose.msra.mxu0 0.0
        %3397 = vmatprep.subr.mxu0 0.0
        %3398 = vmatpush1.xpose.msra.mxu0 0.0
        %3399 = vmatprep.subr.mxu0 0.0
        %3400 = vmatpush1.xpose.msra.mxu0 0.0
        %3401 = vmatprep.subr.mxu0 0.0
        %3402 = vmatpush1.xpose.msra.mxu0 0.0
        %3403 = vmatprep.subr.mxu0 0.0
        %3404 = vmatpush1.xpose.msra.mxu0 0.0
        %3405 = vmatprep.subr.mxu0 0.0
        %3406 = vmatpush1.xpose.msra.mxu0 0.0
        %3407 = vmatprep.subr.mxu0 0.0
        %3408 = vmatpush1.xpose.msra.mxu0 0.0
        %3409 = vmatprep.subr.mxu0 0.0
        %3410 = vmatpush1.xpose.msra.mxu0 0.0
        %3411 = vmatprep.subr.mxu0 0.0
        %3412 = vmatpush1.xpose.msra.mxu0 0.0
        %3413 = vmatprep.subr.mxu0 0.0
        %3414 = vmatpush1.xpose.msra.mxu0 0.0
        %3415 = vmatprep.subr.mxu0 0.0
        %3416 = vmatpush1.xpose.msra.mxu0 0.0
        %3417 = vmatprep.subr.mxu0 0.0
        %3418 = vmatpush1.xpose.msra.mxu0 0.0
        %v3419 = vand.u32 %v464, 4294901760
        %3420 = vmatprep.mubr.f32.mxu0 %v3419
        %v3421 = vand.u32 %v457, 4294901760
        %3422 = vmatmul.mubr.f32.gmra.mrb[0].mxu0 %v3421
        %v3423 = vpop.f32.mrb[0].mxu0
        %v3424 = vadd.f32 %v3322, %v3423
        %v3425 = vpop.f32.mrb[0].mxu0
        %3426 = vdwg.mxu0
        %v3427 = vand.u32 %v231, 4294901760
        %v3428 = vsub.f32 %v231, %v3427
        %3429 = vmatprep.subr.mxu0 %v3428
        %v3430 = vand.u32 %v230, 4294901760
        %v3431 = vsub.f32 %v230, %v3430
        %3432 = vmatpush1.xpose.msra.mxu0 %v3431
        %v3433 = vand.u32 %v263, 4294901760
        %v3434 = vsub.f32 %v263, %v3433
        %3435 = vmatprep.subr.mxu0 %v3434
        %v3436 = vand.u32 %v262, 4294901760
        %v3437 = vsub.f32 %v262, %v3436
        %3438 = vmatpush1.xpose.msra.mxu0 %v3437
        %v3439 = vand.u32 %v295, 4294901760
        %v3440 = vsub.f32 %v295, %v3439
        %3441 = vmatprep.subr.mxu0 %v3440
        %v3442 = vand.u32 %v294, 4294901760
        %v3443 = vsub.f32 %v294, %v3442
        %3444 = vmatpush1.xpose.msra.mxu0 %v3443
        %3445 = vmatprep.subr.mxu0 0.0
        %3446 = vmatpush1.xpose.msra.mxu0 0.0
        %3447 = vmatprep.subr.mxu0 0.0
        %3448 = vmatpush1.xpose.msra.mxu0 0.0
        %3449 = vmatprep.subr.mxu0 0.0
        %3450 = vmatpush1.xpose.msra.mxu0 0.0
        %3451 = vmatprep.subr.mxu0 0.0
        %3452 = vmatpush1.xpose.msra.mxu0 0.0
        %3453 = vmatprep.subr.mxu0 0.0
        %3454 = vmatpush1.xpose.msra.mxu0 0.0
        %3455 = vmatprep.subr.mxu0 0.0
        %3456 = vmatpush1.xpose.msra.mxu0 0.0
        %3457 = vmatprep.subr.mxu0 0.0
        %3458 = vmatpush1.xpose.msra.mxu0 0.0
        %3459 = vmatprep.subr.mxu0 0.0
        %3460 = vmatpush1.xpose.msra.mxu0 0.0
        %3461 = vmatprep.subr.mxu0 0.0
        %3462 = vmatpush1.xpose.msra.mxu0 0.0
        %3463 = vmatprep.subr.mxu0 0.0
        %3464 = vmatpush1.xpose.msra.mxu0 0.0
        %3465 = vmatprep.subr.mxu0 0.0
        %3466 = vmatpush1.xpose.msra.mxu0 0.0
        %3467 = vmatprep.subr.mxu0 0.0
        %3468 = vmatpush1.xpose.msra.mxu0 0.0
        %3469 = vmatprep.subr.mxu0 0.0
        %3470 = vmatpush1.xpose.msra.mxu0 0.0
        %3471 = vmatprep.subr.mxu0 0.0
        %3472 = vmatpush1.xpose.msra.mxu0 0.0
        %3473 = vmatprep.subr.mxu0 0.0
        %3474 = vmatpush1.xpose.msra.mxu0 0.0
        %3475 = vmatprep.subr.mxu0 0.0
        %3476 = vmatpush1.xpose.msra.mxu0 0.0
        %3477 = vmatprep.subr.mxu0 0.0
        %3478 = vmatpush1.xpose.msra.mxu0 0.0
        %3479 = vmatprep.subr.mxu0 0.0
        %3480 = vmatpush1.xpose.msra.mxu0 0.0
        %3481 = vmatprep.subr.mxu0 0.0
        %3482 = vmatpush1.xpose.msra.mxu0 0.0
        %3483 = vmatprep.subr.mxu0 0.0
        %3484 = vmatpush1.xpose.msra.mxu0 0.0
        %3485 = vmatprep.subr.mxu0 0.0
        %3486 = vmatpush1.xpose.msra.mxu0 0.0
        %3487 = vmatprep.subr.mxu0 0.0
        %3488 = vmatpush1.xpose.msra.mxu0 0.0
        %3489 = vmatprep.subr.mxu0 0.0
        %3490 = vmatpush1.xpose.msra.mxu0 0.0
        %3491 = vmatprep.subr.mxu0 0.0
        %3492 = vmatpush1.xpose.msra.mxu0 0.0
        %3493 = vmatprep.subr.mxu0 0.0
        %3494 = vmatpush1.xpose.msra.mxu0 0.0
        %3495 = vmatprep.subr.mxu0 0.0
        %3496 = vmatpush1.xpose.msra.mxu0 0.0
        %3497 = vmatprep.subr.mxu0 0.0
        %3498 = vmatpush1.xpose.msra.mxu0 0.0
        %3499 = vmatprep.subr.mxu0 0.0
        %3500 = vmatpush1.xpose.msra.mxu0 0.0
        %3501 = vmatprep.subr.mxu0 0.0
        %3502 = vmatpush1.xpose.msra.mxu0 0.0
        %v3503 = vand.u32 %v464, 4294901760
        %v3504 = vsub.f32 %v464, %v3503
        %3505 = vmatprep.mubr.f32.mxu0 %v3504
        %v3506 = vand.u32 %v457, 4294901760
        %v3507 = vsub.f32 %v457, %v3506
        %3508 = vmatmul.mubr.f32.gmra.mrb[0].mxu0 %v3507
        %v3509 = vpop.f32.mrb[0].mxu0
        %v3510 = vadd.f32 %v3424, %v3509
        %v3511 = vpop.f32.mrb[0].mxu0
        %3512 = vdwg.mxu0
        %v3513 = vand.u32 %v231, 4294901760
        %3514 = vmatprep.subr.mxu0 %v3513
        %v3515 = vand.u32 %v230, 4294901760
        %3516 = vmatpush1.xpose.msra.mxu0 %v3515
        %v3517 = vand.u32 %v263, 4294901760
        %3518 = vmatprep.subr.mxu0 %v3517
        %v3519 = vand.u32 %v262, 4294901760
        %3520 = vmatpush1.xpose.msra.mxu0 %v3519
        %v3521 = vand.u32 %v295, 4294901760
        %3522 = vmatprep.subr.mxu0 %v3521
        %v3523 = vand.u32 %v294, 4294901760
        %3524 = vmatpush1.xpose.msra.mxu0 %v3523
        %3525 = vmatprep.subr.mxu0 0.0
        %3526 = vmatpush1.xpose.msra.mxu0 0.0
        %3527 = vmatprep.subr.mxu0 0.0
        %3528 = vmatpush1.xpose.msra.mxu0 0.0
        %3529 = vmatprep.subr.mxu0 0.0
        %3530 = vmatpush1.xpose.msra.mxu0 0.0
        %3531 = vmatprep.subr.mxu0 0.0
        %3532 = vmatpush1.xpose.msra.mxu0 0.0
        %3533 = vmatprep.subr.mxu0 0.0
        %3534 = vmatpush1.xpose.msra.mxu0 0.0
        %3535 = vmatprep.subr.mxu0 0.0
        %3536 = vmatpush1.xpose.msra.mxu0 0.0
        %3537 = vmatprep.subr.mxu0 0.0
        %3538 = vmatpush1.xpose.msra.mxu0 0.0
        %3539 = vmatprep.subr.mxu0 0.0
        %3540 = vmatpush1.xpose.msra.mxu0 0.0
        %3541 = vmatprep.subr.mxu0 0.0
        %3542 = vmatpush1.xpose.msra.mxu0 0.0
        %3543 = vmatprep.subr.mxu0 0.0
        %3544 = vmatpush1.xpose.msra.mxu0 0.0
        %3545 = vmatprep.subr.mxu0 0.0
        %3546 = vmatpush1.xpose.msra.mxu0 0.0
        %3547 = vmatprep.subr.mxu0 0.0
        %3548 = vmatpush1.xpose.msra.mxu0 0.0
        %3549 = vmatprep.subr.mxu0 0.0
        %3550 = vmatpush1.xpose.msra.mxu0 0.0
        %3551 = vmatprep.subr.mxu0 0.0
        %3552 = vmatpush1.xpose.msra.mxu0 0.0
        %3553 = vmatprep.subr.mxu0 0.0
        %3554 = vmatpush1.xpose.msra.mxu0 0.0
        %3555 = vmatprep.subr.mxu0 0.0
        %3556 = vmatpush1.xpose.msra.mxu0 0.0
        %3557 = vmatprep.subr.mxu0 0.0
        %3558 = vmatpush1.xpose.msra.mxu0 0.0
        %3559 = vmatprep.subr.mxu0 0.0
        %3560 = vmatpush1.xpose.msra.mxu0 0.0
        %3561 = vmatprep.subr.mxu0 0.0
        %3562 = vmatpush1.xpose.msra.mxu0 0.0
        %3563 = vmatprep.subr.mxu0 0.0
        %3564 = vmatpush1.xpose.msra.mxu0 0.0
        %3565 = vmatprep.subr.mxu0 0.0
        %3566 = vmatpush1.xpose.msra.mxu0 0.0
        %3567 = vmatprep.subr.mxu0 0.0
        %3568 = vmatpush1.xpose.msra.mxu0 0.0
        %3569 = vmatprep.subr.mxu0 0.0
        %3570 = vmatpush1.xpose.msra.mxu0 0.0
        %3571 = vmatprep.subr.mxu0 0.0
        %3572 = vmatpush1.xpose.msra.mxu0 0.0
        %3573 = vmatprep.subr.mxu0 0.0
        %3574 = vmatpush1.xpose.msra.mxu0 0.0
        %3575 = vmatprep.subr.mxu0 0.0
        %3576 = vmatpush1.xpose.msra.mxu0 0.0
        %3577 = vmatprep.subr.mxu0 0.0
        %3578 = vmatpush1.xpose.msra.mxu0 0.0
        %3579 = vmatprep.subr.mxu0 0.0
        %3580 = vmatpush1.xpose.msra.mxu0 0.0
        %3581 = vmatprep.subr.mxu0 0.0
        %3582 = vmatpush1.xpose.msra.mxu0 0.0
        %v3583 = vand.u32 %v464, 4294901760
        %v3584 = vsub.f32 %v464, %v3583
        %v3585 = vand.u32 %v3584, 4294901760
        %3586 = vmatprep.mubr.f32.mxu0 %v3585
        %v3587 = vand.u32 %v457, 4294901760
        %v3588 = vsub.f32 %v457, %v3587
        %v3589 = vand.u32 %v3588, 4294901760
        %3590 = vmatmul.mubr.f32.gmra.mrb[0].mxu0 %v3589
        %v3591 = vpop.f32.mrb[0].mxu0
        %v3592 = vadd.f32 %v3510, %v3591
        %v3593 = vpop.f32.mrb[0].mxu0
        %3594 = vdwg.mxu0
        %v3595 = vand.u32 %v231, 4294901760
        %v3596 = vsub.f32 %v231, %v3595
        %v3597 = vand.u32 %v3596, 4294901760
        %3598 = vmatprep.subr.mxu0 %v3597
        %v3599 = vand.u32 %v230, 4294901760
        %v3600 = vsub.f32 %v230, %v3599
        %v3601 = vand.u32 %v3600, 4294901760
        %3602 = vmatpush1.xpose.msra.mxu0 %v3601
        %v3603 = vand.u32 %v263, 4294901760
        %v3604 = vsub.f32 %v263, %v3603
        %v3605 = vand.u32 %v3604, 4294901760
        %3606 = vmatprep.subr.mxu0 %v3605
        %v3607 = vand.u32 %v262, 4294901760
        %v3608 = vsub.f32 %v262, %v3607
        %v3609 = vand.u32 %v3608, 4294901760
        %3610 = vmatpush1.xpose.msra.mxu0 %v3609
        %v3611 = vand.u32 %v295, 4294901760
        %v3612 = vsub.f32 %v295, %v3611
        %v3613 = vand.u32 %v3612, 4294901760
        %3614 = vmatprep.subr.mxu0 %v3613
        %v3615 = vand.u32 %v294, 4294901760
        %v3616 = vsub.f32 %v294, %v3615
        %v3617 = vand.u32 %v3616, 4294901760
        %3618 = vmatpush1.xpose.msra.mxu0 %v3617
        %3619 = vmatprep.subr.mxu0 0.0
        %3620 = vmatpush1.xpose.msra.mxu0 0.0
        %3621 = vmatprep.subr.mxu0 0.0
        %3622 = vmatpush1.xpose.msra.mxu0 0.0
        %3623 = vmatprep.subr.mxu0 0.0
        %3624 = vmatpush1.xpose.msra.mxu0 0.0
        %3625 = vmatprep.subr.mxu0 0.0
        %3626 = vmatpush1.xpose.msra.mxu0 0.0
        %3627 = vmatprep.subr.mxu0 0.0
        %3628 = vmatpush1.xpose.msra.mxu0 0.0
        %3629 = vmatprep.subr.mxu0 0.0
        %3630 = vmatpush1.xpose.msra.mxu0 0.0
        %3631 = vmatprep.subr.mxu0 0.0
        %3632 = vmatpush1.xpose.msra.mxu0 0.0
        %3633 = vmatprep.subr.mxu0 0.0
        %3634 = vmatpush1.xpose.msra.mxu0 0.0
        %3635 = vmatprep.subr.mxu0 0.0
        %3636 = vmatpush1.xpose.msra.mxu0 0.0
        %3637 = vmatprep.subr.mxu0 0.0
        %3638 = vmatpush1.xpose.msra.mxu0 0.0
        %3639 = vmatprep.subr.mxu0 0.0
        %3640 = vmatpush1.xpose.msra.mxu0 0.0
        %3641 = vmatprep.subr.mxu0 0.0
        %3642 = vmatpush1.xpose.msra.mxu0 0.0
        %3643 = vmatprep.subr.mxu0 0.0
        %3644 = vmatpush1.xpose.msra.mxu0 0.0
        %3645 = vmatprep.subr.mxu0 0.0
        %3646 = vmatpush1.xpose.msra.mxu0 0.0
        %3647 = vmatprep.subr.mxu0 0.0
        %3648 = vmatpush1.xpose.msra.mxu0 0.0
        %3649 = vmatprep.subr.mxu0 0.0
        %3650 = vmatpush1.xpose.msra.mxu0 0.0
        %3651 = vmatprep.subr.mxu0 0.0
        %3652 = vmatpush1.xpose.msra.mxu0 0.0
        %3653 = vmatprep.subr.mxu0 0.0
        %3654 = vmatpush1.xpose.msra.mxu0 0.0
        %3655 = vmatprep.subr.mxu0 0.0
        %3656 = vmatpush1.xpose.msra.mxu0 0.0
        %3657 = vmatprep.subr.mxu0 0.0
        %3658 = vmatpush1.xpose.msra.mxu0 0.0
        %3659 = vmatprep.subr.mxu0 0.0
        %3660 = vmatpush1.xpose.msra.mxu0 0.0
        %3661 = vmatprep.subr.mxu0 0.0
        %3662 = vmatpush1.xpose.msra.mxu0 0.0
        %3663 = vmatprep.subr.mxu0 0.0
        %3664 = vmatpush1.xpose.msra.mxu0 0.0
        %3665 = vmatprep.subr.mxu0 0.0
        %3666 = vmatpush1.xpose.msra.mxu0 0.0
        %3667 = vmatprep.subr.mxu0 0.0
        %3668 = vmatpush1.xpose.msra.mxu0 0.0
        %3669 = vmatprep.subr.mxu0 0.0
        %3670 = vmatpush1.xpose.msra.mxu0 0.0
        %3671 = vmatprep.subr.mxu0 0.0
        %3672 = vmatpush1.xpose.msra.mxu0 0.0
        %3673 = vmatprep.subr.mxu0 0.0
        %3674 = vmatpush1.xpose.msra.mxu0 0.0
        %3675 = vmatprep.subr.mxu0 0.0
        %3676 = vmatpush1.xpose.msra.mxu0 0.0
        %v3677 = vand.u32 %v464, 4294901760
        %3678 = vmatprep.mubr.f32.mxu0 %v3677
        %v3679 = vand.u32 %v457, 4294901760
        %3680 = vmatmul.mubr.f32.gmra.mrb[0].mxu0 %v3679
        %v3681 = vpop.f32.mrb[0].mxu0
        %v3682 = vadd.f32 %v3592, %v3681
        %v3683 = vpop.f32.mrb[0].mxu0
        %3684 = vdwg.mxu0
        %v3685 = vand.u32 %v231, 4294901760
        %3686 = vmatprep.subr.mxu0 %v3685
        %v3687 = vand.u32 %v230, 4294901760
        %3688 = vmatpush1.xpose.msra.mxu0 %v3687
        %v3689 = vand.u32 %v263, 4294901760
        %3690 = vmatprep.subr.mxu0 %v3689
        %v3691 = vand.u32 %v262, 4294901760
        %3692 = vmatpush1.xpose.msra.mxu0 %v3691
        %v3693 = vand.u32 %v295, 4294901760
        %3694 = vmatprep.subr.mxu0 %v3693
        %v3695 = vand.u32 %v294, 4294901760
        %3696 = vmatpush1.xpose.msra.mxu0 %v3695
        %3697 = vmatprep.subr.mxu0 0.0
        %3698 = vmatpush1.xpose.msra.mxu0 0.0
        %3699 = vmatprep.subr.mxu0 0.0
        %3700 = vmatpush1.xpose.msra.mxu0 0.0
        %3701 = vmatprep.subr.mxu0 0.0
        %3702 = vmatpush1.xpose.msra.mxu0 0.0
        %3703 = vmatprep.subr.mxu0 0.0
        %3704 = vmatpush1.xpose.msra.mxu0 0.0
        %3705 = vmatprep.subr.mxu0 0.0
        %3706 = vmatpush1.xpose.msra.mxu0 0.0
        %3707 = vmatprep.subr.mxu0 0.0
        %3708 = vmatpush1.xpose.msra.mxu0 0.0
        %3709 = vmatprep.subr.mxu0 0.0
        %3710 = vmatpush1.xpose.msra.mxu0 0.0
        %3711 = vmatprep.subr.mxu0 0.0
        %3712 = vmatpush1.xpose.msra.mxu0 0.0
        %3713 = vmatprep.subr.mxu0 0.0
        %3714 = vmatpush1.xpose.msra.mxu0 0.0
        %3715 = vmatprep.subr.mxu0 0.0
        %3716 = vmatpush1.xpose.msra.mxu0 0.0
        %3717 = vmatprep.subr.mxu0 0.0
        %3718 = vmatpush1.xpose.msra.mxu0 0.0
        %3719 = vmatprep.subr.mxu0 0.0
        %3720 = vmatpush1.xpose.msra.mxu0 0.0
        %3721 = vmatprep.subr.mxu0 0.0
        %3722 = vmatpush1.xpose.msra.mxu0 0.0
        %3723 = vmatprep.subr.mxu0 0.0
        %3724 = vmatpush1.xpose.msra.mxu0 0.0
        %3725 = vmatprep.subr.mxu0 0.0
        %3726 = vmatpush1.xpose.msra.mxu0 0.0
        %3727 = vmatprep.subr.mxu0 0.0
        %3728 = vmatpush1.xpose.msra.mxu0 0.0
        %3729 = vmatprep.subr.mxu0 0.0
        %3730 = vmatpush1.xpose.msra.mxu0 0.0
        %3731 = vmatprep.subr.mxu0 0.0
        %3732 = vmatpush1.xpose.msra.mxu0 0.0
        %3733 = vmatprep.subr.mxu0 0.0
        %3734 = vmatpush1.xpose.msra.mxu0 0.0
        %3735 = vmatprep.subr.mxu0 0.0
        %3736 = vmatpush1.xpose.msra.mxu0 0.0
        %3737 = vmatprep.subr.mxu0 0.0
        %3738 = vmatpush1.xpose.msra.mxu0 0.0
        %3739 = vmatprep.subr.mxu0 0.0
        %3740 = vmatpush1.xpose.msra.mxu0 0.0
        %3741 = vmatprep.subr.mxu0 0.0
        %3742 = vmatpush1.xpose.msra.mxu0 0.0
        %3743 = vmatprep.subr.mxu0 0.0
        %3744 = vmatpush1.xpose.msra.mxu0 0.0
        %3745 = vmatprep.subr.mxu0 0.0
        %3746 = vmatpush1.xpose.msra.mxu0 0.0
        %3747 = vmatprep.subr.mxu0 0.0
        %3748 = vmatpush1.xpose.msra.mxu0 0.0
        %3749 = vmatprep.subr.mxu0 0.0
        %3750 = vmatpush1.xpose.msra.mxu0 0.0
        %3751 = vmatprep.subr.mxu0 0.0
        %3752 = vmatpush1.xpose.msra.mxu0 0.0
        %3753 = vmatprep.subr.mxu0 0.0
        %3754 = vmatpush1.xpose.msra.mxu0 0.0
        %v3755 = vand.u32 %v464, 4294901760
        %3756 = vmatprep.mubr.f32.mxu0 %v3755
        %v3757 = vand.u32 %v457, 4294901760
        %3758 = vmatmul.mubr.f32.gmra.mrb[0].mxu0 %v3757
        %v3759 = vpop.f32.mrb[0].mxu0
        %v3760 = vadd.f32 %v3682, %v3759
        %v3761 = vpop.f32.mrb[0].mxu0
        %3762 = vdwg.mxu0
        %v3763 = vand.u32 %v233, 4294901760
        %3764 = vmatprep.subr.mxu0 %v3763
        %v3765 = vand.u32 %v232, 4294901760
        %3766 = vmatpush1.xpose.msra.mxu0 %v3765
        %v3767 = vand.u32 %v265, 4294901760
        %3768 = vmatprep.subr.mxu0 %v3767
        %v3769 = vand.u32 %v264, 4294901760
        %3770 = vmatpush1.xpose.msra.mxu0 %v3769
        %v3771 = vand.u32 %v297, 4294901760
        %3772 = vmatprep.subr.mxu0 %v3771
        %v3773 = vand.u32 %v296, 4294901760
        %3774 = vmatpush1.xpose.msra.mxu0 %v3773
        %3775 = vmatprep.subr.mxu0 0.0
        %3776 = vmatpush1.xpose.msra.mxu0 0.0
        %3777 = vmatprep.subr.mxu0 0.0
        %3778 = vmatpush1.xpose.msra.mxu0 0.0
        %3779 = vmatprep.subr.mxu0 0.0
        %3780 = vmatpush1.xpose.msra.mxu0 0.0
        %3781 = vmatprep.subr.mxu0 0.0
        %3782 = vmatpush1.xpose.msra.mxu0 0.0
        %3783 = vmatprep.subr.mxu0 0.0
        %3784 = vmatpush1.xpose.msra.mxu0 0.0
        %3785 = vmatprep.subr.mxu0 0.0
        %3786 = vmatpush1.xpose.msra.mxu0 0.0
        %3787 = vmatprep.subr.mxu0 0.0
        %3788 = vmatpush1.xpose.msra.mxu0 0.0
        %3789 = vmatprep.subr.mxu0 0.0
        %3790 = vmatpush1.xpose.msra.mxu0 0.0
        %3791 = vmatprep.subr.mxu0 0.0
        %3792 = vmatpush1.xpose.msra.mxu0 0.0
        %3793 = vmatprep.subr.mxu0 0.0
        %3794 = vmatpush1.xpose.msra.mxu0 0.0
        %3795 = vmatprep.subr.mxu0 0.0
        %3796 = vmatpush1.xpose.msra.mxu0 0.0
        %3797 = vmatprep.subr.mxu0 0.0
        %3798 = vmatpush1.xpose.msra.mxu0 0.0
        %3799 = vmatprep.subr.mxu0 0.0
        %3800 = vmatpush1.xpose.msra.mxu0 0.0
        %3801 = vmatprep.subr.mxu0 0.0
        %3802 = vmatpush1.xpose.msra.mxu0 0.0
        %3803 = vmatprep.subr.mxu0 0.0
        %3804 = vmatpush1.xpose.msra.mxu0 0.0
        %3805 = vmatprep.subr.mxu0 0.0
        %3806 = vmatpush1.xpose.msra.mxu0 0.0
        %3807 = vmatprep.subr.mxu0 0.0
        %3808 = vmatpush1.xpose.msra.mxu0 0.0
        %3809 = vmatprep.subr.mxu0 0.0
        %3810 = vmatpush1.xpose.msra.mxu0 0.0
        %3811 = vmatprep.subr.mxu0 0.0
        %3812 = vmatpush1.xpose.msra.mxu0 0.0
        %3813 = vmatprep.subr.mxu0 0.0
        %3814 = vmatpush1.xpose.msra.mxu0 0.0
        %3815 = vmatprep.subr.mxu0 0.0
        %3816 = vmatpush1.xpose.msra.mxu0 0.0
        %3817 = vmatprep.subr.mxu0 0.0
        %3818 = vmatpush1.xpose.msra.mxu0 0.0
        %3819 = vmatprep.subr.mxu0 0.0
        %3820 = vmatpush1.xpose.msra.mxu0 0.0
        %3821 = vmatprep.subr.mxu0 0.0
        %3822 = vmatpush1.xpose.msra.mxu0 0.0
        %3823 = vmatprep.subr.mxu0 0.0
        %3824 = vmatpush1.xpose.msra.mxu0 0.0
        %3825 = vmatprep.subr.mxu0 0.0
        %3826 = vmatpush1.xpose.msra.mxu0 0.0
        %3827 = vmatprep.subr.mxu0 0.0
        %3828 = vmatpush1.xpose.msra.mxu0 0.0
        %3829 = vmatprep.subr.mxu0 0.0
        %3830 = vmatpush1.xpose.msra.mxu0 0.0
        %3831 = vmatprep.subr.mxu0 0.0
        %3832 = vmatpush1.xpose.msra.mxu0 0.0
        %v3833 = vand.u32 %v478, 4294901760
        %v3834 = vsub.f32 %v478, %v3833
        %v3835 = vand.u32 %v3834, 4294901760
        %v3836 = vsub.f32 %v3834, %v3835
        %v3837 = vand.u32 %v3836, 4294901760
        %3838 = vmatprep.mubr.f32.mxu0 %v3837
        %v3839 = vand.u32 %v471, 4294901760
        %v3840 = vsub.f32 %v471, %v3839
        %v3841 = vand.u32 %v3840, 4294901760
        %v3842 = vsub.f32 %v3840, %v3841
        %v3843 = vand.u32 %v3842, 4294901760
        %3844 = vmatmul.mubr.f32.gmra.mrb[0].mxu0 %v3843
        %v3845 = vpop.f32.mrb[0].mxu0
        %v3846 = vadd.f32 %v3760, %v3845
        %v3847 = vpop.f32.mrb[0].mxu0
        %3848 = vdwg.mxu0
        %v3849 = vand.u32 %v233, 4294901760
        %v3850 = vsub.f32 %v233, %v3849
        %v3851 = vand.u32 %v3850, 4294901760
        %v3852 = vsub.f32 %v3850, %v3851
        %v3853 = vand.u32 %v3852, 4294901760
        %3854 = vmatprep.subr.mxu0 %v3853
        %v3855 = vand.u32 %v232, 4294901760
        %v3856 = vsub.f32 %v232, %v3855
        %v3857 = vand.u32 %v3856, 4294901760
        %v3858 = vsub.f32 %v3856, %v3857
        %v3859 = vand.u32 %v3858, 4294901760
        %3860 = vmatpush1.xpose.msra.mxu0 %v3859
        %v3861 = vand.u32 %v265, 4294901760
        %v3862 = vsub.f32 %v265, %v3861
        %v3863 = vand.u32 %v3862, 4294901760
        %v3864 = vsub.f32 %v3862, %v3863
        %v3865 = vand.u32 %v3864, 4294901760
        %3866 = vmatprep.subr.mxu0 %v3865
        %v3867 = vand.u32 %v264, 4294901760
        %v3868 = vsub.f32 %v264, %v3867
        %v3869 = vand.u32 %v3868, 4294901760
        %v3870 = vsub.f32 %v3868, %v3869
        %v3871 = vand.u32 %v3870, 4294901760
        %3872 = vmatpush1.xpose.msra.mxu0 %v3871
        %v3873 = vand.u32 %v297, 4294901760
        %v3874 = vsub.f32 %v297, %v3873
        %v3875 = vand.u32 %v3874, 4294901760
        %v3876 = vsub.f32 %v3874, %v3875
        %v3877 = vand.u32 %v3876, 4294901760
        %3878 = vmatprep.subr.mxu0 %v3877
        %v3879 = vand.u32 %v296, 4294901760
        %v3880 = vsub.f32 %v296, %v3879
        %v3881 = vand.u32 %v3880, 4294901760
        %v3882 = vsub.f32 %v3880, %v3881
        %v3883 = vand.u32 %v3882, 4294901760
        %3884 = vmatpush1.xpose.msra.mxu0 %v3883
        %3885 = vmatprep.subr.mxu0 0.0
        %3886 = vmatpush1.xpose.msra.mxu0 0.0
        %3887 = vmatprep.subr.mxu0 0.0
        %3888 = vmatpush1.xpose.msra.mxu0 0.0
        %3889 = vmatprep.subr.mxu0 0.0
        %3890 = vmatpush1.xpose.msra.mxu0 0.0
        %3891 = vmatprep.subr.mxu0 0.0
        %3892 = vmatpush1.xpose.msra.mxu0 0.0
        %3893 = vmatprep.subr.mxu0 0.0
        %3894 = vmatpush1.xpose.msra.mxu0 0.0
        %3895 = vmatprep.subr.mxu0 0.0
        %3896 = vmatpush1.xpose.msra.mxu0 0.0
        %3897 = vmatprep.subr.mxu0 0.0
        %3898 = vmatpush1.xpose.msra.mxu0 0.0
        %3899 = vmatprep.subr.mxu0 0.0
        %3900 = vmatpush1.xpose.msra.mxu0 0.0
        %3901 = vmatprep.subr.mxu0 0.0
        %3902 = vmatpush1.xpose.msra.mxu0 0.0
        %3903 = vmatprep.subr.mxu0 0.0
        %3904 = vmatpush1.xpose.msra.mxu0 0.0
        %3905 = vmatprep.subr.mxu0 0.0
        %3906 = vmatpush1.xpose.msra.mxu0 0.0
        %3907 = vmatprep.subr.mxu0 0.0
        %3908 = vmatpush1.xpose.msra.mxu0 0.0
        %3909 = vmatprep.subr.mxu0 0.0
        %3910 = vmatpush1.xpose.msra.mxu0 0.0
        %3911 = vmatprep.subr.mxu0 0.0
        %3912 = vmatpush1.xpose.msra.mxu0 0.0
        %3913 = vmatprep.subr.mxu0 0.0
        %3914 = vmatpush1.xpose.msra.mxu0 0.0
        %3915 = vmatprep.subr.mxu0 0.0
        %3916 = vmatpush1.xpose.msra.mxu0 0.0
        %3917 = vmatprep.subr.mxu0 0.0
        %3918 = vmatpush1.xpose.msra.mxu0 0.0
        %3919 = vmatprep.subr.mxu0 0.0
        %3920 = vmatpush1.xpose.msra.mxu0 0.0
        %3921 = vmatprep.subr.mxu0 0.0
        %3922 = vmatpush1.xpose.msra.mxu0 0.0
        %3923 = vmatprep.subr.mxu0 0.0
        %3924 = vmatpush1.xpose.msra.mxu0 0.0
        %3925 = vmatprep.subr.mxu0 0.0
        %3926 = vmatpush1.xpose.msra.mxu0 0.0
        %3927 = vmatprep.subr.mxu0 0.0
        %3928 = vmatpush1.xpose.msra.mxu0 0.0
        %3929 = vmatprep.subr.mxu0 0.0
        %3930 = vmatpush1.xpose.msra.mxu0 0.0
        %3931 = vmatprep.subr.mxu0 0.0
        %3932 = vmatpush1.xpose.msra.mxu0 0.0
        %3933 = vmatprep.subr.mxu0 0.0
        %3934 = vmatpush1.xpose.msra.mxu0 0.0
        %3935 = vmatprep.subr.mxu0 0.0
        %3936 = vmatpush1.xpose.msra.mxu0 0.0
        %3937 = vmatprep.subr.mxu0 0.0
        %3938 = vmatpush1.xpose.msra.mxu0 0.0
        %3939 = vmatprep.subr.mxu0 0.0
        %3940 = vmatpush1.xpose.msra.mxu0 0.0
        %3941 = vmatprep.subr.mxu0 0.0
        %3942 = vmatpush1.xpose.msra.mxu0 0.0
        %v3943 = vand.u32 %v478, 4294901760
        %3944 = vmatprep.mubr.f32.mxu0 %v3943
        %v3945 = vand.u32 %v471, 4294901760
        %3946 = vmatmul.mubr.f32.gmra.mrb[0].mxu0 %v3945
        %v3947 = vpop.f32.mrb[0].mxu0
        %v3948 = vadd.f32 %v3846, %v3947
        %v3949 = vpop.f32.mrb[0].mxu0
        %3950 = vdwg.mxu0
        %v3951 = vand.u32 %v233, 4294901760
        %v3952 = vsub.f32 %v233, %v3951
        %3953 = vmatprep.subr.mxu0 %v3952
        %v3954 = vand.u32 %v232, 4294901760
        %v3955 = vsub.f32 %v232, %v3954
        %3956 = vmatpush1.xpose.msra.mxu0 %v3955
        %v3957 = vand.u32 %v265, 4294901760
        %v3958 = vsub.f32 %v265, %v3957
        %3959 = vmatprep.subr.mxu0 %v3958
        %v3960 = vand.u32 %v264, 4294901760
        %v3961 = vsub.f32 %v264, %v3960
        %3962 = vmatpush1.xpose.msra.mxu0 %v3961
        %v3963 = vand.u32 %v297, 4294901760
        %v3964 = vsub.f32 %v297, %v3963
        %3965 = vmatprep.subr.mxu0 %v3964
        %v3966 = vand.u32 %v296, 4294901760
        %v3967 = vsub.f32 %v296, %v3966
        %3968 = vmatpush1.xpose.msra.mxu0 %v3967
        %3969 = vmatprep.subr.mxu0 0.0
        %3970 = vmatpush1.xpose.msra.mxu0 0.0
        %3971 = vmatprep.subr.mxu0 0.0
        %3972 = vmatpush1.xpose.msra.mxu0 0.0
        %3973 = vmatprep.subr.mxu0 0.0
        %3974 = vmatpush1.xpose.msra.mxu0 0.0
        %3975 = vmatprep.subr.mxu0 0.0
        %3976 = vmatpush1.xpose.msra.mxu0 0.0
        %3977 = vmatprep.subr.mxu0 0.0
        %3978 = vmatpush1.xpose.msra.mxu0 0.0
        %3979 = vmatprep.subr.mxu0 0.0
        %3980 = vmatpush1.xpose.msra.mxu0 0.0
        %3981 = vmatprep.subr.mxu0 0.0
        %3982 = vmatpush1.xpose.msra.mxu0 0.0
        %3983 = vmatprep.subr.mxu0 0.0
        %3984 = vmatpush1.xpose.msra.mxu0 0.0
        %3985 = vmatprep.subr.mxu0 0.0
        %3986 = vmatpush1.xpose.msra.mxu0 0.0
        %3987 = vmatprep.subr.mxu0 0.0
        %3988 = vmatpush1.xpose.msra.mxu0 0.0
        %3989 = vmatprep.subr.mxu0 0.0
        %3990 = vmatpush1.xpose.msra.mxu0 0.0
        %3991 = vmatprep.subr.mxu0 0.0
        %3992 = vmatpush1.xpose.msra.mxu0 0.0
        %3993 = vmatprep.subr.mxu0 0.0
        %3994 = vmatpush1.xpose.msra.mxu0 0.0
        %3995 = vmatprep.subr.mxu0 0.0
        %3996 = vmatpush1.xpose.msra.mxu0 0.0
        %3997 = vmatprep.subr.mxu0 0.0
        %3998 = vmatpush1.xpose.msra.mxu0 0.0
        %3999 = vmatprep.subr.mxu0 0.0
        %4000 = vmatpush1.xpose.msra.mxu0 0.0
        %4001 = vmatprep.subr.mxu0 0.0
        %4002 = vmatpush1.xpose.msra.mxu0 0.0
        %4003 = vmatprep.subr.mxu0 0.0
        %4004 = vmatpush1.xpose.msra.mxu0 0.0
        %4005 = vmatprep.subr.mxu0 0.0
        %4006 = vmatpush1.xpose.msra.mxu0 0.0
        %4007 = vmatprep.subr.mxu0 0.0
        %4008 = vmatpush1.xpose.msra.mxu0 0.0
        %4009 = vmatprep.subr.mxu0 0.0
        %4010 = vmatpush1.xpose.msra.mxu0 0.0
        %4011 = vmatprep.subr.mxu0 0.0
        %4012 = vmatpush1.xpose.msra.mxu0 0.0
        %4013 = vmatprep.subr.mxu0 0.0
        %4014 = vmatpush1.xpose.msra.mxu0 0.0
        %4015 = vmatprep.subr.mxu0 0.0
        %4016 = vmatpush1.xpose.msra.mxu0 0.0
        %4017 = vmatprep.subr.mxu0 0.0
        %4018 = vmatpush1.xpose.msra.mxu0 0.0
        %4019 = vmatprep.subr.mxu0 0.0
        %4020 = vmatpush1.xpose.msra.mxu0 0.0
        %4021 = vmatprep.subr.mxu0 0.0
        %4022 = vmatpush1.xpose.msra.mxu0 0.0
        %4023 = vmatprep.subr.mxu0 0.0
        %4024 = vmatpush1.xpose.msra.mxu0 0.0
        %4025 = vmatprep.subr.mxu0 0.0
        %4026 = vmatpush1.xpose.msra.mxu0 0.0
        %v4027 = vand.u32 %v478, 4294901760
        %v4028 = vsub.f32 %v478, %v4027
        %4029 = vmatprep.mubr.f32.mxu0 %v4028
        %v4030 = vand.u32 %v471, 4294901760
        %v4031 = vsub.f32 %v471, %v4030
        %4032 = vmatmul.mubr.f32.gmra.mrb[0].mxu0 %v4031
        %v4033 = vpop.f32.mrb[0].mxu0
        %v4034 = vadd.f32 %v3948, %v4033
        %v4035 = vpop.f32.mrb[0].mxu0
        %4036 = vdwg.mxu0
        %v4037 = vand.u32 %v233, 4294901760
        %4038 = vmatprep.subr.mxu0 %v4037
        %v4039 = vand.u32 %v232, 4294901760
        %4040 = vmatpush1.xpose.msra.mxu0 %v4039
        %v4041 = vand.u32 %v265, 4294901760
        %4042 = vmatprep.subr.mxu0 %v4041
        %v4043 = vand.u32 %v264, 4294901760
        %4044 = vmatpush1.xpose.msra.mxu0 %v4043
        %v4045 = vand.u32 %v297, 4294901760
        %4046 = vmatprep.subr.mxu0 %v4045
        %v4047 = vand.u32 %v296, 4294901760
        %4048 = vmatpush1.xpose.msra.mxu0 %v4047
        %4049 = vmatprep.subr.mxu0 0.0
        %4050 = vmatpush1.xpose.msra.mxu0 0.0
        %4051 = vmatprep.subr.mxu0 0.0
        %4052 = vmatpush1.xpose.msra.mxu0 0.0
        %4053 = vmatprep.subr.mxu0 0.0
        %4054 = vmatpush1.xpose.msra.mxu0 0.0
        %4055 = vmatprep.subr.mxu0 0.0
        %4056 = vmatpush1.xpose.msra.mxu0 0.0
        %4057 = vmatprep.subr.mxu0 0.0
        %4058 = vmatpush1.xpose.msra.mxu0 0.0
        %4059 = vmatprep.subr.mxu0 0.0
        %4060 = vmatpush1.xpose.msra.mxu0 0.0
        %4061 = vmatprep.subr.mxu0 0.0
        %4062 = vmatpush1.xpose.msra.mxu0 0.0
        %4063 = vmatprep.subr.mxu0 0.0
        %4064 = vmatpush1.xpose.msra.mxu0 0.0
        %4065 = vmatprep.subr.mxu0 0.0
        %4066 = vmatpush1.xpose.msra.mxu0 0.0
        %4067 = vmatprep.subr.mxu0 0.0
        %4068 = vmatpush1.xpose.msra.mxu0 0.0
        %4069 = vmatprep.subr.mxu0 0.0
        %4070 = vmatpush1.xpose.msra.mxu0 0.0
        %4071 = vmatprep.subr.mxu0 0.0
        %4072 = vmatpush1.xpose.msra.mxu0 0.0
        %4073 = vmatprep.subr.mxu0 0.0
        %4074 = vmatpush1.xpose.msra.mxu0 0.0
        %4075 = vmatprep.subr.mxu0 0.0
        %4076 = vmatpush1.xpose.msra.mxu0 0.0
        %4077 = vmatprep.subr.mxu0 0.0
        %4078 = vmatpush1.xpose.msra.mxu0 0.0
        %4079 = vmatprep.subr.mxu0 0.0
        %4080 = vmatpush1.xpose.msra.mxu0 0.0
        %4081 = vmatprep.subr.mxu0 0.0
        %4082 = vmatpush1.xpose.msra.mxu0 0.0
        %4083 = vmatprep.subr.mxu0 0.0
        %4084 = vmatpush1.xpose.msra.mxu0 0.0
        %4085 = vmatprep.subr.mxu0 0.0
        %4086 = vmatpush1.xpose.msra.mxu0 0.0
        %4087 = vmatprep.subr.mxu0 0.0
        %4088 = vmatpush1.xpose.msra.mxu0 0.0
        %4089 = vmatprep.subr.mxu0 0.0
        %4090 = vmatpush1.xpose.msra.mxu0 0.0
        %4091 = vmatprep.subr.mxu0 0.0
        %4092 = vmatpush1.xpose.msra.mxu0 0.0
        %4093 = vmatprep.subr.mxu0 0.0
        %4094 = vmatpush1.xpose.msra.mxu0 0.0
        %4095 = vmatprep.subr.mxu0 0.0
        %4096 = vmatpush1.xpose.msra.mxu0 0.0
        %4097 = vmatprep.subr.mxu0 0.0
        %4098 = vmatpush1.xpose.msra.mxu0 0.0
        %4099 = vmatprep.subr.mxu0 0.0
        %4100 = vmatpush1.xpose.msra.mxu0 0.0
        %4101 = vmatprep.subr.mxu0 0.0
        %4102 = vmatpush1.xpose.msra.mxu0 0.0
        %4103 = vmatprep.subr.mxu0 0.0
        %4104 = vmatpush1.xpose.msra.mxu0 0.0
        %4105 = vmatprep.subr.mxu0 0.0
        %4106 = vmatpush1.xpose.msra.mxu0 0.0
        %v4107 = vand.u32 %v478, 4294901760
        %v4108 = vsub.f32 %v478, %v4107
        %v4109 = vand.u32 %v4108, 4294901760
        %4110 = vmatprep.mubr.f32.mxu0 %v4109
        %v4111 = vand.u32 %v471, 4294901760
        %v4112 = vsub.f32 %v471, %v4111
        %v4113 = vand.u32 %v4112, 4294901760
        %4114 = vmatmul.mubr.f32.gmra.mrb[0].mxu0 %v4113
        %v4115 = vpop.f32.mrb[0].mxu0
        %v4116 = vadd.f32 %v4034, %v4115
        %v4117 = vpop.f32.mrb[0].mxu0
        %4118 = vdwg.mxu0
        %v4119 = vand.u32 %v233, 4294901760
        %v4120 = vsub.f32 %v233, %v4119
        %v4121 = vand.u32 %v4120, 4294901760
        %4122 = vmatprep.subr.mxu0 %v4121
        %v4123 = vand.u32 %v232, 4294901760
        %v4124 = vsub.f32 %v232, %v4123
        %v4125 = vand.u32 %v4124, 4294901760
        %4126 = vmatpush1.xpose.msra.mxu0 %v4125
        %v4127 = vand.u32 %v265, 4294901760
        %v4128 = vsub.f32 %v265, %v4127
        %v4129 = vand.u32 %v4128, 4294901760
        %4130 = vmatprep.subr.mxu0 %v4129
        %v4131 = vand.u32 %v264, 4294901760
        %v4132 = vsub.f32 %v264, %v4131
        %v4133 = vand.u32 %v4132, 4294901760
        %4134 = vmatpush1.xpose.msra.mxu0 %v4133
        %v4135 = vand.u32 %v297, 4294901760
        %v4136 = vsub.f32 %v297, %v4135
        %v4137 = vand.u32 %v4136, 4294901760
        %4138 = vmatprep.subr.mxu0 %v4137
        %v4139 = vand.u32 %v296, 4294901760
        %v4140 = vsub.f32 %v296, %v4139
        %v4141 = vand.u32 %v4140, 4294901760
        %4142 = vmatpush1.xpose.msra.mxu0 %v4141
        %4143 = vmatprep.subr.mxu0 0.0
        %4144 = vmatpush1.xpose.msra.mxu0 0.0
        %4145 = vmatprep.subr.mxu0 0.0
        %4146 = vmatpush1.xpose.msra.mxu0 0.0
        %4147 = vmatprep.subr.mxu0 0.0
        %4148 = vmatpush1.xpose.msra.mxu0 0.0
        %4149 = vmatprep.subr.mxu0 0.0
        %4150 = vmatpush1.xpose.msra.mxu0 0.0
        %4151 = vmatprep.subr.mxu0 0.0
        %4152 = vmatpush1.xpose.msra.mxu0 0.0
        %4153 = vmatprep.subr.mxu0 0.0
        %4154 = vmatpush1.xpose.msra.mxu0 0.0
        %4155 = vmatprep.subr.mxu0 0.0
        %4156 = vmatpush1.xpose.msra.mxu0 0.0
        %4157 = vmatprep.subr.mxu0 0.0
        %4158 = vmatpush1.xpose.msra.mxu0 0.0
        %4159 = vmatprep.subr.mxu0 0.0
        %4160 = vmatpush1.xpose.msra.mxu0 0.0
        %4161 = vmatprep.subr.mxu0 0.0
        %4162 = vmatpush1.xpose.msra.mxu0 0.0
        %4163 = vmatprep.subr.mxu0 0.0
        %4164 = vmatpush1.xpose.msra.mxu0 0.0
        %4165 = vmatprep.subr.mxu0 0.0
        %4166 = vmatpush1.xpose.msra.mxu0 0.0
        %4167 = vmatprep.subr.mxu0 0.0
        %4168 = vmatpush1.xpose.msra.mxu0 0.0
        %4169 = vmatprep.subr.mxu0 0.0
        %4170 = vmatpush1.xpose.msra.mxu0 0.0
        %4171 = vmatprep.subr.mxu0 0.0
        %4172 = vmatpush1.xpose.msra.mxu0 0.0
        %4173 = vmatprep.subr.mxu0 0.0
        %4174 = vmatpush1.xpose.msra.mxu0 0.0
        %4175 = vmatprep.subr.mxu0 0.0
        %4176 = vmatpush1.xpose.msra.mxu0 0.0
        %4177 = vmatprep.subr.mxu0 0.0
        %4178 = vmatpush1.xpose.msra.mxu0 0.0
        %4179 = vmatprep.subr.mxu0 0.0
        %4180 = vmatpush1.xpose.msra.mxu0 0.0
        %4181 = vmatprep.subr.mxu0 0.0
        %4182 = vmatpush1.xpose.msra.mxu0 0.0
        %4183 = vmatprep.subr.mxu0 0.0
        %4184 = vmatpush1.xpose.msra.mxu0 0.0
        %4185 = vmatprep.subr.mxu0 0.0
        %4186 = vmatpush1.xpose.msra.mxu0 0.0
        %4187 = vmatprep.subr.mxu0 0.0
        %4188 = vmatpush1.xpose.msra.mxu0 0.0
        %4189 = vmatprep.subr.mxu0 0.0
        %4190 = vmatpush1.xpose.msra.mxu0 0.0
        %4191 = vmatprep.subr.mxu0 0.0
        %4192 = vmatpush1.xpose.msra.mxu0 0.0
        %4193 = vmatprep.subr.mxu0 0.0
        %4194 = vmatpush1.xpose.msra.mxu0 0.0
        %4195 = vmatprep.subr.mxu0 0.0
        %4196 = vmatpush1.xpose.msra.mxu0 0.0
        %4197 = vmatprep.subr.mxu0 0.0
        %4198 = vmatpush1.xpose.msra.mxu0 0.0
        %4199 = vmatprep.subr.mxu0 0.0
        %4200 = vmatpush1.xpose.msra.mxu0 0.0
        %v4201 = vand.u32 %v478, 4294901760
        %4202 = vmatprep.mubr.f32.mxu0 %v4201
        %v4203 = vand.u32 %v471, 4294901760
        %4204 = vmatmul.mubr.f32.gmra.mrb[0].mxu0 %v4203
        %v4205 = vpop.f32.mrb[0].mxu0
        %v4206 = vadd.f32 %v4116, %v4205
        %v4207 = vpop.f32.mrb[0].mxu0
        %4208 = vdwg.mxu0
        %v4209 = vand.u32 %v233, 4294901760
        %4210 = vmatprep.subr.mxu0 %v4209
        %v4211 = vand.u32 %v232, 4294901760
        %4212 = vmatpush1.xpose.msra.mxu0 %v4211
        %v4213 = vand.u32 %v265, 4294901760
        %4214 = vmatprep.subr.mxu0 %v4213
        %v4215 = vand.u32 %v264, 4294901760
        %4216 = vmatpush1.xpose.msra.mxu0 %v4215
        %v4217 = vand.u32 %v297, 4294901760
        %4218 = vmatprep.subr.mxu0 %v4217
        %v4219 = vand.u32 %v296, 4294901760
        %4220 = vmatpush1.xpose.msra.mxu0 %v4219
        %4221 = vmatprep.subr.mxu0 0.0
        %4222 = vmatpush1.xpose.msra.mxu0 0.0
        %4223 = vmatprep.subr.mxu0 0.0
        %4224 = vmatpush1.xpose.msra.mxu0 0.0
        %4225 = vmatprep.subr.mxu0 0.0
        %4226 = vmatpush1.xpose.msra.mxu0 0.0
        %4227 = vmatprep.subr.mxu0 0.0
        %4228 = vmatpush1.xpose.msra.mxu0 0.0
        %4229 = vmatprep.subr.mxu0 0.0
        %4230 = vmatpush1.xpose.msra.mxu0 0.0
        %4231 = vmatprep.subr.mxu0 0.0
        %4232 = vmatpush1.xpose.msra.mxu0 0.0
        %4233 = vmatprep.subr.mxu0 0.0
        %4234 = vmatpush1.xpose.msra.mxu0 0.0
        %4235 = vmatprep.subr.mxu0 0.0
        %4236 = vmatpush1.xpose.msra.mxu0 0.0
        %4237 = vmatprep.subr.mxu0 0.0
        %4238 = vmatpush1.xpose.msra.mxu0 0.0
        %4239 = vmatprep.subr.mxu0 0.0
        %4240 = vmatpush1.xpose.msra.mxu0 0.0
        %4241 = vmatprep.subr.mxu0 0.0
        %4242 = vmatpush1.xpose.msra.mxu0 0.0
        %4243 = vmatprep.subr.mxu0 0.0
        %4244 = vmatpush1.xpose.msra.mxu0 0.0
        %4245 = vmatprep.subr.mxu0 0.0
        %4246 = vmatpush1.xpose.msra.mxu0 0.0
        %4247 = vmatprep.subr.mxu0 0.0
        %4248 = vmatpush1.xpose.msra.mxu0 0.0
        %4249 = vmatprep.subr.mxu0 0.0
        %4250 = vmatpush1.xpose.msra.mxu0 0.0
        %4251 = vmatprep.subr.mxu0 0.0
        %4252 = vmatpush1.xpose.msra.mxu0 0.0
        %4253 = vmatprep.subr.mxu0 0.0
        %4254 = vmatpush1.xpose.msra.mxu0 0.0
        %4255 = vmatprep.subr.mxu0 0.0
        %4256 = vmatpush1.xpose.msra.mxu0 0.0
        %4257 = vmatprep.subr.mxu0 0.0
        %4258 = vmatpush1.xpose.msra.mxu0 0.0
        %4259 = vmatprep.subr.mxu0 0.0
        %4260 = vmatpush1.xpose.msra.mxu0 0.0
        %4261 = vmatprep.subr.mxu0 0.0
        %4262 = vmatpush1.xpose.msra.mxu0 0.0
        %4263 = vmatprep.subr.mxu0 0.0
        %4264 = vmatpush1.xpose.msra.mxu0 0.0
        %4265 = vmatprep.subr.mxu0 0.0
        %4266 = vmatpush1.xpose.msra.mxu0 0.0
        %4267 = vmatprep.subr.mxu0 0.0
        %4268 = vmatpush1.xpose.msra.mxu0 0.0
        %4269 = vmatprep.subr.mxu0 0.0
        %4270 = vmatpush1.xpose.msra.mxu0 0.0
        %4271 = vmatprep.subr.mxu0 0.0
        %4272 = vmatpush1.xpose.msra.mxu0 0.0
        %4273 = vmatprep.subr.mxu0 0.0
        %4274 = vmatpush1.xpose.msra.mxu0 0.0
        %4275 = vmatprep.subr.mxu0 0.0
        %4276 = vmatpush1.xpose.msra.mxu0 0.0
        %4277 = vmatprep.subr.mxu0 0.0
        %4278 = vmatpush1.xpose.msra.mxu0 0.0
        %v4279 = vand.u32 %v478, 4294901760
        %4280 = vmatprep.mubr.f32.mxu0 %v4279
        %v4281 = vand.u32 %v471, 4294901760
        %4282 = vmatmul.mubr.f32.gmra.mrb[0].mxu0 %v4281
        %v4283 = vpop.f32.mrb[0].mxu0
        %v4284 = vadd.f32 %v4206, %v4283
        %v4285 = vpop.f32.mrb[0].mxu0
        %4286 = vdwg.mxu0
        %v4287 = vand.u32 %v235, 4294901760
        %4288 = vmatprep.subr.mxu0 %v4287
        %v4289 = vand.u32 %v234, 4294901760
        %4290 = vmatpush1.xpose.msra.mxu0 %v4289
        %v4291 = vand.u32 %v267, 4294901760
        %4292 = vmatprep.subr.mxu0 %v4291
        %v4293 = vand.u32 %v266, 4294901760
        %4294 = vmatpush1.xpose.msra.mxu0 %v4293
        %v4295 = vand.u32 %v299, 4294901760
        %4296 = vmatprep.subr.mxu0 %v4295
        %v4297 = vand.u32 %v298, 4294901760
        %4298 = vmatpush1.xpose.msra.mxu0 %v4297
        %4299 = vmatprep.subr.mxu0 0.0
        %4300 = vmatpush1.xpose.msra.mxu0 0.0
        %4301 = vmatprep.subr.mxu0 0.0
        %4302 = vmatpush1.xpose.msra.mxu0 0.0
        %4303 = vmatprep.subr.mxu0 0.0
        %4304 = vmatpush1.xpose.msra.mxu0 0.0
        %4305 = vmatprep.subr.mxu0 0.0
        %4306 = vmatpush1.xpose.msra.mxu0 0.0
        %4307 = vmatprep.subr.mxu0 0.0
        %4308 = vmatpush1.xpose.msra.mxu0 0.0
        %4309 = vmatprep.subr.mxu0 0.0
        %4310 = vmatpush1.xpose.msra.mxu0 0.0
        %4311 = vmatprep.subr.mxu0 0.0
        %4312 = vmatpush1.xpose.msra.mxu0 0.0
        %4313 = vmatprep.subr.mxu0 0.0
        %4314 = vmatpush1.xpose.msra.mxu0 0.0
        %4315 = vmatprep.subr.mxu0 0.0
        %4316 = vmatpush1.xpose.msra.mxu0 0.0
        %4317 = vmatprep.subr.mxu0 0.0
        %4318 = vmatpush1.xpose.msra.mxu0 0.0
        %4319 = vmatprep.subr.mxu0 0.0
        %4320 = vmatpush1.xpose.msra.mxu0 0.0
        %4321 = vmatprep.subr.mxu0 0.0
        %4322 = vmatpush1.xpose.msra.mxu0 0.0
        %4323 = vmatprep.subr.mxu0 0.0
        %4324 = vmatpush1.xpose.msra.mxu0 0.0
        %4325 = vmatprep.subr.mxu0 0.0
        %4326 = vmatpush1.xpose.msra.mxu0 0.0
        %4327 = vmatprep.subr.mxu0 0.0
        %4328 = vmatpush1.xpose.msra.mxu0 0.0
        %4329 = vmatprep.subr.mxu0 0.0
        %4330 = vmatpush1.xpose.msra.mxu0 0.0
        %4331 = vmatprep.subr.mxu0 0.0
        %4332 = vmatpush1.xpose.msra.mxu0 0.0
        %4333 = vmatprep.subr.mxu0 0.0
        %4334 = vmatpush1.xpose.msra.mxu0 0.0
        %4335 = vmatprep.subr.mxu0 0.0
        %4336 = vmatpush1.xpose.msra.mxu0 0.0
        %4337 = vmatprep.subr.mxu0 0.0
        %4338 = vmatpush1.xpose.msra.mxu0 0.0
        %4339 = vmatprep.subr.mxu0 0.0
        %4340 = vmatpush1.xpose.msra.mxu0 0.0
        %4341 = vmatprep.subr.mxu0 0.0
        %4342 = vmatpush1.xpose.msra.mxu0 0.0
        %4343 = vmatprep.subr.mxu0 0.0
        %4344 = vmatpush1.xpose.msra.mxu0 0.0
        %4345 = vmatprep.subr.mxu0 0.0
        %4346 = vmatpush1.xpose.msra.mxu0 0.0
        %4347 = vmatprep.subr.mxu0 0.0
        %4348 = vmatpush1.xpose.msra.mxu0 0.0
        %4349 = vmatprep.subr.mxu0 0.0
        %4350 = vmatpush1.xpose.msra.mxu0 0.0
        %4351 = vmatprep.subr.mxu0 0.0
        %4352 = vmatpush1.xpose.msra.mxu0 0.0
        %4353 = vmatprep.subr.mxu0 0.0
        %4354 = vmatpush1.xpose.msra.mxu0 0.0
        %4355 = vmatprep.subr.mxu0 0.0
        %4356 = vmatpush1.xpose.msra.mxu0 0.0
        %v4357 = vand.u32 %v492, 4294901760
        %v4358 = vsub.f32 %v492, %v4357
        %v4359 = vand.u32 %v4358, 4294901760
        %v4360 = vsub.f32 %v4358, %v4359
        %v4361 = vand.u32 %v4360, 4294901760
        %4362 = vmatprep.mubr.f32.mxu0 %v4361
        %v4363 = vand.u32 %v485, 4294901760
        %v4364 = vsub.f32 %v485, %v4363
        %v4365 = vand.u32 %v4364, 4294901760
        %v4366 = vsub.f32 %v4364, %v4365
        %v4367 = vand.u32 %v4366, 4294901760
        %4368 = vmatmul.mubr.f32.gmra.mrb[0].mxu0 %v4367
        %v4369 = vpop.f32.mrb[0].mxu0
        %v4370 = vadd.f32 %v4284, %v4369
        %v4371 = vpop.f32.mrb[0].mxu0
        %4372 = vdwg.mxu0
        %v4373 = vand.u32 %v235, 4294901760
        %v4374 = vsub.f32 %v235, %v4373
        %v4375 = vand.u32 %v4374, 4294901760
        %v4376 = vsub.f32 %v4374, %v4375
        %v4377 = vand.u32 %v4376, 4294901760
        %4378 = vmatprep.subr.mxu0 %v4377
        %v4379 = vand.u32 %v234, 4294901760
        %v4380 = vsub.f32 %v234, %v4379
        %v4381 = vand.u32 %v4380, 4294901760
        %v4382 = vsub.f32 %v4380, %v4381
        %v4383 = vand.u32 %v4382, 4294901760
        %4384 = vmatpush1.xpose.msra.mxu0 %v4383
        %v4385 = vand.u32 %v267, 4294901760
        %v4386 = vsub.f32 %v267, %v4385
        %v4387 = vand.u32 %v4386, 4294901760
        %v4388 = vsub.f32 %v4386, %v4387
        %v4389 = vand.u32 %v4388, 4294901760
        %4390 = vmatprep.subr.mxu0 %v4389
        %v4391 = vand.u32 %v266, 4294901760
        %v4392 = vsub.f32 %v266, %v4391
        %v4393 = vand.u32 %v4392, 4294901760
        %v4394 = vsub.f32 %v4392, %v4393
        %v4395 = vand.u32 %v4394, 4294901760
        %4396 = vmatpush1.xpose.msra.mxu0 %v4395
        %v4397 = vand.u32 %v299, 4294901760
        %v4398 = vsub.f32 %v299, %v4397
        %v4399 = vand.u32 %v4398, 4294901760
        %v4400 = vsub.f32 %v4398, %v4399
        %v4401 = vand.u32 %v4400, 4294901760
        %4402 = vmatprep.subr.mxu0 %v4401
        %v4403 = vand.u32 %v298, 4294901760
        %v4404 = vsub.f32 %v298, %v4403
        %v4405 = vand.u32 %v4404, 4294901760
        %v4406 = vsub.f32 %v4404, %v4405
        %v4407 = vand.u32 %v4406, 4294901760
        %4408 = vmatpush1.xpose.msra.mxu0 %v4407
        %4409 = vmatprep.subr.mxu0 0.0
        %4410 = vmatpush1.xpose.msra.mxu0 0.0
        %4411 = vmatprep.subr.mxu0 0.0
        %4412 = vmatpush1.xpose.msra.mxu0 0.0
        %4413 = vmatprep.subr.mxu0 0.0
        %4414 = vmatpush1.xpose.msra.mxu0 0.0
        %4415 = vmatprep.subr.mxu0 0.0
        %4416 = vmatpush1.xpose.msra.mxu0 0.0
        %4417 = vmatprep.subr.mxu0 0.0
        %4418 = vmatpush1.xpose.msra.mxu0 0.0
        %4419 = vmatprep.subr.mxu0 0.0
        %4420 = vmatpush1.xpose.msra.mxu0 0.0
        %4421 = vmatprep.subr.mxu0 0.0
        %4422 = vmatpush1.xpose.msra.mxu0 0.0
        %4423 = vmatprep.subr.mxu0 0.0
        %4424 = vmatpush1.xpose.msra.mxu0 0.0
        %4425 = vmatprep.subr.mxu0 0.0
        %4426 = vmatpush1.xpose.msra.mxu0 0.0
        %4427 = vmatprep.subr.mxu0 0.0
        %4428 = vmatpush1.xpose.msra.mxu0 0.0
        %4429 = vmatprep.subr.mxu0 0.0
        %4430 = vmatpush1.xpose.msra.mxu0 0.0
        %4431 = vmatprep.subr.mxu0 0.0
        %4432 = vmatpush1.xpose.msra.mxu0 0.0
        %4433 = vmatprep.subr.mxu0 0.0
        %4434 = vmatpush1.xpose.msra.mxu0 0.0
        %4435 = vmatprep.subr.mxu0 0.0
        %4436 = vmatpush1.xpose.msra.mxu0 0.0
        %4437 = vmatprep.subr.mxu0 0.0
        %4438 = vmatpush1.xpose.msra.mxu0 0.0
        %4439 = vmatprep.subr.mxu0 0.0
        %4440 = vmatpush1.xpose.msra.mxu0 0.0
        %4441 = vmatprep.subr.mxu0 0.0
        %4442 = vmatpush1.xpose.msra.mxu0 0.0
        %4443 = vmatprep.subr.mxu0 0.0
        %4444 = vmatpush1.xpose.msra.mxu0 0.0
        %4445 = vmatprep.subr.mxu0 0.0
        %4446 = vmatpush1.xpose.msra.mxu0 0.0
        %4447 = vmatprep.subr.mxu0 0.0
        %4448 = vmatpush1.xpose.msra.mxu0 0.0
        %4449 = vmatprep.subr.mxu0 0.0
        %4450 = vmatpush1.xpose.msra.mxu0 0.0
        %4451 = vmatprep.subr.mxu0 0.0
        %4452 = vmatpush1.xpose.msra.mxu0 0.0
        %4453 = vmatprep.subr.mxu0 0.0
        %4454 = vmatpush1.xpose.msra.mxu0 0.0
        %4455 = vmatprep.subr.mxu0 0.0
        %4456 = vmatpush1.xpose.msra.mxu0 0.0
        %4457 = vmatprep.subr.mxu0 0.0
        %4458 = vmatpush1.xpose.msra.mxu0 0.0
        %4459 = vmatprep.subr.mxu0 0.0
        %4460 = vmatpush1.xpose.msra.mxu0 0.0
        %4461 = vmatprep.subr.mxu0 0.0
        %4462 = vmatpush1.xpose.msra.mxu0 0.0
        %4463 = vmatprep.subr.mxu0 0.0
        %4464 = vmatpush1.xpose.msra.mxu0 0.0
        %4465 = vmatprep.subr.mxu0 0.0
        %4466 = vmatpush1.xpose.msra.mxu0 0.0
        %v4467 = vand.u32 %v492, 4294901760
        %4468 = vmatprep.mubr.f32.mxu0 %v4467
        %v4469 = vand.u32 %v485, 4294901760
        %4470 = vmatmul.mubr.f32.gmra.mrb[0].mxu0 %v4469
        %v4471 = vpop.f32.mrb[0].mxu0
        %v4472 = vadd.f32 %v4370, %v4471
        %v4473 = vpop.f32.mrb[0].mxu0
        %4474 = vdwg.mxu0
        %v4475 = vand.u32 %v235, 4294901760
        %v4476 = vsub.f32 %v235, %v4475
        %4477 = vmatprep.subr.mxu0 %v4476
        %v4478 = vand.u32 %v234, 4294901760
        %v4479 = vsub.f32 %v234, %v4478
        %4480 = vmatpush1.xpose.msra.mxu0 %v4479
        %v4481 = vand.u32 %v267, 4294901760
        %v4482 = vsub.f32 %v267, %v4481
        %4483 = vmatprep.subr.mxu0 %v4482
        %v4484 = vand.u32 %v266, 4294901760
        %v4485 = vsub.f32 %v266, %v4484
        %4486 = vmatpush1.xpose.msra.mxu0 %v4485
        %v4487 = vand.u32 %v299, 4294901760
        %v4488 = vsub.f32 %v299, %v4487
        %4489 = vmatprep.subr.mxu0 %v4488
        %v4490 = vand.u32 %v298, 4294901760
        %v4491 = vsub.f32 %v298, %v4490
        %4492 = vmatpush1.xpose.msra.mxu0 %v4491
        %4493 = vmatprep.subr.mxu0 0.0
        %4494 = vmatpush1.xpose.msra.mxu0 0.0
        %4495 = vmatprep.subr.mxu0 0.0
        %4496 = vmatpush1.xpose.msra.mxu0 0.0
        %4497 = vmatprep.subr.mxu0 0.0
        %4498 = vmatpush1.xpose.msra.mxu0 0.0
        %4499 = vmatprep.subr.mxu0 0.0
        %4500 = vmatpush1.xpose.msra.mxu0 0.0
        %4501 = vmatprep.subr.mxu0 0.0
        %4502 = vmatpush1.xpose.msra.mxu0 0.0
        %4503 = vmatprep.subr.mxu0 0.0
        %4504 = vmatpush1.xpose.msra.mxu0 0.0
        %4505 = vmatprep.subr.mxu0 0.0
        %4506 = vmatpush1.xpose.msra.mxu0 0.0
        %4507 = vmatprep.subr.mxu0 0.0
        %4508 = vmatpush1.xpose.msra.mxu0 0.0
        %4509 = vmatprep.subr.mxu0 0.0
        %4510 = vmatpush1.xpose.msra.mxu0 0.0
        %4511 = vmatprep.subr.mxu0 0.0
        %4512 = vmatpush1.xpose.msra.mxu0 0.0
        %4513 = vmatprep.subr.mxu0 0.0
        %4514 = vmatpush1.xpose.msra.mxu0 0.0
        %4515 = vmatprep.subr.mxu0 0.0
        %4516 = vmatpush1.xpose.msra.mxu0 0.0
        %4517 = vmatprep.subr.mxu0 0.0
        %4518 = vmatpush1.xpose.msra.mxu0 0.0
        %4519 = vmatprep.subr.mxu0 0.0
        %4520 = vmatpush1.xpose.msra.mxu0 0.0
        %4521 = vmatprep.subr.mxu0 0.0
        %4522 = vmatpush1.xpose.msra.mxu0 0.0
        %4523 = vmatprep.subr.mxu0 0.0
        %4524 = vmatpush1.xpose.msra.mxu0 0.0
        %4525 = vmatprep.subr.mxu0 0.0
        %4526 = vmatpush1.xpose.msra.mxu0 0.0
        %4527 = vmatprep.subr.mxu0 0.0
        %4528 = vmatpush1.xpose.msra.mxu0 0.0
        %4529 = vmatprep.subr.mxu0 0.0
        %4530 = vmatpush1.xpose.msra.mxu0 0.0
        %4531 = vmatprep.subr.mxu0 0.0
        %4532 = vmatpush1.xpose.msra.mxu0 0.0
        %4533 = vmatprep.subr.mxu0 0.0
        %4534 = vmatpush1.xpose.msra.mxu0 0.0
        %4535 = vmatprep.subr.mxu0 0.0
        %4536 = vmatpush1.xpose.msra.mxu0 0.0
        %4537 = vmatprep.subr.mxu0 0.0
        %4538 = vmatpush1.xpose.msra.mxu0 0.0
        %4539 = vmatprep.subr.mxu0 0.0
        %4540 = vmatpush1.xpose.msra.mxu0 0.0
        %4541 = vmatprep.subr.mxu0 0.0
        %4542 = vmatpush1.xpose.msra.mxu0 0.0
        %4543 = vmatprep.subr.mxu0 0.0
        %4544 = vmatpush1.xpose.msra.mxu0 0.0
        %4545 = vmatprep.subr.mxu0 0.0
        %4546 = vmatpush1.xpose.msra.mxu0 0.0
        %4547 = vmatprep.subr.mxu0 0.0
        %4548 = vmatpush1.xpose.msra.mxu0 0.0
        %4549 = vmatprep.subr.mxu0 0.0
        %4550 = vmatpush1.xpose.msra.mxu0 0.0
        %v4551 = vand.u32 %v492, 4294901760
        %v4552 = vsub.f32 %v492, %v4551
        %4553 = vmatprep.mubr.f32.mxu0 %v4552
        %v4554 = vand.u32 %v485, 4294901760
        %v4555 = vsub.f32 %v485, %v4554
        %4556 = vmatmul.mubr.f32.gmra.mrb[0].mxu0 %v4555
        %v4557 = vpop.f32.mrb[0].mxu0
        %v4558 = vadd.f32 %v4472, %v4557
        %v4559 = vpop.f32.mrb[0].mxu0
        %4560 = vdwg.mxu0
        %v4561 = vand.u32 %v235, 4294901760
        %4562 = vmatprep.subr.mxu0 %v4561
        %v4563 = vand.u32 %v234, 4294901760
        %4564 = vmatpush1.xpose.msra.mxu0 %v4563
        %v4565 = vand.u32 %v267, 4294901760
        %4566 = vmatprep.subr.mxu0 %v4565
        %v4567 = vand.u32 %v266, 4294901760
        %4568 = vmatpush1.xpose.msra.mxu0 %v4567
        %v4569 = vand.u32 %v299, 4294901760
        %4570 = vmatprep.subr.mxu0 %v4569
        %v4571 = vand.u32 %v298, 4294901760
        %4572 = vmatpush1.xpose.msra.mxu0 %v4571
        %4573 = vmatprep.subr.mxu0 0.0
        %4574 = vmatpush1.xpose.msra.mxu0 0.0
        %4575 = vmatprep.subr.mxu0 0.0
        %4576 = vmatpush1.xpose.msra.mxu0 0.0
        %4577 = vmatprep.subr.mxu0 0.0
        %4578 = vmatpush1.xpose.msra.mxu0 0.0
        %4579 = vmatprep.subr.mxu0 0.0
        %4580 = vmatpush1.xpose.msra.mxu0 0.0
        %4581 = vmatprep.subr.mxu0 0.0
        %4582 = vmatpush1.xpose.msra.mxu0 0.0
        %4583 = vmatprep.subr.mxu0 0.0
        %4584 = vmatpush1.xpose.msra.mxu0 0.0
        %4585 = vmatprep.subr.mxu0 0.0
        %4586 = vmatpush1.xpose.msra.mxu0 0.0
        %4587 = vmatprep.subr.mxu0 0.0
        %4588 = vmatpush1.xpose.msra.mxu0 0.0
        %4589 = vmatprep.subr.mxu0 0.0
        %4590 = vmatpush1.xpose.msra.mxu0 0.0
        %4591 = vmatprep.subr.mxu0 0.0
        %4592 = vmatpush1.xpose.msra.mxu0 0.0
        %4593 = vmatprep.subr.mxu0 0.0
        %4594 = vmatpush1.xpose.msra.mxu0 0.0
        %4595 = vmatprep.subr.mxu0 0.0
        %4596 = vmatpush1.xpose.msra.mxu0 0.0
        %4597 = vmatprep.subr.mxu0 0.0
        %4598 = vmatpush1.xpose.msra.mxu0 0.0
        %4599 = vmatprep.subr.mxu0 0.0
        %4600 = vmatpush1.xpose.msra.mxu0 0.0
        %4601 = vmatprep.subr.mxu0 0.0
        %4602 = vmatpush1.xpose.msra.mxu0 0.0
        %4603 = vmatprep.subr.mxu0 0.0
        %4604 = vmatpush1.xpose.msra.mxu0 0.0
        %4605 = vmatprep.subr.mxu0 0.0
        %4606 = vmatpush1.xpose.msra.mxu0 0.0
        %4607 = vmatprep.subr.mxu0 0.0
        %4608 = vmatpush1.xpose.msra.mxu0 0.0
        %4609 = vmatprep.subr.mxu0 0.0
        %4610 = vmatpush1.xpose.msra.mxu0 0.0
        %4611 = vmatprep.subr.mxu0 0.0
        %4612 = vmatpush1.xpose.msra.mxu0 0.0
        %4613 = vmatprep.subr.mxu0 0.0
        %4614 = vmatpush1.xpose.msra.mxu0 0.0
        %4615 = vmatprep.subr.mxu0 0.0
        %4616 = vmatpush1.xpose.msra.mxu0 0.0
        %4617 = vmatprep.subr.mxu0 0.0
        %4618 = vmatpush1.xpose.msra.mxu0 0.0
        %4619 = vmatprep.subr.mxu0 0.0
        %4620 = vmatpush1.xpose.msra.mxu0 0.0
        %4621 = vmatprep.subr.mxu0 0.0
        %4622 = vmatpush1.xpose.msra.mxu0 0.0
        %4623 = vmatprep.subr.mxu0 0.0
        %4624 = vmatpush1.xpose.msra.mxu0 0.0
        %4625 = vmatprep.subr.mxu0 0.0
        %4626 = vmatpush1.xpose.msra.mxu0 0.0
        %4627 = vmatprep.subr.mxu0 0.0
        %4628 = vmatpush1.xpose.msra.mxu0 0.0
        %4629 = vmatprep.subr.mxu0 0.0
        %4630 = vmatpush1.xpose.msra.mxu0 0.0
        %v4631 = vand.u32 %v492, 4294901760
        %v4632 = vsub.f32 %v492, %v4631
        %v4633 = vand.u32 %v4632, 4294901760
        %4634 = vmatprep.mubr.f32.mxu0 %v4633
        %v4635 = vand.u32 %v485, 4294901760
        %v4636 = vsub.f32 %v485, %v4635
        %v4637 = vand.u32 %v4636, 4294901760
        %4638 = vmatmul.mubr.f32.gmra.mrb[0].mxu0 %v4637
        %v4639 = vpop.f32.mrb[0].mxu0
        %v4640 = vadd.f32 %v4558, %v4639
        %v4641 = vpop.f32.mrb[0].mxu0
        %4642 = vdwg.mxu0
        %v4643 = vand.u32 %v235, 4294901760
        %v4644 = vsub.f32 %v235, %v4643
        %v4645 = vand.u32 %v4644, 4294901760
        %4646 = vmatprep.subr.mxu0 %v4645
        %v4647 = vand.u32 %v234, 4294901760
        %v4648 = vsub.f32 %v234, %v4647
        %v4649 = vand.u32 %v4648, 4294901760
        %4650 = vmatpush1.xpose.msra.mxu0 %v4649
        %v4651 = vand.u32 %v267, 4294901760
        %v4652 = vsub.f32 %v267, %v4651
        %v4653 = vand.u32 %v4652, 4294901760
        %4654 = vmatprep.subr.mxu0 %v4653
        %v4655 = vand.u32 %v266, 4294901760
        %v4656 = vsub.f32 %v266, %v4655
        %v4657 = vand.u32 %v4656, 4294901760
        %4658 = vmatpush1.xpose.msra.mxu0 %v4657
        %v4659 = vand.u32 %v299, 4294901760
        %v4660 = vsub.f32 %v299, %v4659
        %v4661 = vand.u32 %v4660, 4294901760
        %4662 = vmatprep.subr.mxu0 %v4661
        %v4663 = vand.u32 %v298, 4294901760
        %v4664 = vsub.f32 %v298, %v4663
        %v4665 = vand.u32 %v4664, 4294901760
        %4666 = vmatpush1.xpose.msra.mxu0 %v4665
        %4667 = vmatprep.subr.mxu0 0.0
        %4668 = vmatpush1.xpose.msra.mxu0 0.0
        %4669 = vmatprep.subr.mxu0 0.0
        %4670 = vmatpush1.xpose.msra.mxu0 0.0
        %4671 = vmatprep.subr.mxu0 0.0
        %4672 = vmatpush1.xpose.msra.mxu0 0.0
        %4673 = vmatprep.subr.mxu0 0.0
        %4674 = vmatpush1.xpose.msra.mxu0 0.0
        %4675 = vmatprep.subr.mxu0 0.0
        %4676 = vmatpush1.xpose.msra.mxu0 0.0
        %4677 = vmatprep.subr.mxu0 0.0
        %4678 = vmatpush1.xpose.msra.mxu0 0.0
        %4679 = vmatprep.subr.mxu0 0.0
        %4680 = vmatpush1.xpose.msra.mxu0 0.0
        %4681 = vmatprep.subr.mxu0 0.0
        %4682 = vmatpush1.xpose.msra.mxu0 0.0
        %4683 = vmatprep.subr.mxu0 0.0
        %4684 = vmatpush1.xpose.msra.mxu0 0.0
        %4685 = vmatprep.subr.mxu0 0.0
        %4686 = vmatpush1.xpose.msra.mxu0 0.0
        %4687 = vmatprep.subr.mxu0 0.0
        %4688 = vmatpush1.xpose.msra.mxu0 0.0
        %4689 = vmatprep.subr.mxu0 0.0
        %4690 = vmatpush1.xpose.msra.mxu0 0.0
        %4691 = vmatprep.subr.mxu0 0.0
        %4692 = vmatpush1.xpose.msra.mxu0 0.0
        %4693 = vmatprep.subr.mxu0 0.0
        %4694 = vmatpush1.xpose.msra.mxu0 0.0
        %4695 = vmatprep.subr.mxu0 0.0
        %4696 = vmatpush1.xpose.msra.mxu0 0.0
        %4697 = vmatprep.subr.mxu0 0.0
        %4698 = vmatpush1.xpose.msra.mxu0 0.0
        %4699 = vmatprep.subr.mxu0 0.0
        %4700 = vmatpush1.xpose.msra.mxu0 0.0
        %4701 = vmatprep.subr.mxu0 0.0
        %4702 = vmatpush1.xpose.msra.mxu0 0.0
        %4703 = vmatprep.subr.mxu0 0.0
        %4704 = vmatpush1.xpose.msra.mxu0 0.0
        %4705 = vmatprep.subr.mxu0 0.0
        %4706 = vmatpush1.xpose.msra.mxu0 0.0
        %4707 = vmatprep.subr.mxu0 0.0
        %4708 = vmatpush1.xpose.msra.mxu0 0.0
        %4709 = vmatprep.subr.mxu0 0.0
        %4710 = vmatpush1.xpose.msra.mxu0 0.0
        %4711 = vmatprep.subr.mxu0 0.0
        %4712 = vmatpush1.xpose.msra.mxu0 0.0
        %4713 = vmatprep.subr.mxu0 0.0
        %4714 = vmatpush1.xpose.msra.mxu0 0.0
        %4715 = vmatprep.subr.mxu0 0.0
        %4716 = vmatpush1.xpose.msra.mxu0 0.0
        %4717 = vmatprep.subr.mxu0 0.0
        %4718 = vmatpush1.xpose.msra.mxu0 0.0
        %4719 = vmatprep.subr.mxu0 0.0
        %4720 = vmatpush1.xpose.msra.mxu0 0.0
        %4721 = vmatprep.subr.mxu0 0.0
        %4722 = vmatpush1.xpose.msra.mxu0 0.0
        %4723 = vmatprep.subr.mxu0 0.0
        %4724 = vmatpush1.xpose.msra.mxu0 0.0
        %v4725 = vand.u32 %v492, 4294901760
        %4726 = vmatprep.mubr.f32.mxu0 %v4725
        %v4727 = vand.u32 %v485, 4294901760
        %4728 = vmatmul.mubr.f32.gmra.mrb[0].mxu0 %v4727
        %v4729 = vpop.f32.mrb[0].mxu0
        %v4730 = vadd.f32 %v4640, %v4729
        %v4731 = vpop.f32.mrb[0].mxu0
        %4732 = vdwg.mxu0
        %v4733 = vand.u32 %v235, 4294901760
        %4734 = vmatprep.subr.mxu0 %v4733
        %v4735 = vand.u32 %v234, 4294901760
        %4736 = vmatpush1.xpose.msra.mxu0 %v4735
        %v4737 = vand.u32 %v267, 4294901760
        %4738 = vmatprep.subr.mxu0 %v4737
        %v4739 = vand.u32 %v266, 4294901760
        %4740 = vmatpush1.xpose.msra.mxu0 %v4739
        %v4741 = vand.u32 %v299, 4294901760
        %4742 = vmatprep.subr.mxu0 %v4741
        %v4743 = vand.u32 %v298, 4294901760
        %4744 = vmatpush1.xpose.msra.mxu0 %v4743
        %4745 = vmatprep.subr.mxu0 0.0
        %4746 = vmatpush1.xpose.msra.mxu0 0.0
        %4747 = vmatprep.subr.mxu0 0.0
        %4748 = vmatpush1.xpose.msra.mxu0 0.0
        %4749 = vmatprep.subr.mxu0 0.0
        %4750 = vmatpush1.xpose.msra.mxu0 0.0
        %4751 = vmatprep.subr.mxu0 0.0
        %4752 = vmatpush1.xpose.msra.mxu0 0.0
        %4753 = vmatprep.subr.mxu0 0.0
        %4754 = vmatpush1.xpose.msra.mxu0 0.0
        %4755 = vmatprep.subr.mxu0 0.0
        %4756 = vmatpush1.xpose.msra.mxu0 0.0
        %4757 = vmatprep.subr.mxu0 0.0
        %4758 = vmatpush1.xpose.msra.mxu0 0.0
        %4759 = vmatprep.subr.mxu0 0.0
        %4760 = vmatpush1.xpose.msra.mxu0 0.0
        %4761 = vmatprep.subr.mxu0 0.0
        %4762 = vmatpush1.xpose.msra.mxu0 0.0
        %4763 = vmatprep.subr.mxu0 0.0
        %4764 = vmatpush1.xpose.msra.mxu0 0.0
        %4765 = vmatprep.subr.mxu0 0.0
        %4766 = vmatpush1.xpose.msra.mxu0 0.0
        %4767 = vmatprep.subr.mxu0 0.0
        %4768 = vmatpush1.xpose.msra.mxu0 0.0
        %4769 = vmatprep.subr.mxu0 0.0
        %4770 = vmatpush1.xpose.msra.mxu0 0.0
        %4771 = vmatprep.subr.mxu0 0.0
        %4772 = vmatpush1.xpose.msra.mxu0 0.0
        %4773 = vmatprep.subr.mxu0 0.0
        %4774 = vmatpush1.xpose.msra.mxu0 0.0
        %4775 = vmatprep.subr.mxu0 0.0
        %4776 = vmatpush1.xpose.msra.mxu0 0.0
        %4777 = vmatprep.subr.mxu0 0.0
        %4778 = vmatpush1.xpose.msra.mxu0 0.0
        %4779 = vmatprep.subr.mxu0 0.0
        %4780 = vmatpush1.xpose.msra.mxu0 0.0
        %4781 = vmatprep.subr.mxu0 0.0
        %4782 = vmatpush1.xpose.msra.mxu0 0.0
        %4783 = vmatprep.subr.mxu0 0.0
        %4784 = vmatpush1.xpose.msra.mxu0 0.0
        %4785 = vmatprep.subr.mxu0 0.0
        %4786 = vmatpush1.xpose.msra.mxu0 0.0
        %4787 = vmatprep.subr.mxu0 0.0
        %4788 = vmatpush1.xpose.msra.mxu0 0.0
        %4789 = vmatprep.subr.mxu0 0.0
        %4790 = vmatpush1.xpose.msra.mxu0 0.0
        %4791 = vmatprep.subr.mxu0 0.0
        %4792 = vmatpush1.xpose.msra.mxu0 0.0
        %4793 = vmatprep.subr.mxu0 0.0
        %4794 = vmatpush1.xpose.msra.mxu0 0.0
        %4795 = vmatprep.subr.mxu0 0.0
        %4796 = vmatpush1.xpose.msra.mxu0 0.0
        %4797 = vmatprep.subr.mxu0 0.0
        %4798 = vmatpush1.xpose.msra.mxu0 0.0
        %4799 = vmatprep.subr.mxu0 0.0
        %4800 = vmatpush1.xpose.msra.mxu0 0.0
        %4801 = vmatprep.subr.mxu0 0.0
        %4802 = vmatpush1.xpose.msra.mxu0 0.0
        %v4803 = vand.u32 %v492, 4294901760
        %4804 = vmatprep.mubr.f32.mxu0 %v4803
        %v4805 = vand.u32 %v485, 4294901760
        %4806 = vmatmul.mubr.f32.gmra.mrb[0].mxu0 %v4805
        %v4807 = vpop.f32.mrb[0].mxu0
        %v4808 = vadd.f32 %v4730, %v4807
        %v4809 = vpop.f32.mrb[0].mxu0
        %4810 = vdwg.mxu0
        %v4811 = vand.u32 %v237, 4294901760
        %4812 = vmatprep.subr.mxu0 %v4811
        %v4813 = vand.u32 %v236, 4294901760
        %4814 = vmatpush1.xpose.msra.mxu0 %v4813
        %v4815 = vand.u32 %v269, 4294901760
        %4816 = vmatprep.subr.mxu0 %v4815
        %v4817 = vand.u32 %v268, 4294901760
        %4818 = vmatpush1.xpose.msra.mxu0 %v4817
        %v4819 = vand.u32 %v301, 4294901760
        %4820 = vmatprep.subr.mxu0 %v4819
        %v4821 = vand.u32 %v300, 4294901760
        %4822 = vmatpush1.xpose.msra.mxu0 %v4821
        %4823 = vmatprep.subr.mxu0 0.0
        %4824 = vmatpush1.xpose.msra.mxu0 0.0
        %4825 = vmatprep.subr.mxu0 0.0
        %4826 = vmatpush1.xpose.msra.mxu0 0.0
        %4827 = vmatprep.subr.mxu0 0.0
        %4828 = vmatpush1.xpose.msra.mxu0 0.0
        %4829 = vmatprep.subr.mxu0 0.0
        %4830 = vmatpush1.xpose.msra.mxu0 0.0
        %4831 = vmatprep.subr.mxu0 0.0
        %4832 = vmatpush1.xpose.msra.mxu0 0.0
        %4833 = vmatprep.subr.mxu0 0.0
        %4834 = vmatpush1.xpose.msra.mxu0 0.0
        %4835 = vmatprep.subr.mxu0 0.0
        %4836 = vmatpush1.xpose.msra.mxu0 0.0
        %4837 = vmatprep.subr.mxu0 0.0
        %4838 = vmatpush1.xpose.msra.mxu0 0.0
        %4839 = vmatprep.subr.mxu0 0.0
        %4840 = vmatpush1.xpose.msra.mxu0 0.0
        %4841 = vmatprep.subr.mxu0 0.0
        %4842 = vmatpush1.xpose.msra.mxu0 0.0
        %4843 = vmatprep.subr.mxu0 0.0
        %4844 = vmatpush1.xpose.msra.mxu0 0.0
        %4845 = vmatprep.subr.mxu0 0.0
        %4846 = vmatpush1.xpose.msra.mxu0 0.0
        %4847 = vmatprep.subr.mxu0 0.0
        %4848 = vmatpush1.xpose.msra.mxu0 0.0
        %4849 = vmatprep.subr.mxu0 0.0
        %4850 = vmatpush1.xpose.msra.mxu0 0.0
        %4851 = vmatprep.subr.mxu0 0.0
        %4852 = vmatpush1.xpose.msra.mxu0 0.0
        %4853 = vmatprep.subr.mxu0 0.0
        %4854 = vmatpush1.xpose.msra.mxu0 0.0
        %4855 = vmatprep.subr.mxu0 0.0
        %4856 = vmatpush1.xpose.msra.mxu0 0.0
        %4857 = vmatprep.subr.mxu0 0.0
        %4858 = vmatpush1.xpose.msra.mxu0 0.0
        %4859 = vmatprep.subr.mxu0 0.0
        %4860 = vmatpush1.xpose.msra.mxu0 0.0
        %4861 = vmatprep.subr.mxu0 0.0
        %4862 = vmatpush1.xpose.msra.mxu0 0.0
        %4863 = vmatprep.subr.mxu0 0.0
        %4864 = vmatpush1.xpose.msra.mxu0 0.0
        %4865 = vmatprep.subr.mxu0 0.0
        %4866 = vmatpush1.xpose.msra.mxu0 0.0
        %4867 = vmatprep.subr.mxu0 0.0
        %4868 = vmatpush1.xpose.msra.mxu0 0.0
        %4869 = vmatprep.subr.mxu0 0.0
        %4870 = vmatpush1.xpose.msra.mxu0 0.0
        %4871 = vmatprep.subr.mxu0 0.0
        %4872 = vmatpush1.xpose.msra.mxu0 0.0
        %4873 = vmatprep.subr.mxu0 0.0
        %4874 = vmatpush1.xpose.msra.mxu0 0.0
        %4875 = vmatprep.subr.mxu0 0.0
        %4876 = vmatpush1.xpose.msra.mxu0 0.0
        %4877 = vmatprep.subr.mxu0 0.0
        %4878 = vmatpush1.xpose.msra.mxu0 0.0
        %4879 = vmatprep.subr.mxu0 0.0
        %4880 = vmatpush1.xpose.msra.mxu0 0.0
        %v4881 = vand.u32 %v506, 4294901760
        %v4882 = vsub.f32 %v506, %v4881
        %v4883 = vand.u32 %v4882, 4294901760
        %v4884 = vsub.f32 %v4882, %v4883
        %v4885 = vand.u32 %v4884, 4294901760
        %4886 = vmatprep.mubr.f32.mxu0 %v4885
        %v4887 = vand.u32 %v499, 4294901760
        %v4888 = vsub.f32 %v499, %v4887
        %v4889 = vand.u32 %v4888, 4294901760
        %v4890 = vsub.f32 %v4888, %v4889
        %v4891 = vand.u32 %v4890, 4294901760
        %4892 = vmatmul.mubr.f32.gmra.mrb[0].mxu0 %v4891
        %v4893 = vpop.f32.mrb[0].mxu0
        %v4894 = vadd.f32 %v4808, %v4893
        %v4895 = vpop.f32.mrb[0].mxu0
        %4896 = vdwg.mxu0
        %v4897 = vand.u32 %v237, 4294901760
        %v4898 = vsub.f32 %v237, %v4897
        %v4899 = vand.u32 %v4898, 4294901760
        %v4900 = vsub.f32 %v4898, %v4899
        %v4901 = vand.u32 %v4900, 4294901760
        %4902 = vmatprep.subr.mxu0 %v4901
        %v4903 = vand.u32 %v236, 4294901760
        %v4904 = vsub.f32 %v236, %v4903
        %v4905 = vand.u32 %v4904, 4294901760
        %v4906 = vsub.f32 %v4904, %v4905
        %v4907 = vand.u32 %v4906, 4294901760
        %4908 = vmatpush1.xpose.msra.mxu0 %v4907
        %v4909 = vand.u32 %v269, 4294901760
        %v4910 = vsub.f32 %v269, %v4909
        %v4911 = vand.u32 %v4910, 4294901760
        %v4912 = vsub.f32 %v4910, %v4911
        %v4913 = vand.u32 %v4912, 4294901760
        %4914 = vmatprep.subr.mxu0 %v4913
        %v4915 = vand.u32 %v268, 4294901760
        %v4916 = vsub.f32 %v268, %v4915
        %v4917 = vand.u32 %v4916, 4294901760
        %v4918 = vsub.f32 %v4916, %v4917
        %v4919 = vand.u32 %v4918, 4294901760
        %4920 = vmatpush1.xpose.msra.mxu0 %v4919
        %v4921 = vand.u32 %v301, 4294901760
        %v4922 = vsub.f32 %v301, %v4921
        %v4923 = vand.u32 %v4922, 4294901760
        %v4924 = vsub.f32 %v4922, %v4923
        %v4925 = vand.u32 %v4924, 4294901760
        %4926 = vmatprep.subr.mxu0 %v4925
        %v4927 = vand.u32 %v300, 4294901760
        %v4928 = vsub.f32 %v300, %v4927
        %v4929 = vand.u32 %v4928, 4294901760
        %v4930 = vsub.f32 %v4928, %v4929
        %v4931 = vand.u32 %v4930, 4294901760
        %4932 = vmatpush1.xpose.msra.mxu0 %v4931
        %4933 = vmatprep.subr.mxu0 0.0
        %4934 = vmatpush1.xpose.msra.mxu0 0.0
        %4935 = vmatprep.subr.mxu0 0.0
        %4936 = vmatpush1.xpose.msra.mxu0 0.0
        %4937 = vmatprep.subr.mxu0 0.0
        %4938 = vmatpush1.xpose.msra.mxu0 0.0
        %4939 = vmatprep.subr.mxu0 0.0
        %4940 = vmatpush1.xpose.msra.mxu0 0.0
        %4941 = vmatprep.subr.mxu0 0.0
        %4942 = vmatpush1.xpose.msra.mxu0 0.0
        %4943 = vmatprep.subr.mxu0 0.0
        %4944 = vmatpush1.xpose.msra.mxu0 0.0
        %4945 = vmatprep.subr.mxu0 0.0
        %4946 = vmatpush1.xpose.msra.mxu0 0.0
        %4947 = vmatprep.subr.mxu0 0.0
        %4948 = vmatpush1.xpose.msra.mxu0 0.0
        %4949 = vmatprep.subr.mxu0 0.0
        %4950 = vmatpush1.xpose.msra.mxu0 0.0
        %4951 = vmatprep.subr.mxu0 0.0
        %4952 = vmatpush1.xpose.msra.mxu0 0.0
        %4953 = vmatprep.subr.mxu0 0.0
        %4954 = vmatpush1.xpose.msra.mxu0 0.0
        %4955 = vmatprep.subr.mxu0 0.0
        %4956 = vmatpush1.xpose.msra.mxu0 0.0
        %4957 = vmatprep.subr.mxu0 0.0
        %4958 = vmatpush1.xpose.msra.mxu0 0.0
        %4959 = vmatprep.subr.mxu0 0.0
        %4960 = vmatpush1.xpose.msra.mxu0 0.0
        %4961 = vmatprep.subr.mxu0 0.0
        %4962 = vmatpush1.xpose.msra.mxu0 0.0
        %4963 = vmatprep.subr.mxu0 0.0
        %4964 = vmatpush1.xpose.msra.mxu0 0.0
        %4965 = vmatprep.subr.mxu0 0.0
        %4966 = vmatpush1.xpose.msra.mxu0 0.0
        %4967 = vmatprep.subr.mxu0 0.0
        %4968 = vmatpush1.xpose.msra.mxu0 0.0
        %4969 = vmatprep.subr.mxu0 0.0
        %4970 = vmatpush1.xpose.msra.mxu0 0.0
        %4971 = vmatprep.subr.mxu0 0.0
        %4972 = vmatpush1.xpose.msra.mxu0 0.0
        %4973 = vmatprep.subr.mxu0 0.0
        %4974 = vmatpush1.xpose.msra.mxu0 0.0
        %4975 = vmatprep.subr.mxu0 0.0
        %4976 = vmatpush1.xpose.msra.mxu0 0.0
        %4977 = vmatprep.subr.mxu0 0.0
        %4978 = vmatpush1.xpose.msra.mxu0 0.0
        %4979 = vmatprep.subr.mxu0 0.0
        %4980 = vmatpush1.xpose.msra.mxu0 0.0
        %4981 = vmatprep.subr.mxu0 0.0
        %4982 = vmatpush1.xpose.msra.mxu0 0.0
        %4983 = vmatprep.subr.mxu0 0.0
        %4984 = vmatpush1.xpose.msra.mxu0 0.0
        %4985 = vmatprep.subr.mxu0 0.0
        %4986 = vmatpush1.xpose.msra.mxu0 0.0
        %4987 = vmatprep.subr.mxu0 0.0
        %4988 = vmatpush1.xpose.msra.mxu0 0.0
        %4989 = vmatprep.subr.mxu0 0.0
        %4990 = vmatpush1.xpose.msra.mxu0 0.0
        %v4991 = vand.u32 %v506, 4294901760
        %4992 = vmatprep.mubr.f32.mxu0 %v4991
        %v4993 = vand.u32 %v499, 4294901760
        %4994 = vmatmul.mubr.f32.gmra.mrb[0].mxu0 %v4993
        %v4995 = vpop.f32.mrb[0].mxu0
        %v4996 = vadd.f32 %v4894, %v4995
        %v4997 = vpop.f32.mrb[0].mxu0
        %4998 = vdwg.mxu0
        %v4999 = vand.u32 %v237, 4294901760
        %v5000 = vsub.f32 %v237, %v4999
        %5001 = vmatprep.subr.mxu0 %v5000
        %v5002 = vand.u32 %v236, 4294901760
        %v5003 = vsub.f32 %v236, %v5002
        %5004 = vmatpush1.xpose.msra.mxu0 %v5003
        %v5005 = vand.u32 %v269, 4294901760
        %v5006 = vsub.f32 %v269, %v5005
        %5007 = vmatprep.subr.mxu0 %v5006
        %v5008 = vand.u32 %v268, 4294901760
        %v5009 = vsub.f32 %v268, %v5008
        %5010 = vmatpush1.xpose.msra.mxu0 %v5009
        %v5011 = vand.u32 %v301, 4294901760
        %v5012 = vsub.f32 %v301, %v5011
        %5013 = vmatprep.subr.mxu0 %v5012
        %v5014 = vand.u32 %v300, 4294901760
        %v5015 = vsub.f32 %v300, %v5014
        %5016 = vmatpush1.xpose.msra.mxu0 %v5015
        %5017 = vmatprep.subr.mxu0 0.0
        %5018 = vmatpush1.xpose.msra.mxu0 0.0
        %5019 = vmatprep.subr.mxu0 0.0
        %5020 = vmatpush1.xpose.msra.mxu0 0.0
        %5021 = vmatprep.subr.mxu0 0.0
        %5022 = vmatpush1.xpose.msra.mxu0 0.0
        %5023 = vmatprep.subr.mxu0 0.0
        %5024 = vmatpush1.xpose.msra.mxu0 0.0
        %5025 = vmatprep.subr.mxu0 0.0
        %5026 = vmatpush1.xpose.msra.mxu0 0.0
        %5027 = vmatprep.subr.mxu0 0.0
        %5028 = vmatpush1.xpose.msra.mxu0 0.0
        %5029 = vmatprep.subr.mxu0 0.0
        %5030 = vmatpush1.xpose.msra.mxu0 0.0
        %5031 = vmatprep.subr.mxu0 0.0
        %5032 = vmatpush1.xpose.msra.mxu0 0.0
        %5033 = vmatprep.subr.mxu0 0.0
        %5034 = vmatpush1.xpose.msra.mxu0 0.0
        %5035 = vmatprep.subr.mxu0 0.0
        %5036 = vmatpush1.xpose.msra.mxu0 0.0
        %5037 = vmatprep.subr.mxu0 0.0
        %5038 = vmatpush1.xpose.msra.mxu0 0.0
        %5039 = vmatprep.subr.mxu0 0.0
        %5040 = vmatpush1.xpose.msra.mxu0 0.0
        %5041 = vmatprep.subr.mxu0 0.0
        %5042 = vmatpush1.xpose.msra.mxu0 0.0
        %5043 = vmatprep.subr.mxu0 0.0
        %5044 = vmatpush1.xpose.msra.mxu0 0.0
        %5045 = vmatprep.subr.mxu0 0.0
        %5046 = vmatpush1.xpose.msra.mxu0 0.0
        %5047 = vmatprep.subr.mxu0 0.0
        %5048 = vmatpush1.xpose.msra.mxu0 0.0
        %5049 = vmatprep.subr.mxu0 0.0
        %5050 = vmatpush1.xpose.msra.mxu0 0.0
        %5051 = vmatprep.subr.mxu0 0.0
        %5052 = vmatpush1.xpose.msra.mxu0 0.0
        %5053 = vmatprep.subr.mxu0 0.0
        %5054 = vmatpush1.xpose.msra.mxu0 0.0
        %5055 = vmatprep.subr.mxu0 0.0
        %5056 = vmatpush1.xpose.msra.mxu0 0.0
        %5057 = vmatprep.subr.mxu0 0.0
        %5058 = vmatpush1.xpose.msra.mxu0 0.0
        %5059 = vmatprep.subr.mxu0 0.0
        %5060 = vmatpush1.xpose.msra.mxu0 0.0
        %5061 = vmatprep.subr.mxu0 0.0
        %5062 = vmatpush1.xpose.msra.mxu0 0.0
        %5063 = vmatprep.subr.mxu0 0.0
        %5064 = vmatpush1.xpose.msra.mxu0 0.0
        %5065 = vmatprep.subr.mxu0 0.0
        %5066 = vmatpush1.xpose.msra.mxu0 0.0
        %5067 = vmatprep.subr.mxu0 0.0
        %5068 = vmatpush1.xpose.msra.mxu0 0.0
        %5069 = vmatprep.subr.mxu0 0.0
        %5070 = vmatpush1.xpose.msra.mxu0 0.0
        %5071 = vmatprep.subr.mxu0 0.0
        %5072 = vmatpush1.xpose.msra.mxu0 0.0
        %5073 = vmatprep.subr.mxu0 0.0
        %5074 = vmatpush1.xpose.msra.mxu0 0.0
        %v5075 = vand.u32 %v506, 4294901760
        %v5076 = vsub.f32 %v506, %v5075
        %5077 = vmatprep.mubr.f32.mxu0 %v5076
        %v5078 = vand.u32 %v499, 4294901760
        %v5079 = vsub.f32 %v499, %v5078
        %5080 = vmatmul.mubr.f32.gmra.mrb[0].mxu0 %v5079
        %v5081 = vpop.f32.mrb[0].mxu0
        %v5082 = vadd.f32 %v4996, %v5081
        %v5083 = vpop.f32.mrb[0].mxu0
        %5084 = vdwg.mxu0
        %v5085 = vand.u32 %v237, 4294901760
        %5086 = vmatprep.subr.mxu0 %v5085
        %v5087 = vand.u32 %v236, 4294901760
        %5088 = vmatpush1.xpose.msra.mxu0 %v5087
        %v5089 = vand.u32 %v269, 4294901760
        %5090 = vmatprep.subr.mxu0 %v5089
        %v5091 = vand.u32 %v268, 4294901760
        %5092 = vmatpush1.xpose.msra.mxu0 %v5091
        %v5093 = vand.u32 %v301, 4294901760
        %5094 = vmatprep.subr.mxu0 %v5093
        %v5095 = vand.u32 %v300, 4294901760
        %5096 = vmatpush1.xpose.msra.mxu0 %v5095
        %5097 = vmatprep.subr.mxu0 0.0
        %5098 = vmatpush1.xpose.msra.mxu0 0.0
        %5099 = vmatprep.subr.mxu0 0.0
        %5100 = vmatpush1.xpose.msra.mxu0 0.0
        %5101 = vmatprep.subr.mxu0 0.0
        %5102 = vmatpush1.xpose.msra.mxu0 0.0
        %5103 = vmatprep.subr.mxu0 0.0
        %5104 = vmatpush1.xpose.msra.mxu0 0.0
        %5105 = vmatprep.subr.mxu0 0.0
        %5106 = vmatpush1.xpose.msra.mxu0 0.0
        %5107 = vmatprep.subr.mxu0 0.0
        %5108 = vmatpush1.xpose.msra.mxu0 0.0
        %5109 = vmatprep.subr.mxu0 0.0
        %5110 = vmatpush1.xpose.msra.mxu0 0.0
        %5111 = vmatprep.subr.mxu0 0.0
        %5112 = vmatpush1.xpose.msra.mxu0 0.0
        %5113 = vmatprep.subr.mxu0 0.0
        %5114 = vmatpush1.xpose.msra.mxu0 0.0
        %5115 = vmatprep.subr.mxu0 0.0
        %5116 = vmatpush1.xpose.msra.mxu0 0.0
        %5117 = vmatprep.subr.mxu0 0.0
        %5118 = vmatpush1.xpose.msra.mxu0 0.0
        %5119 = vmatprep.subr.mxu0 0.0
        %5120 = vmatpush1.xpose.msra.mxu0 0.0
        %5121 = vmatprep.subr.mxu0 0.0
        %5122 = vmatpush1.xpose.msra.mxu0 0.0
        %5123 = vmatprep.subr.mxu0 0.0
        %5124 = vmatpush1.xpose.msra.mxu0 0.0
        %5125 = vmatprep.subr.mxu0 0.0
        %5126 = vmatpush1.xpose.msra.mxu0 0.0
        %5127 = vmatprep.subr.mxu0 0.0
        %5128 = vmatpush1.xpose.msra.mxu0 0.0
        %5129 = vmatprep.subr.mxu0 0.0
        %5130 = vmatpush1.xpose.msra.mxu0 0.0
        %5131 = vmatprep.subr.mxu0 0.0
        %5132 = vmatpush1.xpose.msra.mxu0 0.0
        %5133 = vmatprep.subr.mxu0 0.0
        %5134 = vmatpush1.xpose.msra.mxu0 0.0
        %5135 = vmatprep.subr.mxu0 0.0
        %5136 = vmatpush1.xpose.msra.mxu0 0.0
        %5137 = vmatprep.subr.mxu0 0.0
        %5138 = vmatpush1.xpose.msra.mxu0 0.0
        %5139 = vmatprep.subr.mxu0 0.0
        %5140 = vmatpush1.xpose.msra.mxu0 0.0
        %5141 = vmatprep.subr.mxu0 0.0
        %5142 = vmatpush1.xpose.msra.mxu0 0.0
        %5143 = vmatprep.subr.mxu0 0.0
        %5144 = vmatpush1.xpose.msra.mxu0 0.0
        %5145 = vmatprep.subr.mxu0 0.0
        %5146 = vmatpush1.xpose.msra.mxu0 0.0
        %5147 = vmatprep.subr.mxu0 0.0
        %5148 = vmatpush1.xpose.msra.mxu0 0.0
        %5149 = vmatprep.subr.mxu0 0.0
        %5150 = vmatpush1.xpose.msra.mxu0 0.0
        %5151 = vmatprep.subr.mxu0 0.0
        %5152 = vmatpush1.xpose.msra.mxu0 0.0
        %5153 = vmatprep.subr.mxu0 0.0
        %5154 = vmatpush1.xpose.msra.mxu0 0.0
        %v5155 = vand.u32 %v506, 4294901760
        %v5156 = vsub.f32 %v506, %v5155
        %v5157 = vand.u32 %v5156, 4294901760
        %5158 = vmatprep.mubr.f32.mxu0 %v5157
        %v5159 = vand.u32 %v499, 4294901760
        %v5160 = vsub.f32 %v499, %v5159
        %v5161 = vand.u32 %v5160, 4294901760
        %5162 = vmatmul.mubr.f32.gmra.mrb[0].mxu0 %v5161
        %v5163 = vpop.f32.mrb[0].mxu0
        %v5164 = vadd.f32 %v5082, %v5163
        %v5165 = vpop.f32.mrb[0].mxu0
        %5166 = vdwg.mxu0
        %v5167 = vand.u32 %v237, 4294901760
        %v5168 = vsub.f32 %v237, %v5167
        %v5169 = vand.u32 %v5168, 4294901760
        %5170 = vmatprep.subr.mxu0 %v5169
        %v5171 = vand.u32 %v236, 4294901760
        %v5172 = vsub.f32 %v236, %v5171
        %v5173 = vand.u32 %v5172, 4294901760
        %5174 = vmatpush1.xpose.msra.mxu0 %v5173
        %v5175 = vand.u32 %v269, 4294901760
        %v5176 = vsub.f32 %v269, %v5175
        %v5177 = vand.u32 %v5176, 4294901760
        %5178 = vmatprep.subr.mxu0 %v5177
        %v5179 = vand.u32 %v268, 4294901760
        %v5180 = vsub.f32 %v268, %v5179
        %v5181 = vand.u32 %v5180, 4294901760
        %5182 = vmatpush1.xpose.msra.mxu0 %v5181
        %v5183 = vand.u32 %v301, 4294901760
        %v5184 = vsub.f32 %v301, %v5183
        %v5185 = vand.u32 %v5184, 4294901760
        %5186 = vmatprep.subr.mxu0 %v5185
        %v5187 = vand.u32 %v300, 4294901760
        %v5188 = vsub.f32 %v300, %v5187
        %v5189 = vand.u32 %v5188, 4294901760
        %5190 = vmatpush1.xpose.msra.mxu0 %v5189
        %5191 = vmatprep.subr.mxu0 0.0
        %5192 = vmatpush1.xpose.msra.mxu0 0.0
        %5193 = vmatprep.subr.mxu0 0.0
        %5194 = vmatpush1.xpose.msra.mxu0 0.0
        %5195 = vmatprep.subr.mxu0 0.0
        %5196 = vmatpush1.xpose.msra.mxu0 0.0
        %5197 = vmatprep.subr.mxu0 0.0
        %5198 = vmatpush1.xpose.msra.mxu0 0.0
        %5199 = vmatprep.subr.mxu0 0.0
        %5200 = vmatpush1.xpose.msra.mxu0 0.0
        %5201 = vmatprep.subr.mxu0 0.0
        %5202 = vmatpush1.xpose.msra.mxu0 0.0
        %5203 = vmatprep.subr.mxu0 0.0
        %5204 = vmatpush1.xpose.msra.mxu0 0.0
        %5205 = vmatprep.subr.mxu0 0.0
        %5206 = vmatpush1.xpose.msra.mxu0 0.0
        %5207 = vmatprep.subr.mxu0 0.0
        %5208 = vmatpush1.xpose.msra.mxu0 0.0
        %5209 = vmatprep.subr.mxu0 0.0
        %5210 = vmatpush1.xpose.msra.mxu0 0.0
        %5211 = vmatprep.subr.mxu0 0.0
        %5212 = vmatpush1.xpose.msra.mxu0 0.0
        %5213 = vmatprep.subr.mxu0 0.0
        %5214 = vmatpush1.xpose.msra.mxu0 0.0
        %5215 = vmatprep.subr.mxu0 0.0
        %5216 = vmatpush1.xpose.msra.mxu0 0.0
        %5217 = vmatprep.subr.mxu0 0.0
        %5218 = vmatpush1.xpose.msra.mxu0 0.0
        %5219 = vmatprep.subr.mxu0 0.0
        %5220 = vmatpush1.xpose.msra.mxu0 0.0
        %5221 = vmatprep.subr.mxu0 0.0
        %5222 = vmatpush1.xpose.msra.mxu0 0.0
        %5223 = vmatprep.subr.mxu0 0.0
        %5224 = vmatpush1.xpose.msra.mxu0 0.0
        %5225 = vmatprep.subr.mxu0 0.0
        %5226 = vmatpush1.xpose.msra.mxu0 0.0
        %5227 = vmatprep.subr.mxu0 0.0
        %5228 = vmatpush1.xpose.msra.mxu0 0.0
        %5229 = vmatprep.subr.mxu0 0.0
        %5230 = vmatpush1.xpose.msra.mxu0 0.0
        %5231 = vmatprep.subr.mxu0 0.0
        %5232 = vmatpush1.xpose.msra.mxu0 0.0
        %5233 = vmatprep.subr.mxu0 0.0
        %5234 = vmatpush1.xpose.msra.mxu0 0.0
        %5235 = vmatprep.subr.mxu0 0.0
        %5236 = vmatpush1.xpose.msra.mxu0 0.0
        %5237 = vmatprep.subr.mxu0 0.0
        %5238 = vmatpush1.xpose.msra.mxu0 0.0
        %5239 = vmatprep.subr.mxu0 0.0
        %5240 = vmatpush1.xpose.msra.mxu0 0.0
        %5241 = vmatprep.subr.mxu0 0.0
        %5242 = vmatpush1.xpose.msra.mxu0 0.0
        %5243 = vmatprep.subr.mxu0 0.0
        %5244 = vmatpush1.xpose.msra.mxu0 0.0
        %5245 = vmatprep.subr.mxu0 0.0
        %5246 = vmatpush1.xpose.msra.mxu0 0.0
        %5247 = vmatprep.subr.mxu0 0.0
        %5248 = vmatpush1.xpose.msra.mxu0 0.0
        %v5249 = vand.u32 %v506, 4294901760
        %5250 = vmatprep.mubr.f32.mxu0 %v5249
        %v5251 = vand.u32 %v499, 4294901760
        %5252 = vmatmul.mubr.f32.gmra.mrb[0].mxu0 %v5251
        %v5253 = vpop.f32.mrb[0].mxu0
        %v5254 = vadd.f32 %v5164, %v5253
        %v5255 = vpop.f32.mrb[0].mxu0
        %5256 = vdwg.mxu0
        %v5257 = vand.u32 %v237, 4294901760
        %5258 = vmatprep.subr.mxu0 %v5257
        %v5259 = vand.u32 %v236, 4294901760
        %5260 = vmatpush1.xpose.msra.mxu0 %v5259
        %v5261 = vand.u32 %v269, 4294901760
        %5262 = vmatprep.subr.mxu0 %v5261
        %v5263 = vand.u32 %v268, 4294901760
        %5264 = vmatpush1.xpose.msra.mxu0 %v5263
        %v5265 = vand.u32 %v301, 4294901760
        %5266 = vmatprep.subr.mxu0 %v5265
        %v5267 = vand.u32 %v300, 4294901760
        %5268 = vmatpush1.xpose.msra.mxu0 %v5267
        %5269 = vmatprep.subr.mxu0 0.0
        %5270 = vmatpush1.xpose.msra.mxu0 0.0
        %5271 = vmatprep.subr.mxu0 0.0
        %5272 = vmatpush1.xpose.msra.mxu0 0.0
        %5273 = vmatprep.subr.mxu0 0.0
        %5274 = vmatpush1.xpose.msra.mxu0 0.0
        %5275 = vmatprep.subr.mxu0 0.0
        %5276 = vmatpush1.xpose.msra.mxu0 0.0
        %5277 = vmatprep.subr.mxu0 0.0
        %5278 = vmatpush1.xpose.msra.mxu0 0.0
        %5279 = vmatprep.subr.mxu0 0.0
        %5280 = vmatpush1.xpose.msra.mxu0 0.0
        %5281 = vmatprep.subr.mxu0 0.0
        %5282 = vmatpush1.xpose.msra.mxu0 0.0
        %5283 = vmatprep.subr.mxu0 0.0
        %5284 = vmatpush1.xpose.msra.mxu0 0.0
        %5285 = vmatprep.subr.mxu0 0.0
        %5286 = vmatpush1.xpose.msra.mxu0 0.0
        %5287 = vmatprep.subr.mxu0 0.0
        %5288 = vmatpush1.xpose.msra.mxu0 0.0
        %5289 = vmatprep.subr.mxu0 0.0
        %5290 = vmatpush1.xpose.msra.mxu0 0.0
        %5291 = vmatprep.subr.mxu0 0.0
        %5292 = vmatpush1.xpose.msra.mxu0 0.0
        %5293 = vmatprep.subr.mxu0 0.0
        %5294 = vmatpush1.xpose.msra.mxu0 0.0
        %5295 = vmatprep.subr.mxu0 0.0
        %5296 = vmatpush1.xpose.msra.mxu0 0.0
        %5297 = vmatprep.subr.mxu0 0.0
        %5298 = vmatpush1.xpose.msra.mxu0 0.0
        %5299 = vmatprep.subr.mxu0 0.0
        %5300 = vmatpush1.xpose.msra.mxu0 0.0
        %5301 = vmatprep.subr.mxu0 0.0
        %5302 = vmatpush1.xpose.msra.mxu0 0.0
        %5303 = vmatprep.subr.mxu0 0.0
        %5304 = vmatpush1.xpose.msra.mxu0 0.0
        %5305 = vmatprep.subr.mxu0 0.0
        %5306 = vmatpush1.xpose.msra.mxu0 0.0
        %5307 = vmatprep.subr.mxu0 0.0
        %5308 = vmatpush1.xpose.msra.mxu0 0.0
        %5309 = vmatprep.subr.mxu0 0.0
        %5310 = vmatpush1.xpose.msra.mxu0 0.0
        %5311 = vmatprep.subr.mxu0 0.0
        %5312 = vmatpush1.xpose.msra.mxu0 0.0
        %5313 = vmatprep.subr.mxu0 0.0
        %5314 = vmatpush1.xpose.msra.mxu0 0.0
        %5315 = vmatprep.subr.mxu0 0.0
        %5316 = vmatpush1.xpose.msra.mxu0 0.0
        %5317 = vmatprep.subr.mxu0 0.0
        %5318 = vmatpush1.xpose.msra.mxu0 0.0
        %5319 = vmatprep.subr.mxu0 0.0
        %5320 = vmatpush1.xpose.msra.mxu0 0.0
        %5321 = vmatprep.subr.mxu0 0.0
        %5322 = vmatpush1.xpose.msra.mxu0 0.0
        %5323 = vmatprep.subr.mxu0 0.0
        %5324 = vmatpush1.xpose.msra.mxu0 0.0
        %5325 = vmatprep.subr.mxu0 0.0
        %5326 = vmatpush1.xpose.msra.mxu0 0.0
        %v5327 = vand.u32 %v506, 4294901760
        %5328 = vmatprep.mubr.f32.mxu0 %v5327
        %v5329 = vand.u32 %v499, 4294901760
        %5330 = vmatmul.mubr.f32.gmra.mrb[0].mxu0 %v5329
        %v5331 = vpop.f32.mrb[0].mxu0
        %v5332 = vadd.f32 %v5254, %v5331
        %v5333 = vpop.f32.mrb[0].mxu0
        %5334 = vdwg.mxu0
        %v5335 = vand.u32 %v239, 4294901760
        %5336 = vmatprep.subr.mxu0 %v5335
        %v5337 = vand.u32 %v238, 4294901760
        %5338 = vmatpush1.xpose.msra.mxu0 %v5337
        %v5339 = vand.u32 %v271, 4294901760
        %5340 = vmatprep.subr.mxu0 %v5339
        %v5341 = vand.u32 %v270, 4294901760
        %5342 = vmatpush1.xpose.msra.mxu0 %v5341
        %v5343 = vand.u32 %v303, 4294901760
        %5344 = vmatprep.subr.mxu0 %v5343
        %v5345 = vand.u32 %v302, 4294901760
        %5346 = vmatpush1.xpose.msra.mxu0 %v5345
        %5347 = vmatprep.subr.mxu0 0.0
        %5348 = vmatpush1.xpose.msra.mxu0 0.0
        %5349 = vmatprep.subr.mxu0 0.0
        %5350 = vmatpush1.xpose.msra.mxu0 0.0
        %5351 = vmatprep.subr.mxu0 0.0
        %5352 = vmatpush1.xpose.msra.mxu0 0.0
        %5353 = vmatprep.subr.mxu0 0.0
        %5354 = vmatpush1.xpose.msra.mxu0 0.0
        %5355 = vmatprep.subr.mxu0 0.0
        %5356 = vmatpush1.xpose.msra.mxu0 0.0
        %5357 = vmatprep.subr.mxu0 0.0
        %5358 = vmatpush1.xpose.msra.mxu0 0.0
        %5359 = vmatprep.subr.mxu0 0.0
        %5360 = vmatpush1.xpose.msra.mxu0 0.0
        %5361 = vmatprep.subr.mxu0 0.0
        %5362 = vmatpush1.xpose.msra.mxu0 0.0
        %5363 = vmatprep.subr.mxu0 0.0
        %5364 = vmatpush1.xpose.msra.mxu0 0.0
        %5365 = vmatprep.subr.mxu0 0.0
        %5366 = vmatpush1.xpose.msra.mxu0 0.0
        %5367 = vmatprep.subr.mxu0 0.0
        %5368 = vmatpush1.xpose.msra.mxu0 0.0
        %5369 = vmatprep.subr.mxu0 0.0
        %5370 = vmatpush1.xpose.msra.mxu0 0.0
        %5371 = vmatprep.subr.mxu0 0.0
        %5372 = vmatpush1.xpose.msra.mxu0 0.0
        %5373 = vmatprep.subr.mxu0 0.0
        %5374 = vmatpush1.xpose.msra.mxu0 0.0
        %5375 = vmatprep.subr.mxu0 0.0
        %5376 = vmatpush1.xpose.msra.mxu0 0.0
        %5377 = vmatprep.subr.mxu0 0.0
        %5378 = vmatpush1.xpose.msra.mxu0 0.0
        %5379 = vmatprep.subr.mxu0 0.0
        %5380 = vmatpush1.xpose.msra.mxu0 0.0
        %5381 = vmatprep.subr.mxu0 0.0
        %5382 = vmatpush1.xpose.msra.mxu0 0.0
        %5383 = vmatprep.subr.mxu0 0.0
        %5384 = vmatpush1.xpose.msra.mxu0 0.0
        %5385 = vmatprep.subr.mxu0 0.0
        %5386 = vmatpush1.xpose.msra.mxu0 0.0
        %5387 = vmatprep.subr.mxu0 0.0
        %5388 = vmatpush1.xpose.msra.mxu0 0.0
        %5389 = vmatprep.subr.mxu0 0.0
        %5390 = vmatpush1.xpose.msra.mxu0 0.0
        %5391 = vmatprep.subr.mxu0 0.0
        %5392 = vmatpush1.xpose.msra.mxu0 0.0
        %5393 = vmatprep.subr.mxu0 0.0
        %5394 = vmatpush1.xpose.msra.mxu0 0.0
        %5395 = vmatprep.subr.mxu0 0.0
        %5396 = vmatpush1.xpose.msra.mxu0 0.0
        %5397 = vmatprep.subr.mxu0 0.0
        %5398 = vmatpush1.xpose.msra.mxu0 0.0
        %5399 = vmatprep.subr.mxu0 0.0
        %5400 = vmatpush1.xpose.msra.mxu0 0.0
        %5401 = vmatprep.subr.mxu0 0.0
        %5402 = vmatpush1.xpose.msra.mxu0 0.0
        %5403 = vmatprep.subr.mxu0 0.0
        %5404 = vmatpush1.xpose.msra.mxu0 0.0
        %v5405 = vand.u32 %v520, 4294901760
        %v5406 = vsub.f32 %v520, %v5405
        %v5407 = vand.u32 %v5406, 4294901760
        %v5408 = vsub.f32 %v5406, %v5407
        %v5409 = vand.u32 %v5408, 4294901760
        %5410 = vmatprep.mubr.f32.mxu0 %v5409
        %v5411 = vand.u32 %v513, 4294901760
        %v5412 = vsub.f32 %v513, %v5411
        %v5413 = vand.u32 %v5412, 4294901760
        %v5414 = vsub.f32 %v5412, %v5413
        %v5415 = vand.u32 %v5414, 4294901760
        %5416 = vmatmul.mubr.f32.gmra.mrb[0].mxu0 %v5415
        %v5417 = vpop.f32.mrb[0].mxu0
        %v5418 = vadd.f32 %v5332, %v5417
        %v5419 = vpop.f32.mrb[0].mxu0
        %5420 = vdwg.mxu0
        %v5421 = vand.u32 %v239, 4294901760
        %v5422 = vsub.f32 %v239, %v5421
        %v5423 = vand.u32 %v5422, 4294901760
        %v5424 = vsub.f32 %v5422, %v5423
        %v5425 = vand.u32 %v5424, 4294901760
        %5426 = vmatprep.subr.mxu0 %v5425
        %v5427 = vand.u32 %v238, 4294901760
        %v5428 = vsub.f32 %v238, %v5427
        %v5429 = vand.u32 %v5428, 4294901760
        %v5430 = vsub.f32 %v5428, %v5429
        %v5431 = vand.u32 %v5430, 4294901760
        %5432 = vmatpush1.xpose.msra.mxu0 %v5431
        %v5433 = vand.u32 %v271, 4294901760
        %v5434 = vsub.f32 %v271, %v5433
        %v5435 = vand.u32 %v5434, 4294901760
        %v5436 = vsub.f32 %v5434, %v5435
        %v5437 = vand.u32 %v5436, 4294901760
        %5438 = vmatprep.subr.mxu0 %v5437
        %v5439 = vand.u32 %v270, 4294901760
        %v5440 = vsub.f32 %v270, %v5439
        %v5441 = vand.u32 %v5440, 4294901760
        %v5442 = vsub.f32 %v5440, %v5441
        %v5443 = vand.u32 %v5442, 4294901760
        %5444 = vmatpush1.xpose.msra.mxu0 %v5443
        %v5445 = vand.u32 %v303, 4294901760
        %v5446 = vsub.f32 %v303, %v5445
        %v5447 = vand.u32 %v5446, 4294901760
        %v5448 = vsub.f32 %v5446, %v5447
        %v5449 = vand.u32 %v5448, 4294901760
        %5450 = vmatprep.subr.mxu0 %v5449
        %v5451 = vand.u32 %v302, 4294901760
        %v5452 = vsub.f32 %v302, %v5451
        %v5453 = vand.u32 %v5452, 4294901760
        %v5454 = vsub.f32 %v5452, %v5453
        %v5455 = vand.u32 %v5454, 4294901760
        %5456 = vmatpush1.xpose.msra.mxu0 %v5455
        %5457 = vmatprep.subr.mxu0 0.0
        %5458 = vmatpush1.xpose.msra.mxu0 0.0
        %5459 = vmatprep.subr.mxu0 0.0
        %5460 = vmatpush1.xpose.msra.mxu0 0.0
        %5461 = vmatprep.subr.mxu0 0.0
        %5462 = vmatpush1.xpose.msra.mxu0 0.0
        %5463 = vmatprep.subr.mxu0 0.0
        %5464 = vmatpush1.xpose.msra.mxu0 0.0
        %5465 = vmatprep.subr.mxu0 0.0
        %5466 = vmatpush1.xpose.msra.mxu0 0.0
        %5467 = vmatprep.subr.mxu0 0.0
        %5468 = vmatpush1.xpose.msra.mxu0 0.0
        %5469 = vmatprep.subr.mxu0 0.0
        %5470 = vmatpush1.xpose.msra.mxu0 0.0
        %5471 = vmatprep.subr.mxu0 0.0
        %5472 = vmatpush1.xpose.msra.mxu0 0.0
        %5473 = vmatprep.subr.mxu0 0.0
        %5474 = vmatpush1.xpose.msra.mxu0 0.0
        %5475 = vmatprep.subr.mxu0 0.0
        %5476 = vmatpush1.xpose.msra.mxu0 0.0
        %5477 = vmatprep.subr.mxu0 0.0
        %5478 = vmatpush1.xpose.msra.mxu0 0.0
        %5479 = vmatprep.subr.mxu0 0.0
        %5480 = vmatpush1.xpose.msra.mxu0 0.0
        %5481 = vmatprep.subr.mxu0 0.0
        %5482 = vmatpush1.xpose.msra.mxu0 0.0
        %5483 = vmatprep.subr.mxu0 0.0
        %5484 = vmatpush1.xpose.msra.mxu0 0.0
        %5485 = vmatprep.subr.mxu0 0.0
        %5486 = vmatpush1.xpose.msra.mxu0 0.0
        %5487 = vmatprep.subr.mxu0 0.0
        %5488 = vmatpush1.xpose.msra.mxu0 0.0
        %5489 = vmatprep.subr.mxu0 0.0
        %5490 = vmatpush1.xpose.msra.mxu0 0.0
        %5491 = vmatprep.subr.mxu0 0.0
        %5492 = vmatpush1.xpose.msra.mxu0 0.0
        %5493 = vmatprep.subr.mxu0 0.0
        %5494 = vmatpush1.xpose.msra.mxu0 0.0
        %5495 = vmatprep.subr.mxu0 0.0
        %5496 = vmatpush1.xpose.msra.mxu0 0.0
        %5497 = vmatprep.subr.mxu0 0.0
        %5498 = vmatpush1.xpose.msra.mxu0 0.0
        %5499 = vmatprep.subr.mxu0 0.0
        %5500 = vmatpush1.xpose.msra.mxu0 0.0
        %5501 = vmatprep.subr.mxu0 0.0
        %5502 = vmatpush1.xpose.msra.mxu0 0.0
        %5503 = vmatprep.subr.mxu0 0.0
        %5504 = vmatpush1.xpose.msra.mxu0 0.0
        %5505 = vmatprep.subr.mxu0 0.0
        %5506 = vmatpush1.xpose.msra.mxu0 0.0
        %5507 = vmatprep.subr.mxu0 0.0
        %5508 = vmatpush1.xpose.msra.mxu0 0.0
        %5509 = vmatprep.subr.mxu0 0.0
        %5510 = vmatpush1.xpose.msra.mxu0 0.0
        %5511 = vmatprep.subr.mxu0 0.0
        %5512 = vmatpush1.xpose.msra.mxu0 0.0
        %5513 = vmatprep.subr.mxu0 0.0
        %5514 = vmatpush1.xpose.msra.mxu0 0.0
        %v5515 = vand.u32 %v520, 4294901760
        %5516 = vmatprep.mubr.f32.mxu0 %v5515
        %v5517 = vand.u32 %v513, 4294901760
        %5518 = vmatmul.mubr.f32.gmra.mrb[0].mxu0 %v5517
        %v5519 = vpop.f32.mrb[0].mxu0
        %v5520 = vadd.f32 %v5418, %v5519
        %v5521 = vpop.f32.mrb[0].mxu0
        %5522 = vdwg.mxu0
        %v5523 = vand.u32 %v239, 4294901760
        %v5524 = vsub.f32 %v239, %v5523
        %5525 = vmatprep.subr.mxu0 %v5524
        %v5526 = vand.u32 %v238, 4294901760
        %v5527 = vsub.f32 %v238, %v5526
        %5528 = vmatpush1.xpose.msra.mxu0 %v5527
        %v5529 = vand.u32 %v271, 4294901760
        %v5530 = vsub.f32 %v271, %v5529
        %5531 = vmatprep.subr.mxu0 %v5530
        %v5532 = vand.u32 %v270, 4294901760
        %v5533 = vsub.f32 %v270, %v5532
        %5534 = vmatpush1.xpose.msra.mxu0 %v5533
        %v5535 = vand.u32 %v303, 4294901760
        %v5536 = vsub.f32 %v303, %v5535
        %5537 = vmatprep.subr.mxu0 %v5536
        %v5538 = vand.u32 %v302, 4294901760
        %v5539 = vsub.f32 %v302, %v5538
        %5540 = vmatpush1.xpose.msra.mxu0 %v5539
        %5541 = vmatprep.subr.mxu0 0.0
        %5542 = vmatpush1.xpose.msra.mxu0 0.0
        %5543 = vmatprep.subr.mxu0 0.0
        %5544 = vmatpush1.xpose.msra.mxu0 0.0
        %5545 = vmatprep.subr.mxu0 0.0
        %5546 = vmatpush1.xpose.msra.mxu0 0.0
        %5547 = vmatprep.subr.mxu0 0.0
        %5548 = vmatpush1.xpose.msra.mxu0 0.0
        %5549 = vmatprep.subr.mxu0 0.0
        %5550 = vmatpush1.xpose.msra.mxu0 0.0
        %5551 = vmatprep.subr.mxu0 0.0
        %5552 = vmatpush1.xpose.msra.mxu0 0.0
        %5553 = vmatprep.subr.mxu0 0.0
        %5554 = vmatpush1.xpose.msra.mxu0 0.0
        %5555 = vmatprep.subr.mxu0 0.0
        %5556 = vmatpush1.xpose.msra.mxu0 0.0
        %5557 = vmatprep.subr.mxu0 0.0
        %5558 = vmatpush1.xpose.msra.mxu0 0.0
        %5559 = vmatprep.subr.mxu0 0.0
        %5560 = vmatpush1.xpose.msra.mxu0 0.0
        %5561 = vmatprep.subr.mxu0 0.0
        %5562 = vmatpush1.xpose.msra.mxu0 0.0
        %5563 = vmatprep.subr.mxu0 0.0
        %5564 = vmatpush1.xpose.msra.mxu0 0.0
        %5565 = vmatprep.subr.mxu0 0.0
        %5566 = vmatpush1.xpose.msra.mxu0 0.0
        %5567 = vmatprep.subr.mxu0 0.0
        %5568 = vmatpush1.xpose.msra.mxu0 0.0
        %5569 = vmatprep.subr.mxu0 0.0
        %5570 = vmatpush1.xpose.msra.mxu0 0.0
        %5571 = vmatprep.subr.mxu0 0.0
        %5572 = vmatpush1.xpose.msra.mxu0 0.0
        %5573 = vmatprep.subr.mxu0 0.0
        %5574 = vmatpush1.xpose.msra.mxu0 0.0
        %5575 = vmatprep.subr.mxu0 0.0
        %5576 = vmatpush1.xpose.msra.mxu0 0.0
        %5577 = vmatprep.subr.mxu0 0.0
        %5578 = vmatpush1.xpose.msra.mxu0 0.0
        %5579 = vmatprep.subr.mxu0 0.0
        %5580 = vmatpush1.xpose.msra.mxu0 0.0
        %5581 = vmatprep.subr.mxu0 0.0
        %5582 = vmatpush1.xpose.msra.mxu0 0.0
        %5583 = vmatprep.subr.mxu0 0.0
        %5584 = vmatpush1.xpose.msra.mxu0 0.0
        %5585 = vmatprep.subr.mxu0 0.0
        %5586 = vmatpush1.xpose.msra.mxu0 0.0
        %5587 = vmatprep.subr.mxu0 0.0
        %5588 = vmatpush1.xpose.msra.mxu0 0.0
        %5589 = vmatprep.subr.mxu0 0.0
        %5590 = vmatpush1.xpose.msra.mxu0 0.0
        %5591 = vmatprep.subr.mxu0 0.0
        %5592 = vmatpush1.xpose.msra.mxu0 0.0
        %5593 = vmatprep.subr.mxu0 0.0
        %5594 = vmatpush1.xpose.msra.mxu0 0.0
        %5595 = vmatprep.subr.mxu0 0.0
        %5596 = vmatpush1.xpose.msra.mxu0 0.0
        %5597 = vmatprep.subr.mxu0 0.0
        %5598 = vmatpush1.xpose.msra.mxu0 0.0
        %v5599 = vand.u32 %v520, 4294901760
        %v5600 = vsub.f32 %v520, %v5599
        %5601 = vmatprep.mubr.f32.mxu0 %v5600
        %v5602 = vand.u32 %v513, 4294901760
        %v5603 = vsub.f32 %v513, %v5602
        %5604 = vmatmul.mubr.f32.gmra.mrb[0].mxu0 %v5603
        %v5605 = vpop.f32.mrb[0].mxu0
        %v5606 = vadd.f32 %v5520, %v5605
        %v5607 = vpop.f32.mrb[0].mxu0
        %5608 = vdwg.mxu0
        %v5609 = vand.u32 %v239, 4294901760
        %5610 = vmatprep.subr.mxu0 %v5609
        %v5611 = vand.u32 %v238, 4294901760
        %5612 = vmatpush1.xpose.msra.mxu0 %v5611
        %v5613 = vand.u32 %v271, 4294901760
        %5614 = vmatprep.subr.mxu0 %v5613
        %v5615 = vand.u32 %v270, 4294901760
        %5616 = vmatpush1.xpose.msra.mxu0 %v5615
        %v5617 = vand.u32 %v303, 4294901760
        %5618 = vmatprep.subr.mxu0 %v5617
        %v5619 = vand.u32 %v302, 4294901760
        %5620 = vmatpush1.xpose.msra.mxu0 %v5619
        %5621 = vmatprep.subr.mxu0 0.0
        %5622 = vmatpush1.xpose.msra.mxu0 0.0
        %5623 = vmatprep.subr.mxu0 0.0
        %5624 = vmatpush1.xpose.msra.mxu0 0.0
        %5625 = vmatprep.subr.mxu0 0.0
        %5626 = vmatpush1.xpose.msra.mxu0 0.0
        %5627 = vmatprep.subr.mxu0 0.0
        %5628 = vmatpush1.xpose.msra.mxu0 0.0
        %5629 = vmatprep.subr.mxu0 0.0
        %5630 = vmatpush1.xpose.msra.mxu0 0.0
        %5631 = vmatprep.subr.mxu0 0.0
        %5632 = vmatpush1.xpose.msra.mxu0 0.0
        %5633 = vmatprep.subr.mxu0 0.0
        %5634 = vmatpush1.xpose.msra.mxu0 0.0
        %5635 = vmatprep.subr.mxu0 0.0
        %5636 = vmatpush1.xpose.msra.mxu0 0.0
        %5637 = vmatprep.subr.mxu0 0.0
        %5638 = vmatpush1.xpose.msra.mxu0 0.0
        %5639 = vmatprep.subr.mxu0 0.0
        %5640 = vmatpush1.xpose.msra.mxu0 0.0
        %5641 = vmatprep.subr.mxu0 0.0
        %5642 = vmatpush1.xpose.msra.mxu0 0.0
        %5643 = vmatprep.subr.mxu0 0.0
        %5644 = vmatpush1.xpose.msra.mxu0 0.0
        %5645 = vmatprep.subr.mxu0 0.0
        %5646 = vmatpush1.xpose.msra.mxu0 0.0
        %5647 = vmatprep.subr.mxu0 0.0
        %5648 = vmatpush1.xpose.msra.mxu0 0.0
        %5649 = vmatprep.subr.mxu0 0.0
        %5650 = vmatpush1.xpose.msra.mxu0 0.0
        %5651 = vmatprep.subr.mxu0 0.0
        %5652 = vmatpush1.xpose.msra.mxu0 0.0
        %5653 = vmatprep.subr.mxu0 0.0
        %5654 = vmatpush1.xpose.msra.mxu0 0.0
        %5655 = vmatprep.subr.mxu0 0.0
        %5656 = vmatpush1.xpose.msra.mxu0 0.0
        %5657 = vmatprep.subr.mxu0 0.0
        %5658 = vmatpush1.xpose.msra.mxu0 0.0
        %5659 = vmatprep.subr.mxu0 0.0
        %5660 = vmatpush1.xpose.msra.mxu0 0.0
        %5661 = vmatprep.subr.mxu0 0.0
        %5662 = vmatpush1.xpose.msra.mxu0 0.0
        %5663 = vmatprep.subr.mxu0 0.0
        %5664 = vmatpush1.xpose.msra.mxu0 0.0
        %5665 = vmatprep.subr.mxu0 0.0
        %5666 = vmatpush1.xpose.msra.mxu0 0.0
        %5667 = vmatprep.subr.mxu0 0.0
        %5668 = vmatpush1.xpose.msra.mxu0 0.0
        %5669 = vmatprep.subr.mxu0 0.0
        %5670 = vmatpush1.xpose.msra.mxu0 0.0
        %5671 = vmatprep.subr.mxu0 0.0
        %5672 = vmatpush1.xpose.msra.mxu0 0.0
        %5673 = vmatprep.subr.mxu0 0.0
        %5674 = vmatpush1.xpose.msra.mxu0 0.0
        %5675 = vmatprep.subr.mxu0 0.0
        %5676 = vmatpush1.xpose.msra.mxu0 0.0
        %5677 = vmatprep.subr.mxu0 0.0
        %5678 = vmatpush1.xpose.msra.mxu0 0.0
        %v5679 = vand.u32 %v520, 4294901760
        %v5680 = vsub.f32 %v520, %v5679
        %v5681 = vand.u32 %v5680, 4294901760
        %5682 = vmatprep.mubr.f32.mxu0 %v5681
        %v5683 = vand.u32 %v513, 4294901760
        %v5684 = vsub.f32 %v513, %v5683
        %v5685 = vand.u32 %v5684, 4294901760
        %5686 = vmatmul.mubr.f32.gmra.mrb[0].mxu0 %v5685
        %v5687 = vpop.f32.mrb[0].mxu0
        %v5688 = vadd.f32 %v5606, %v5687
        %v5689 = vpop.f32.mrb[0].mxu0
        %5690 = vdwg.mxu0
        %v5691 = vand.u32 %v239, 4294901760
        %v5692 = vsub.f32 %v239, %v5691
        %v5693 = vand.u32 %v5692, 4294901760
        %5694 = vmatprep.subr.mxu0 %v5693
        %v5695 = vand.u32 %v238, 4294901760
        %v5696 = vsub.f32 %v238, %v5695
        %v5697 = vand.u32 %v5696, 4294901760
        %5698 = vmatpush1.xpose.msra.mxu0 %v5697
        %v5699 = vand.u32 %v271, 4294901760
        %v5700 = vsub.f32 %v271, %v5699
        %v5701 = vand.u32 %v5700, 4294901760
        %5702 = vmatprep.subr.mxu0 %v5701
        %v5703 = vand.u32 %v270, 4294901760
        %v5704 = vsub.f32 %v270, %v5703
        %v5705 = vand.u32 %v5704, 4294901760
        %5706 = vmatpush1.xpose.msra.mxu0 %v5705
        %v5707 = vand.u32 %v303, 4294901760
        %v5708 = vsub.f32 %v303, %v5707
        %v5709 = vand.u32 %v5708, 4294901760
        %5710 = vmatprep.subr.mxu0 %v5709
        %v5711 = vand.u32 %v302, 4294901760
        %v5712 = vsub.f32 %v302, %v5711
        %v5713 = vand.u32 %v5712, 4294901760
        %5714 = vmatpush1.xpose.msra.mxu0 %v5713
        %5715 = vmatprep.subr.mxu0 0.0
        %5716 = vmatpush1.xpose.msra.mxu0 0.0
        %5717 = vmatprep.subr.mxu0 0.0
        %5718 = vmatpush1.xpose.msra.mxu0 0.0
        %5719 = vmatprep.subr.mxu0 0.0
        %5720 = vmatpush1.xpose.msra.mxu0 0.0
        %5721 = vmatprep.subr.mxu0 0.0
        %5722 = vmatpush1.xpose.msra.mxu0 0.0
        %5723 = vmatprep.subr.mxu0 0.0
        %5724 = vmatpush1.xpose.msra.mxu0 0.0
        %5725 = vmatprep.subr.mxu0 0.0
        %5726 = vmatpush1.xpose.msra.mxu0 0.0
        %5727 = vmatprep.subr.mxu0 0.0
        %5728 = vmatpush1.xpose.msra.mxu0 0.0
        %5729 = vmatprep.subr.mxu0 0.0
        %5730 = vmatpush1.xpose.msra.mxu0 0.0
        %5731 = vmatprep.subr.mxu0 0.0
        %5732 = vmatpush1.xpose.msra.mxu0 0.0
        %5733 = vmatprep.subr.mxu0 0.0
        %5734 = vmatpush1.xpose.msra.mxu0 0.0
        %5735 = vmatprep.subr.mxu0 0.0
        %5736 = vmatpush1.xpose.msra.mxu0 0.0
        %5737 = vmatprep.subr.mxu0 0.0
        %5738 = vmatpush1.xpose.msra.mxu0 0.0
        %5739 = vmatprep.subr.mxu0 0.0
        %5740 = vmatpush1.xpose.msra.mxu0 0.0
        %5741 = vmatprep.subr.mxu0 0.0
        %5742 = vmatpush1.xpose.msra.mxu0 0.0
        %5743 = vmatprep.subr.mxu0 0.0
        %5744 = vmatpush1.xpose.msra.mxu0 0.0
        %5745 = vmatprep.subr.mxu0 0.0
        %5746 = vmatpush1.xpose.msra.mxu0 0.0
        %5747 = vmatprep.subr.mxu0 0.0
        %5748 = vmatpush1.xpose.msra.mxu0 0.0
        %5749 = vmatprep.subr.mxu0 0.0
        %5750 = vmatpush1.xpose.msra.mxu0 0.0
        %5751 = vmatprep.subr.mxu0 0.0
        %5752 = vmatpush1.xpose.msra.mxu0 0.0
        %5753 = vmatprep.subr.mxu0 0.0
        %5754 = vmatpush1.xpose.msra.mxu0 0.0
        %5755 = vmatprep.subr.mxu0 0.0
        %5756 = vmatpush1.xpose.msra.mxu0 0.0
        %5757 = vmatprep.subr.mxu0 0.0
        %5758 = vmatpush1.xpose.msra.mxu0 0.0
        %5759 = vmatprep.subr.mxu0 0.0
        %5760 = vmatpush1.xpose.msra.mxu0 0.0
        %5761 = vmatprep.subr.mxu0 0.0
        %5762 = vmatpush1.xpose.msra.mxu0 0.0
        %5763 = vmatprep.subr.mxu0 0.0
        %5764 = vmatpush1.xpose.msra.mxu0 0.0
        %5765 = vmatprep.subr.mxu0 0.0
        %5766 = vmatpush1.xpose.msra.mxu0 0.0
        %5767 = vmatprep.subr.mxu0 0.0
        %5768 = vmatpush1.xpose.msra.mxu0 0.0
        %5769 = vmatprep.subr.mxu0 0.0
        %5770 = vmatpush1.xpose.msra.mxu0 0.0
        %5771 = vmatprep.subr.mxu0 0.0
        %5772 = vmatpush1.xpose.msra.mxu0 0.0
        %v5773 = vand.u32 %v520, 4294901760
        %5774 = vmatprep.mubr.f32.mxu0 %v5773
        %v5775 = vand.u32 %v513, 4294901760
        %5776 = vmatmul.mubr.f32.gmra.mrb[0].mxu0 %v5775
        %v5777 = vpop.f32.mrb[0].mxu0
        %v5778 = vadd.f32 %v5688, %v5777
        %v5779 = vpop.f32.mrb[0].mxu0
        %5780 = vdwg.mxu0
        %v5781 = vand.u32 %v239, 4294901760
        %5782 = vmatprep.subr.mxu0 %v5781
        %v5783 = vand.u32 %v238, 4294901760
        %5784 = vmatpush1.xpose.msra.mxu0 %v5783
        %v5785 = vand.u32 %v271, 4294901760
        %5786 = vmatprep.subr.mxu0 %v5785
        %v5787 = vand.u32 %v270, 4294901760
        %5788 = vmatpush1.xpose.msra.mxu0 %v5787
        %v5789 = vand.u32 %v303, 4294901760
        %5790 = vmatprep.subr.mxu0 %v5789
        %v5791 = vand.u32 %v302, 4294901760
        %5792 = vmatpush1.xpose.msra.mxu0 %v5791
        %5793 = vmatprep.subr.mxu0 0.0
        %5794 = vmatpush1.xpose.msra.mxu0 0.0
        %5795 = vmatprep.subr.mxu0 0.0
        %5796 = vmatpush1.xpose.msra.mxu0 0.0
        %5797 = vmatprep.subr.mxu0 0.0
        %5798 = vmatpush1.xpose.msra.mxu0 0.0
        %5799 = vmatprep.subr.mxu0 0.0
        %5800 = vmatpush1.xpose.msra.mxu0 0.0
        %5801 = vmatprep.subr.mxu0 0.0
        %5802 = vmatpush1.xpose.msra.mxu0 0.0
        %5803 = vmatprep.subr.mxu0 0.0
        %5804 = vmatpush1.xpose.msra.mxu0 0.0
        %5805 = vmatprep.subr.mxu0 0.0
        %5806 = vmatpush1.xpose.msra.mxu0 0.0
        %5807 = vmatprep.subr.mxu0 0.0
        %5808 = vmatpush1.xpose.msra.mxu0 0.0
        %5809 = vmatprep.subr.mxu0 0.0
        %5810 = vmatpush1.xpose.msra.mxu0 0.0
        %5811 = vmatprep.subr.mxu0 0.0
        %5812 = vmatpush1.xpose.msra.mxu0 0.0
        %5813 = vmatprep.subr.mxu0 0.0
        %5814 = vmatpush1.xpose.msra.mxu0 0.0
        %5815 = vmatprep.subr.mxu0 0.0
        %5816 = vmatpush1.xpose.msra.mxu0 0.0
        %5817 = vmatprep.subr.mxu0 0.0
        %5818 = vmatpush1.xpose.msra.mxu0 0.0
        %5819 = vmatprep.subr.mxu0 0.0
        %5820 = vmatpush1.xpose.msra.mxu0 0.0
        %5821 = vmatprep.subr.mxu0 0.0
        %5822 = vmatpush1.xpose.msra.mxu0 0.0
        %5823 = vmatprep.subr.mxu0 0.0
        %5824 = vmatpush1.xpose.msra.mxu0 0.0
        %5825 = vmatprep.subr.mxu0 0.0
        %5826 = vmatpush1.xpose.msra.mxu0 0.0
        %5827 = vmatprep.subr.mxu0 0.0
        %5828 = vmatpush1.xpose.msra.mxu0 0.0
        %5829 = vmatprep.subr.mxu0 0.0
        %5830 = vmatpush1.xpose.msra.mxu0 0.0
        %5831 = vmatprep.subr.mxu0 0.0
        %5832 = vmatpush1.xpose.msra.mxu0 0.0
        %5833 = vmatprep.subr.mxu0 0.0
        %5834 = vmatpush1.xpose.msra.mxu0 0.0
        %5835 = vmatprep.subr.mxu0 0.0
        %5836 = vmatpush1.xpose.msra.mxu0 0.0
        %5837 = vmatprep.subr.mxu0 0.0
        %5838 = vmatpush1.xpose.msra.mxu0 0.0
        %5839 = vmatprep.subr.mxu0 0.0
        %5840 = vmatpush1.xpose.msra.mxu0 0.0
        %5841 = vmatprep.subr.mxu0 0.0
        %5842 = vmatpush1.xpose.msra.mxu0 0.0
        %5843 = vmatprep.subr.mxu0 0.0
        %5844 = vmatpush1.xpose.msra.mxu0 0.0
        %5845 = vmatprep.subr.mxu0 0.0
        %5846 = vmatpush1.xpose.msra.mxu0 0.0
        %5847 = vmatprep.subr.mxu0 0.0
        %5848 = vmatpush1.xpose.msra.mxu0 0.0
        %5849 = vmatprep.subr.mxu0 0.0
        %5850 = vmatpush1.xpose.msra.mxu0 0.0
        %v5851 = vand.u32 %v520, 4294901760
        %5852 = vmatprep.mubr.f32.mxu0 %v5851
        %v5853 = vand.u32 %v513, 4294901760
        %5854 = vmatmul.mubr.f32.gmra.mrb[0].mxu0 %v5853
        %v5855 = vpop.f32.mrb[0].mxu0
        %v5856 = vadd.f32 %v5778, %v5855
        %v5857 = vpop.f32.mrb[0].mxu0
        %5858 = vdwg.mxu0
        %v5859 = vand.u32 %v241, 4294901760
        %5860 = vmatprep.subr.mxu0 %v5859
        %v5861 = vand.u32 %v240, 4294901760
        %5862 = vmatpush1.xpose.msra.mxu0 %v5861
        %v5863 = vand.u32 %v273, 4294901760
        %5864 = vmatprep.subr.mxu0 %v5863
        %v5865 = vand.u32 %v272, 4294901760
        %5866 = vmatpush1.xpose.msra.mxu0 %v5865
        %v5867 = vand.u32 %v305, 4294901760
        %5868 = vmatprep.subr.mxu0 %v5867
        %v5869 = vand.u32 %v304, 4294901760
        %5870 = vmatpush1.xpose.msra.mxu0 %v5869
        %5871 = vmatprep.subr.mxu0 0.0
        %5872 = vmatpush1.xpose.msra.mxu0 0.0
        %5873 = vmatprep.subr.mxu0 0.0
        %5874 = vmatpush1.xpose.msra.mxu0 0.0
        %5875 = vmatprep.subr.mxu0 0.0
        %5876 = vmatpush1.xpose.msra.mxu0 0.0
        %5877 = vmatprep.subr.mxu0 0.0
        %5878 = vmatpush1.xpose.msra.mxu0 0.0
        %5879 = vmatprep.subr.mxu0 0.0
        %5880 = vmatpush1.xpose.msra.mxu0 0.0
        %5881 = vmatprep.subr.mxu0 0.0
        %5882 = vmatpush1.xpose.msra.mxu0 0.0
        %5883 = vmatprep.subr.mxu0 0.0
        %5884 = vmatpush1.xpose.msra.mxu0 0.0
        %5885 = vmatprep.subr.mxu0 0.0
        %5886 = vmatpush1.xpose.msra.mxu0 0.0
        %5887 = vmatprep.subr.mxu0 0.0
        %5888 = vmatpush1.xpose.msra.mxu0 0.0
        %5889 = vmatprep.subr.mxu0 0.0
        %5890 = vmatpush1.xpose.msra.mxu0 0.0
        %5891 = vmatprep.subr.mxu0 0.0
        %5892 = vmatpush1.xpose.msra.mxu0 0.0
        %5893 = vmatprep.subr.mxu0 0.0
        %5894 = vmatpush1.xpose.msra.mxu0 0.0
        %5895 = vmatprep.subr.mxu0 0.0
        %5896 = vmatpush1.xpose.msra.mxu0 0.0
        %5897 = vmatprep.subr.mxu0 0.0
        %5898 = vmatpush1.xpose.msra.mxu0 0.0
        %5899 = vmatprep.subr.mxu0 0.0
        %5900 = vmatpush1.xpose.msra.mxu0 0.0
        %5901 = vmatprep.subr.mxu0 0.0
        %5902 = vmatpush1.xpose.msra.mxu0 0.0
        %5903 = vmatprep.subr.mxu0 0.0
        %5904 = vmatpush1.xpose.msra.mxu0 0.0
        %5905 = vmatprep.subr.mxu0 0.0
        %5906 = vmatpush1.xpose.msra.mxu0 0.0
        %5907 = vmatprep.subr.mxu0 0.0
        %5908 = vmatpush1.xpose.msra.mxu0 0.0
        %5909 = vmatprep.subr.mxu0 0.0
        %5910 = vmatpush1.xpose.msra.mxu0 0.0
        %5911 = vmatprep.subr.mxu0 0.0
        %5912 = vmatpush1.xpose.msra.mxu0 0.0
        %5913 = vmatprep.subr.mxu0 0.0
        %5914 = vmatpush1.xpose.msra.mxu0 0.0
        %5915 = vmatprep.subr.mxu0 0.0
        %5916 = vmatpush1.xpose.msra.mxu0 0.0
        %5917 = vmatprep.subr.mxu0 0.0
        %5918 = vmatpush1.xpose.msra.mxu0 0.0
        %5919 = vmatprep.subr.mxu0 0.0
        %5920 = vmatpush1.xpose.msra.mxu0 0.0
        %5921 = vmatprep.subr.mxu0 0.0
        %5922 = vmatpush1.xpose.msra.mxu0 0.0
        %5923 = vmatprep.subr.mxu0 0.0
        %5924 = vmatpush1.xpose.msra.mxu0 0.0
        %5925 = vmatprep.subr.mxu0 0.0
        %5926 = vmatpush1.xpose.msra.mxu0 0.0
        %5927 = vmatprep.subr.mxu0 0.0
        %5928 = vmatpush1.xpose.msra.mxu0 0.0
        %v5929 = vand.u32 %v534, 4294901760
        %v5930 = vsub.f32 %v534, %v5929
        %v5931 = vand.u32 %v5930, 4294901760
        %v5932 = vsub.f32 %v5930, %v5931
        %v5933 = vand.u32 %v5932, 4294901760
        %5934 = vmatprep.mubr.f32.mxu0 %v5933
        %v5935 = vand.u32 %v527, 4294901760
        %v5936 = vsub.f32 %v527, %v5935
        %v5937 = vand.u32 %v5936, 4294901760
        %v5938 = vsub.f32 %v5936, %v5937
        %v5939 = vand.u32 %v5938, 4294901760
        %5940 = vmatmul.mubr.f32.gmra.mrb[0].mxu0 %v5939
        %v5941 = vpop.f32.mrb[0].mxu0
        %v5942 = vadd.f32 %v5856, %v5941
        %v5943 = vpop.f32.mrb[0].mxu0
        %5944 = vdwg.mxu0
        %v5945 = vand.u32 %v241, 4294901760
        %v5946 = vsub.f32 %v241, %v5945
        %v5947 = vand.u32 %v5946, 4294901760
        %v5948 = vsub.f32 %v5946, %v5947
        %v5949 = vand.u32 %v5948, 4294901760
        %5950 = vmatprep.subr.mxu0 %v5949
        %v5951 = vand.u32 %v240, 4294901760
        %v5952 = vsub.f32 %v240, %v5951
        %v5953 = vand.u32 %v5952, 4294901760
        %v5954 = vsub.f32 %v5952, %v5953
        %v5955 = vand.u32 %v5954, 4294901760
        %5956 = vmatpush1.xpose.msra.mxu0 %v5955
        %v5957 = vand.u32 %v273, 4294901760
        %v5958 = vsub.f32 %v273, %v5957
        %v5959 = vand.u32 %v5958, 4294901760
        %v5960 = vsub.f32 %v5958, %v5959
        %v5961 = vand.u32 %v5960, 4294901760
        %5962 = vmatprep.subr.mxu0 %v5961
        %v5963 = vand.u32 %v272, 4294901760
        %v5964 = vsub.f32 %v272, %v5963
        %v5965 = vand.u32 %v5964, 4294901760
        %v5966 = vsub.f32 %v5964, %v5965
        %v5967 = vand.u32 %v5966, 4294901760
        %5968 = vmatpush1.xpose.msra.mxu0 %v5967
        %v5969 = vand.u32 %v305, 4294901760
        %v5970 = vsub.f32 %v305, %v5969
        %v5971 = vand.u32 %v5970, 4294901760
        %v5972 = vsub.f32 %v5970, %v5971
        %v5973 = vand.u32 %v5972, 4294901760
        %5974 = vmatprep.subr.mxu0 %v5973
        %v5975 = vand.u32 %v304, 4294901760
        %v5976 = vsub.f32 %v304, %v5975
        %v5977 = vand.u32 %v5976, 4294901760
        %v5978 = vsub.f32 %v5976, %v5977
        %v5979 = vand.u32 %v5978, 4294901760
        %5980 = vmatpush1.xpose.msra.mxu0 %v5979
        %5981 = vmatprep.subr.mxu0 0.0
        %5982 = vmatpush1.xpose.msra.mxu0 0.0
        %5983 = vmatprep.subr.mxu0 0.0
        %5984 = vmatpush1.xpose.msra.mxu0 0.0
        %5985 = vmatprep.subr.mxu0 0.0
        %5986 = vmatpush1.xpose.msra.mxu0 0.0
        %5987 = vmatprep.subr.mxu0 0.0
        %5988 = vmatpush1.xpose.msra.mxu0 0.0
        %5989 = vmatprep.subr.mxu0 0.0
        %5990 = vmatpush1.xpose.msra.mxu0 0.0
        %5991 = vmatprep.subr.mxu0 0.0
        %5992 = vmatpush1.xpose.msra.mxu0 0.0
        %5993 = vmatprep.subr.mxu0 0.0
        %5994 = vmatpush1.xpose.msra.mxu0 0.0
        %5995 = vmatprep.subr.mxu0 0.0
        %5996 = vmatpush1.xpose.msra.mxu0 0.0
        %5997 = vmatprep.subr.mxu0 0.0
        %5998 = vmatpush1.xpose.msra.mxu0 0.0
        %5999 = vmatprep.subr.mxu0 0.0
        %6000 = vmatpush1.xpose.msra.mxu0 0.0
        %6001 = vmatprep.subr.mxu0 0.0
        %6002 = vmatpush1.xpose.msra.mxu0 0.0
        %6003 = vmatprep.subr.mxu0 0.0
        %6004 = vmatpush1.xpose.msra.mxu0 0.0
        %6005 = vmatprep.subr.mxu0 0.0
        %6006 = vmatpush1.xpose.msra.mxu0 0.0
        %6007 = vmatprep.subr.mxu0 0.0
        %6008 = vmatpush1.xpose.msra.mxu0 0.0
        %6009 = vmatprep.subr.mxu0 0.0
        %6010 = vmatpush1.xpose.msra.mxu0 0.0
        %6011 = vmatprep.subr.mxu0 0.0
        %6012 = vmatpush1.xpose.msra.mxu0 0.0
        %6013 = vmatprep.subr.mxu0 0.0
        %6014 = vmatpush1.xpose.msra.mxu0 0.0
        %6015 = vmatprep.subr.mxu0 0.0
        %6016 = vmatpush1.xpose.msra.mxu0 0.0
        %6017 = vmatprep.subr.mxu0 0.0
        %6018 = vmatpush1.xpose.msra.mxu0 0.0
        %6019 = vmatprep.subr.mxu0 0.0
        %6020 = vmatpush1.xpose.msra.mxu0 0.0
        %6021 = vmatprep.subr.mxu0 0.0
        %6022 = vmatpush1.xpose.msra.mxu0 0.0
        %6023 = vmatprep.subr.mxu0 0.0
        %6024 = vmatpush1.xpose.msra.mxu0 0.0
        %6025 = vmatprep.subr.mxu0 0.0
        %6026 = vmatpush1.xpose.msra.mxu0 0.0
        %6027 = vmatprep.subr.mxu0 0.0
        %6028 = vmatpush1.xpose.msra.mxu0 0.0
        %6029 = vmatprep.subr.mxu0 0.0
        %6030 = vmatpush1.xpose.msra.mxu0 0.0
        %6031 = vmatprep.subr.mxu0 0.0
        %6032 = vmatpush1.xpose.msra.mxu0 0.0
        %6033 = vmatprep.subr.mxu0 0.0
        %6034 = vmatpush1.xpose.msra.mxu0 0.0
        %6035 = vmatprep.subr.mxu0 0.0
        %6036 = vmatpush1.xpose.msra.mxu0 0.0
        %6037 = vmatprep.subr.mxu0 0.0
        %6038 = vmatpush1.xpose.msra.mxu0 0.0
        %v6039 = vand.u32 %v534, 4294901760
        %6040 = vmatprep.mubr.f32.mxu0 %v6039
        %v6041 = vand.u32 %v527, 4294901760
        %6042 = vmatmul.mubr.f32.gmra.mrb[0].mxu0 %v6041
        %v6043 = vpop.f32.mrb[0].mxu0
        %v6044 = vadd.f32 %v5942, %v6043
        %v6045 = vpop.f32.mrb[0].mxu0
        %6046 = vdwg.mxu0
        %v6047 = vand.u32 %v241, 4294901760
        %v6048 = vsub.f32 %v241, %v6047
        %6049 = vmatprep.subr.mxu0 %v6048
        %v6050 = vand.u32 %v240, 4294901760
        %v6051 = vsub.f32 %v240, %v6050
        %6052 = vmatpush1.xpose.msra.mxu0 %v6051
        %v6053 = vand.u32 %v273, 4294901760
        %v6054 = vsub.f32 %v273, %v6053
        %6055 = vmatprep.subr.mxu0 %v6054
        %v6056 = vand.u32 %v272, 4294901760
        %v6057 = vsub.f32 %v272, %v6056
        %6058 = vmatpush1.xpose.msra.mxu0 %v6057
        %v6059 = vand.u32 %v305, 4294901760
        %v6060 = vsub.f32 %v305, %v6059
        %6061 = vmatprep.subr.mxu0 %v6060
        %v6062 = vand.u32 %v304, 4294901760
        %v6063 = vsub.f32 %v304, %v6062
        %6064 = vmatpush1.xpose.msra.mxu0 %v6063
        %6065 = vmatprep.subr.mxu0 0.0
        %6066 = vmatpush1.xpose.msra.mxu0 0.0
        %6067 = vmatprep.subr.mxu0 0.0
        %6068 = vmatpush1.xpose.msra.mxu0 0.0
        %6069 = vmatprep.subr.mxu0 0.0
        %6070 = vmatpush1.xpose.msra.mxu0 0.0
        %6071 = vmatprep.subr.mxu0 0.0
        %6072 = vmatpush1.xpose.msra.mxu0 0.0
        %6073 = vmatprep.subr.mxu0 0.0
        %6074 = vmatpush1.xpose.msra.mxu0 0.0
        %6075 = vmatprep.subr.mxu0 0.0
        %6076 = vmatpush1.xpose.msra.mxu0 0.0
        %6077 = vmatprep.subr.mxu0 0.0
        %6078 = vmatpush1.xpose.msra.mxu0 0.0
        %6079 = vmatprep.subr.mxu0 0.0
        %6080 = vmatpush1.xpose.msra.mxu0 0.0
        %6081 = vmatprep.subr.mxu0 0.0
        %6082 = vmatpush1.xpose.msra.mxu0 0.0
        %6083 = vmatprep.subr.mxu0 0.0
        %6084 = vmatpush1.xpose.msra.mxu0 0.0
        %6085 = vmatprep.subr.mxu0 0.0
        %6086 = vmatpush1.xpose.msra.mxu0 0.0
        %6087 = vmatprep.subr.mxu0 0.0
        %6088 = vmatpush1.xpose.msra.mxu0 0.0
        %6089 = vmatprep.subr.mxu0 0.0
        %6090 = vmatpush1.xpose.msra.mxu0 0.0
        %6091 = vmatprep.subr.mxu0 0.0
        %6092 = vmatpush1.xpose.msra.mxu0 0.0
        %6093 = vmatprep.subr.mxu0 0.0
        %6094 = vmatpush1.xpose.msra.mxu0 0.0
        %6095 = vmatprep.subr.mxu0 0.0
        %6096 = vmatpush1.xpose.msra.mxu0 0.0
        %6097 = vmatprep.subr.mxu0 0.0
        %6098 = vmatpush1.xpose.msra.mxu0 0.0
        %6099 = vmatprep.subr.mxu0 0.0
        %6100 = vmatpush1.xpose.msra.mxu0 0.0
        %6101 = vmatprep.subr.mxu0 0.0
        %6102 = vmatpush1.xpose.msra.mxu0 0.0
        %6103 = vmatprep.subr.mxu0 0.0
        %6104 = vmatpush1.xpose.msra.mxu0 0.0
        %6105 = vmatprep.subr.mxu0 0.0
        %6106 = vmatpush1.xpose.msra.mxu0 0.0
        %6107 = vmatprep.subr.mxu0 0.0
        %6108 = vmatpush1.xpose.msra.mxu0 0.0
        %6109 = vmatprep.subr.mxu0 0.0
        %6110 = vmatpush1.xpose.msra.mxu0 0.0
        %6111 = vmatprep.subr.mxu0 0.0
        %6112 = vmatpush1.xpose.msra.mxu0 0.0
        %6113 = vmatprep.subr.mxu0 0.0
        %6114 = vmatpush1.xpose.msra.mxu0 0.0
        %6115 = vmatprep.subr.mxu0 0.0
        %6116 = vmatpush1.xpose.msra.mxu0 0.0
        %6117 = vmatprep.subr.mxu0 0.0
        %6118 = vmatpush1.xpose.msra.mxu0 0.0
        %6119 = vmatprep.subr.mxu0 0.0
        %6120 = vmatpush1.xpose.msra.mxu0 0.0
        %6121 = vmatprep.subr.mxu0 0.0
        %6122 = vmatpush1.xpose.msra.mxu0 0.0
        %v6123 = vand.u32 %v534, 4294901760
        %v6124 = vsub.f32 %v534, %v6123
        %6125 = vmatprep.mubr.f32.mxu0 %v6124
        %v6126 = vand.u32 %v527, 4294901760
        %v6127 = vsub.f32 %v527, %v6126
        %6128 = vmatmul.mubr.f32.gmra.mrb[0].mxu0 %v6127
        %v6129 = vpop.f32.mrb[0].mxu0
        %v6130 = vadd.f32 %v6044, %v6129
        %v6131 = vpop.f32.mrb[0].mxu0
        %6132 = vdwg.mxu0
        %v6133 = vand.u32 %v241, 4294901760
        %6134 = vmatprep.subr.mxu0 %v6133
        %v6135 = vand.u32 %v240, 4294901760
        %6136 = vmatpush1.xpose.msra.mxu0 %v6135
        %v6137 = vand.u32 %v273, 4294901760
        %6138 = vmatprep.subr.mxu0 %v6137
        %v6139 = vand.u32 %v272, 4294901760
        %6140 = vmatpush1.xpose.msra.mxu0 %v6139
        %v6141 = vand.u32 %v305, 4294901760
        %6142 = vmatprep.subr.mxu0 %v6141
        %v6143 = vand.u32 %v304, 4294901760
        %6144 = vmatpush1.xpose.msra.mxu0 %v6143
        %6145 = vmatprep.subr.mxu0 0.0
        %6146 = vmatpush1.xpose.msra.mxu0 0.0
        %6147 = vmatprep.subr.mxu0 0.0
        %6148 = vmatpush1.xpose.msra.mxu0 0.0
        %6149 = vmatprep.subr.mxu0 0.0
        %6150 = vmatpush1.xpose.msra.mxu0 0.0
        %6151 = vmatprep.subr.mxu0 0.0
        %6152 = vmatpush1.xpose.msra.mxu0 0.0
        %6153 = vmatprep.subr.mxu0 0.0
        %6154 = vmatpush1.xpose.msra.mxu0 0.0
        %6155 = vmatprep.subr.mxu0 0.0
        %6156 = vmatpush1.xpose.msra.mxu0 0.0
        %6157 = vmatprep.subr.mxu0 0.0
        %6158 = vmatpush1.xpose.msra.mxu0 0.0
        %6159 = vmatprep.subr.mxu0 0.0
        %6160 = vmatpush1.xpose.msra.mxu0 0.0
        %6161 = vmatprep.subr.mxu0 0.0
        %6162 = vmatpush1.xpose.msra.mxu0 0.0
        %6163 = vmatprep.subr.mxu0 0.0
        %6164 = vmatpush1.xpose.msra.mxu0 0.0
        %6165 = vmatprep.subr.mxu0 0.0
        %6166 = vmatpush1.xpose.msra.mxu0 0.0
        %6167 = vmatprep.subr.mxu0 0.0
        %6168 = vmatpush1.xpose.msra.mxu0 0.0
        %6169 = vmatprep.subr.mxu0 0.0
        %6170 = vmatpush1.xpose.msra.mxu0 0.0
        %6171 = vmatprep.subr.mxu0 0.0
        %6172 = vmatpush1.xpose.msra.mxu0 0.0
        %6173 = vmatprep.subr.mxu0 0.0
        %6174 = vmatpush1.xpose.msra.mxu0 0.0
        %6175 = vmatprep.subr.mxu0 0.0
        %6176 = vmatpush1.xpose.msra.mxu0 0.0
        %6177 = vmatprep.subr.mxu0 0.0
        %6178 = vmatpush1.xpose.msra.mxu0 0.0
        %6179 = vmatprep.subr.mxu0 0.0
        %6180 = vmatpush1.xpose.msra.mxu0 0.0
        %6181 = vmatprep.subr.mxu0 0.0
        %6182 = vmatpush1.xpose.msra.mxu0 0.0
        %6183 = vmatprep.subr.mxu0 0.0
        %6184 = vmatpush1.xpose.msra.mxu0 0.0
        %6185 = vmatprep.subr.mxu0 0.0
        %6186 = vmatpush1.xpose.msra.mxu0 0.0
        %6187 = vmatprep.subr.mxu0 0.0
        %6188 = vmatpush1.xpose.msra.mxu0 0.0
        %6189 = vmatprep.subr.mxu0 0.0
        %6190 = vmatpush1.xpose.msra.mxu0 0.0
        %6191 = vmatprep.subr.mxu0 0.0
        %6192 = vmatpush1.xpose.msra.mxu0 0.0
        %6193 = vmatprep.subr.mxu0 0.0
        %6194 = vmatpush1.xpose.msra.mxu0 0.0
        %6195 = vmatprep.subr.mxu0 0.0
        %6196 = vmatpush1.xpose.msra.mxu0 0.0
        %6197 = vmatprep.subr.mxu0 0.0
        %6198 = vmatpush1.xpose.msra.mxu0 0.0
        %6199 = vmatprep.subr.mxu0 0.0
        %6200 = vmatpush1.xpose.msra.mxu0 0.0
        %6201 = vmatprep.subr.mxu0 0.0
        %6202 = vmatpush1.xpose.msra.mxu0 0.0
        %v6203 = vand.u32 %v534, 4294901760
        %v6204 = vsub.f32 %v534, %v6203
        %v6205 = vand.u32 %v6204, 4294901760
        %6206 = vmatprep.mubr.f32.mxu0 %v6205
        %v6207 = vand.u32 %v527, 4294901760
        %v6208 = vsub.f32 %v527, %v6207
        %v6209 = vand.u32 %v6208, 4294901760
        %6210 = vmatmul.mubr.f32.gmra.mrb[0].mxu0 %v6209
        %v6211 = vpop.f32.mrb[0].mxu0
        %v6212 = vadd.f32 %v6130, %v6211
        %v6213 = vpop.f32.mrb[0].mxu0
        %6214 = vdwg.mxu0
        %v6215 = vand.u32 %v241, 4294901760
        %v6216 = vsub.f32 %v241, %v6215
        %v6217 = vand.u32 %v6216, 4294901760
        %6218 = vmatprep.subr.mxu0 %v6217
        %v6219 = vand.u32 %v240, 4294901760
        %v6220 = vsub.f32 %v240, %v6219
        %v6221 = vand.u32 %v6220, 4294901760
        %6222 = vmatpush1.xpose.msra.mxu0 %v6221
        %v6223 = vand.u32 %v273, 4294901760
        %v6224 = vsub.f32 %v273, %v6223
        %v6225 = vand.u32 %v6224, 4294901760
        %6226 = vmatprep.subr.mxu0 %v6225
        %v6227 = vand.u32 %v272, 4294901760
        %v6228 = vsub.f32 %v272, %v6227
        %v6229 = vand.u32 %v6228, 4294901760
        %6230 = vmatpush1.xpose.msra.mxu0 %v6229
        %v6231 = vand.u32 %v305, 4294901760
        %v6232 = vsub.f32 %v305, %v6231
        %v6233 = vand.u32 %v6232, 4294901760
        %6234 = vmatprep.subr.mxu0 %v6233
        %v6235 = vand.u32 %v304, 4294901760
        %v6236 = vsub.f32 %v304, %v6235
        %v6237 = vand.u32 %v6236, 4294901760
        %6238 = vmatpush1.xpose.msra.mxu0 %v6237
        %6239 = vmatprep.subr.mxu0 0.0
        %6240 = vmatpush1.xpose.msra.mxu0 0.0
        %6241 = vmatprep.subr.mxu0 0.0
        %6242 = vmatpush1.xpose.msra.mxu0 0.0
        %6243 = vmatprep.subr.mxu0 0.0
        %6244 = vmatpush1.xpose.msra.mxu0 0.0
        %6245 = vmatprep.subr.mxu0 0.0
        %6246 = vmatpush1.xpose.msra.mxu0 0.0
        %6247 = vmatprep.subr.mxu0 0.0
        %6248 = vmatpush1.xpose.msra.mxu0 0.0
        %6249 = vmatprep.subr.mxu0 0.0
        %6250 = vmatpush1.xpose.msra.mxu0 0.0
        %6251 = vmatprep.subr.mxu0 0.0
        %6252 = vmatpush1.xpose.msra.mxu0 0.0
        %6253 = vmatprep.subr.mxu0 0.0
        %6254 = vmatpush1.xpose.msra.mxu0 0.0
        %6255 = vmatprep.subr.mxu0 0.0
        %6256 = vmatpush1.xpose.msra.mxu0 0.0
        %6257 = vmatprep.subr.mxu0 0.0
        %6258 = vmatpush1.xpose.msra.mxu0 0.0
        %6259 = vmatprep.subr.mxu0 0.0
        %6260 = vmatpush1.xpose.msra.mxu0 0.0
        %6261 = vmatprep.subr.mxu0 0.0
        %6262 = vmatpush1.xpose.msra.mxu0 0.0
        %6263 = vmatprep.subr.mxu0 0.0
        %6264 = vmatpush1.xpose.msra.mxu0 0.0
        %6265 = vmatprep.subr.mxu0 0.0
        %6266 = vmatpush1.xpose.msra.mxu0 0.0
        %6267 = vmatprep.subr.mxu0 0.0
        %6268 = vmatpush1.xpose.msra.mxu0 0.0
        %6269 = vmatprep.subr.mxu0 0.0
        %6270 = vmatpush1.xpose.msra.mxu0 0.0
        %6271 = vmatprep.subr.mxu0 0.0
        %6272 = vmatpush1.xpose.msra.mxu0 0.0
        %6273 = vmatprep.subr.mxu0 0.0
        %6274 = vmatpush1.xpose.msra.mxu0 0.0
        %6275 = vmatprep.subr.mxu0 0.0
        %6276 = vmatpush1.xpose.msra.mxu0 0.0
        %6277 = vmatprep.subr.mxu0 0.0
        %6278 = vmatpush1.xpose.msra.mxu0 0.0
        %6279 = vmatprep.subr.mxu0 0.0
        %6280 = vmatpush1.xpose.msra.mxu0 0.0
        %6281 = vmatprep.subr.mxu0 0.0
        %6282 = vmatpush1.xpose.msra.mxu0 0.0
        %6283 = vmatprep.subr.mxu0 0.0
        %6284 = vmatpush1.xpose.msra.mxu0 0.0
        %6285 = vmatprep.subr.mxu0 0.0
        %6286 = vmatpush1.xpose.msra.mxu0 0.0
        %6287 = vmatprep.subr.mxu0 0.0
        %6288 = vmatpush1.xpose.msra.mxu0 0.0
        %6289 = vmatprep.subr.mxu0 0.0
        %6290 = vmatpush1.xpose.msra.mxu0 0.0
        %6291 = vmatprep.subr.mxu0 0.0
        %6292 = vmatpush1.xpose.msra.mxu0 0.0
        %6293 = vmatprep.subr.mxu0 0.0
        %6294 = vmatpush1.xpose.msra.mxu0 0.0
        %6295 = vmatprep.subr.mxu0 0.0
        %6296 = vmatpush1.xpose.msra.mxu0 0.0
        %v6297 = vand.u32 %v534, 4294901760
        %6298 = vmatprep.mubr.f32.mxu0 %v6297
        %v6299 = vand.u32 %v527, 4294901760
        %6300 = vmatmul.mubr.f32.gmra.mrb[0].mxu0 %v6299
        %v6301 = vpop.f32.mrb[0].mxu0
        %v6302 = vadd.f32 %v6212, %v6301
        %v6303 = vpop.f32.mrb[0].mxu0
        %6304 = vdwg.mxu0
        %v6305 = vand.u32 %v241, 4294901760
        %6306 = vmatprep.subr.mxu0 %v6305
        %v6307 = vand.u32 %v240, 4294901760
        %6308 = vmatpush1.xpose.msra.mxu0 %v6307
        %v6309 = vand.u32 %v273, 4294901760
        %6310 = vmatprep.subr.mxu0 %v6309
        %v6311 = vand.u32 %v272, 4294901760
        %6312 = vmatpush1.xpose.msra.mxu0 %v6311
        %v6313 = vand.u32 %v305, 4294901760
        %6314 = vmatprep.subr.mxu0 %v6313
        %v6315 = vand.u32 %v304, 4294901760
        %6316 = vmatpush1.xpose.msra.mxu0 %v6315
        %6317 = vmatprep.subr.mxu0 0.0
        %6318 = vmatpush1.xpose.msra.mxu0 0.0
        %6319 = vmatprep.subr.mxu0 0.0
        %6320 = vmatpush1.xpose.msra.mxu0 0.0
        %6321 = vmatprep.subr.mxu0 0.0
        %6322 = vmatpush1.xpose.msra.mxu0 0.0
        %6323 = vmatprep.subr.mxu0 0.0
        %6324 = vmatpush1.xpose.msra.mxu0 0.0
        %6325 = vmatprep.subr.mxu0 0.0
        %6326 = vmatpush1.xpose.msra.mxu0 0.0
        %6327 = vmatprep.subr.mxu0 0.0
        %6328 = vmatpush1.xpose.msra.mxu0 0.0
        %6329 = vmatprep.subr.mxu0 0.0
        %6330 = vmatpush1.xpose.msra.mxu0 0.0
        %6331 = vmatprep.subr.mxu0 0.0
        %6332 = vmatpush1.xpose.msra.mxu0 0.0
        %6333 = vmatprep.subr.mxu0 0.0
        %6334 = vmatpush1.xpose.msra.mxu0 0.0
        %6335 = vmatprep.subr.mxu0 0.0
        %6336 = vmatpush1.xpose.msra.mxu0 0.0
        %6337 = vmatprep.subr.mxu0 0.0
        %6338 = vmatpush1.xpose.msra.mxu0 0.0
        %6339 = vmatprep.subr.mxu0 0.0
        %6340 = vmatpush1.xpose.msra.mxu0 0.0
        %6341 = vmatprep.subr.mxu0 0.0
        %6342 = vmatpush1.xpose.msra.mxu0 0.0
        %6343 = vmatprep.subr.mxu0 0.0
        %6344 = vmatpush1.xpose.msra.mxu0 0.0
        %6345 = vmatprep.subr.mxu0 0.0
        %6346 = vmatpush1.xpose.msra.mxu0 0.0
        %6347 = vmatprep.subr.mxu0 0.0
        %6348 = vmatpush1.xpose.msra.mxu0 0.0
        %6349 = vmatprep.subr.mxu0 0.0
        %6350 = vmatpush1.xpose.msra.mxu0 0.0
        %6351 = vmatprep.subr.mxu0 0.0
        %6352 = vmatpush1.xpose.msra.mxu0 0.0
        %6353 = vmatprep.subr.mxu0 0.0
        %6354 = vmatpush1.xpose.msra.mxu0 0.0
        %6355 = vmatprep.subr.mxu0 0.0
        %6356 = vmatpush1.xpose.msra.mxu0 0.0
        %6357 = vmatprep.subr.mxu0 0.0
        %6358 = vmatpush1.xpose.msra.mxu0 0.0
        %6359 = vmatprep.subr.mxu0 0.0
        %6360 = vmatpush1.xpose.msra.mxu0 0.0
        %6361 = vmatprep.subr.mxu0 0.0
        %6362 = vmatpush1.xpose.msra.mxu0 0.0
        %6363 = vmatprep.subr.mxu0 0.0
        %6364 = vmatpush1.xpose.msra.mxu0 0.0
        %6365 = vmatprep.subr.mxu0 0.0
        %6366 = vmatpush1.xpose.msra.mxu0 0.0
        %6367 = vmatprep.subr.mxu0 0.0
        %6368 = vmatpush1.xpose.msra.mxu0 0.0
        %6369 = vmatprep.subr.mxu0 0.0
        %6370 = vmatpush1.xpose.msra.mxu0 0.0
        %6371 = vmatprep.subr.mxu0 0.0
        %6372 = vmatpush1.xpose.msra.mxu0 0.0
        %6373 = vmatprep.subr.mxu0 0.0
        %6374 = vmatpush1.xpose.msra.mxu0 0.0
        %v6375 = vand.u32 %v534, 4294901760
        %6376 = vmatprep.mubr.f32.mxu0 %v6375
        %v6377 = vand.u32 %v527, 4294901760
        %6378 = vmatmul.mubr.f32.gmra.mrb[0].mxu0 %v6377
        %v6379 = vpop.f32.mrb[0].mxu0
        %v6380 = vadd.f32 %v6302, %v6379
        %v6381 = vpop.f32.mrb[0].mxu0
        %6382 = vdwg.mxu0
        %v6383 = vand.u32 %v243, 4294901760
        %6384 = vmatprep.subr.mxu0 %v6383
        %v6385 = vand.u32 %v242, 4294901760
        %6386 = vmatpush1.xpose.msra.mxu0 %v6385
        %v6387 = vand.u32 %v275, 4294901760
        %6388 = vmatprep.subr.mxu0 %v6387
        %v6389 = vand.u32 %v274, 4294901760
        %6390 = vmatpush1.xpose.msra.mxu0 %v6389
        %v6391 = vand.u32 %v307, 4294901760
        %6392 = vmatprep.subr.mxu0 %v6391
        %v6393 = vand.u32 %v306, 4294901760
        %6394 = vmatpush1.xpose.msra.mxu0 %v6393
        %6395 = vmatprep.subr.mxu0 0.0
        %6396 = vmatpush1.xpose.msra.mxu0 0.0
        %6397 = vmatprep.subr.mxu0 0.0
        %6398 = vmatpush1.xpose.msra.mxu0 0.0
        %6399 = vmatprep.subr.mxu0 0.0
        %6400 = vmatpush1.xpose.msra.mxu0 0.0
        %6401 = vmatprep.subr.mxu0 0.0
        %6402 = vmatpush1.xpose.msra.mxu0 0.0
        %6403 = vmatprep.subr.mxu0 0.0
        %6404 = vmatpush1.xpose.msra.mxu0 0.0
        %6405 = vmatprep.subr.mxu0 0.0
        %6406 = vmatpush1.xpose.msra.mxu0 0.0
        %6407 = vmatprep.subr.mxu0 0.0
        %6408 = vmatpush1.xpose.msra.mxu0 0.0
        %6409 = vmatprep.subr.mxu0 0.0
        %6410 = vmatpush1.xpose.msra.mxu0 0.0
        %6411 = vmatprep.subr.mxu0 0.0
        %6412 = vmatpush1.xpose.msra.mxu0 0.0
        %6413 = vmatprep.subr.mxu0 0.0
        %6414 = vmatpush1.xpose.msra.mxu0 0.0
        %6415 = vmatprep.subr.mxu0 0.0
        %6416 = vmatpush1.xpose.msra.mxu0 0.0
        %6417 = vmatprep.subr.mxu0 0.0
        %6418 = vmatpush1.xpose.msra.mxu0 0.0
        %6419 = vmatprep.subr.mxu0 0.0
        %6420 = vmatpush1.xpose.msra.mxu0 0.0
        %6421 = vmatprep.subr.mxu0 0.0
        %6422 = vmatpush1.xpose.msra.mxu0 0.0
        %6423 = vmatprep.subr.mxu0 0.0
        %6424 = vmatpush1.xpose.msra.mxu0 0.0
        %6425 = vmatprep.subr.mxu0 0.0
        %6426 = vmatpush1.xpose.msra.mxu0 0.0
        %6427 = vmatprep.subr.mxu0 0.0
        %6428 = vmatpush1.xpose.msra.mxu0 0.0
        %6429 = vmatprep.subr.mxu0 0.0
        %6430 = vmatpush1.xpose.msra.mxu0 0.0
        %6431 = vmatprep.subr.mxu0 0.0
        %6432 = vmatpush1.xpose.msra.mxu0 0.0
        %6433 = vmatprep.subr.mxu0 0.0
        %6434 = vmatpush1.xpose.msra.mxu0 0.0
        %6435 = vmatprep.subr.mxu0 0.0
        %6436 = vmatpush1.xpose.msra.mxu0 0.0
        %6437 = vmatprep.subr.mxu0 0.0
        %6438 = vmatpush1.xpose.msra.mxu0 0.0
        %6439 = vmatprep.subr.mxu0 0.0
        %6440 = vmatpush1.xpose.msra.mxu0 0.0
        %6441 = vmatprep.subr.mxu0 0.0
        %6442 = vmatpush1.xpose.msra.mxu0 0.0
        %6443 = vmatprep.subr.mxu0 0.0
        %6444 = vmatpush1.xpose.msra.mxu0 0.0
        %6445 = vmatprep.subr.mxu0 0.0
        %6446 = vmatpush1.xpose.msra.mxu0 0.0
        %6447 = vmatprep.subr.mxu0 0.0
        %6448 = vmatpush1.xpose.msra.mxu0 0.0
        %6449 = vmatprep.subr.mxu0 0.0
        %6450 = vmatpush1.xpose.msra.mxu0 0.0
        %6451 = vmatprep.subr.mxu0 0.0
        %6452 = vmatpush1.xpose.msra.mxu0 0.0
        %v6453 = vand.u32 %v548, 4294901760
        %v6454 = vsub.f32 %v548, %v6453
        %v6455 = vand.u32 %v6454, 4294901760
        %v6456 = vsub.f32 %v6454, %v6455
        %v6457 = vand.u32 %v6456, 4294901760
        %6458 = vmatprep.mubr.f32.mxu0 %v6457
        %v6459 = vand.u32 %v541, 4294901760
        %v6460 = vsub.f32 %v541, %v6459
        %v6461 = vand.u32 %v6460, 4294901760
        %v6462 = vsub.f32 %v6460, %v6461
        %v6463 = vand.u32 %v6462, 4294901760
        %6464 = vmatmul.mubr.f32.gmra.mrb[0].mxu0 %v6463
        %v6465 = vpop.f32.mrb[0].mxu0
        %v6466 = vadd.f32 %v6380, %v6465
        %v6467 = vpop.f32.mrb[0].mxu0
        %6468 = vdwg.mxu0
        %v6469 = vand.u32 %v243, 4294901760
        %v6470 = vsub.f32 %v243, %v6469
        %v6471 = vand.u32 %v6470, 4294901760
        %v6472 = vsub.f32 %v6470, %v6471
        %v6473 = vand.u32 %v6472, 4294901760
        %6474 = vmatprep.subr.mxu0 %v6473
        %v6475 = vand.u32 %v242, 4294901760
        %v6476 = vsub.f32 %v242, %v6475
        %v6477 = vand.u32 %v6476, 4294901760
        %v6478 = vsub.f32 %v6476, %v6477
        %v6479 = vand.u32 %v6478, 4294901760
        %6480 = vmatpush1.xpose.msra.mxu0 %v6479
        %v6481 = vand.u32 %v275, 4294901760
        %v6482 = vsub.f32 %v275, %v6481
        %v6483 = vand.u32 %v6482, 4294901760
        %v6484 = vsub.f32 %v6482, %v6483
        %v6485 = vand.u32 %v6484, 4294901760
        %6486 = vmatprep.subr.mxu0 %v6485
        %v6487 = vand.u32 %v274, 4294901760
        %v6488 = vsub.f32 %v274, %v6487
        %v6489 = vand.u32 %v6488, 4294901760
        %v6490 = vsub.f32 %v6488, %v6489
        %v6491 = vand.u32 %v6490, 4294901760
        %6492 = vmatpush1.xpose.msra.mxu0 %v6491
        %v6493 = vand.u32 %v307, 4294901760
        %v6494 = vsub.f32 %v307, %v6493
        %v6495 = vand.u32 %v6494, 4294901760
        %v6496 = vsub.f32 %v6494, %v6495
        %v6497 = vand.u32 %v6496, 4294901760
        %6498 = vmatprep.subr.mxu0 %v6497
        %v6499 = vand.u32 %v306, 4294901760
        %v6500 = vsub.f32 %v306, %v6499
        %v6501 = vand.u32 %v6500, 4294901760
        %v6502 = vsub.f32 %v6500, %v6501
        %v6503 = vand.u32 %v6502, 4294901760
        %6504 = vmatpush1.xpose.msra.mxu0 %v6503
        %6505 = vmatprep.subr.mxu0 0.0
        %6506 = vmatpush1.xpose.msra.mxu0 0.0
        %6507 = vmatprep.subr.mxu0 0.0
        %6508 = vmatpush1.xpose.msra.mxu0 0.0
        %6509 = vmatprep.subr.mxu0 0.0
        %6510 = vmatpush1.xpose.msra.mxu0 0.0
        %6511 = vmatprep.subr.mxu0 0.0
        %6512 = vmatpush1.xpose.msra.mxu0 0.0
        %6513 = vmatprep.subr.mxu0 0.0
        %6514 = vmatpush1.xpose.msra.mxu0 0.0
        %6515 = vmatprep.subr.mxu0 0.0
        %6516 = vmatpush1.xpose.msra.mxu0 0.0
        %6517 = vmatprep.subr.mxu0 0.0
        %6518 = vmatpush1.xpose.msra.mxu0 0.0
        %6519 = vmatprep.subr.mxu0 0.0
        %6520 = vmatpush1.xpose.msra.mxu0 0.0
        %6521 = vmatprep.subr.mxu0 0.0
        %6522 = vmatpush1.xpose.msra.mxu0 0.0
        %6523 = vmatprep.subr.mxu0 0.0
        %6524 = vmatpush1.xpose.msra.mxu0 0.0
        %6525 = vmatprep.subr.mxu0 0.0
        %6526 = vmatpush1.xpose.msra.mxu0 0.0
        %6527 = vmatprep.subr.mxu0 0.0
        %6528 = vmatpush1.xpose.msra.mxu0 0.0
        %6529 = vmatprep.subr.mxu0 0.0
        %6530 = vmatpush1.xpose.msra.mxu0 0.0
        %6531 = vmatprep.subr.mxu0 0.0
        %6532 = vmatpush1.xpose.msra.mxu0 0.0
        %6533 = vmatprep.subr.mxu0 0.0
        %6534 = vmatpush1.xpose.msra.mxu0 0.0
        %6535 = vmatprep.subr.mxu0 0.0
        %6536 = vmatpush1.xpose.msra.mxu0 0.0
        %6537 = vmatprep.subr.mxu0 0.0
        %6538 = vmatpush1.xpose.msra.mxu0 0.0
        %6539 = vmatprep.subr.mxu0 0.0
        %6540 = vmatpush1.xpose.msra.mxu0 0.0
        %6541 = vmatprep.subr.mxu0 0.0
        %6542 = vmatpush1.xpose.msra.mxu0 0.0
        %6543 = vmatprep.subr.mxu0 0.0
        %6544 = vmatpush1.xpose.msra.mxu0 0.0
        %6545 = vmatprep.subr.mxu0 0.0
        %6546 = vmatpush1.xpose.msra.mxu0 0.0
        %6547 = vmatprep.subr.mxu0 0.0
        %6548 = vmatpush1.xpose.msra.mxu0 0.0
        %6549 = vmatprep.subr.mxu0 0.0
        %6550 = vmatpush1.xpose.msra.mxu0 0.0
        %6551 = vmatprep.subr.mxu0 0.0
        %6552 = vmatpush1.xpose.msra.mxu0 0.0
        %6553 = vmatprep.subr.mxu0 0.0
        %6554 = vmatpush1.xpose.msra.mxu0 0.0
        %6555 = vmatprep.subr.mxu0 0.0
        %6556 = vmatpush1.xpose.msra.mxu0 0.0
        %6557 = vmatprep.subr.mxu0 0.0
        %6558 = vmatpush1.xpose.msra.mxu0 0.0
        %6559 = vmatprep.subr.mxu0 0.0
        %6560 = vmatpush1.xpose.msra.mxu0 0.0
        %6561 = vmatprep.subr.mxu0 0.0
        %6562 = vmatpush1.xpose.msra.mxu0 0.0
        %v6563 = vand.u32 %v548, 4294901760
        %6564 = vmatprep.mubr.f32.mxu0 %v6563
        %v6565 = vand.u32 %v541, 4294901760
        %6566 = vmatmul.mubr.f32.gmra.mrb[0].mxu0 %v6565
        %v6567 = vpop.f32.mrb[0].mxu0
        %v6568 = vadd.f32 %v6466, %v6567
        %v6569 = vpop.f32.mrb[0].mxu0
        %6570 = vdwg.mxu0
        %v6571 = vand.u32 %v243, 4294901760
        %v6572 = vsub.f32 %v243, %v6571
        %6573 = vmatprep.subr.mxu0 %v6572
        %v6574 = vand.u32 %v242, 4294901760
        %v6575 = vsub.f32 %v242, %v6574
        %6576 = vmatpush1.xpose.msra.mxu0 %v6575
        %v6577 = vand.u32 %v275, 4294901760
        %v6578 = vsub.f32 %v275, %v6577
        %6579 = vmatprep.subr.mxu0 %v6578
        %v6580 = vand.u32 %v274, 4294901760
        %v6581 = vsub.f32 %v274, %v6580
        %6582 = vmatpush1.xpose.msra.mxu0 %v6581
        %v6583 = vand.u32 %v307, 4294901760
        %v6584 = vsub.f32 %v307, %v6583
        %6585 = vmatprep.subr.mxu0 %v6584
        %v6586 = vand.u32 %v306, 4294901760
        %v6587 = vsub.f32 %v306, %v6586
        %6588 = vmatpush1.xpose.msra.mxu0 %v6587
        %6589 = vmatprep.subr.mxu0 0.0
        %6590 = vmatpush1.xpose.msra.mxu0 0.0
        %6591 = vmatprep.subr.mxu0 0.0
        %6592 = vmatpush1.xpose.msra.mxu0 0.0
        %6593 = vmatprep.subr.mxu0 0.0
        %6594 = vmatpush1.xpose.msra.mxu0 0.0
        %6595 = vmatprep.subr.mxu0 0.0
        %6596 = vmatpush1.xpose.msra.mxu0 0.0
        %6597 = vmatprep.subr.mxu0 0.0
        %6598 = vmatpush1.xpose.msra.mxu0 0.0
        %6599 = vmatprep.subr.mxu0 0.0
        %6600 = vmatpush1.xpose.msra.mxu0 0.0
        %6601 = vmatprep.subr.mxu0 0.0
        %6602 = vmatpush1.xpose.msra.mxu0 0.0
        %6603 = vmatprep.subr.mxu0 0.0
        %6604 = vmatpush1.xpose.msra.mxu0 0.0
        %6605 = vmatprep.subr.mxu0 0.0
        %6606 = vmatpush1.xpose.msra.mxu0 0.0
        %6607 = vmatprep.subr.mxu0 0.0
        %6608 = vmatpush1.xpose.msra.mxu0 0.0
        %6609 = vmatprep.subr.mxu0 0.0
        %6610 = vmatpush1.xpose.msra.mxu0 0.0
        %6611 = vmatprep.subr.mxu0 0.0
        %6612 = vmatpush1.xpose.msra.mxu0 0.0
        %6613 = vmatprep.subr.mxu0 0.0
        %6614 = vmatpush1.xpose.msra.mxu0 0.0
        %6615 = vmatprep.subr.mxu0 0.0
        %6616 = vmatpush1.xpose.msra.mxu0 0.0
        %6617 = vmatprep.subr.mxu0 0.0
        %6618 = vmatpush1.xpose.msra.mxu0 0.0
        %6619 = vmatprep.subr.mxu0 0.0
        %6620 = vmatpush1.xpose.msra.mxu0 0.0
        %6621 = vmatprep.subr.mxu0 0.0
        %6622 = vmatpush1.xpose.msra.mxu0 0.0
        %6623 = vmatprep.subr.mxu0 0.0
        %6624 = vmatpush1.xpose.msra.mxu0 0.0
        %6625 = vmatprep.subr.mxu0 0.0
        %6626 = vmatpush1.xpose.msra.mxu0 0.0
        %6627 = vmatprep.subr.mxu0 0.0
        %6628 = vmatpush1.xpose.msra.mxu0 0.0
        %6629 = vmatprep.subr.mxu0 0.0
        %6630 = vmatpush1.xpose.msra.mxu0 0.0
        %6631 = vmatprep.subr.mxu0 0.0
        %6632 = vmatpush1.xpose.msra.mxu0 0.0
        %6633 = vmatprep.subr.mxu0 0.0
        %6634 = vmatpush1.xpose.msra.mxu0 0.0
        %6635 = vmatprep.subr.mxu0 0.0
        %6636 = vmatpush1.xpose.msra.mxu0 0.0
        %6637 = vmatprep.subr.mxu0 0.0
        %6638 = vmatpush1.xpose.msra.mxu0 0.0
        %6639 = vmatprep.subr.mxu0 0.0
        %6640 = vmatpush1.xpose.msra.mxu0 0.0
        %6641 = vmatprep.subr.mxu0 0.0
        %6642 = vmatpush1.xpose.msra.mxu0 0.0
        %6643 = vmatprep.subr.mxu0 0.0
        %6644 = vmatpush1.xpose.msra.mxu0 0.0
        %6645 = vmatprep.subr.mxu0 0.0
        %6646 = vmatpush1.xpose.msra.mxu0 0.0
        %v6647 = vand.u32 %v548, 4294901760
        %v6648 = vsub.f32 %v548, %v6647
        %6649 = vmatprep.mubr.f32.mxu0 %v6648
        %v6650 = vand.u32 %v541, 4294901760
        %v6651 = vsub.f32 %v541, %v6650
        %6652 = vmatmul.mubr.f32.gmra.mrb[0].mxu0 %v6651
        %v6653 = vpop.f32.mrb[0].mxu0
        %v6654 = vadd.f32 %v6568, %v6653
        %v6655 = vpop.f32.mrb[0].mxu0
        %6656 = vdwg.mxu0
        %v6657 = vand.u32 %v243, 4294901760
        %6658 = vmatprep.subr.mxu0 %v6657
        %v6659 = vand.u32 %v242, 4294901760
        %6660 = vmatpush1.xpose.msra.mxu0 %v6659
        %v6661 = vand.u32 %v275, 4294901760
        %6662 = vmatprep.subr.mxu0 %v6661
        %v6663 = vand.u32 %v274, 4294901760
        %6664 = vmatpush1.xpose.msra.mxu0 %v6663
        %v6665 = vand.u32 %v307, 4294901760
        %6666 = vmatprep.subr.mxu0 %v6665
        %v6667 = vand.u32 %v306, 4294901760
        %6668 = vmatpush1.xpose.msra.mxu0 %v6667
        %6669 = vmatprep.subr.mxu0 0.0
        %6670 = vmatpush1.xpose.msra.mxu0 0.0
        %6671 = vmatprep.subr.mxu0 0.0
        %6672 = vmatpush1.xpose.msra.mxu0 0.0
        %6673 = vmatprep.subr.mxu0 0.0
        %6674 = vmatpush1.xpose.msra.mxu0 0.0
        %6675 = vmatprep.subr.mxu0 0.0
        %6676 = vmatpush1.xpose.msra.mxu0 0.0
        %6677 = vmatprep.subr.mxu0 0.0
        %6678 = vmatpush1.xpose.msra.mxu0 0.0
        %6679 = vmatprep.subr.mxu0 0.0
        %6680 = vmatpush1.xpose.msra.mxu0 0.0
        %6681 = vmatprep.subr.mxu0 0.0
        %6682 = vmatpush1.xpose.msra.mxu0 0.0
        %6683 = vmatprep.subr.mxu0 0.0
        %6684 = vmatpush1.xpose.msra.mxu0 0.0
        %6685 = vmatprep.subr.mxu0 0.0
        %6686 = vmatpush1.xpose.msra.mxu0 0.0
        %6687 = vmatprep.subr.mxu0 0.0
        %6688 = vmatpush1.xpose.msra.mxu0 0.0
        %6689 = vmatprep.subr.mxu0 0.0
        %6690 = vmatpush1.xpose.msra.mxu0 0.0
        %6691 = vmatprep.subr.mxu0 0.0
        %6692 = vmatpush1.xpose.msra.mxu0 0.0
        %6693 = vmatprep.subr.mxu0 0.0
        %6694 = vmatpush1.xpose.msra.mxu0 0.0
        %6695 = vmatprep.subr.mxu0 0.0
        %6696 = vmatpush1.xpose.msra.mxu0 0.0
        %6697 = vmatprep.subr.mxu0 0.0
        %6698 = vmatpush1.xpose.msra.mxu0 0.0
        %6699 = vmatprep.subr.mxu0 0.0
        %6700 = vmatpush1.xpose.msra.mxu0 0.0
        %6701 = vmatprep.subr.mxu0 0.0
        %6702 = vmatpush1.xpose.msra.mxu0 0.0
        %6703 = vmatprep.subr.mxu0 0.0
        %6704 = vmatpush1.xpose.msra.mxu0 0.0
        %6705 = vmatprep.subr.mxu0 0.0
        %6706 = vmatpush1.xpose.msra.mxu0 0.0
        %6707 = vmatprep.subr.mxu0 0.0
        %6708 = vmatpush1.xpose.msra.mxu0 0.0
        %6709 = vmatprep.subr.mxu0 0.0
        %6710 = vmatpush1.xpose.msra.mxu0 0.0
        %6711 = vmatprep.subr.mxu0 0.0
        %6712 = vmatpush1.xpose.msra.mxu0 0.0
        %6713 = vmatprep.subr.mxu0 0.0
        %6714 = vmatpush1.xpose.msra.mxu0 0.0
        %6715 = vmatprep.subr.mxu0 0.0
        %6716 = vmatpush1.xpose.msra.mxu0 0.0
        %6717 = vmatprep.subr.mxu0 0.0
        %6718 = vmatpush1.xpose.msra.mxu0 0.0
        %6719 = vmatprep.subr.mxu0 0.0
        %6720 = vmatpush1.xpose.msra.mxu0 0.0
        %6721 = vmatprep.subr.mxu0 0.0
        %6722 = vmatpush1.xpose.msra.mxu0 0.0
        %6723 = vmatprep.subr.mxu0 0.0
        %6724 = vmatpush1.xpose.msra.mxu0 0.0
        %6725 = vmatprep.subr.mxu0 0.0
        %6726 = vmatpush1.xpose.msra.mxu0 0.0
        %v6727 = vand.u32 %v548, 4294901760
        %v6728 = vsub.f32 %v548, %v6727
        %v6729 = vand.u32 %v6728, 4294901760
        %6730 = vmatprep.mubr.f32.mxu0 %v6729
        %v6731 = vand.u32 %v541, 4294901760
        %v6732 = vsub.f32 %v541, %v6731
        %v6733 = vand.u32 %v6732, 4294901760
        %6734 = vmatmul.mubr.f32.gmra.mrb[0].mxu0 %v6733
        %v6735 = vpop.f32.mrb[0].mxu0
        %v6736 = vadd.f32 %v6654, %v6735
        %v6737 = vpop.f32.mrb[0].mxu0
        %6738 = vdwg.mxu0
        %v6739 = vand.u32 %v243, 4294901760
        %v6740 = vsub.f32 %v243, %v6739
        %v6741 = vand.u32 %v6740, 4294901760
        %6742 = vmatprep.subr.mxu0 %v6741
        %v6743 = vand.u32 %v242, 4294901760
        %v6744 = vsub.f32 %v242, %v6743
        %v6745 = vand.u32 %v6744, 4294901760
        %6746 = vmatpush1.xpose.msra.mxu0 %v6745
        %v6747 = vand.u32 %v275, 4294901760
        %v6748 = vsub.f32 %v275, %v6747
        %v6749 = vand.u32 %v6748, 4294901760
        %6750 = vmatprep.subr.mxu0 %v6749
        %v6751 = vand.u32 %v274, 4294901760
        %v6752 = vsub.f32 %v274, %v6751
        %v6753 = vand.u32 %v6752, 4294901760
        %6754 = vmatpush1.xpose.msra.mxu0 %v6753
        %v6755 = vand.u32 %v307, 4294901760
        %v6756 = vsub.f32 %v307, %v6755
        %v6757 = vand.u32 %v6756, 4294901760
        %6758 = vmatprep.subr.mxu0 %v6757
        %v6759 = vand.u32 %v306, 4294901760
        %v6760 = vsub.f32 %v306, %v6759
        %v6761 = vand.u32 %v6760, 4294901760
        %6762 = vmatpush1.xpose.msra.mxu0 %v6761
        %6763 = vmatprep.subr.mxu0 0.0
        %6764 = vmatpush1.xpose.msra.mxu0 0.0
        %6765 = vmatprep.subr.mxu0 0.0
        %6766 = vmatpush1.xpose.msra.mxu0 0.0
        %6767 = vmatprep.subr.mxu0 0.0
        %6768 = vmatpush1.xpose.msra.mxu0 0.0
        %6769 = vmatprep.subr.mxu0 0.0
        %6770 = vmatpush1.xpose.msra.mxu0 0.0
        %6771 = vmatprep.subr.mxu0 0.0
        %6772 = vmatpush1.xpose.msra.mxu0 0.0
        %6773 = vmatprep.subr.mxu0 0.0
        %6774 = vmatpush1.xpose.msra.mxu0 0.0
        %6775 = vmatprep.subr.mxu0 0.0
        %6776 = vmatpush1.xpose.msra.mxu0 0.0
        %6777 = vmatprep.subr.mxu0 0.0
        %6778 = vmatpush1.xpose.msra.mxu0 0.0
        %6779 = vmatprep.subr.mxu0 0.0
        %6780 = vmatpush1.xpose.msra.mxu0 0.0
        %6781 = vmatprep.subr.mxu0 0.0
        %6782 = vmatpush1.xpose.msra.mxu0 0.0
        %6783 = vmatprep.subr.mxu0 0.0
        %6784 = vmatpush1.xpose.msra.mxu0 0.0
        %6785 = vmatprep.subr.mxu0 0.0
        %6786 = vmatpush1.xpose.msra.mxu0 0.0
        %6787 = vmatprep.subr.mxu0 0.0
        %6788 = vmatpush1.xpose.msra.mxu0 0.0
        %6789 = vmatprep.subr.mxu0 0.0
        %6790 = vmatpush1.xpose.msra.mxu0 0.0
        %6791 = vmatprep.subr.mxu0 0.0
        %6792 = vmatpush1.xpose.msra.mxu0 0.0
        %6793 = vmatprep.subr.mxu0 0.0
        %6794 = vmatpush1.xpose.msra.mxu0 0.0
        %6795 = vmatprep.subr.mxu0 0.0
        %6796 = vmatpush1.xpose.msra.mxu0 0.0
        %6797 = vmatprep.subr.mxu0 0.0
        %6798 = vmatpush1.xpose.msra.mxu0 0.0
        %6799 = vmatprep.subr.mxu0 0.0
        %6800 = vmatpush1.xpose.msra.mxu0 0.0
        %6801 = vmatprep.subr.mxu0 0.0
        %6802 = vmatpush1.xpose.msra.mxu0 0.0
        %6803 = vmatprep.subr.mxu0 0.0
        %6804 = vmatpush1.xpose.msra.mxu0 0.0
        %6805 = vmatprep.subr.mxu0 0.0
        %6806 = vmatpush1.xpose.msra.mxu0 0.0
        %6807 = vmatprep.subr.mxu0 0.0
        %6808 = vmatpush1.xpose.msra.mxu0 0.0
        %6809 = vmatprep.subr.mxu0 0.0
        %6810 = vmatpush1.xpose.msra.mxu0 0.0
        %6811 = vmatprep.subr.mxu0 0.0
        %6812 = vmatpush1.xpose.msra.mxu0 0.0
        %6813 = vmatprep.subr.mxu0 0.0
        %6814 = vmatpush1.xpose.msra.mxu0 0.0
        %6815 = vmatprep.subr.mxu0 0.0
        %6816 = vmatpush1.xpose.msra.mxu0 0.0
        %6817 = vmatprep.subr.mxu0 0.0
        %6818 = vmatpush1.xpose.msra.mxu0 0.0
        %6819 = vmatprep.subr.mxu0 0.0
        %6820 = vmatpush1.xpose.msra.mxu0 0.0
        %v6821 = vand.u32 %v548, 4294901760
        %6822 = vmatprep.mubr.f32.mxu0 %v6821
        %v6823 = vand.u32 %v541, 4294901760
        %6824 = vmatmul.mubr.f32.gmra.mrb[0].mxu0 %v6823
        %v6825 = vpop.f32.mrb[0].mxu0
        %v6826 = vadd.f32 %v6736, %v6825
        %v6827 = vpop.f32.mrb[0].mxu0
        %6828 = vdwg.mxu0
        %v6829 = vand.u32 %v243, 4294901760
        %6830 = vmatprep.subr.mxu0 %v6829
        %v6831 = vand.u32 %v242, 4294901760
        %6832 = vmatpush1.xpose.msra.mxu0 %v6831
        %v6833 = vand.u32 %v275, 4294901760
        %6834 = vmatprep.subr.mxu0 %v6833
        %v6835 = vand.u32 %v274, 4294901760
        %6836 = vmatpush1.xpose.msra.mxu0 %v6835
        %v6837 = vand.u32 %v307, 4294901760
        %6838 = vmatprep.subr.mxu0 %v6837
        %v6839 = vand.u32 %v306, 4294901760
        %6840 = vmatpush1.xpose.msra.mxu0 %v6839
        %6841 = vmatprep.subr.mxu0 0.0
        %6842 = vmatpush1.xpose.msra.mxu0 0.0
        %6843 = vmatprep.subr.mxu0 0.0
        %6844 = vmatpush1.xpose.msra.mxu0 0.0
        %6845 = vmatprep.subr.mxu0 0.0
        %6846 = vmatpush1.xpose.msra.mxu0 0.0
        %6847 = vmatprep.subr.mxu0 0.0
        %6848 = vmatpush1.xpose.msra.mxu0 0.0
        %6849 = vmatprep.subr.mxu0 0.0
        %6850 = vmatpush1.xpose.msra.mxu0 0.0
        %6851 = vmatprep.subr.mxu0 0.0
        %6852 = vmatpush1.xpose.msra.mxu0 0.0
        %6853 = vmatprep.subr.mxu0 0.0
        %6854 = vmatpush1.xpose.msra.mxu0 0.0
        %6855 = vmatprep.subr.mxu0 0.0
        %6856 = vmatpush1.xpose.msra.mxu0 0.0
        %6857 = vmatprep.subr.mxu0 0.0
        %6858 = vmatpush1.xpose.msra.mxu0 0.0
        %6859 = vmatprep.subr.mxu0 0.0
        %6860 = vmatpush1.xpose.msra.mxu0 0.0
        %6861 = vmatprep.subr.mxu0 0.0
        %6862 = vmatpush1.xpose.msra.mxu0 0.0
        %6863 = vmatprep.subr.mxu0 0.0
        %6864 = vmatpush1.xpose.msra.mxu0 0.0
        %6865 = vmatprep.subr.mxu0 0.0
        %6866 = vmatpush1.xpose.msra.mxu0 0.0
        %6867 = vmatprep.subr.mxu0 0.0
        %6868 = vmatpush1.xpose.msra.mxu0 0.0
        %6869 = vmatprep.subr.mxu0 0.0
        %6870 = vmatpush1.xpose.msra.mxu0 0.0
        %6871 = vmatprep.subr.mxu0 0.0
        %6872 = vmatpush1.xpose.msra.mxu0 0.0
        %6873 = vmatprep.subr.mxu0 0.0
        %6874 = vmatpush1.xpose.msra.mxu0 0.0
        %6875 = vmatprep.subr.mxu0 0.0
        %6876 = vmatpush1.xpose.msra.mxu0 0.0
        %6877 = vmatprep.subr.mxu0 0.0
        %6878 = vmatpush1.xpose.msra.mxu0 0.0
        %6879 = vmatprep.subr.mxu0 0.0
        %6880 = vmatpush1.xpose.msra.mxu0 0.0
        %6881 = vmatprep.subr.mxu0 0.0
        %6882 = vmatpush1.xpose.msra.mxu0 0.0
        %6883 = vmatprep.subr.mxu0 0.0
        %6884 = vmatpush1.xpose.msra.mxu0 0.0
        %6885 = vmatprep.subr.mxu0 0.0
        %6886 = vmatpush1.xpose.msra.mxu0 0.0
        %6887 = vmatprep.subr.mxu0 0.0
        %6888 = vmatpush1.xpose.msra.mxu0 0.0
        %6889 = vmatprep.subr.mxu0 0.0
        %6890 = vmatpush1.xpose.msra.mxu0 0.0
        %6891 = vmatprep.subr.mxu0 0.0
        %6892 = vmatpush1.xpose.msra.mxu0 0.0
        %6893 = vmatprep.subr.mxu0 0.0
        %6894 = vmatpush1.xpose.msra.mxu0 0.0
        %6895 = vmatprep.subr.mxu0 0.0
        %6896 = vmatpush1.xpose.msra.mxu0 0.0
        %6897 = vmatprep.subr.mxu0 0.0
        %6898 = vmatpush1.xpose.msra.mxu0 0.0
        %v6899 = vand.u32 %v548, 4294901760
        %6900 = vmatprep.mubr.f32.mxu0 %v6899
        %v6901 = vand.u32 %v541, 4294901760
        %6902 = vmatmul.mubr.f32.gmra.mrb[0].mxu0 %v6901
        %v6903 = vpop.f32.mrb[0].mxu0
        %v6904 = vadd.f32 %v6826, %v6903
        %v6905 = vpop.f32.mrb[0].mxu0
        %6906 = vdwg.mxu0
        %v6907 = vand.u32 %v245, 4294901760
        %6908 = vmatprep.subr.mxu0 %v6907
        %v6909 = vand.u32 %v244, 4294901760
        %6910 = vmatpush1.xpose.msra.mxu0 %v6909
        %v6911 = vand.u32 %v277, 4294901760
        %6912 = vmatprep.subr.mxu0 %v6911
        %v6913 = vand.u32 %v276, 4294901760
        %6914 = vmatpush1.xpose.msra.mxu0 %v6913
        %v6915 = vand.u32 %v309, 4294901760
        %6916 = vmatprep.subr.mxu0 %v6915
        %v6917 = vand.u32 %v308, 4294901760
        %6918 = vmatpush1.xpose.msra.mxu0 %v6917
        %6919 = vmatprep.subr.mxu0 0.0
        %6920 = vmatpush1.xpose.msra.mxu0 0.0
        %6921 = vmatprep.subr.mxu0 0.0
        %6922 = vmatpush1.xpose.msra.mxu0 0.0
        %6923 = vmatprep.subr.mxu0 0.0
        %6924 = vmatpush1.xpose.msra.mxu0 0.0
        %6925 = vmatprep.subr.mxu0 0.0
        %6926 = vmatpush1.xpose.msra.mxu0 0.0
        %6927 = vmatprep.subr.mxu0 0.0
        %6928 = vmatpush1.xpose.msra.mxu0 0.0
        %6929 = vmatprep.subr.mxu0 0.0
        %6930 = vmatpush1.xpose.msra.mxu0 0.0
        %6931 = vmatprep.subr.mxu0 0.0
        %6932 = vmatpush1.xpose.msra.mxu0 0.0
        %6933 = vmatprep.subr.mxu0 0.0
        %6934 = vmatpush1.xpose.msra.mxu0 0.0
        %6935 = vmatprep.subr.mxu0 0.0
        %6936 = vmatpush1.xpose.msra.mxu0 0.0
        %6937 = vmatprep.subr.mxu0 0.0
        %6938 = vmatpush1.xpose.msra.mxu0 0.0
        %6939 = vmatprep.subr.mxu0 0.0
        %6940 = vmatpush1.xpose.msra.mxu0 0.0
        %6941 = vmatprep.subr.mxu0 0.0
        %6942 = vmatpush1.xpose.msra.mxu0 0.0
        %6943 = vmatprep.subr.mxu0 0.0
        %6944 = vmatpush1.xpose.msra.mxu0 0.0
        %6945 = vmatprep.subr.mxu0 0.0
        %6946 = vmatpush1.xpose.msra.mxu0 0.0
        %6947 = vmatprep.subr.mxu0 0.0
        %6948 = vmatpush1.xpose.msra.mxu0 0.0
        %6949 = vmatprep.subr.mxu0 0.0
        %6950 = vmatpush1.xpose.msra.mxu0 0.0
        %6951 = vmatprep.subr.mxu0 0.0
        %6952 = vmatpush1.xpose.msra.mxu0 0.0
        %6953 = vmatprep.subr.mxu0 0.0
        %6954 = vmatpush1.xpose.msra.mxu0 0.0
        %6955 = vmatprep.subr.mxu0 0.0
        %6956 = vmatpush1.xpose.msra.mxu0 0.0
        %6957 = vmatprep.subr.mxu0 0.0
        %6958 = vmatpush1.xpose.msra.mxu0 0.0
        %6959 = vmatprep.subr.mxu0 0.0
        %6960 = vmatpush1.xpose.msra.mxu0 0.0
        %6961 = vmatprep.subr.mxu0 0.0
        %6962 = vmatpush1.xpose.msra.mxu0 0.0
        %6963 = vmatprep.subr.mxu0 0.0
        %6964 = vmatpush1.xpose.msra.mxu0 0.0
        %6965 = vmatprep.subr.mxu0 0.0
        %6966 = vmatpush1.xpose.msra.mxu0 0.0
        %6967 = vmatprep.subr.mxu0 0.0
        %6968 = vmatpush1.xpose.msra.mxu0 0.0
        %6969 = vmatprep.subr.mxu0 0.0
        %6970 = vmatpush1.xpose.msra.mxu0 0.0
        %6971 = vmatprep.subr.mxu0 0.0
        %6972 = vmatpush1.xpose.msra.mxu0 0.0
        %6973 = vmatprep.subr.mxu0 0.0
        %6974 = vmatpush1.xpose.msra.mxu0 0.0
        %6975 = vmatprep.subr.mxu0 0.0
        %6976 = vmatpush1.xpose.msra.mxu0 0.0
        %v6977 = vand.u32 %v562, 4294901760
        %v6978 = vsub.f32 %v562, %v6977
        %v6979 = vand.u32 %v6978, 4294901760
        %v6980 = vsub.f32 %v6978, %v6979
        %v6981 = vand.u32 %v6980, 4294901760
        %6982 = vmatprep.mubr.f32.mxu0 %v6981
        %v6983 = vand.u32 %v555, 4294901760
        %v6984 = vsub.f32 %v555, %v6983
        %v6985 = vand.u32 %v6984, 4294901760
        %v6986 = vsub.f32 %v6984, %v6985
        %v6987 = vand.u32 %v6986, 4294901760
        %6988 = vmatmul.mubr.f32.gmra.mrb[0].mxu0 %v6987
        %v6989 = vpop.f32.mrb[0].mxu0
        %v6990 = vadd.f32 %v6904, %v6989
        %v6991 = vpop.f32.mrb[0].mxu0
        %6992 = vdwg.mxu0
        %v6993 = vand.u32 %v245, 4294901760
        %v6994 = vsub.f32 %v245, %v6993
        %v6995 = vand.u32 %v6994, 4294901760
        %v6996 = vsub.f32 %v6994, %v6995
        %v6997 = vand.u32 %v6996, 4294901760
        %6998 = vmatprep.subr.mxu0 %v6997
        %v6999 = vand.u32 %v244, 4294901760
        %v7000 = vsub.f32 %v244, %v6999
        %v7001 = vand.u32 %v7000, 4294901760
        %v7002 = vsub.f32 %v7000, %v7001
        %v7003 = vand.u32 %v7002, 4294901760
        %7004 = vmatpush1.xpose.msra.mxu0 %v7003
        %v7005 = vand.u32 %v277, 4294901760
        %v7006 = vsub.f32 %v277, %v7005
        %v7007 = vand.u32 %v7006, 4294901760
        %v7008 = vsub.f32 %v7006, %v7007
        %v7009 = vand.u32 %v7008, 4294901760
        %7010 = vmatprep.subr.mxu0 %v7009
        %v7011 = vand.u32 %v276, 4294901760
        %v7012 = vsub.f32 %v276, %v7011
        %v7013 = vand.u32 %v7012, 4294901760
        %v7014 = vsub.f32 %v7012, %v7013
        %v7015 = vand.u32 %v7014, 4294901760
        %7016 = vmatpush1.xpose.msra.mxu0 %v7015
        %v7017 = vand.u32 %v309, 4294901760
        %v7018 = vsub.f32 %v309, %v7017
        %v7019 = vand.u32 %v7018, 4294901760
        %v7020 = vsub.f32 %v7018, %v7019
        %v7021 = vand.u32 %v7020, 4294901760
        %7022 = vmatprep.subr.mxu0 %v7021
        %v7023 = vand.u32 %v308, 4294901760
        %v7024 = vsub.f32 %v308, %v7023
        %v7025 = vand.u32 %v7024, 4294901760
        %v7026 = vsub.f32 %v7024, %v7025
        %v7027 = vand.u32 %v7026, 4294901760
        %7028 = vmatpush1.xpose.msra.mxu0 %v7027
        %7029 = vmatprep.subr.mxu0 0.0
        %7030 = vmatpush1.xpose.msra.mxu0 0.0
        %7031 = vmatprep.subr.mxu0 0.0
        %7032 = vmatpush1.xpose.msra.mxu0 0.0
        %7033 = vmatprep.subr.mxu0 0.0
        %7034 = vmatpush1.xpose.msra.mxu0 0.0
        %7035 = vmatprep.subr.mxu0 0.0
        %7036 = vmatpush1.xpose.msra.mxu0 0.0
        %7037 = vmatprep.subr.mxu0 0.0
        %7038 = vmatpush1.xpose.msra.mxu0 0.0
        %7039 = vmatprep.subr.mxu0 0.0
        %7040 = vmatpush1.xpose.msra.mxu0 0.0
        %7041 = vmatprep.subr.mxu0 0.0
        %7042 = vmatpush1.xpose.msra.mxu0 0.0
        %7043 = vmatprep.subr.mxu0 0.0
        %7044 = vmatpush1.xpose.msra.mxu0 0.0
        %7045 = vmatprep.subr.mxu0 0.0
        %7046 = vmatpush1.xpose.msra.mxu0 0.0
        %7047 = vmatprep.subr.mxu0 0.0
        %7048 = vmatpush1.xpose.msra.mxu0 0.0
        %7049 = vmatprep.subr.mxu0 0.0
        %7050 = vmatpush1.xpose.msra.mxu0 0.0
        %7051 = vmatprep.subr.mxu0 0.0
        %7052 = vmatpush1.xpose.msra.mxu0 0.0
        %7053 = vmatprep.subr.mxu0 0.0
        %7054 = vmatpush1.xpose.msra.mxu0 0.0
        %7055 = vmatprep.subr.mxu0 0.0
        %7056 = vmatpush1.xpose.msra.mxu0 0.0
        %7057 = vmatprep.subr.mxu0 0.0
        %7058 = vmatpush1.xpose.msra.mxu0 0.0
        %7059 = vmatprep.subr.mxu0 0.0
        %7060 = vmatpush1.xpose.msra.mxu0 0.0
        %7061 = vmatprep.subr.mxu0 0.0
        %7062 = vmatpush1.xpose.msra.mxu0 0.0
        %7063 = vmatprep.subr.mxu0 0.0
        %7064 = vmatpush1.xpose.msra.mxu0 0.0
        %7065 = vmatprep.subr.mxu0 0.0
        %7066 = vmatpush1.xpose.msra.mxu0 0.0
        %7067 = vmatprep.subr.mxu0 0.0
        %7068 = vmatpush1.xpose.msra.mxu0 0.0
        %7069 = vmatprep.subr.mxu0 0.0
        %7070 = vmatpush1.xpose.msra.mxu0 0.0
        %7071 = vmatprep.subr.mxu0 0.0
        %7072 = vmatpush1.xpose.msra.mxu0 0.0
        %7073 = vmatprep.subr.mxu0 0.0
        %7074 = vmatpush1.xpose.msra.mxu0 0.0
        %7075 = vmatprep.subr.mxu0 0.0
        %7076 = vmatpush1.xpose.msra.mxu0 0.0
        %7077 = vmatprep.subr.mxu0 0.0
        %7078 = vmatpush1.xpose.msra.mxu0 0.0
        %7079 = vmatprep.subr.mxu0 0.0
        %7080 = vmatpush1.xpose.msra.mxu0 0.0
        %7081 = vmatprep.subr.mxu0 0.0
        %7082 = vmatpush1.xpose.msra.mxu0 0.0
        %7083 = vmatprep.subr.mxu0 0.0
        %7084 = vmatpush1.xpose.msra.mxu0 0.0
        %7085 = vmatprep.subr.mxu0 0.0
        %7086 = vmatpush1.xpose.msra.mxu0 0.0
        %v7087 = vand.u32 %v562, 4294901760
        %7088 = vmatprep.mubr.f32.mxu0 %v7087
        %v7089 = vand.u32 %v555, 4294901760
        %7090 = vmatmul.mubr.f32.gmra.mrb[0].mxu0 %v7089
        %v7091 = vpop.f32.mrb[0].mxu0
        %v7092 = vadd.f32 %v6990, %v7091
        %v7093 = vpop.f32.mrb[0].mxu0
        %7094 = vdwg.mxu0
        %v7095 = vand.u32 %v245, 4294901760
        %v7096 = vsub.f32 %v245, %v7095
        %7097 = vmatprep.subr.mxu0 %v7096
        %v7098 = vand.u32 %v244, 4294901760
        %v7099 = vsub.f32 %v244, %v7098
        %7100 = vmatpush1.xpose.msra.mxu0 %v7099
        %v7101 = vand.u32 %v277, 4294901760
        %v7102 = vsub.f32 %v277, %v7101
        %7103 = vmatprep.subr.mxu0 %v7102
        %v7104 = vand.u32 %v276, 4294901760
        %v7105 = vsub.f32 %v276, %v7104
        %7106 = vmatpush1.xpose.msra.mxu0 %v7105
        %v7107 = vand.u32 %v309, 4294901760
        %v7108 = vsub.f32 %v309, %v7107
        %7109 = vmatprep.subr.mxu0 %v7108
        %v7110 = vand.u32 %v308, 4294901760
        %v7111 = vsub.f32 %v308, %v7110
        %7112 = vmatpush1.xpose.msra.mxu0 %v7111
        %7113 = vmatprep.subr.mxu0 0.0
        %7114 = vmatpush1.xpose.msra.mxu0 0.0
        %7115 = vmatprep.subr.mxu0 0.0
        %7116 = vmatpush1.xpose.msra.mxu0 0.0
        %7117 = vmatprep.subr.mxu0 0.0
        %7118 = vmatpush1.xpose.msra.mxu0 0.0
        %7119 = vmatprep.subr.mxu0 0.0
        %7120 = vmatpush1.xpose.msra.mxu0 0.0
        %7121 = vmatprep.subr.mxu0 0.0
        %7122 = vmatpush1.xpose.msra.mxu0 0.0
        %7123 = vmatprep.subr.mxu0 0.0
        %7124 = vmatpush1.xpose.msra.mxu0 0.0
        %7125 = vmatprep.subr.mxu0 0.0
        %7126 = vmatpush1.xpose.msra.mxu0 0.0
        %7127 = vmatprep.subr.mxu0 0.0
        %7128 = vmatpush1.xpose.msra.mxu0 0.0
        %7129 = vmatprep.subr.mxu0 0.0
        %7130 = vmatpush1.xpose.msra.mxu0 0.0
        %7131 = vmatprep.subr.mxu0 0.0
        %7132 = vmatpush1.xpose.msra.mxu0 0.0
        %7133 = vmatprep.subr.mxu0 0.0
        %7134 = vmatpush1.xpose.msra.mxu0 0.0
        %7135 = vmatprep.subr.mxu0 0.0
        %7136 = vmatpush1.xpose.msra.mxu0 0.0
        %7137 = vmatprep.subr.mxu0 0.0
        %7138 = vmatpush1.xpose.msra.mxu0 0.0
        %7139 = vmatprep.subr.mxu0 0.0
        %7140 = vmatpush1.xpose.msra.mxu0 0.0
        %7141 = vmatprep.subr.mxu0 0.0
        %7142 = vmatpush1.xpose.msra.mxu0 0.0
        %7143 = vmatprep.subr.mxu0 0.0
        %7144 = vmatpush1.xpose.msra.mxu0 0.0
        %7145 = vmatprep.subr.mxu0 0.0
        %7146 = vmatpush1.xpose.msra.mxu0 0.0
        %7147 = vmatprep.subr.mxu0 0.0
        %7148 = vmatpush1.xpose.msra.mxu0 0.0
        %7149 = vmatprep.subr.mxu0 0.0
        %7150 = vmatpush1.xpose.msra.mxu0 0.0
        %7151 = vmatprep.subr.mxu0 0.0
        %7152 = vmatpush1.xpose.msra.mxu0 0.0
        %7153 = vmatprep.subr.mxu0 0.0
        %7154 = vmatpush1.xpose.msra.mxu0 0.0
        %7155 = vmatprep.subr.mxu0 0.0
        %7156 = vmatpush1.xpose.msra.mxu0 0.0
        %7157 = vmatprep.subr.mxu0 0.0
        %7158 = vmatpush1.xpose.msra.mxu0 0.0
        %7159 = vmatprep.subr.mxu0 0.0
        %7160 = vmatpush1.xpose.msra.mxu0 0.0
        %7161 = vmatprep.subr.mxu0 0.0
        %7162 = vmatpush1.xpose.msra.mxu0 0.0
        %7163 = vmatprep.subr.mxu0 0.0
        %7164 = vmatpush1.xpose.msra.mxu0 0.0
        %7165 = vmatprep.subr.mxu0 0.0
        %7166 = vmatpush1.xpose.msra.mxu0 0.0
        %7167 = vmatprep.subr.mxu0 0.0
        %7168 = vmatpush1.xpose.msra.mxu0 0.0
        %7169 = vmatprep.subr.mxu0 0.0
        %7170 = vmatpush1.xpose.msra.mxu0 0.0
        %v7171 = vand.u32 %v562, 4294901760
        %v7172 = vsub.f32 %v562, %v7171
        %7173 = vmatprep.mubr.f32.mxu0 %v7172
        %v7174 = vand.u32 %v555, 4294901760
        %v7175 = vsub.f32 %v555, %v7174
        %7176 = vmatmul.mubr.f32.gmra.mrb[0].mxu0 %v7175
        %v7177 = vpop.f32.mrb[0].mxu0
        %v7178 = vadd.f32 %v7092, %v7177
        %v7179 = vpop.f32.mrb[0].mxu0
        %7180 = vdwg.mxu0
        %v7181 = vand.u32 %v245, 4294901760
        %7182 = vmatprep.subr.mxu0 %v7181
        %v7183 = vand.u32 %v244, 4294901760
        %7184 = vmatpush1.xpose.msra.mxu0 %v7183
        %v7185 = vand.u32 %v277, 4294901760
        %7186 = vmatprep.subr.mxu0 %v7185
        %v7187 = vand.u32 %v276, 4294901760
        %7188 = vmatpush1.xpose.msra.mxu0 %v7187
        %v7189 = vand.u32 %v309, 4294901760
        %7190 = vmatprep.subr.mxu0 %v7189
        %v7191 = vand.u32 %v308, 4294901760
        %7192 = vmatpush1.xpose.msra.mxu0 %v7191
        %7193 = vmatprep.subr.mxu0 0.0
        %7194 = vmatpush1.xpose.msra.mxu0 0.0
        %7195 = vmatprep.subr.mxu0 0.0
        %7196 = vmatpush1.xpose.msra.mxu0 0.0
        %7197 = vmatprep.subr.mxu0 0.0
        %7198 = vmatpush1.xpose.msra.mxu0 0.0
        %7199 = vmatprep.subr.mxu0 0.0
        %7200 = vmatpush1.xpose.msra.mxu0 0.0
        %7201 = vmatprep.subr.mxu0 0.0
        %7202 = vmatpush1.xpose.msra.mxu0 0.0
        %7203 = vmatprep.subr.mxu0 0.0
        %7204 = vmatpush1.xpose.msra.mxu0 0.0
        %7205 = vmatprep.subr.mxu0 0.0
        %7206 = vmatpush1.xpose.msra.mxu0 0.0
        %7207 = vmatprep.subr.mxu0 0.0
        %7208 = vmatpush1.xpose.msra.mxu0 0.0
        %7209 = vmatprep.subr.mxu0 0.0
        %7210 = vmatpush1.xpose.msra.mxu0 0.0
        %7211 = vmatprep.subr.mxu0 0.0
        %7212 = vmatpush1.xpose.msra.mxu0 0.0
        %7213 = vmatprep.subr.mxu0 0.0
        %7214 = vmatpush1.xpose.msra.mxu0 0.0
        %7215 = vmatprep.subr.mxu0 0.0
        %7216 = vmatpush1.xpose.msra.mxu0 0.0
        %7217 = vmatprep.subr.mxu0 0.0
        %7218 = vmatpush1.xpose.msra.mxu0 0.0
        %7219 = vmatprep.subr.mxu0 0.0
        %7220 = vmatpush1.xpose.msra.mxu0 0.0
        %7221 = vmatprep.subr.mxu0 0.0
        %7222 = vmatpush1.xpose.msra.mxu0 0.0
        %7223 = vmatprep.subr.mxu0 0.0
        %7224 = vmatpush1.xpose.msra.mxu0 0.0
        %7225 = vmatprep.subr.mxu0 0.0
        %7226 = vmatpush1.xpose.msra.mxu0 0.0
        %7227 = vmatprep.subr.mxu0 0.0
        %7228 = vmatpush1.xpose.msra.mxu0 0.0
        %7229 = vmatprep.subr.mxu0 0.0
        %7230 = vmatpush1.xpose.msra.mxu0 0.0
        %7231 = vmatprep.subr.mxu0 0.0
        %7232 = vmatpush1.xpose.msra.mxu0 0.0
        %7233 = vmatprep.subr.mxu0 0.0
        %7234 = vmatpush1.xpose.msra.mxu0 0.0
        %7235 = vmatprep.subr.mxu0 0.0
        %7236 = vmatpush1.xpose.msra.mxu0 0.0
        %7237 = vmatprep.subr.mxu0 0.0
        %7238 = vmatpush1.xpose.msra.mxu0 0.0
        %7239 = vmatprep.subr.mxu0 0.0
        %7240 = vmatpush1.xpose.msra.mxu0 0.0
        %7241 = vmatprep.subr.mxu0 0.0
        %7242 = vmatpush1.xpose.msra.mxu0 0.0
        %7243 = vmatprep.subr.mxu0 0.0
        %7244 = vmatpush1.xpose.msra.mxu0 0.0
        %7245 = vmatprep.subr.mxu0 0.0
        %7246 = vmatpush1.xpose.msra.mxu0 0.0
        %7247 = vmatprep.subr.mxu0 0.0
        %7248 = vmatpush1.xpose.msra.mxu0 0.0
        %7249 = vmatprep.subr.mxu0 0.0
        %7250 = vmatpush1.xpose.msra.mxu0 0.0
        %v7251 = vand.u32 %v562, 4294901760
        %v7252 = vsub.f32 %v562, %v7251
        %v7253 = vand.u32 %v7252, 4294901760
        %7254 = vmatprep.mubr.f32.mxu0 %v7253
        %v7255 = vand.u32 %v555, 4294901760
        %v7256 = vsub.f32 %v555, %v7255
        %v7257 = vand.u32 %v7256, 4294901760
        %7258 = vmatmul.mubr.f32.gmra.mrb[0].mxu0 %v7257
        %v7259 = vpop.f32.mrb[0].mxu0
        %v7260 = vadd.f32 %v7178, %v7259
        %v7261 = vpop.f32.mrb[0].mxu0
        %7262 = vdwg.mxu0
        %v7263 = vand.u32 %v245, 4294901760
        %v7264 = vsub.f32 %v245, %v7263
        %v7265 = vand.u32 %v7264, 4294901760
        %7266 = vmatprep.subr.mxu0 %v7265
        %v7267 = vand.u32 %v244, 4294901760
        %v7268 = vsub.f32 %v244, %v7267
        %v7269 = vand.u32 %v7268, 4294901760
        %7270 = vmatpush1.xpose.msra.mxu0 %v7269
        %v7271 = vand.u32 %v277, 4294901760
        %v7272 = vsub.f32 %v277, %v7271
        %v7273 = vand.u32 %v7272, 4294901760
        %7274 = vmatprep.subr.mxu0 %v7273
        %v7275 = vand.u32 %v276, 4294901760
        %v7276 = vsub.f32 %v276, %v7275
        %v7277 = vand.u32 %v7276, 4294901760
        %7278 = vmatpush1.xpose.msra.mxu0 %v7277
        %v7279 = vand.u32 %v309, 4294901760
        %v7280 = vsub.f32 %v309, %v7279
        %v7281 = vand.u32 %v7280, 4294901760
        %7282 = vmatprep.subr.mxu0 %v7281
        %v7283 = vand.u32 %v308, 4294901760
        %v7284 = vsub.f32 %v308, %v7283
        %v7285 = vand.u32 %v7284, 4294901760
        %7286 = vmatpush1.xpose.msra.mxu0 %v7285
        %7287 = vmatprep.subr.mxu0 0.0
        %7288 = vmatpush1.xpose.msra.mxu0 0.0
        %7289 = vmatprep.subr.mxu0 0.0
        %7290 = vmatpush1.xpose.msra.mxu0 0.0
        %7291 = vmatprep.subr.mxu0 0.0
        %7292 = vmatpush1.xpose.msra.mxu0 0.0
        %7293 = vmatprep.subr.mxu0 0.0
        %7294 = vmatpush1.xpose.msra.mxu0 0.0
        %7295 = vmatprep.subr.mxu0 0.0
        %7296 = vmatpush1.xpose.msra.mxu0 0.0
        %7297 = vmatprep.subr.mxu0 0.0
        %7298 = vmatpush1.xpose.msra.mxu0 0.0
        %7299 = vmatprep.subr.mxu0 0.0
        %7300 = vmatpush1.xpose.msra.mxu0 0.0
        %7301 = vmatprep.subr.mxu0 0.0
        %7302 = vmatpush1.xpose.msra.mxu0 0.0
        %7303 = vmatprep.subr.mxu0 0.0
        %7304 = vmatpush1.xpose.msra.mxu0 0.0
        %7305 = vmatprep.subr.mxu0 0.0
        %7306 = vmatpush1.xpose.msra.mxu0 0.0
        %7307 = vmatprep.subr.mxu0 0.0
        %7308 = vmatpush1.xpose.msra.mxu0 0.0
        %7309 = vmatprep.subr.mxu0 0.0
        %7310 = vmatpush1.xpose.msra.mxu0 0.0
        %7311 = vmatprep.subr.mxu0 0.0
        %7312 = vmatpush1.xpose.msra.mxu0 0.0
        %7313 = vmatprep.subr.mxu0 0.0
        %7314 = vmatpush1.xpose.msra.mxu0 0.0
        %7315 = vmatprep.subr.mxu0 0.0
        %7316 = vmatpush1.xpose.msra.mxu0 0.0
        %7317 = vmatprep.subr.mxu0 0.0
        %7318 = vmatpush1.xpose.msra.mxu0 0.0
        %7319 = vmatprep.subr.mxu0 0.0
        %7320 = vmatpush1.xpose.msra.mxu0 0.0
        %7321 = vmatprep.subr.mxu0 0.0
        %7322 = vmatpush1.xpose.msra.mxu0 0.0
        %7323 = vmatprep.subr.mxu0 0.0
        %7324 = vmatpush1.xpose.msra.mxu0 0.0
        %7325 = vmatprep.subr.mxu0 0.0
        %7326 = vmatpush1.xpose.msra.mxu0 0.0
        %7327 = vmatprep.subr.mxu0 0.0
        %7328 = vmatpush1.xpose.msra.mxu0 0.0
        %7329 = vmatprep.subr.mxu0 0.0
        %7330 = vmatpush1.xpose.msra.mxu0 0.0
        %7331 = vmatprep.subr.mxu0 0.0
        %7332 = vmatpush1.xpose.msra.mxu0 0.0
        %7333 = vmatprep.subr.mxu0 0.0
        %7334 = vmatpush1.xpose.msra.mxu0 0.0
        %7335 = vmatprep.subr.mxu0 0.0
        %7336 = vmatpush1.xpose.msra.mxu0 0.0
        %7337 = vmatprep.subr.mxu0 0.0
        %7338 = vmatpush1.xpose.msra.mxu0 0.0
        %7339 = vmatprep.subr.mxu0 0.0
        %7340 = vmatpush1.xpose.msra.mxu0 0.0
        %7341 = vmatprep.subr.mxu0 0.0
        %7342 = vmatpush1.xpose.msra.mxu0 0.0
        %7343 = vmatprep.subr.mxu0 0.0
        %7344 = vmatpush1.xpose.msra.mxu0 0.0
        %v7345 = vand.u32 %v562, 4294901760
        %7346 = vmatprep.mubr.f32.mxu0 %v7345
        %v7347 = vand.u32 %v555, 4294901760
        %7348 = vmatmul.mubr.f32.gmra.mrb[0].mxu0 %v7347
        %v7349 = vpop.f32.mrb[0].mxu0
        %v7350 = vadd.f32 %v7260, %v7349
        %v7351 = vpop.f32.mrb[0].mxu0
        %7352 = vdwg.mxu0
        %v7353 = vand.u32 %v245, 4294901760
        %7354 = vmatprep.subr.mxu0 %v7353
        %v7355 = vand.u32 %v244, 4294901760
        %7356 = vmatpush1.xpose.msra.mxu0 %v7355
        %v7357 = vand.u32 %v277, 4294901760
        %7358 = vmatprep.subr.mxu0 %v7357
        %v7359 = vand.u32 %v276, 4294901760
        %7360 = vmatpush1.xpose.msra.mxu0 %v7359
        %v7361 = vand.u32 %v309, 4294901760
        %7362 = vmatprep.subr.mxu0 %v7361
        %v7363 = vand.u32 %v308, 4294901760
        %7364 = vmatpush1.xpose.msra.mxu0 %v7363
        %7365 = vmatprep.subr.mxu0 0.0
        %7366 = vmatpush1.xpose.msra.mxu0 0.0
        %7367 = vmatprep.subr.mxu0 0.0
        %7368 = vmatpush1.xpose.msra.mxu0 0.0
        %7369 = vmatprep.subr.mxu0 0.0
        %7370 = vmatpush1.xpose.msra.mxu0 0.0
        %7371 = vmatprep.subr.mxu0 0.0
        %7372 = vmatpush1.xpose.msra.mxu0 0.0
        %7373 = vmatprep.subr.mxu0 0.0
        %7374 = vmatpush1.xpose.msra.mxu0 0.0
        %7375 = vmatprep.subr.mxu0 0.0
        %7376 = vmatpush1.xpose.msra.mxu0 0.0
        %7377 = vmatprep.subr.mxu0 0.0
        %7378 = vmatpush1.xpose.msra.mxu0 0.0
        %7379 = vmatprep.subr.mxu0 0.0
        %7380 = vmatpush1.xpose.msra.mxu0 0.0
        %7381 = vmatprep.subr.mxu0 0.0
        %7382 = vmatpush1.xpose.msra.mxu0 0.0
        %7383 = vmatprep.subr.mxu0 0.0
        %7384 = vmatpush1.xpose.msra.mxu0 0.0
        %7385 = vmatprep.subr.mxu0 0.0
        %7386 = vmatpush1.xpose.msra.mxu0 0.0
        %7387 = vmatprep.subr.mxu0 0.0
        %7388 = vmatpush1.xpose.msra.mxu0 0.0
        %7389 = vmatprep.subr.mxu0 0.0
        %7390 = vmatpush1.xpose.msra.mxu0 0.0
        %7391 = vmatprep.subr.mxu0 0.0
        %7392 = vmatpush1.xpose.msra.mxu0 0.0
        %7393 = vmatprep.subr.mxu0 0.0
        %7394 = vmatpush1.xpose.msra.mxu0 0.0
        %7395 = vmatprep.subr.mxu0 0.0
        %7396 = vmatpush1.xpose.msra.mxu0 0.0
        %7397 = vmatprep.subr.mxu0 0.0
        %7398 = vmatpush1.xpose.msra.mxu0 0.0
        %7399 = vmatprep.subr.mxu0 0.0
        %7400 = vmatpush1.xpose.msra.mxu0 0.0
        %7401 = vmatprep.subr.mxu0 0.0
        %7402 = vmatpush1.xpose.msra.mxu0 0.0
        %7403 = vmatprep.subr.mxu0 0.0
        %7404 = vmatpush1.xpose.msra.mxu0 0.0
        %7405 = vmatprep.subr.mxu0 0.0
        %7406 = vmatpush1.xpose.msra.mxu0 0.0
        %7407 = vmatprep.subr.mxu0 0.0
        %7408 = vmatpush1.xpose.msra.mxu0 0.0
        %7409 = vmatprep.subr.mxu0 0.0
        %7410 = vmatpush1.xpose.msra.mxu0 0.0
        %7411 = vmatprep.subr.mxu0 0.0
        %7412 = vmatpush1.xpose.msra.mxu0 0.0
        %7413 = vmatprep.subr.mxu0 0.0
        %7414 = vmatpush1.xpose.msra.mxu0 0.0
        %7415 = vmatprep.subr.mxu0 0.0
        %7416 = vmatpush1.xpose.msra.mxu0 0.0
        %7417 = vmatprep.subr.mxu0 0.0
        %7418 = vmatpush1.xpose.msra.mxu0 0.0
        %7419 = vmatprep.subr.mxu0 0.0
        %7420 = vmatpush1.xpose.msra.mxu0 0.0
        %7421 = vmatprep.subr.mxu0 0.0
        %7422 = vmatpush1.xpose.msra.mxu0 0.0
        %v7423 = vand.u32 %v562, 4294901760
        %7424 = vmatprep.mubr.f32.mxu0 %v7423
        %v7425 = vand.u32 %v555, 4294901760
        %7426 = vmatmul.mubr.f32.gmra.mrb[0].mxu0 %v7425
        %v7427 = vpop.f32.mrb[0].mxu0
        %v7428 = vadd.f32 %v7350, %v7427
        %v7429 = vpop.f32.mrb[0].mxu0
        %7430 = vdwg.mxu0
        %v7431 = vand.u32 %v247, 4294901760
        %7432 = vmatprep.subr.mxu0 %v7431
        %v7433 = vand.u32 %v246, 4294901760
        %7434 = vmatpush1.xpose.msra.mxu0 %v7433
        %v7435 = vand.u32 %v279, 4294901760
        %7436 = vmatprep.subr.mxu0 %v7435
        %v7437 = vand.u32 %v278, 4294901760
        %7438 = vmatpush1.xpose.msra.mxu0 %v7437
        %v7439 = vand.u32 %v311, 4294901760
        %7440 = vmatprep.subr.mxu0 %v7439
        %v7441 = vand.u32 %v310, 4294901760
        %7442 = vmatpush1.xpose.msra.mxu0 %v7441
        %7443 = vmatprep.subr.mxu0 0.0
        %7444 = vmatpush1.xpose.msra.mxu0 0.0
        %7445 = vmatprep.subr.mxu0 0.0
        %7446 = vmatpush1.xpose.msra.mxu0 0.0
        %7447 = vmatprep.subr.mxu0 0.0
        %7448 = vmatpush1.xpose.msra.mxu0 0.0
        %7449 = vmatprep.subr.mxu0 0.0
        %7450 = vmatpush1.xpose.msra.mxu0 0.0
        %7451 = vmatprep.subr.mxu0 0.0
        %7452 = vmatpush1.xpose.msra.mxu0 0.0
        %7453 = vmatprep.subr.mxu0 0.0
        %7454 = vmatpush1.xpose.msra.mxu0 0.0
        %7455 = vmatprep.subr.mxu0 0.0
        %7456 = vmatpush1.xpose.msra.mxu0 0.0
        %7457 = vmatprep.subr.mxu0 0.0
        %7458 = vmatpush1.xpose.msra.mxu0 0.0
        %7459 = vmatprep.subr.mxu0 0.0
        %7460 = vmatpush1.xpose.msra.mxu0 0.0
        %7461 = vmatprep.subr.mxu0 0.0
        %7462 = vmatpush1.xpose.msra.mxu0 0.0
        %7463 = vmatprep.subr.mxu0 0.0
        %7464 = vmatpush1.xpose.msra.mxu0 0.0
        %7465 = vmatprep.subr.mxu0 0.0
        %7466 = vmatpush1.xpose.msra.mxu0 0.0
        %7467 = vmatprep.subr.mxu0 0.0
        %7468 = vmatpush1.xpose.msra.mxu0 0.0
        %7469 = vmatprep.subr.mxu0 0.0
        %7470 = vmatpush1.xpose.msra.mxu0 0.0
        %7471 = vmatprep.subr.mxu0 0.0
        %7472 = vmatpush1.xpose.msra.mxu0 0.0
        %7473 = vmatprep.subr.mxu0 0.0
        %7474 = vmatpush1.xpose.msra.mxu0 0.0
        %7475 = vmatprep.subr.mxu0 0.0
        %7476 = vmatpush1.xpose.msra.mxu0 0.0
        %7477 = vmatprep.subr.mxu0 0.0
        %7478 = vmatpush1.xpose.msra.mxu0 0.0
        %7479 = vmatprep.subr.mxu0 0.0
        %7480 = vmatpush1.xpose.msra.mxu0 0.0
        %7481 = vmatprep.subr.mxu0 0.0
        %7482 = vmatpush1.xpose.msra.mxu0 0.0
        %7483 = vmatprep.subr.mxu0 0.0
        %7484 = vmatpush1.xpose.msra.mxu0 0.0
        %7485 = vmatprep.subr.mxu0 0.0
        %7486 = vmatpush1.xpose.msra.mxu0 0.0
        %7487 = vmatprep.subr.mxu0 0.0
        %7488 = vmatpush1.xpose.msra.mxu0 0.0
        %7489 = vmatprep.subr.mxu0 0.0
        %7490 = vmatpush1.xpose.msra.mxu0 0.0
        %7491 = vmatprep.subr.mxu0 0.0
        %7492 = vmatpush1.xpose.msra.mxu0 0.0
        %7493 = vmatprep.subr.mxu0 0.0
        %7494 = vmatpush1.xpose.msra.mxu0 0.0
        %7495 = vmatprep.subr.mxu0 0.0
        %7496 = vmatpush1.xpose.msra.mxu0 0.0
        %7497 = vmatprep.subr.mxu0 0.0
        %7498 = vmatpush1.xpose.msra.mxu0 0.0
        %7499 = vmatprep.subr.mxu0 0.0
        %7500 = vmatpush1.xpose.msra.mxu0 0.0
        %v7501 = vand.u32 %v576, 4294901760
        %v7502 = vsub.f32 %v576, %v7501
        %v7503 = vand.u32 %v7502, 4294901760
        %v7504 = vsub.f32 %v7502, %v7503
        %v7505 = vand.u32 %v7504, 4294901760
        %7506 = vmatprep.mubr.f32.mxu0 %v7505
        %v7507 = vand.u32 %v569, 4294901760
        %v7508 = vsub.f32 %v569, %v7507
        %v7509 = vand.u32 %v7508, 4294901760
        %v7510 = vsub.f32 %v7508, %v7509
        %v7511 = vand.u32 %v7510, 4294901760
        %7512 = vmatmul.mubr.f32.gmra.mrb[0].mxu0 %v7511
        %v7513 = vpop.f32.mrb[0].mxu0
        %v7514 = vadd.f32 %v7428, %v7513
        %v7515 = vpop.f32.mrb[0].mxu0
        %7516 = vdwg.mxu0
        %v7517 = vand.u32 %v247, 4294901760
        %v7518 = vsub.f32 %v247, %v7517
        %v7519 = vand.u32 %v7518, 4294901760
        %v7520 = vsub.f32 %v7518, %v7519
        %v7521 = vand.u32 %v7520, 4294901760
        %7522 = vmatprep.subr.mxu0 %v7521
        %v7523 = vand.u32 %v246, 4294901760
        %v7524 = vsub.f32 %v246, %v7523
        %v7525 = vand.u32 %v7524, 4294901760
        %v7526 = vsub.f32 %v7524, %v7525
        %v7527 = vand.u32 %v7526, 4294901760
        %7528 = vmatpush1.xpose.msra.mxu0 %v7527
        %v7529 = vand.u32 %v279, 4294901760
        %v7530 = vsub.f32 %v279, %v7529
        %v7531 = vand.u32 %v7530, 4294901760
        %v7532 = vsub.f32 %v7530, %v7531
        %v7533 = vand.u32 %v7532, 4294901760
        %7534 = vmatprep.subr.mxu0 %v7533
        %v7535 = vand.u32 %v278, 4294901760
        %v7536 = vsub.f32 %v278, %v7535
        %v7537 = vand.u32 %v7536, 4294901760
        %v7538 = vsub.f32 %v7536, %v7537
        %v7539 = vand.u32 %v7538, 4294901760
        %7540 = vmatpush1.xpose.msra.mxu0 %v7539
        %v7541 = vand.u32 %v311, 4294901760
        %v7542 = vsub.f32 %v311, %v7541
        %v7543 = vand.u32 %v7542, 4294901760
        %v7544 = vsub.f32 %v7542, %v7543
        %v7545 = vand.u32 %v7544, 4294901760
        %7546 = vmatprep.subr.mxu0 %v7545
        %v7547 = vand.u32 %v310, 4294901760
        %v7548 = vsub.f32 %v310, %v7547
        %v7549 = vand.u32 %v7548, 4294901760
        %v7550 = vsub.f32 %v7548, %v7549
        %v7551 = vand.u32 %v7550, 4294901760
        %7552 = vmatpush1.xpose.msra.mxu0 %v7551
        %7553 = vmatprep.subr.mxu0 0.0
        %7554 = vmatpush1.xpose.msra.mxu0 0.0
        %7555 = vmatprep.subr.mxu0 0.0
        %7556 = vmatpush1.xpose.msra.mxu0 0.0
        %7557 = vmatprep.subr.mxu0 0.0
        %7558 = vmatpush1.xpose.msra.mxu0 0.0
        %7559 = vmatprep.subr.mxu0 0.0
        %7560 = vmatpush1.xpose.msra.mxu0 0.0
        %7561 = vmatprep.subr.mxu0 0.0
        %7562 = vmatpush1.xpose.msra.mxu0 0.0
        %7563 = vmatprep.subr.mxu0 0.0
        %7564 = vmatpush1.xpose.msra.mxu0 0.0
        %7565 = vmatprep.subr.mxu0 0.0
        %7566 = vmatpush1.xpose.msra.mxu0 0.0
        %7567 = vmatprep.subr.mxu0 0.0
        %7568 = vmatpush1.xpose.msra.mxu0 0.0
        %7569 = vmatprep.subr.mxu0 0.0
        %7570 = vmatpush1.xpose.msra.mxu0 0.0
        %7571 = vmatprep.subr.mxu0 0.0
        %7572 = vmatpush1.xpose.msra.mxu0 0.0
        %7573 = vmatprep.subr.mxu0 0.0
        %7574 = vmatpush1.xpose.msra.mxu0 0.0
        %7575 = vmatprep.subr.mxu0 0.0
        %7576 = vmatpush1.xpose.msra.mxu0 0.0
        %7577 = vmatprep.subr.mxu0 0.0
        %7578 = vmatpush1.xpose.msra.mxu0 0.0
        %7579 = vmatprep.subr.mxu0 0.0
        %7580 = vmatpush1.xpose.msra.mxu0 0.0
        %7581 = vmatprep.subr.mxu0 0.0
        %7582 = vmatpush1.xpose.msra.mxu0 0.0
        %7583 = vmatprep.subr.mxu0 0.0
        %7584 = vmatpush1.xpose.msra.mxu0 0.0
        %7585 = vmatprep.subr.mxu0 0.0
        %7586 = vmatpush1.xpose.msra.mxu0 0.0
        %7587 = vmatprep.subr.mxu0 0.0
        %7588 = vmatpush1.xpose.msra.mxu0 0.0
        %7589 = vmatprep.subr.mxu0 0.0
        %7590 = vmatpush1.xpose.msra.mxu0 0.0
        %7591 = vmatprep.subr.mxu0 0.0
        %7592 = vmatpush1.xpose.msra.mxu0 0.0
        %7593 = vmatprep.subr.mxu0 0.0
        %7594 = vmatpush1.xpose.msra.mxu0 0.0
        %7595 = vmatprep.subr.mxu0 0.0
        %7596 = vmatpush1.xpose.msra.mxu0 0.0
        %7597 = vmatprep.subr.mxu0 0.0
        %7598 = vmatpush1.xpose.msra.mxu0 0.0
        %7599 = vmatprep.subr.mxu0 0.0
        %7600 = vmatpush1.xpose.msra.mxu0 0.0
        %7601 = vmatprep.subr.mxu0 0.0
        %7602 = vmatpush1.xpose.msra.mxu0 0.0
        %7603 = vmatprep.subr.mxu0 0.0
        %7604 = vmatpush1.xpose.msra.mxu0 0.0
        %7605 = vmatprep.subr.mxu0 0.0
        %7606 = vmatpush1.xpose.msra.mxu0 0.0
        %7607 = vmatprep.subr.mxu0 0.0
        %7608 = vmatpush1.xpose.msra.mxu0 0.0
        %7609 = vmatprep.subr.mxu0 0.0
        %7610 = vmatpush1.xpose.msra.mxu0 0.0
        %v7611 = vand.u32 %v576, 4294901760
        %7612 = vmatprep.mubr.f32.mxu0 %v7611
        %v7613 = vand.u32 %v569, 4294901760
        %7614 = vmatmul.mubr.f32.gmra.mrb[0].mxu0 %v7613
        %v7615 = vpop.f32.mrb[0].mxu0
        %v7616 = vadd.f32 %v7514, %v7615
        %v7617 = vpop.f32.mrb[0].mxu0
        %7618 = vdwg.mxu0
        %v7619 = vand.u32 %v247, 4294901760
        %v7620 = vsub.f32 %v247, %v7619
        %7621 = vmatprep.subr.mxu0 %v7620
        %v7622 = vand.u32 %v246, 4294901760
        %v7623 = vsub.f32 %v246, %v7622
        %7624 = vmatpush1.xpose.msra.mxu0 %v7623
        %v7625 = vand.u32 %v279, 4294901760
        %v7626 = vsub.f32 %v279, %v7625
        %7627 = vmatprep.subr.mxu0 %v7626
        %v7628 = vand.u32 %v278, 4294901760
        %v7629 = vsub.f32 %v278, %v7628
        %7630 = vmatpush1.xpose.msra.mxu0 %v7629
        %v7631 = vand.u32 %v311, 4294901760
        %v7632 = vsub.f32 %v311, %v7631
        %7633 = vmatprep.subr.mxu0 %v7632
        %v7634 = vand.u32 %v310, 4294901760
        %v7635 = vsub.f32 %v310, %v7634
        %7636 = vmatpush1.xpose.msra.mxu0 %v7635
        %7637 = vmatprep.subr.mxu0 0.0
        %7638 = vmatpush1.xpose.msra.mxu0 0.0
        %7639 = vmatprep.subr.mxu0 0.0
        %7640 = vmatpush1.xpose.msra.mxu0 0.0
        %7641 = vmatprep.subr.mxu0 0.0
        %7642 = vmatpush1.xpose.msra.mxu0 0.0
        %7643 = vmatprep.subr.mxu0 0.0
        %7644 = vmatpush1.xpose.msra.mxu0 0.0
        %7645 = vmatprep.subr.mxu0 0.0
        %7646 = vmatpush1.xpose.msra.mxu0 0.0
        %7647 = vmatprep.subr.mxu0 0.0
        %7648 = vmatpush1.xpose.msra.mxu0 0.0
        %7649 = vmatprep.subr.mxu0 0.0
        %7650 = vmatpush1.xpose.msra.mxu0 0.0
        %7651 = vmatprep.subr.mxu0 0.0
        %7652 = vmatpush1.xpose.msra.mxu0 0.0
        %7653 = vmatprep.subr.mxu0 0.0
        %7654 = vmatpush1.xpose.msra.mxu0 0.0
        %7655 = vmatprep.subr.mxu0 0.0
        %7656 = vmatpush1.xpose.msra.mxu0 0.0
        %7657 = vmatprep.subr.mxu0 0.0
        %7658 = vmatpush1.xpose.msra.mxu0 0.0
        %7659 = vmatprep.subr.mxu0 0.0
        %7660 = vmatpush1.xpose.msra.mxu0 0.0
        %7661 = vmatprep.subr.mxu0 0.0
        %7662 = vmatpush1.xpose.msra.mxu0 0.0
        %7663 = vmatprep.subr.mxu0 0.0
        %7664 = vmatpush1.xpose.msra.mxu0 0.0
        %7665 = vmatprep.subr.mxu0 0.0
        %7666 = vmatpush1.xpose.msra.mxu0 0.0
        %7667 = vmatprep.subr.mxu0 0.0
        %7668 = vmatpush1.xpose.msra.mxu0 0.0
        %7669 = vmatprep.subr.mxu0 0.0
        %7670 = vmatpush1.xpose.msra.mxu0 0.0
        %7671 = vmatprep.subr.mxu0 0.0
        %7672 = vmatpush1.xpose.msra.mxu0 0.0
        %7673 = vmatprep.subr.mxu0 0.0
        %7674 = vmatpush1.xpose.msra.mxu0 0.0
        %7675 = vmatprep.subr.mxu0 0.0
        %7676 = vmatpush1.xpose.msra.mxu0 0.0
        %7677 = vmatprep.subr.mxu0 0.0
        %7678 = vmatpush1.xpose.msra.mxu0 0.0
        %7679 = vmatprep.subr.mxu0 0.0
        %7680 = vmatpush1.xpose.msra.mxu0 0.0
        %7681 = vmatprep.subr.mxu0 0.0
        %7682 = vmatpush1.xpose.msra.mxu0 0.0
        %7683 = vmatprep.subr.mxu0 0.0
        %7684 = vmatpush1.xpose.msra.mxu0 0.0
        %7685 = vmatprep.subr.mxu0 0.0
        %7686 = vmatpush1.xpose.msra.mxu0 0.0
        %7687 = vmatprep.subr.mxu0 0.0
        %7688 = vmatpush1.xpose.msra.mxu0 0.0
        %7689 = vmatprep.subr.mxu0 0.0
        %7690 = vmatpush1.xpose.msra.mxu0 0.0
        %7691 = vmatprep.subr.mxu0 0.0
        %7692 = vmatpush1.xpose.msra.mxu0 0.0
        %7693 = vmatprep.subr.mxu0 0.0
        %7694 = vmatpush1.xpose.msra.mxu0 0.0
        %v7695 = vand.u32 %v576, 4294901760
        %v7696 = vsub.f32 %v576, %v7695
        %7697 = vmatprep.mubr.f32.mxu0 %v7696
        %v7698 = vand.u32 %v569, 4294901760
        %v7699 = vsub.f32 %v569, %v7698
        %7700 = vmatmul.mubr.f32.gmra.mrb[0].mxu0 %v7699
        %v7701 = vpop.f32.mrb[0].mxu0
        %v7702 = vadd.f32 %v7616, %v7701
        %v7703 = vpop.f32.mrb[0].mxu0
        %7704 = vdwg.mxu0
        %v7705 = vand.u32 %v247, 4294901760
        %7706 = vmatprep.subr.mxu0 %v7705
        %v7707 = vand.u32 %v246, 4294901760
        %7708 = vmatpush1.xpose.msra.mxu0 %v7707
        %v7709 = vand.u32 %v279, 4294901760
        %7710 = vmatprep.subr.mxu0 %v7709
        %v7711 = vand.u32 %v278, 4294901760
        %7712 = vmatpush1.xpose.msra.mxu0 %v7711
        %v7713 = vand.u32 %v311, 4294901760
        %7714 = vmatprep.subr.mxu0 %v7713
        %v7715 = vand.u32 %v310, 4294901760
        %7716 = vmatpush1.xpose.msra.mxu0 %v7715
        %7717 = vmatprep.subr.mxu0 0.0
        %7718 = vmatpush1.xpose.msra.mxu0 0.0
        %7719 = vmatprep.subr.mxu0 0.0
        %7720 = vmatpush1.xpose.msra.mxu0 0.0
        %7721 = vmatprep.subr.mxu0 0.0
        %7722 = vmatpush1.xpose.msra.mxu0 0.0
        %7723 = vmatprep.subr.mxu0 0.0
        %7724 = vmatpush1.xpose.msra.mxu0 0.0
        %7725 = vmatprep.subr.mxu0 0.0
        %7726 = vmatpush1.xpose.msra.mxu0 0.0
        %7727 = vmatprep.subr.mxu0 0.0
        %7728 = vmatpush1.xpose.msra.mxu0 0.0
        %7729 = vmatprep.subr.mxu0 0.0
        %7730 = vmatpush1.xpose.msra.mxu0 0.0
        %7731 = vmatprep.subr.mxu0 0.0
        %7732 = vmatpush1.xpose.msra.mxu0 0.0
        %7733 = vmatprep.subr.mxu0 0.0
        %7734 = vmatpush1.xpose.msra.mxu0 0.0
        %7735 = vmatprep.subr.mxu0 0.0
        %7736 = vmatpush1.xpose.msra.mxu0 0.0
        %7737 = vmatprep.subr.mxu0 0.0
        %7738 = vmatpush1.xpose.msra.mxu0 0.0
        %7739 = vmatprep.subr.mxu0 0.0
        %7740 = vmatpush1.xpose.msra.mxu0 0.0
        %7741 = vmatprep.subr.mxu0 0.0
        %7742 = vmatpush1.xpose.msra.mxu0 0.0
        %7743 = vmatprep.subr.mxu0 0.0
        %7744 = vmatpush1.xpose.msra.mxu0 0.0
        %7745 = vmatprep.subr.mxu0 0.0
        %7746 = vmatpush1.xpose.msra.mxu0 0.0
        %7747 = vmatprep.subr.mxu0 0.0
        %7748 = vmatpush1.xpose.msra.mxu0 0.0
        %7749 = vmatprep.subr.mxu0 0.0
        %7750 = vmatpush1.xpose.msra.mxu0 0.0
        %7751 = vmatprep.subr.mxu0 0.0
        %7752 = vmatpush1.xpose.msra.mxu0 0.0
        %7753 = vmatprep.subr.mxu0 0.0
        %7754 = vmatpush1.xpose.msra.mxu0 0.0
        %7755 = vmatprep.subr.mxu0 0.0
        %7756 = vmatpush1.xpose.msra.mxu0 0.0
        %7757 = vmatprep.subr.mxu0 0.0
        %7758 = vmatpush1.xpose.msra.mxu0 0.0
        %7759 = vmatprep.subr.mxu0 0.0
        %7760 = vmatpush1.xpose.msra.mxu0 0.0
        %7761 = vmatprep.subr.mxu0 0.0
        %7762 = vmatpush1.xpose.msra.mxu0 0.0
        %7763 = vmatprep.subr.mxu0 0.0
        %7764 = vmatpush1.xpose.msra.mxu0 0.0
        %7765 = vmatprep.subr.mxu0 0.0
        %7766 = vmatpush1.xpose.msra.mxu0 0.0
        %7767 = vmatprep.subr.mxu0 0.0
        %7768 = vmatpush1.xpose.msra.mxu0 0.0
        %7769 = vmatprep.subr.mxu0 0.0
        %7770 = vmatpush1.xpose.msra.mxu0 0.0
        %7771 = vmatprep.subr.mxu0 0.0
        %7772 = vmatpush1.xpose.msra.mxu0 0.0
        %7773 = vmatprep.subr.mxu0 0.0
        %7774 = vmatpush1.xpose.msra.mxu0 0.0
        %v7775 = vand.u32 %v576, 4294901760
        %v7776 = vsub.f32 %v576, %v7775
        %v7777 = vand.u32 %v7776, 4294901760
        %7778 = vmatprep.mubr.f32.mxu0 %v7777
        %v7779 = vand.u32 %v569, 4294901760
        %v7780 = vsub.f32 %v569, %v7779
        %v7781 = vand.u32 %v7780, 4294901760
        %7782 = vmatmul.mubr.f32.gmra.mrb[0].mxu0 %v7781
        %v7783 = vpop.f32.mrb[0].mxu0
        %v7784 = vadd.f32 %v7702, %v7783
        %v7785 = vpop.f32.mrb[0].mxu0
        %7786 = vdwg.mxu0
        %v7787 = vand.u32 %v247, 4294901760
        %v7788 = vsub.f32 %v247, %v7787
        %v7789 = vand.u32 %v7788, 4294901760
        %7790 = vmatprep.subr.mxu0 %v7789
        %v7791 = vand.u32 %v246, 4294901760
        %v7792 = vsub.f32 %v246, %v7791
        %v7793 = vand.u32 %v7792, 4294901760
        %7794 = vmatpush1.xpose.msra.mxu0 %v7793
        %v7795 = vand.u32 %v279, 4294901760
        %v7796 = vsub.f32 %v279, %v7795
        %v7797 = vand.u32 %v7796, 4294901760
        %7798 = vmatprep.subr.mxu0 %v7797
        %v7799 = vand.u32 %v278, 4294901760
        %v7800 = vsub.f32 %v278, %v7799
        %v7801 = vand.u32 %v7800, 4294901760
        %7802 = vmatpush1.xpose.msra.mxu0 %v7801
        %v7803 = vand.u32 %v311, 4294901760
        %v7804 = vsub.f32 %v311, %v7803
        %v7805 = vand.u32 %v7804, 4294901760
        %7806 = vmatprep.subr.mxu0 %v7805
        %v7807 = vand.u32 %v310, 4294901760
        %v7808 = vsub.f32 %v310, %v7807
        %v7809 = vand.u32 %v7808, 4294901760
        %7810 = vmatpush1.xpose.msra.mxu0 %v7809
        %7811 = vmatprep.subr.mxu0 0.0
        %7812 = vmatpush1.xpose.msra.mxu0 0.0
        %7813 = vmatprep.subr.mxu0 0.0
        %7814 = vmatpush1.xpose.msra.mxu0 0.0
        %7815 = vmatprep.subr.mxu0 0.0
        %7816 = vmatpush1.xpose.msra.mxu0 0.0
        %7817 = vmatprep.subr.mxu0 0.0
        %7818 = vmatpush1.xpose.msra.mxu0 0.0
        %7819 = vmatprep.subr.mxu0 0.0
        %7820 = vmatpush1.xpose.msra.mxu0 0.0
        %7821 = vmatprep.subr.mxu0 0.0
        %7822 = vmatpush1.xpose.msra.mxu0 0.0
        %7823 = vmatprep.subr.mxu0 0.0
        %7824 = vmatpush1.xpose.msra.mxu0 0.0
        %7825 = vmatprep.subr.mxu0 0.0
        %7826 = vmatpush1.xpose.msra.mxu0 0.0
        %7827 = vmatprep.subr.mxu0 0.0
        %7828 = vmatpush1.xpose.msra.mxu0 0.0
        %7829 = vmatprep.subr.mxu0 0.0
        %7830 = vmatpush1.xpose.msra.mxu0 0.0
        %7831 = vmatprep.subr.mxu0 0.0
        %7832 = vmatpush1.xpose.msra.mxu0 0.0
        %7833 = vmatprep.subr.mxu0 0.0
        %7834 = vmatpush1.xpose.msra.mxu0 0.0
        %7835 = vmatprep.subr.mxu0 0.0
        %7836 = vmatpush1.xpose.msra.mxu0 0.0
        %7837 = vmatprep.subr.mxu0 0.0
        %7838 = vmatpush1.xpose.msra.mxu0 0.0
        %7839 = vmatprep.subr.mxu0 0.0
        %7840 = vmatpush1.xpose.msra.mxu0 0.0
        %7841 = vmatprep.subr.mxu0 0.0
        %7842 = vmatpush1.xpose.msra.mxu0 0.0
        %7843 = vmatprep.subr.mxu0 0.0
        %7844 = vmatpush1.xpose.msra.mxu0 0.0
        %7845 = vmatprep.subr.mxu0 0.0
        %7846 = vmatpush1.xpose.msra.mxu0 0.0
        %7847 = vmatprep.subr.mxu0 0.0
        %7848 = vmatpush1.xpose.msra.mxu0 0.0
        %7849 = vmatprep.subr.mxu0 0.0
        %7850 = vmatpush1.xpose.msra.mxu0 0.0
        %7851 = vmatprep.subr.mxu0 0.0
        %7852 = vmatpush1.xpose.msra.mxu0 0.0
        %7853 = vmatprep.subr.mxu0 0.0
        %7854 = vmatpush1.xpose.msra.mxu0 0.0
        %7855 = vmatprep.subr.mxu0 0.0
        %7856 = vmatpush1.xpose.msra.mxu0 0.0
        %7857 = vmatprep.subr.mxu0 0.0
        %7858 = vmatpush1.xpose.msra.mxu0 0.0
        %7859 = vmatprep.subr.mxu0 0.0
        %7860 = vmatpush1.xpose.msra.mxu0 0.0
        %7861 = vmatprep.subr.mxu0 0.0
        %7862 = vmatpush1.xpose.msra.mxu0 0.0
        %7863 = vmatprep.subr.mxu0 0.0
        %7864 = vmatpush1.xpose.msra.mxu0 0.0
        %7865 = vmatprep.subr.mxu0 0.0
        %7866 = vmatpush1.xpose.msra.mxu0 0.0
        %7867 = vmatprep.subr.mxu0 0.0
        %7868 = vmatpush1.xpose.msra.mxu0 0.0
        %v7869 = vand.u32 %v576, 4294901760
        %7870 = vmatprep.mubr.f32.mxu0 %v7869
        %v7871 = vand.u32 %v569, 4294901760
        %7872 = vmatmul.mubr.f32.gmra.mrb[0].mxu0 %v7871
        %v7873 = vpop.f32.mrb[0].mxu0
        %v7874 = vadd.f32 %v7784, %v7873
        %v7875 = vpop.f32.mrb[0].mxu0
        %7876 = vdwg.mxu0
        %v7877 = vand.u32 %v247, 4294901760
        %7878 = vmatprep.subr.mxu0 %v7877
        %v7879 = vand.u32 %v246, 4294901760
        %7880 = vmatpush1.xpose.msra.mxu0 %v7879
        %v7881 = vand.u32 %v279, 4294901760
        %7882 = vmatprep.subr.mxu0 %v7881
        %v7883 = vand.u32 %v278, 4294901760
        %7884 = vmatpush1.xpose.msra.mxu0 %v7883
        %v7885 = vand.u32 %v311, 4294901760
        %7886 = vmatprep.subr.mxu0 %v7885
        %v7887 = vand.u32 %v310, 4294901760
        %7888 = vmatpush1.xpose.msra.mxu0 %v7887
        %7889 = vmatprep.subr.mxu0 0.0
        %7890 = vmatpush1.xpose.msra.mxu0 0.0
        %7891 = vmatprep.subr.mxu0 0.0
        %7892 = vmatpush1.xpose.msra.mxu0 0.0
        %7893 = vmatprep.subr.mxu0 0.0
        %7894 = vmatpush1.xpose.msra.mxu0 0.0
        %7895 = vmatprep.subr.mxu0 0.0
        %7896 = vmatpush1.xpose.msra.mxu0 0.0
        %7897 = vmatprep.subr.mxu0 0.0
        %7898 = vmatpush1.xpose.msra.mxu0 0.0
        %7899 = vmatprep.subr.mxu0 0.0
        %7900 = vmatpush1.xpose.msra.mxu0 0.0
        %7901 = vmatprep.subr.mxu0 0.0
        %7902 = vmatpush1.xpose.msra.mxu0 0.0
        %7903 = vmatprep.subr.mxu0 0.0
        %7904 = vmatpush1.xpose.msra.mxu0 0.0
        %7905 = vmatprep.subr.mxu0 0.0
        %7906 = vmatpush1.xpose.msra.mxu0 0.0
        %7907 = vmatprep.subr.mxu0 0.0
        %7908 = vmatpush1.xpose.msra.mxu0 0.0
        %7909 = vmatprep.subr.mxu0 0.0
        %7910 = vmatpush1.xpose.msra.mxu0 0.0
        %7911 = vmatprep.subr.mxu0 0.0
        %7912 = vmatpush1.xpose.msra.mxu0 0.0
        %7913 = vmatprep.subr.mxu0 0.0
        %7914 = vmatpush1.xpose.msra.mxu0 0.0
        %7915 = vmatprep.subr.mxu0 0.0
        %7916 = vmatpush1.xpose.msra.mxu0 0.0
        %7917 = vmatprep.subr.mxu0 0.0
        %7918 = vmatpush1.xpose.msra.mxu0 0.0
        %7919 = vmatprep.subr.mxu0 0.0
        %7920 = vmatpush1.xpose.msra.mxu0 0.0
        %7921 = vmatprep.subr.mxu0 0.0
        %7922 = vmatpush1.xpose.msra.mxu0 0.0
        %7923 = vmatprep.subr.mxu0 0.0
        %7924 = vmatpush1.xpose.msra.mxu0 0.0
        %7925 = vmatprep.subr.mxu0 0.0
        %7926 = vmatpush1.xpose.msra.mxu0 0.0
        %7927 = vmatprep.subr.mxu0 0.0
        %7928 = vmatpush1.xpose.msra.mxu0 0.0
        %7929 = vmatprep.subr.mxu0 0.0
        %7930 = vmatpush1.xpose.msra.mxu0 0.0
        %7931 = vmatprep.subr.mxu0 0.0
        %7932 = vmatpush1.xpose.msra.mxu0 0.0
        %7933 = vmatprep.subr.mxu0 0.0
        %7934 = vmatpush1.xpose.msra.mxu0 0.0
        %7935 = vmatprep.subr.mxu0 0.0
        %7936 = vmatpush1.xpose.msra.mxu0 0.0
        %7937 = vmatprep.subr.mxu0 0.0
        %7938 = vmatpush1.xpose.msra.mxu0 0.0
        %7939 = vmatprep.subr.mxu0 0.0
        %7940 = vmatpush1.xpose.msra.mxu0 0.0
        %7941 = vmatprep.subr.mxu0 0.0
        %7942 = vmatpush1.xpose.msra.mxu0 0.0
        %7943 = vmatprep.subr.mxu0 0.0
        %7944 = vmatpush1.xpose.msra.mxu0 0.0
        %7945 = vmatprep.subr.mxu0 0.0
        %7946 = vmatpush1.xpose.msra.mxu0 0.0
        %v7947 = vand.u32 %v576, 4294901760
        %7948 = vmatprep.mubr.f32.mxu0 %v7947
        %v7949 = vand.u32 %v569, 4294901760
        %7950 = vmatmul.mubr.f32.gmra.mrb[0].mxu0 %v7949
        %v7951 = vpop.f32.mrb[0].mxu0
        %v7952 = vadd.f32 %v7874, %v7951
        %v7953 = vpop.f32.mrb[0].mxu0
        %7954 = vdwg.mxu0
        %v7955 = vand.u32 %v249, 4294901760
        %7956 = vmatprep.subr.mxu0 %v7955
        %v7957 = vand.u32 %v248, 4294901760
        %7958 = vmatpush1.xpose.msra.mxu0 %v7957
        %v7959 = vand.u32 %v281, 4294901760
        %7960 = vmatprep.subr.mxu0 %v7959
        %v7961 = vand.u32 %v280, 4294901760
        %7962 = vmatpush1.xpose.msra.mxu0 %v7961
        %v7963 = vand.u32 %v313, 4294901760
        %7964 = vmatprep.subr.mxu0 %v7963
        %v7965 = vand.u32 %v312, 4294901760
        %7966 = vmatpush1.xpose.msra.mxu0 %v7965
        %7967 = vmatprep.subr.mxu0 0.0
        %7968 = vmatpush1.xpose.msra.mxu0 0.0
        %7969 = vmatprep.subr.mxu0 0.0
        %7970 = vmatpush1.xpose.msra.mxu0 0.0
        %7971 = vmatprep.subr.mxu0 0.0
        %7972 = vmatpush1.xpose.msra.mxu0 0.0
        %7973 = vmatprep.subr.mxu0 0.0
        %7974 = vmatpush1.xpose.msra.mxu0 0.0
        %7975 = vmatprep.subr.mxu0 0.0
        %7976 = vmatpush1.xpose.msra.mxu0 0.0
        %7977 = vmatprep.subr.mxu0 0.0
        %7978 = vmatpush1.xpose.msra.mxu0 0.0
        %7979 = vmatprep.subr.mxu0 0.0
        %7980 = vmatpush1.xpose.msra.mxu0 0.0
        %7981 = vmatprep.subr.mxu0 0.0
        %7982 = vmatpush1.xpose.msra.mxu0 0.0
        %7983 = vmatprep.subr.mxu0 0.0
        %7984 = vmatpush1.xpose.msra.mxu0 0.0
        %7985 = vmatprep.subr.mxu0 0.0
        %7986 = vmatpush1.xpose.msra.mxu0 0.0
        %7987 = vmatprep.subr.mxu0 0.0
        %7988 = vmatpush1.xpose.msra.mxu0 0.0
        %7989 = vmatprep.subr.mxu0 0.0
        %7990 = vmatpush1.xpose.msra.mxu0 0.0
        %7991 = vmatprep.subr.mxu0 0.0
        %7992 = vmatpush1.xpose.msra.mxu0 0.0
        %7993 = vmatprep.subr.mxu0 0.0
        %7994 = vmatpush1.xpose.msra.mxu0 0.0
        %7995 = vmatprep.subr.mxu0 0.0
        %7996 = vmatpush1.xpose.msra.mxu0 0.0
        %7997 = vmatprep.subr.mxu0 0.0
        %7998 = vmatpush1.xpose.msra.mxu0 0.0
        %7999 = vmatprep.subr.mxu0 0.0
        %8000 = vmatpush1.xpose.msra.mxu0 0.0
        %8001 = vmatprep.subr.mxu0 0.0
        %8002 = vmatpush1.xpose.msra.mxu0 0.0
        %8003 = vmatprep.subr.mxu0 0.0
        %8004 = vmatpush1.xpose.msra.mxu0 0.0
        %8005 = vmatprep.subr.mxu0 0.0
        %8006 = vmatpush1.xpose.msra.mxu0 0.0
        %8007 = vmatprep.subr.mxu0 0.0
        %8008 = vmatpush1.xpose.msra.mxu0 0.0
        %8009 = vmatprep.subr.mxu0 0.0
        %8010 = vmatpush1.xpose.msra.mxu0 0.0
        %8011 = vmatprep.subr.mxu0 0.0
        %8012 = vmatpush1.xpose.msra.mxu0 0.0
        %8013 = vmatprep.subr.mxu0 0.0
        %8014 = vmatpush1.xpose.msra.mxu0 0.0
        %8015 = vmatprep.subr.mxu0 0.0
        %8016 = vmatpush1.xpose.msra.mxu0 0.0
        %8017 = vmatprep.subr.mxu0 0.0
        %8018 = vmatpush1.xpose.msra.mxu0 0.0
        %8019 = vmatprep.subr.mxu0 0.0
        %8020 = vmatpush1.xpose.msra.mxu0 0.0
        %8021 = vmatprep.subr.mxu0 0.0
        %8022 = vmatpush1.xpose.msra.mxu0 0.0
        %8023 = vmatprep.subr.mxu0 0.0
        %8024 = vmatpush1.xpose.msra.mxu0 0.0
        %v8025 = vand.u32 %v590, 4294901760
        %v8026 = vsub.f32 %v590, %v8025
        %v8027 = vand.u32 %v8026, 4294901760
        %v8028 = vsub.f32 %v8026, %v8027
        %v8029 = vand.u32 %v8028, 4294901760
        %8030 = vmatprep.mubr.f32.mxu0 %v8029
        %v8031 = vand.u32 %v583, 4294901760
        %v8032 = vsub.f32 %v583, %v8031
        %v8033 = vand.u32 %v8032, 4294901760
        %v8034 = vsub.f32 %v8032, %v8033
        %v8035 = vand.u32 %v8034, 4294901760
        %8036 = vmatmul.mubr.f32.gmra.mrb[0].mxu0 %v8035
        %v8037 = vpop.f32.mrb[0].mxu0
        %v8038 = vadd.f32 %v7952, %v8037
        %v8039 = vpop.f32.mrb[0].mxu0
        %8040 = vdwg.mxu0
        %v8041 = vand.u32 %v249, 4294901760
        %v8042 = vsub.f32 %v249, %v8041
        %v8043 = vand.u32 %v8042, 4294901760
        %v8044 = vsub.f32 %v8042, %v8043
        %v8045 = vand.u32 %v8044, 4294901760
        %8046 = vmatprep.subr.mxu0 %v8045
        %v8047 = vand.u32 %v248, 4294901760
        %v8048 = vsub.f32 %v248, %v8047
        %v8049 = vand.u32 %v8048, 4294901760
        %v8050 = vsub.f32 %v8048, %v8049
        %v8051 = vand.u32 %v8050, 4294901760
        %8052 = vmatpush1.xpose.msra.mxu0 %v8051
        %v8053 = vand.u32 %v281, 4294901760
        %v8054 = vsub.f32 %v281, %v8053
        %v8055 = vand.u32 %v8054, 4294901760
        %v8056 = vsub.f32 %v8054, %v8055
        %v8057 = vand.u32 %v8056, 4294901760
        %8058 = vmatprep.subr.mxu0 %v8057
        %v8059 = vand.u32 %v280, 4294901760
        %v8060 = vsub.f32 %v280, %v8059
        %v8061 = vand.u32 %v8060, 4294901760
        %v8062 = vsub.f32 %v8060, %v8061
        %v8063 = vand.u32 %v8062, 4294901760
        %8064 = vmatpush1.xpose.msra.mxu0 %v8063
        %v8065 = vand.u32 %v313, 4294901760
        %v8066 = vsub.f32 %v313, %v8065
        %v8067 = vand.u32 %v8066, 4294901760
        %v8068 = vsub.f32 %v8066, %v8067
        %v8069 = vand.u32 %v8068, 4294901760
        %8070 = vmatprep.subr.mxu0 %v8069
        %v8071 = vand.u32 %v312, 4294901760
        %v8072 = vsub.f32 %v312, %v8071
        %v8073 = vand.u32 %v8072, 4294901760
        %v8074 = vsub.f32 %v8072, %v8073
        %v8075 = vand.u32 %v8074, 4294901760
        %8076 = vmatpush1.xpose.msra.mxu0 %v8075
        %8077 = vmatprep.subr.mxu0 0.0
        %8078 = vmatpush1.xpose.msra.mxu0 0.0
        %8079 = vmatprep.subr.mxu0 0.0
        %8080 = vmatpush1.xpose.msra.mxu0 0.0
        %8081 = vmatprep.subr.mxu0 0.0
        %8082 = vmatpush1.xpose.msra.mxu0 0.0
        %8083 = vmatprep.subr.mxu0 0.0
        %8084 = vmatpush1.xpose.msra.mxu0 0.0
        %8085 = vmatprep.subr.mxu0 0.0
        %8086 = vmatpush1.xpose.msra.mxu0 0.0
        %8087 = vmatprep.subr.mxu0 0.0
        %8088 = vmatpush1.xpose.msra.mxu0 0.0
        %8089 = vmatprep.subr.mxu0 0.0
        %8090 = vmatpush1.xpose.msra.mxu0 0.0
        %8091 = vmatprep.subr.mxu0 0.0
        %8092 = vmatpush1.xpose.msra.mxu0 0.0
        %8093 = vmatprep.subr.mxu0 0.0
        %8094 = vmatpush1.xpose.msra.mxu0 0.0
        %8095 = vmatprep.subr.mxu0 0.0
        %8096 = vmatpush1.xpose.msra.mxu0 0.0
        %8097 = vmatprep.subr.mxu0 0.0
        %8098 = vmatpush1.xpose.msra.mxu0 0.0
        %8099 = vmatprep.subr.mxu0 0.0
        %8100 = vmatpush1.xpose.msra.mxu0 0.0
        %8101 = vmatprep.subr.mxu0 0.0
        %8102 = vmatpush1.xpose.msra.mxu0 0.0
        %8103 = vmatprep.subr.mxu0 0.0
        %8104 = vmatpush1.xpose.msra.mxu0 0.0
        %8105 = vmatprep.subr.mxu0 0.0
        %8106 = vmatpush1.xpose.msra.mxu0 0.0
        %8107 = vmatprep.subr.mxu0 0.0
        %8108 = vmatpush1.xpose.msra.mxu0 0.0
        %8109 = vmatprep.subr.mxu0 0.0
        %8110 = vmatpush1.xpose.msra.mxu0 0.0
        %8111 = vmatprep.subr.mxu0 0.0
        %8112 = vmatpush1.xpose.msra.mxu0 0.0
        %8113 = vmatprep.subr.mxu0 0.0
        %8114 = vmatpush1.xpose.msra.mxu0 0.0
        %8115 = vmatprep.subr.mxu0 0.0
        %8116 = vmatpush1.xpose.msra.mxu0 0.0
        %8117 = vmatprep.subr.mxu0 0.0
        %8118 = vmatpush1.xpose.msra.mxu0 0.0
        %8119 = vmatprep.subr.mxu0 0.0
        %8120 = vmatpush1.xpose.msra.mxu0 0.0
        %8121 = vmatprep.subr.mxu0 0.0
        %8122 = vmatpush1.xpose.msra.mxu0 0.0
        %8123 = vmatprep.subr.mxu0 0.0
        %8124 = vmatpush1.xpose.msra.mxu0 0.0
        %8125 = vmatprep.subr.mxu0 0.0
        %8126 = vmatpush1.xpose.msra.mxu0 0.0
        %8127 = vmatprep.subr.mxu0 0.0
        %8128 = vmatpush1.xpose.msra.mxu0 0.0
        %8129 = vmatprep.subr.mxu0 0.0
        %8130 = vmatpush1.xpose.msra.mxu0 0.0
        %8131 = vmatprep.subr.mxu0 0.0
        %8132 = vmatpush1.xpose.msra.mxu0 0.0
        %8133 = vmatprep.subr.mxu0 0.0
        %8134 = vmatpush1.xpose.msra.mxu0 0.0
        %v8135 = vand.u32 %v590, 4294901760
        %8136 = vmatprep.mubr.f32.mxu0 %v8135
        %v8137 = vand.u32 %v583, 4294901760
        %8138 = vmatmul.mubr.f32.gmra.mrb[0].mxu0 %v8137
        %v8139 = vpop.f32.mrb[0].mxu0
        %v8140 = vadd.f32 %v8038, %v8139
        %v8141 = vpop.f32.mrb[0].mxu0
        %8142 = vdwg.mxu0
        %v8143 = vand.u32 %v249, 4294901760
        %v8144 = vsub.f32 %v249, %v8143
        %8145 = vmatprep.subr.mxu0 %v8144
        %v8146 = vand.u32 %v248, 4294901760
        %v8147 = vsub.f32 %v248, %v8146
        %8148 = vmatpush1.xpose.msra.mxu0 %v8147
        %v8149 = vand.u32 %v281, 4294901760
        %v8150 = vsub.f32 %v281, %v8149
        %8151 = vmatprep.subr.mxu0 %v8150
        %v8152 = vand.u32 %v280, 4294901760
        %v8153 = vsub.f32 %v280, %v8152
        %8154 = vmatpush1.xpose.msra.mxu0 %v8153
        %v8155 = vand.u32 %v313, 4294901760
        %v8156 = vsub.f32 %v313, %v8155
        %8157 = vmatprep.subr.mxu0 %v8156
        %v8158 = vand.u32 %v312, 4294901760
        %v8159 = vsub.f32 %v312, %v8158
        %8160 = vmatpush1.xpose.msra.mxu0 %v8159
        %8161 = vmatprep.subr.mxu0 0.0
        %8162 = vmatpush1.xpose.msra.mxu0 0.0
        %8163 = vmatprep.subr.mxu0 0.0
        %8164 = vmatpush1.xpose.msra.mxu0 0.0
        %8165 = vmatprep.subr.mxu0 0.0
        %8166 = vmatpush1.xpose.msra.mxu0 0.0
        %8167 = vmatprep.subr.mxu0 0.0
        %8168 = vmatpush1.xpose.msra.mxu0 0.0
        %8169 = vmatprep.subr.mxu0 0.0
        %8170 = vmatpush1.xpose.msra.mxu0 0.0
        %8171 = vmatprep.subr.mxu0 0.0
        %8172 = vmatpush1.xpose.msra.mxu0 0.0
        %8173 = vmatprep.subr.mxu0 0.0
        %8174 = vmatpush1.xpose.msra.mxu0 0.0
        %8175 = vmatprep.subr.mxu0 0.0
        %8176 = vmatpush1.xpose.msra.mxu0 0.0
        %8177 = vmatprep.subr.mxu0 0.0
        %8178 = vmatpush1.xpose.msra.mxu0 0.0
        %8179 = vmatprep.subr.mxu0 0.0
        %8180 = vmatpush1.xpose.msra.mxu0 0.0
        %8181 = vmatprep.subr.mxu0 0.0
        %8182 = vmatpush1.xpose.msra.mxu0 0.0
        %8183 = vmatprep.subr.mxu0 0.0
        %8184 = vmatpush1.xpose.msra.mxu0 0.0
        %8185 = vmatprep.subr.mxu0 0.0
        %8186 = vmatpush1.xpose.msra.mxu0 0.0
        %8187 = vmatprep.subr.mxu0 0.0
        %8188 = vmatpush1.xpose.msra.mxu0 0.0
        %8189 = vmatprep.subr.mxu0 0.0
        %8190 = vmatpush1.xpose.msra.mxu0 0.0
        %8191 = vmatprep.subr.mxu0 0.0
        %8192 = vmatpush1.xpose.msra.mxu0 0.0
        %8193 = vmatprep.subr.mxu0 0.0
        %8194 = vmatpush1.xpose.msra.mxu0 0.0
        %8195 = vmatprep.subr.mxu0 0.0
        %8196 = vmatpush1.xpose.msra.mxu0 0.0
        %8197 = vmatprep.subr.mxu0 0.0
        %8198 = vmatpush1.xpose.msra.mxu0 0.0
        %8199 = vmatprep.subr.mxu0 0.0
        %8200 = vmatpush1.xpose.msra.mxu0 0.0
        %8201 = vmatprep.subr.mxu0 0.0
        %8202 = vmatpush1.xpose.msra.mxu0 0.0
        %8203 = vmatprep.subr.mxu0 0.0
        %8204 = vmatpush1.xpose.msra.mxu0 0.0
        %8205 = vmatprep.subr.mxu0 0.0
        %8206 = vmatpush1.xpose.msra.mxu0 0.0
        %8207 = vmatprep.subr.mxu0 0.0
        %8208 = vmatpush1.xpose.msra.mxu0 0.0
        %8209 = vmatprep.subr.mxu0 0.0
        %8210 = vmatpush1.xpose.msra.mxu0 0.0
        %8211 = vmatprep.subr.mxu0 0.0
        %8212 = vmatpush1.xpose.msra.mxu0 0.0
        %8213 = vmatprep.subr.mxu0 0.0
        %8214 = vmatpush1.xpose.msra.mxu0 0.0
        %8215 = vmatprep.subr.mxu0 0.0
        %8216 = vmatpush1.xpose.msra.mxu0 0.0
        %8217 = vmatprep.subr.mxu0 0.0
        %8218 = vmatpush1.xpose.msra.mxu0 0.0
        %v8219 = vand.u32 %v590, 4294901760
        %v8220 = vsub.f32 %v590, %v8219
        %8221 = vmatprep.mubr.f32.mxu0 %v8220
        %v8222 = vand.u32 %v583, 4294901760
        %v8223 = vsub.f32 %v583, %v8222
        %8224 = vmatmul.mubr.f32.gmra.mrb[0].mxu0 %v8223
        %v8225 = vpop.f32.mrb[0].mxu0
        %v8226 = vadd.f32 %v8140, %v8225
        %v8227 = vpop.f32.mrb[0].mxu0
        %8228 = vdwg.mxu0
        %v8229 = vand.u32 %v249, 4294901760
        %8230 = vmatprep.subr.mxu0 %v8229
        %v8231 = vand.u32 %v248, 4294901760
        %8232 = vmatpush1.xpose.msra.mxu0 %v8231
        %v8233 = vand.u32 %v281, 4294901760
        %8234 = vmatprep.subr.mxu0 %v8233
        %v8235 = vand.u32 %v280, 4294901760
        %8236 = vmatpush1.xpose.msra.mxu0 %v8235
        %v8237 = vand.u32 %v313, 4294901760
        %8238 = vmatprep.subr.mxu0 %v8237
        %v8239 = vand.u32 %v312, 4294901760
        %8240 = vmatpush1.xpose.msra.mxu0 %v8239
        %8241 = vmatprep.subr.mxu0 0.0
        %8242 = vmatpush1.xpose.msra.mxu0 0.0
        %8243 = vmatprep.subr.mxu0 0.0
        %8244 = vmatpush1.xpose.msra.mxu0 0.0
        %8245 = vmatprep.subr.mxu0 0.0
        %8246 = vmatpush1.xpose.msra.mxu0 0.0
        %8247 = vmatprep.subr.mxu0 0.0
        %8248 = vmatpush1.xpose.msra.mxu0 0.0
        %8249 = vmatprep.subr.mxu0 0.0
        %8250 = vmatpush1.xpose.msra.mxu0 0.0
        %8251 = vmatprep.subr.mxu0 0.0
        %8252 = vmatpush1.xpose.msra.mxu0 0.0
        %8253 = vmatprep.subr.mxu0 0.0
        %8254 = vmatpush1.xpose.msra.mxu0 0.0
        %8255 = vmatprep.subr.mxu0 0.0
        %8256 = vmatpush1.xpose.msra.mxu0 0.0
        %8257 = vmatprep.subr.mxu0 0.0
        %8258 = vmatpush1.xpose.msra.mxu0 0.0
        %8259 = vmatprep.subr.mxu0 0.0
        %8260 = vmatpush1.xpose.msra.mxu0 0.0
        %8261 = vmatprep.subr.mxu0 0.0
        %8262 = vmatpush1.xpose.msra.mxu0 0.0
        %8263 = vmatprep.subr.mxu0 0.0
        %8264 = vmatpush1.xpose.msra.mxu0 0.0
        %8265 = vmatprep.subr.mxu0 0.0
        %8266 = vmatpush1.xpose.msra.mxu0 0.0
        %8267 = vmatprep.subr.mxu0 0.0
        %8268 = vmatpush1.xpose.msra.mxu0 0.0
        %8269 = vmatprep.subr.mxu0 0.0
        %8270 = vmatpush1.xpose.msra.mxu0 0.0
        %8271 = vmatprep.subr.mxu0 0.0
        %8272 = vmatpush1.xpose.msra.mxu0 0.0
        %8273 = vmatprep.subr.mxu0 0.0
        %8274 = vmatpush1.xpose.msra.mxu0 0.0
        %8275 = vmatprep.subr.mxu0 0.0
        %8276 = vmatpush1.xpose.msra.mxu0 0.0
        %8277 = vmatprep.subr.mxu0 0.0
        %8278 = vmatpush1.xpose.msra.mxu0 0.0
        %8279 = vmatprep.subr.mxu0 0.0
        %8280 = vmatpush1.xpose.msra.mxu0 0.0
        %8281 = vmatprep.subr.mxu0 0.0
        %8282 = vmatpush1.xpose.msra.mxu0 0.0
        %8283 = vmatprep.subr.mxu0 0.0
        %8284 = vmatpush1.xpose.msra.mxu0 0.0
        %8285 = vmatprep.subr.mxu0 0.0
        %8286 = vmatpush1.xpose.msra.mxu0 0.0
        %8287 = vmatprep.subr.mxu0 0.0
        %8288 = vmatpush1.xpose.msra.mxu0 0.0
        %8289 = vmatprep.subr.mxu0 0.0
        %8290 = vmatpush1.xpose.msra.mxu0 0.0
        %8291 = vmatprep.subr.mxu0 0.0
        %8292 = vmatpush1.xpose.msra.mxu0 0.0
        %8293 = vmatprep.subr.mxu0 0.0
        %8294 = vmatpush1.xpose.msra.mxu0 0.0
        %8295 = vmatprep.subr.mxu0 0.0
        %8296 = vmatpush1.xpose.msra.mxu0 0.0
        %8297 = vmatprep.subr.mxu0 0.0
        %8298 = vmatpush1.xpose.msra.mxu0 0.0
        %v8299 = vand.u32 %v590, 4294901760
        %v8300 = vsub.f32 %v590, %v8299
        %v8301 = vand.u32 %v8300, 4294901760
        %8302 = vmatprep.mubr.f32.mxu0 %v8301
        %v8303 = vand.u32 %v583, 4294901760
        %v8304 = vsub.f32 %v583, %v8303
        %v8305 = vand.u32 %v8304, 4294901760
        %8306 = vmatmul.mubr.f32.gmra.mrb[0].mxu0 %v8305
        %v8307 = vpop.f32.mrb[0].mxu0
        %v8308 = vadd.f32 %v8226, %v8307
        %v8309 = vpop.f32.mrb[0].mxu0
        %8310 = vdwg.mxu0
        %v8311 = vand.u32 %v249, 4294901760
        %v8312 = vsub.f32 %v249, %v8311
        %v8313 = vand.u32 %v8312, 4294901760
        %8314 = vmatprep.subr.mxu0 %v8313
        %v8315 = vand.u32 %v248, 4294901760
        %v8316 = vsub.f32 %v248, %v8315
        %v8317 = vand.u32 %v8316, 4294901760
        %8318 = vmatpush1.xpose.msra.mxu0 %v8317
        %v8319 = vand.u32 %v281, 4294901760
        %v8320 = vsub.f32 %v281, %v8319
        %v8321 = vand.u32 %v8320, 4294901760
        %8322 = vmatprep.subr.mxu0 %v8321
        %v8323 = vand.u32 %v280, 4294901760
        %v8324 = vsub.f32 %v280, %v8323
        %v8325 = vand.u32 %v8324, 4294901760
        %8326 = vmatpush1.xpose.msra.mxu0 %v8325
        %v8327 = vand.u32 %v313, 4294901760
        %v8328 = vsub.f32 %v313, %v8327
        %v8329 = vand.u32 %v8328, 4294901760
        %8330 = vmatprep.subr.mxu0 %v8329
        %v8331 = vand.u32 %v312, 4294901760
        %v8332 = vsub.f32 %v312, %v8331
        %v8333 = vand.u32 %v8332, 4294901760
        %8334 = vmatpush1.xpose.msra.mxu0 %v8333
        %8335 = vmatprep.subr.mxu0 0.0
        %8336 = vmatpush1.xpose.msra.mxu0 0.0
        %8337 = vmatprep.subr.mxu0 0.0
        %8338 = vmatpush1.xpose.msra.mxu0 0.0
        %8339 = vmatprep.subr.mxu0 0.0
        %8340 = vmatpush1.xpose.msra.mxu0 0.0
        %8341 = vmatprep.subr.mxu0 0.0
        %8342 = vmatpush1.xpose.msra.mxu0 0.0
        %8343 = vmatprep.subr.mxu0 0.0
        %8344 = vmatpush1.xpose.msra.mxu0 0.0
        %8345 = vmatprep.subr.mxu0 0.0
        %8346 = vmatpush1.xpose.msra.mxu0 0.0
        %8347 = vmatprep.subr.mxu0 0.0
        %8348 = vmatpush1.xpose.msra.mxu0 0.0
        %8349 = vmatprep.subr.mxu0 0.0
        %8350 = vmatpush1.xpose.msra.mxu0 0.0
        %8351 = vmatprep.subr.mxu0 0.0
        %8352 = vmatpush1.xpose.msra.mxu0 0.0
        %8353 = vmatprep.subr.mxu0 0.0
        %8354 = vmatpush1.xpose.msra.mxu0 0.0
        %8355 = vmatprep.subr.mxu0 0.0
        %8356 = vmatpush1.xpose.msra.mxu0 0.0
        %8357 = vmatprep.subr.mxu0 0.0
        %8358 = vmatpush1.xpose.msra.mxu0 0.0
        %8359 = vmatprep.subr.mxu0 0.0
        %8360 = vmatpush1.xpose.msra.mxu0 0.0
        %8361 = vmatprep.subr.mxu0 0.0
        %8362 = vmatpush1.xpose.msra.mxu0 0.0
        %8363 = vmatprep.subr.mxu0 0.0
        %8364 = vmatpush1.xpose.msra.mxu0 0.0
        %8365 = vmatprep.subr.mxu0 0.0
        %8366 = vmatpush1.xpose.msra.mxu0 0.0
        %8367 = vmatprep.subr.mxu0 0.0
        %8368 = vmatpush1.xpose.msra.mxu0 0.0
        %8369 = vmatprep.subr.mxu0 0.0
        %8370 = vmatpush1.xpose.msra.mxu0 0.0
        %8371 = vmatprep.subr.mxu0 0.0
        %8372 = vmatpush1.xpose.msra.mxu0 0.0
        %8373 = vmatprep.subr.mxu0 0.0
        %8374 = vmatpush1.xpose.msra.mxu0 0.0
        %8375 = vmatprep.subr.mxu0 0.0
        %8376 = vmatpush1.xpose.msra.mxu0 0.0
        %8377 = vmatprep.subr.mxu0 0.0
        %8378 = vmatpush1.xpose.msra.mxu0 0.0
        %8379 = vmatprep.subr.mxu0 0.0
        %8380 = vmatpush1.xpose.msra.mxu0 0.0
        %8381 = vmatprep.subr.mxu0 0.0
        %8382 = vmatpush1.xpose.msra.mxu0 0.0
        %8383 = vmatprep.subr.mxu0 0.0
        %8384 = vmatpush1.xpose.msra.mxu0 0.0
        %8385 = vmatprep.subr.mxu0 0.0
        %8386 = vmatpush1.xpose.msra.mxu0 0.0
        %8387 = vmatprep.subr.mxu0 0.0
        %8388 = vmatpush1.xpose.msra.mxu0 0.0
        %8389 = vmatprep.subr.mxu0 0.0
        %8390 = vmatpush1.xpose.msra.mxu0 0.0
        %8391 = vmatprep.subr.mxu0 0.0
        %8392 = vmatpush1.xpose.msra.mxu0 0.0
        %v8393 = vand.u32 %v590, 4294901760
        %8394 = vmatprep.mubr.f32.mxu0 %v8393
        %v8395 = vand.u32 %v583, 4294901760
        %8396 = vmatmul.mubr.f32.gmra.mrb[0].mxu0 %v8395
        %v8397 = vpop.f32.mrb[0].mxu0
        %v8398 = vadd.f32 %v8308, %v8397
        %v8399 = vpop.f32.mrb[0].mxu0
        %8400 = vdwg.mxu0
        %v8401 = vand.u32 %v249, 4294901760
        %8402 = vmatprep.subr.mxu0 %v8401
        %v8403 = vand.u32 %v248, 4294901760
        %8404 = vmatpush1.xpose.msra.mxu0 %v8403
        %v8405 = vand.u32 %v281, 4294901760
        %8406 = vmatprep.subr.mxu0 %v8405
        %v8407 = vand.u32 %v280, 4294901760
        %8408 = vmatpush1.xpose.msra.mxu0 %v8407
        %v8409 = vand.u32 %v313, 4294901760
        %8410 = vmatprep.subr.mxu0 %v8409
        %v8411 = vand.u32 %v312, 4294901760
        %8412 = vmatpush1.xpose.msra.mxu0 %v8411
        %8413 = vmatprep.subr.mxu0 0.0
        %8414 = vmatpush1.xpose.msra.mxu0 0.0
        %8415 = vmatprep.subr.mxu0 0.0
        %8416 = vmatpush1.xpose.msra.mxu0 0.0
        %8417 = vmatprep.subr.mxu0 0.0
        %8418 = vmatpush1.xpose.msra.mxu0 0.0
        %8419 = vmatprep.subr.mxu0 0.0
        %8420 = vmatpush1.xpose.msra.mxu0 0.0
        %8421 = vmatprep.subr.mxu0 0.0
        %8422 = vmatpush1.xpose.msra.mxu0 0.0
        %8423 = vmatprep.subr.mxu0 0.0
        %8424 = vmatpush1.xpose.msra.mxu0 0.0
        %8425 = vmatprep.subr.mxu0 0.0
        %8426 = vmatpush1.xpose.msra.mxu0 0.0
        %8427 = vmatprep.subr.mxu0 0.0
        %8428 = vmatpush1.xpose.msra.mxu0 0.0
        %8429 = vmatprep.subr.mxu0 0.0
        %8430 = vmatpush1.xpose.msra.mxu0 0.0
        %8431 = vmatprep.subr.mxu0 0.0
        %8432 = vmatpush1.xpose.msra.mxu0 0.0
        %8433 = vmatprep.subr.mxu0 0.0
        %8434 = vmatpush1.xpose.msra.mxu0 0.0
        %8435 = vmatprep.subr.mxu0 0.0
        %8436 = vmatpush1.xpose.msra.mxu0 0.0
        %8437 = vmatprep.subr.mxu0 0.0
        %8438 = vmatpush1.xpose.msra.mxu0 0.0
        %8439 = vmatprep.subr.mxu0 0.0
        %8440 = vmatpush1.xpose.msra.mxu0 0.0
        %8441 = vmatprep.subr.mxu0 0.0
        %8442 = vmatpush1.xpose.msra.mxu0 0.0
        %8443 = vmatprep.subr.mxu0 0.0
        %8444 = vmatpush1.xpose.msra.mxu0 0.0
        %8445 = vmatprep.subr.mxu0 0.0
        %8446 = vmatpush1.xpose.msra.mxu0 0.0
        %8447 = vmatprep.subr.mxu0 0.0
        %8448 = vmatpush1.xpose.msra.mxu0 0.0
        %8449 = vmatprep.subr.mxu0 0.0
        %8450 = vmatpush1.xpose.msra.mxu0 0.0
        %8451 = vmatprep.subr.mxu0 0.0
        %8452 = vmatpush1.xpose.msra.mxu0 0.0
        %8453 = vmatprep.subr.mxu0 0.0
        %8454 = vmatpush1.xpose.msra.mxu0 0.0
        %8455 = vmatprep.subr.mxu0 0.0
        %8456 = vmatpush1.xpose.msra.mxu0 0.0
        %8457 = vmatprep.subr.mxu0 0.0
        %8458 = vmatpush1.xpose.msra.mxu0 0.0
        %8459 = vmatprep.subr.mxu0 0.0
        %8460 = vmatpush1.xpose.msra.mxu0 0.0
        %8461 = vmatprep.subr.mxu0 0.0
        %8462 = vmatpush1.xpose.msra.mxu0 0.0
        %8463 = vmatprep.subr.mxu0 0.0
        %8464 = vmatpush1.xpose.msra.mxu0 0.0
        %8465 = vmatprep.subr.mxu0 0.0
        %8466 = vmatpush1.xpose.msra.mxu0 0.0
        %8467 = vmatprep.subr.mxu0 0.0
        %8468 = vmatpush1.xpose.msra.mxu0 0.0
        %8469 = vmatprep.subr.mxu0 0.0
        %8470 = vmatpush1.xpose.msra.mxu0 0.0
        %v8471 = vand.u32 %v590, 4294901760
        %8472 = vmatprep.mubr.f32.mxu0 %v8471
        %v8473 = vand.u32 %v583, 4294901760
        %8474 = vmatmul.mubr.f32.gmra.mrb[0].mxu0 %v8473
        %v8475 = vpop.f32.mrb[0].mxu0
        %v8476 = vadd.f32 %v8398, %v8475
        %v8477 = vpop.f32.mrb[0].mxu0
        %8478 = vdwg.mxu0
        %v8479 = vand.u32 %v611, 4294901760
        %8480 = vmatprep.subr.mxu0 %v8479
        %v8481 = vand.u32 %v250, 4294901760
        %8482 = vmatpush1.xpose.msra.mxu0 %v8481
        %v8483 = vand.u32 %v614, 4294901760
        %8484 = vmatprep.subr.mxu0 %v8483
        %v8485 = vand.u32 %v282, 4294901760
        %8486 = vmatpush1.xpose.msra.mxu0 %v8485
        %v8487 = vand.u32 %v617, 4294901760
        %8488 = vmatprep.subr.mxu0 %v8487
        %v8489 = vand.u32 %v314, 4294901760
        %8490 = vmatpush1.xpose.msra.mxu0 %v8489
        %8491 = vmatprep.subr.mxu0 0.0
        %8492 = vmatpush1.xpose.msra.mxu0 0.0
        %8493 = vmatprep.subr.mxu0 0.0
        %8494 = vmatpush1.xpose.msra.mxu0 0.0
        %8495 = vmatprep.subr.mxu0 0.0
        %8496 = vmatpush1.xpose.msra.mxu0 0.0
        %8497 = vmatprep.subr.mxu0 0.0
        %8498 = vmatpush1.xpose.msra.mxu0 0.0
        %8499 = vmatprep.subr.mxu0 0.0
        %8500 = vmatpush1.xpose.msra.mxu0 0.0
        %8501 = vmatprep.subr.mxu0 0.0
        %8502 = vmatpush1.xpose.msra.mxu0 0.0
        %8503 = vmatprep.subr.mxu0 0.0
        %8504 = vmatpush1.xpose.msra.mxu0 0.0
        %8505 = vmatprep.subr.mxu0 0.0
        %8506 = vmatpush1.xpose.msra.mxu0 0.0
        %8507 = vmatprep.subr.mxu0 0.0
        %8508 = vmatpush1.xpose.msra.mxu0 0.0
        %8509 = vmatprep.subr.mxu0 0.0
        %8510 = vmatpush1.xpose.msra.mxu0 0.0
        %8511 = vmatprep.subr.mxu0 0.0
        %8512 = vmatpush1.xpose.msra.mxu0 0.0
        %8513 = vmatprep.subr.mxu0 0.0
        %8514 = vmatpush1.xpose.msra.mxu0 0.0
        %8515 = vmatprep.subr.mxu0 0.0
        %8516 = vmatpush1.xpose.msra.mxu0 0.0
        %8517 = vmatprep.subr.mxu0 0.0
        %8518 = vmatpush1.xpose.msra.mxu0 0.0
        %8519 = vmatprep.subr.mxu0 0.0
        %8520 = vmatpush1.xpose.msra.mxu0 0.0
        %8521 = vmatprep.subr.mxu0 0.0
        %8522 = vmatpush1.xpose.msra.mxu0 0.0
        %8523 = vmatprep.subr.mxu0 0.0
        %8524 = vmatpush1.xpose.msra.mxu0 0.0
        %8525 = vmatprep.subr.mxu0 0.0
        %8526 = vmatpush1.xpose.msra.mxu0 0.0
        %8527 = vmatprep.subr.mxu0 0.0
        %8528 = vmatpush1.xpose.msra.mxu0 0.0
        %8529 = vmatprep.subr.mxu0 0.0
        %8530 = vmatpush1.xpose.msra.mxu0 0.0
        %8531 = vmatprep.subr.mxu0 0.0
        %8532 = vmatpush1.xpose.msra.mxu0 0.0
        %8533 = vmatprep.subr.mxu0 0.0
        %8534 = vmatpush1.xpose.msra.mxu0 0.0
        %8535 = vmatprep.subr.mxu0 0.0
        %8536 = vmatpush1.xpose.msra.mxu0 0.0
        %8537 = vmatprep.subr.mxu0 0.0
        %8538 = vmatpush1.xpose.msra.mxu0 0.0
        %8539 = vmatprep.subr.mxu0 0.0
        %8540 = vmatpush1.xpose.msra.mxu0 0.0
        %8541 = vmatprep.subr.mxu0 0.0
        %8542 = vmatpush1.xpose.msra.mxu0 0.0
        %8543 = vmatprep.subr.mxu0 0.0
        %8544 = vmatpush1.xpose.msra.mxu0 0.0
        %8545 = vmatprep.subr.mxu0 0.0
        %8546 = vmatpush1.xpose.msra.mxu0 0.0
        %8547 = vmatprep.subr.mxu0 0.0
        %8548 = vmatpush1.xpose.msra.mxu0 0.0
        %v8549 = vand.u32 %v608, 4294901760
        %v8550 = vsub.f32 %v608, %v8549
        %v8551 = vand.u32 %v8550, 4294901760
        %v8552 = vsub.f32 %v8550, %v8551
        %v8553 = vand.u32 %v8552, 4294901760
        %8554 = vmatprep.mubr.f32.mxu0 %v8553
        %v8555 = vand.u32 %v597, 4294901760
        %v8556 = vsub.f32 %v597, %v8555
        %v8557 = vand.u32 %v8556, 4294901760
        %v8558 = vsub.f32 %v8556, %v8557
        %v8559 = vand.u32 %v8558, 4294901760
        %8560 = vmatmul.mubr.f32.gmra.mrb[0].mxu0 %v8559
        %v8561 = vpop.f32.mrb[0].mxu0
        %v8562 = vadd.f32 %v8476, %v8561
        %v8563 = vpop.f32.mrb[0].mxu0
        %8564 = vdwg.mxu0
        %v8565 = vand.u32 %v611, 4294901760
        %v8566 = vsub.f32 %v611, %v8565
        %v8567 = vand.u32 %v8566, 4294901760
        %v8568 = vsub.f32 %v8566, %v8567
        %v8569 = vand.u32 %v8568, 4294901760
        %8570 = vmatprep.subr.mxu0 %v8569
        %v8571 = vand.u32 %v250, 4294901760
        %v8572 = vsub.f32 %v250, %v8571
        %v8573 = vand.u32 %v8572, 4294901760
        %v8574 = vsub.f32 %v8572, %v8573
        %v8575 = vand.u32 %v8574, 4294901760
        %8576 = vmatpush1.xpose.msra.mxu0 %v8575
        %v8577 = vand.u32 %v614, 4294901760
        %v8578 = vsub.f32 %v614, %v8577
        %v8579 = vand.u32 %v8578, 4294901760
        %v8580 = vsub.f32 %v8578, %v8579
        %v8581 = vand.u32 %v8580, 4294901760
        %8582 = vmatprep.subr.mxu0 %v8581
        %v8583 = vand.u32 %v282, 4294901760
        %v8584 = vsub.f32 %v282, %v8583
        %v8585 = vand.u32 %v8584, 4294901760
        %v8586 = vsub.f32 %v8584, %v8585
        %v8587 = vand.u32 %v8586, 4294901760
        %8588 = vmatpush1.xpose.msra.mxu0 %v8587
        %v8589 = vand.u32 %v617, 4294901760
        %v8590 = vsub.f32 %v617, %v8589
        %v8591 = vand.u32 %v8590, 4294901760
        %v8592 = vsub.f32 %v8590, %v8591
        %v8593 = vand.u32 %v8592, 4294901760
        %8594 = vmatprep.subr.mxu0 %v8593
        %v8595 = vand.u32 %v314, 4294901760
        %v8596 = vsub.f32 %v314, %v8595
        %v8597 = vand.u32 %v8596, 4294901760
        %v8598 = vsub.f32 %v8596, %v8597
        %v8599 = vand.u32 %v8598, 4294901760
        %8600 = vmatpush1.xpose.msra.mxu0 %v8599
        %8601 = vmatprep.subr.mxu0 0.0
        %8602 = vmatpush1.xpose.msra.mxu0 0.0
        %8603 = vmatprep.subr.mxu0 0.0
        %8604 = vmatpush1.xpose.msra.mxu0 0.0
        %8605 = vmatprep.subr.mxu0 0.0
        %8606 = vmatpush1.xpose.msra.mxu0 0.0
        %8607 = vmatprep.subr.mxu0 0.0
        %8608 = vmatpush1.xpose.msra.mxu0 0.0
        %8609 = vmatprep.subr.mxu0 0.0
        %8610 = vmatpush1.xpose.msra.mxu0 0.0
        %8611 = vmatprep.subr.mxu0 0.0
        %8612 = vmatpush1.xpose.msra.mxu0 0.0
        %8613 = vmatprep.subr.mxu0 0.0
        %8614 = vmatpush1.xpose.msra.mxu0 0.0
        %8615 = vmatprep.subr.mxu0 0.0
        %8616 = vmatpush1.xpose.msra.mxu0 0.0
        %8617 = vmatprep.subr.mxu0 0.0
        %8618 = vmatpush1.xpose.msra.mxu0 0.0
        %8619 = vmatprep.subr.mxu0 0.0
        %8620 = vmatpush1.xpose.msra.mxu0 0.0
        %8621 = vmatprep.subr.mxu0 0.0
        %8622 = vmatpush1.xpose.msra.mxu0 0.0
        %8623 = vmatprep.subr.mxu0 0.0
        %8624 = vmatpush1.xpose.msra.mxu0 0.0
        %8625 = vmatprep.subr.mxu0 0.0
        %8626 = vmatpush1.xpose.msra.mxu0 0.0
        %8627 = vmatprep.subr.mxu0 0.0
        %8628 = vmatpush1.xpose.msra.mxu0 0.0
        %8629 = vmatprep.subr.mxu0 0.0
        %8630 = vmatpush1.xpose.msra.mxu0 0.0
        %8631 = vmatprep.subr.mxu0 0.0
        %8632 = vmatpush1.xpose.msra.mxu0 0.0
        %8633 = vmatprep.subr.mxu0 0.0
        %8634 = vmatpush1.xpose.msra.mxu0 0.0
        %8635 = vmatprep.subr.mxu0 0.0
        %8636 = vmatpush1.xpose.msra.mxu0 0.0
        %8637 = vmatprep.subr.mxu0 0.0
        %8638 = vmatpush1.xpose.msra.mxu0 0.0
        %8639 = vmatprep.subr.mxu0 0.0
        %8640 = vmatpush1.xpose.msra.mxu0 0.0
        %8641 = vmatprep.subr.mxu0 0.0
        %8642 = vmatpush1.xpose.msra.mxu0 0.0
        %8643 = vmatprep.subr.mxu0 0.0
        %8644 = vmatpush1.xpose.msra.mxu0 0.0
        %8645 = vmatprep.subr.mxu0 0.0
        %8646 = vmatpush1.xpose.msra.mxu0 0.0
        %8647 = vmatprep.subr.mxu0 0.0
        %8648 = vmatpush1.xpose.msra.mxu0 0.0
        %8649 = vmatprep.subr.mxu0 0.0
        %8650 = vmatpush1.xpose.msra.mxu0 0.0
        %8651 = vmatprep.subr.mxu0 0.0
        %8652 = vmatpush1.xpose.msra.mxu0 0.0
        %8653 = vmatprep.subr.mxu0 0.0
        %8654 = vmatpush1.xpose.msra.mxu0 0.0
        %8655 = vmatprep.subr.mxu0 0.0
        %8656 = vmatpush1.xpose.msra.mxu0 0.0
        %8657 = vmatprep.subr.mxu0 0.0
        %8658 = vmatpush1.xpose.msra.mxu0 0.0
        %v8659 = vand.u32 %v608, 4294901760
        %8660 = vmatprep.mubr.f32.mxu0 %v8659
        %v8661 = vand.u32 %v597, 4294901760
        %8662 = vmatmul.mubr.f32.gmra.mrb[0].mxu0 %v8661
        %v8663 = vpop.f32.mrb[0].mxu0
        %v8664 = vadd.f32 %v8562, %v8663
        %v8665 = vpop.f32.mrb[0].mxu0
        %8666 = vdwg.mxu0
        %v8667 = vand.u32 %v611, 4294901760
        %v8668 = vsub.f32 %v611, %v8667
        %8669 = vmatprep.subr.mxu0 %v8668
        %v8670 = vand.u32 %v250, 4294901760
        %v8671 = vsub.f32 %v250, %v8670
        %8672 = vmatpush1.xpose.msra.mxu0 %v8671
        %v8673 = vand.u32 %v614, 4294901760
        %v8674 = vsub.f32 %v614, %v8673
        %8675 = vmatprep.subr.mxu0 %v8674
        %v8676 = vand.u32 %v282, 4294901760
        %v8677 = vsub.f32 %v282, %v8676
        %8678 = vmatpush1.xpose.msra.mxu0 %v8677
        %v8679 = vand.u32 %v617, 4294901760
        %v8680 = vsub.f32 %v617, %v8679
        %8681 = vmatprep.subr.mxu0 %v8680
        %v8682 = vand.u32 %v314, 4294901760
        %v8683 = vsub.f32 %v314, %v8682
        %8684 = vmatpush1.xpose.msra.mxu0 %v8683
        %8685 = vmatprep.subr.mxu0 0.0
        %8686 = vmatpush1.xpose.msra.mxu0 0.0
        %8687 = vmatprep.subr.mxu0 0.0
        %8688 = vmatpush1.xpose.msra.mxu0 0.0
        %8689 = vmatprep.subr.mxu0 0.0
        %8690 = vmatpush1.xpose.msra.mxu0 0.0
        %8691 = vmatprep.subr.mxu0 0.0
        %8692 = vmatpush1.xpose.msra.mxu0 0.0
        %8693 = vmatprep.subr.mxu0 0.0
        %8694 = vmatpush1.xpose.msra.mxu0 0.0
        %8695 = vmatprep.subr.mxu0 0.0
        %8696 = vmatpush1.xpose.msra.mxu0 0.0
        %8697 = vmatprep.subr.mxu0 0.0
        %8698 = vmatpush1.xpose.msra.mxu0 0.0
        %8699 = vmatprep.subr.mxu0 0.0
        %8700 = vmatpush1.xpose.msra.mxu0 0.0
        %8701 = vmatprep.subr.mxu0 0.0
        %8702 = vmatpush1.xpose.msra.mxu0 0.0
        %8703 = vmatprep.subr.mxu0 0.0
        %8704 = vmatpush1.xpose.msra.mxu0 0.0
        %8705 = vmatprep.subr.mxu0 0.0
        %8706 = vmatpush1.xpose.msra.mxu0 0.0
        %8707 = vmatprep.subr.mxu0 0.0
        %8708 = vmatpush1.xpose.msra.mxu0 0.0
        %8709 = vmatprep.subr.mxu0 0.0
        %8710 = vmatpush1.xpose.msra.mxu0 0.0
        %8711 = vmatprep.subr.mxu0 0.0
        %8712 = vmatpush1.xpose.msra.mxu0 0.0
        %8713 = vmatprep.subr.mxu0 0.0
        %8714 = vmatpush1.xpose.msra.mxu0 0.0
        %8715 = vmatprep.subr.mxu0 0.0
        %8716 = vmatpush1.xpose.msra.mxu0 0.0
        %8717 = vmatprep.subr.mxu0 0.0
        %8718 = vmatpush1.xpose.msra.mxu0 0.0
        %8719 = vmatprep.subr.mxu0 0.0
        %8720 = vmatpush1.xpose.msra.mxu0 0.0
        %8721 = vmatprep.subr.mxu0 0.0
        %8722 = vmatpush1.xpose.msra.mxu0 0.0
        %8723 = vmatprep.subr.mxu0 0.0
        %8724 = vmatpush1.xpose.msra.mxu0 0.0
        %8725 = vmatprep.subr.mxu0 0.0
        %8726 = vmatpush1.xpose.msra.mxu0 0.0
        %8727 = vmatprep.subr.mxu0 0.0
        %8728 = vmatpush1.xpose.msra.mxu0 0.0
        %8729 = vmatprep.subr.mxu0 0.0
        %8730 = vmatpush1.xpose.msra.mxu0 0.0
        %8731 = vmatprep.subr.mxu0 0.0
        %8732 = vmatpush1.xpose.msra.mxu0 0.0
        %8733 = vmatprep.subr.mxu0 0.0
        %8734 = vmatpush1.xpose.msra.mxu0 0.0
        %8735 = vmatprep.subr.mxu0 0.0
        %8736 = vmatpush1.xpose.msra.mxu0 0.0
        %8737 = vmatprep.subr.mxu0 0.0
        %8738 = vmatpush1.xpose.msra.mxu0 0.0
        %8739 = vmatprep.subr.mxu0 0.0
        %8740 = vmatpush1.xpose.msra.mxu0 0.0
        %8741 = vmatprep.subr.mxu0 0.0
        %8742 = vmatpush1.xpose.msra.mxu0 0.0
        %v8743 = vand.u32 %v608, 4294901760
        %v8744 = vsub.f32 %v608, %v8743
        %8745 = vmatprep.mubr.f32.mxu0 %v8744
        %v8746 = vand.u32 %v597, 4294901760
        %v8747 = vsub.f32 %v597, %v8746
        %8748 = vmatmul.mubr.f32.gmra.mrb[0].mxu0 %v8747
        %v8749 = vpop.f32.mrb[0].mxu0
        %v8750 = vadd.f32 %v8664, %v8749
        %v8751 = vpop.f32.mrb[0].mxu0
        %8752 = vdwg.mxu0
        %v8753 = vand.u32 %v611, 4294901760
        %8754 = vmatprep.subr.mxu0 %v8753
        %v8755 = vand.u32 %v250, 4294901760
        %8756 = vmatpush1.xpose.msra.mxu0 %v8755
        %v8757 = vand.u32 %v614, 4294901760
        %8758 = vmatprep.subr.mxu0 %v8757
        %v8759 = vand.u32 %v282, 4294901760
        %8760 = vmatpush1.xpose.msra.mxu0 %v8759
        %v8761 = vand.u32 %v617, 4294901760
        %8762 = vmatprep.subr.mxu0 %v8761
        %v8763 = vand.u32 %v314, 4294901760
        %8764 = vmatpush1.xpose.msra.mxu0 %v8763
        %8765 = vmatprep.subr.mxu0 0.0
        %8766 = vmatpush1.xpose.msra.mxu0 0.0
        %8767 = vmatprep.subr.mxu0 0.0
        %8768 = vmatpush1.xpose.msra.mxu0 0.0
        %8769 = vmatprep.subr.mxu0 0.0
        %8770 = vmatpush1.xpose.msra.mxu0 0.0
        %8771 = vmatprep.subr.mxu0 0.0
        %8772 = vmatpush1.xpose.msra.mxu0 0.0
        %8773 = vmatprep.subr.mxu0 0.0
        %8774 = vmatpush1.xpose.msra.mxu0 0.0
        %8775 = vmatprep.subr.mxu0 0.0
        %8776 = vmatpush1.xpose.msra.mxu0 0.0
        %8777 = vmatprep.subr.mxu0 0.0
        %8778 = vmatpush1.xpose.msra.mxu0 0.0
        %8779 = vmatprep.subr.mxu0 0.0
        %8780 = vmatpush1.xpose.msra.mxu0 0.0
        %8781 = vmatprep.subr.mxu0 0.0
        %8782 = vmatpush1.xpose.msra.mxu0 0.0
        %8783 = vmatprep.subr.mxu0 0.0
        %8784 = vmatpush1.xpose.msra.mxu0 0.0
        %8785 = vmatprep.subr.mxu0 0.0
        %8786 = vmatpush1.xpose.msra.mxu0 0.0
        %8787 = vmatprep.subr.mxu0 0.0
        %8788 = vmatpush1.xpose.msra.mxu0 0.0
        %8789 = vmatprep.subr.mxu0 0.0
        %8790 = vmatpush1.xpose.msra.mxu0 0.0
        %8791 = vmatprep.subr.mxu0 0.0
        %8792 = vmatpush1.xpose.msra.mxu0 0.0
        %8793 = vmatprep.subr.mxu0 0.0
        %8794 = vmatpush1.xpose.msra.mxu0 0.0
        %8795 = vmatprep.subr.mxu0 0.0
        %8796 = vmatpush1.xpose.msra.mxu0 0.0
        %8797 = vmatprep.subr.mxu0 0.0
        %8798 = vmatpush1.xpose.msra.mxu0 0.0
        %8799 = vmatprep.subr.mxu0 0.0
        %8800 = vmatpush1.xpose.msra.mxu0 0.0
        %8801 = vmatprep.subr.mxu0 0.0
        %8802 = vmatpush1.xpose.msra.mxu0 0.0
        %8803 = vmatprep.subr.mxu0 0.0
        %8804 = vmatpush1.xpose.msra.mxu0 0.0
        %8805 = vmatprep.subr.mxu0 0.0
        %8806 = vmatpush1.xpose.msra.mxu0 0.0
        %8807 = vmatprep.subr.mxu0 0.0
        %8808 = vmatpush1.xpose.msra.mxu0 0.0
        %8809 = vmatprep.subr.mxu0 0.0
        %8810 = vmatpush1.xpose.msra.mxu0 0.0
        %8811 = vmatprep.subr.mxu0 0.0
        %8812 = vmatpush1.xpose.msra.mxu0 0.0
        %8813 = vmatprep.subr.mxu0 0.0
        %8814 = vmatpush1.xpose.msra.mxu0 0.0
        %8815 = vmatprep.subr.mxu0 0.0
        %8816 = vmatpush1.xpose.msra.mxu0 0.0
        %8817 = vmatprep.subr.mxu0 0.0
        %8818 = vmatpush1.xpose.msra.mxu0 0.0
        %8819 = vmatprep.subr.mxu0 0.0
        %8820 = vmatpush1.xpose.msra.mxu0 0.0
        %8821 = vmatprep.subr.mxu0 0.0
        %8822 = vmatpush1.xpose.msra.mxu0 0.0
        %v8823 = vand.u32 %v608, 4294901760
        %v8824 = vsub.f32 %v608, %v8823
        %v8825 = vand.u32 %v8824, 4294901760
        %8826 = vmatprep.mubr.f32.mxu0 %v8825
        %v8827 = vand.u32 %v597, 4294901760
        %v8828 = vsub.f32 %v597, %v8827
        %v8829 = vand.u32 %v8828, 4294901760
        %8830 = vmatmul.mubr.f32.gmra.mrb[0].mxu0 %v8829
        %v8831 = vpop.f32.mrb[0].mxu0
        %v8832 = vadd.f32 %v8750, %v8831
        %v8833 = vpop.f32.mrb[0].mxu0
        %8834 = vdwg.mxu0
        %v8835 = vand.u32 %v611, 4294901760
        %v8836 = vsub.f32 %v611, %v8835
        %v8837 = vand.u32 %v8836, 4294901760
        %8838 = vmatprep.subr.mxu0 %v8837
        %v8839 = vand.u32 %v250, 4294901760
        %v8840 = vsub.f32 %v250, %v8839
        %v8841 = vand.u32 %v8840, 4294901760
        %8842 = vmatpush1.xpose.msra.mxu0 %v8841
        %v8843 = vand.u32 %v614, 4294901760
        %v8844 = vsub.f32 %v614, %v8843
        %v8845 = vand.u32 %v8844, 4294901760
        %8846 = vmatprep.subr.mxu0 %v8845
        %v8847 = vand.u32 %v282, 4294901760
        %v8848 = vsub.f32 %v282, %v8847
        %v8849 = vand.u32 %v8848, 4294901760
        %8850 = vmatpush1.xpose.msra.mxu0 %v8849
        %v8851 = vand.u32 %v617, 4294901760
        %v8852 = vsub.f32 %v617, %v8851
        %v8853 = vand.u32 %v8852, 4294901760
        %8854 = vmatprep.subr.mxu0 %v8853
        %v8855 = vand.u32 %v314, 4294901760
        %v8856 = vsub.f32 %v314, %v8855
        %v8857 = vand.u32 %v8856, 4294901760
        %8858 = vmatpush1.xpose.msra.mxu0 %v8857
        %8859 = vmatprep.subr.mxu0 0.0
        %8860 = vmatpush1.xpose.msra.mxu0 0.0
        %8861 = vmatprep.subr.mxu0 0.0
        %8862 = vmatpush1.xpose.msra.mxu0 0.0
        %8863 = vmatprep.subr.mxu0 0.0
        %8864 = vmatpush1.xpose.msra.mxu0 0.0
        %8865 = vmatprep.subr.mxu0 0.0
        %8866 = vmatpush1.xpose.msra.mxu0 0.0
        %8867 = vmatprep.subr.mxu0 0.0
        %8868 = vmatpush1.xpose.msra.mxu0 0.0
        %8869 = vmatprep.subr.mxu0 0.0
        %8870 = vmatpush1.xpose.msra.mxu0 0.0
        %8871 = vmatprep.subr.mxu0 0.0
        %8872 = vmatpush1.xpose.msra.mxu0 0.0
        %8873 = vmatprep.subr.mxu0 0.0
        %8874 = vmatpush1.xpose.msra.mxu0 0.0
        %8875 = vmatprep.subr.mxu0 0.0
        %8876 = vmatpush1.xpose.msra.mxu0 0.0
        %8877 = vmatprep.subr.mxu0 0.0
        %8878 = vmatpush1.xpose.msra.mxu0 0.0
        %8879 = vmatprep.subr.mxu0 0.0
        %8880 = vmatpush1.xpose.msra.mxu0 0.0
        %8881 = vmatprep.subr.mxu0 0.0
        %8882 = vmatpush1.xpose.msra.mxu0 0.0
        %8883 = vmatprep.subr.mxu0 0.0
        %8884 = vmatpush1.xpose.msra.mxu0 0.0
        %8885 = vmatprep.subr.mxu0 0.0
        %8886 = vmatpush1.xpose.msra.mxu0 0.0
        %8887 = vmatprep.subr.mxu0 0.0
        %8888 = vmatpush1.xpose.msra.mxu0 0.0
        %8889 = vmatprep.subr.mxu0 0.0
        %8890 = vmatpush1.xpose.msra.mxu0 0.0
        %8891 = vmatprep.subr.mxu0 0.0
        %8892 = vmatpush1.xpose.msra.mxu0 0.0
        %8893 = vmatprep.subr.mxu0 0.0
        %8894 = vmatpush1.xpose.msra.mxu0 0.0
        %8895 = vmatprep.subr.mxu0 0.0
        %8896 = vmatpush1.xpose.msra.mxu0 0.0
        %8897 = vmatprep.subr.mxu0 0.0
        %8898 = vmatpush1.xpose.msra.mxu0 0.0
        %8899 = vmatprep.subr.mxu0 0.0
        %8900 = vmatpush1.xpose.msra.mxu0 0.0
        %8901 = vmatprep.subr.mxu0 0.0
        %8902 = vmatpush1.xpose.msra.mxu0 0.0
        %8903 = vmatprep.subr.mxu0 0.0
        %8904 = vmatpush1.xpose.msra.mxu0 0.0
        %8905 = vmatprep.subr.mxu0 0.0
        %8906 = vmatpush1.xpose.msra.mxu0 0.0
        %8907 = vmatprep.subr.mxu0 0.0
        %8908 = vmatpush1.xpose.msra.mxu0 0.0
        %8909 = vmatprep.subr.mxu0 0.0
        %8910 = vmatpush1.xpose.msra.mxu0 0.0
        %8911 = vmatprep.subr.mxu0 0.0
        %8912 = vmatpush1.xpose.msra.mxu0 0.0
        %8913 = vmatprep.subr.mxu0 0.0
        %8914 = vmatpush1.xpose.msra.mxu0 0.0
        %8915 = vmatprep.subr.mxu0 0.0
        %8916 = vmatpush1.xpose.msra.mxu0 0.0
        %v8917 = vand.u32 %v608, 4294901760
        %8918 = vmatprep.mubr.f32.mxu0 %v8917
        %v8919 = vand.u32 %v597, 4294901760
        %8920 = vmatmul.mubr.f32.gmra.mrb[0].mxu0 %v8919
        %v8921 = vpop.f32.mrb[0].mxu0
        %v8922 = vadd.f32 %v8832, %v8921
        %v8923 = vpop.f32.mrb[0].mxu0
        %8924 = vdwg.mxu0
        %v8925 = vand.u32 %v611, 4294901760
        %8926 = vmatprep.subr.mxu0 %v8925
        %v8927 = vand.u32 %v250, 4294901760
        %8928 = vmatpush1.xpose.msra.mxu0 %v8927
        %v8929 = vand.u32 %v614, 4294901760
        %8930 = vmatprep.subr.mxu0 %v8929
        %v8931 = vand.u32 %v282, 4294901760
        %8932 = vmatpush1.xpose.msra.mxu0 %v8931
        %v8933 = vand.u32 %v617, 4294901760
        %8934 = vmatprep.subr.mxu0 %v8933
        %v8935 = vand.u32 %v314, 4294901760
        %8936 = vmatpush1.xpose.msra.mxu0 %v8935
        %8937 = vmatprep.subr.mxu0 0.0
        %8938 = vmatpush1.xpose.msra.mxu0 0.0
        %8939 = vmatprep.subr.mxu0 0.0
        %8940 = vmatpush1.xpose.msra.mxu0 0.0
        %8941 = vmatprep.subr.mxu0 0.0
        %8942 = vmatpush1.xpose.msra.mxu0 0.0
        %8943 = vmatprep.subr.mxu0 0.0
        %8944 = vmatpush1.xpose.msra.mxu0 0.0
        %8945 = vmatprep.subr.mxu0 0.0
        %8946 = vmatpush1.xpose.msra.mxu0 0.0
        %8947 = vmatprep.subr.mxu0 0.0
        %8948 = vmatpush1.xpose.msra.mxu0 0.0
        %8949 = vmatprep.subr.mxu0 0.0
        %8950 = vmatpush1.xpose.msra.mxu0 0.0
        %8951 = vmatprep.subr.mxu0 0.0
        %8952 = vmatpush1.xpose.msra.mxu0 0.0
        %8953 = vmatprep.subr.mxu0 0.0
        %8954 = vmatpush1.xpose.msra.mxu0 0.0
        %8955 = vmatprep.subr.mxu0 0.0
        %8956 = vmatpush1.xpose.msra.mxu0 0.0
        %8957 = vmatprep.subr.mxu0 0.0
        %8958 = vmatpush1.xpose.msra.mxu0 0.0
        %8959 = vmatprep.subr.mxu0 0.0
        %8960 = vmatpush1.xpose.msra.mxu0 0.0
        %8961 = vmatprep.subr.mxu0 0.0
        %8962 = vmatpush1.xpose.msra.mxu0 0.0
        %8963 = vmatprep.subr.mxu0 0.0
        %8964 = vmatpush1.xpose.msra.mxu0 0.0
        %8965 = vmatprep.subr.mxu0 0.0
        %8966 = vmatpush1.xpose.msra.mxu0 0.0
        %8967 = vmatprep.subr.mxu0 0.0
        %8968 = vmatpush1.xpose.msra.mxu0 0.0
        %8969 = vmatprep.subr.mxu0 0.0
        %8970 = vmatpush1.xpose.msra.mxu0 0.0
        %8971 = vmatprep.subr.mxu0 0.0
        %8972 = vmatpush1.xpose.msra.mxu0 0.0
        %8973 = vmatprep.subr.mxu0 0.0
        %8974 = vmatpush1.xpose.msra.mxu0 0.0
        %8975 = vmatprep.subr.mxu0 0.0
        %8976 = vmatpush1.xpose.msra.mxu0 0.0
        %8977 = vmatprep.subr.mxu0 0.0
        %8978 = vmatpush1.xpose.msra.mxu0 0.0
        %8979 = vmatprep.subr.mxu0 0.0
        %8980 = vmatpush1.xpose.msra.mxu0 0.0
        %8981 = vmatprep.subr.mxu0 0.0
        %8982 = vmatpush1.xpose.msra.mxu0 0.0
        %8983 = vmatprep.subr.mxu0 0.0
        %8984 = vmatpush1.xpose.msra.mxu0 0.0
        %8985 = vmatprep.subr.mxu0 0.0
        %8986 = vmatpush1.xpose.msra.mxu0 0.0
        %8987 = vmatprep.subr.mxu0 0.0
        %8988 = vmatpush1.xpose.msra.mxu0 0.0
        %8989 = vmatprep.subr.mxu0 0.0
        %8990 = vmatpush1.xpose.msra.mxu0 0.0
        %8991 = vmatprep.subr.mxu0 0.0
        %8992 = vmatpush1.xpose.msra.mxu0 0.0
        %8993 = vmatprep.subr.mxu0 0.0
        %8994 = vmatpush1.xpose.msra.mxu0 0.0
        %v8995 = vand.u32 %v608, 4294901760
        %8996 = vmatprep.mubr.f32.mxu0 %v8995
        %v8997 = vand.u32 %v597, 4294901760
        %8998 = vmatmul.mubr.f32.gmra.mrb[0].mxu0 %v8997
        %v8999 = vpop.f32.mrb[0].mxu0
        %v9000 = vadd.f32 %v8922, %v8999
        %v9001 = vpop.f32.mrb[0].mxu0
        %9002 = vdwg.mxu0
        %v9003 = vld [vmem:[%s2] sm:$0x1]
        %v9004 = vmul.f32 %v9000, 2.0
        %v9005 = vsub.f32 %v9003, %v9004
        %v9006 = vlaneseq
        %v9007 = vand.u32 %v9006, 127
        %vm9008 = vcmask 155648
        %v9009 = vsel %vm9008, %v9005, inf
        %9010 = vmin.xlane.f32.xlu0 %v9009
        %v9011 = vpop.xlane.xlu0 %9010
        %vm9012 = vcmp.eq.f32.partialorder %v9005, %v9011
        %v9013 = vsel %vm9012, %v9007, 20
        %v9014 = vsel %vm9008, %v9013, 2147483647
        %v9015 = vand.u32 %v9014, 65535
        %v9016 = vshra.s32 %v9014, 16
        %v9017 = vcvt.s32.f32 %v9015
        %v9018 = vcvt.s32.f32 %v9016
        %9019 = vmin.xlane.f32.xlu0 %v9018
        %v9020 = vpop.xlane.xlu0 %9019
        %vm9021 = vcmp.eq.f32.partialorder %v9018, %v9020
        %v9022 = vsel %vm9021, %v9017, inf
        %9023 = vmin.xlane.f32.xlu0 %v9022
        %v9024 = vpop.xlane.xlu0 %9023
        %v9025 = vcvt.f32.s32 %v9024
        %v9026 = vcvt.f32.s32 %v9020
        %v9027 = vshll.u32 %v9026, 16
        %v9028 = vadd.s32 %v9027, %v9025
        %vm9029 = vcmp.lt.s32.totalorder %v9028, 19
        %v9030 = vsel %vm9029, %v9028, 19
        %v9031 = vlaneseq
        %v9032 = vshrl.u32 %v9031, 7
        %v9033 = vadd.s32 %v9032, 8
        %v9034 = vadd.s32 %v9032, 16
        %v9035 = vlaneseq
        %v9036 = vshrl.u32 %v9035, 7
        %v9037 = vsub.s32 0, %v9036
        %v9038 = vrot.slane %v9030, %v9037
        %vm9039 = vcmp.eq.s32.totalorder %v9032, %v9038
        %vm9040 = vcmp.eq.s32.totalorder %v9033, %v9038
        %vm9041 = vcmp.eq.s32.totalorder %v9034, %v9038
        %v9042 = vsel %vm9039, 1, 0
        %v9043 = vsel %vm9040, 1, 0
        %v9044 = vsel %vm9041, 1, 0
        %vm9045 = vcmp.eq.s32.totalorder %v9042, 1
        %vm9046 = vcmp.eq.s32.totalorder %v9043, 1
        %vm9047 = vcmp.eq.s32.totalorder %v9044, 1
        %v9048 = vsel %vm9045, %v220, 0.0
        %v9049 = vsel %vm9045, %v221, 0.0
        %v9050 = vsel %vm9045, %v222, 0.0
        %v9051 = vsel %vm9045, %v223, 0.0
        %v9052 = vsel %vm9045, %v224, 0.0
        %v9053 = vsel %vm9045, %v225, 0.0
        %v9054 = vsel %vm9045, %v226, 0.0
        %v9055 = vsel %vm9045, %v227, 0.0
        %v9056 = vsel %vm9045, %v228, 0.0
        %v9057 = vsel %vm9045, %v229, 0.0
        %v9058 = vsel %vm9045, %v230, 0.0
        %v9059 = vsel %vm9045, %v231, 0.0
        %v9060 = vsel %vm9045, %v232, 0.0
        %v9061 = vsel %vm9045, %v233, 0.0
        %v9062 = vsel %vm9045, %v234, 0.0
        %v9063 = vsel %vm9045, %v235, 0.0
        %v9064 = vsel %vm9045, %v236, 0.0
        %v9065 = vsel %vm9045, %v237, 0.0
        %v9066 = vsel %vm9045, %v238, 0.0
        %v9067 = vsel %vm9045, %v239, 0.0
        %v9068 = vsel %vm9045, %v240, 0.0
        %v9069 = vsel %vm9045, %v241, 0.0
        %v9070 = vsel %vm9045, %v242, 0.0
        %v9071 = vsel %vm9045, %v243, 0.0
        %v9072 = vsel %vm9045, %v244, 0.0
        %v9073 = vsel %vm9045, %v245, 0.0
        %v9074 = vsel %vm9045, %v246, 0.0
        %v9075 = vsel %vm9045, %v247, 0.0
        %v9076 = vsel %vm9045, %v248, 0.0
        %v9077 = vsel %vm9045, %v249, 0.0
        %v9078 = vsel %vm9045, %v250, 0.0
        %v9079 = vsel %vm9045, %v251, 0.0
        %v9080 = vsel %vm9046, %v252, 0.0
        %v9081 = vsel %vm9046, %v253, 0.0
        %v9082 = vsel %vm9046, %v254, 0.0
        %v9083 = vsel %vm9046, %v255, 0.0
        %v9084 = vsel %vm9046, %v256, 0.0
        %v9085 = vsel %vm9046, %v257, 0.0
        %v9086 = vsel %vm9046, %v258, 0.0
        %v9087 = vsel %vm9046, %v259, 0.0
        %v9088 = vsel %vm9046, %v260, 0.0
        %v9089 = vsel %vm9046, %v261, 0.0
        %v9090 = vsel %vm9046, %v262, 0.0
        %v9091 = vsel %vm9046, %v263, 0.0
        %v9092 = vsel %vm9046, %v264, 0.0
        %v9093 = vsel %vm9046, %v265, 0.0
        %v9094 = vsel %vm9046, %v266, 0.0
        %v9095 = vsel %vm9046, %v267, 0.0
        %v9096 = vsel %vm9046, %v268, 0.0
        %v9097 = vsel %vm9046, %v269, 0.0
        %v9098 = vsel %vm9046, %v270, 0.0
        %v9099 = vsel %vm9046, %v271, 0.0
        %v9100 = vsel %vm9046, %v272, 0.0
        %v9101 = vsel %vm9046, %v273, 0.0
        %v9102 = vsel %vm9046, %v274, 0.0
        %v9103 = vsel %vm9046, %v275, 0.0
        %v9104 = vsel %vm9046, %v276, 0.0
        %v9105 = vsel %vm9046, %v277, 0.0
        %v9106 = vsel %vm9046, %v278, 0.0
        %v9107 = vsel %vm9046, %v279, 0.0
        %v9108 = vsel %vm9046, %v280, 0.0
        %v9109 = vsel %vm9046, %v281, 0.0
        %v9110 = vsel %vm9046, %v282, 0.0
        %v9111 = vsel %vm9046, %v283, 0.0
        %v9112 = vsel %vm9047, %v284, 0.0
        %v9113 = vsel %vm9047, %v285, 0.0
        %v9114 = vsel %vm9047, %v286, 0.0
        %v9115 = vsel %vm9047, %v287, 0.0
        %v9116 = vsel %vm9047, %v288, 0.0
        %v9117 = vsel %vm9047, %v289, 0.0
        %v9118 = vsel %vm9047, %v290, 0.0
        %v9119 = vsel %vm9047, %v291, 0.0
        %v9120 = vsel %vm9047, %v292, 0.0
        %v9121 = vsel %vm9047, %v293, 0.0
        %v9122 = vsel %vm9047, %v294, 0.0
        %v9123 = vsel %vm9047, %v295, 0.0
        %v9124 = vsel %vm9047, %v296, 0.0
        %v9125 = vsel %vm9047, %v297, 0.0
        %v9126 = vsel %vm9047, %v298, 0.0
        %v9127 = vsel %vm9047, %v299, 0.0
        %v9128 = vsel %vm9047, %v300, 0.0
        %v9129 = vsel %vm9047, %v301, 0.0
        %v9130 = vsel %vm9047, %v302, 0.0
        %v9131 = vsel %vm9047, %v303, 0.0
        %v9132 = vsel %vm9047, %v304, 0.0
        %v9133 = vsel %vm9047, %v305, 0.0
        %v9134 = vsel %vm9047, %v306, 0.0
        %v9135 = vsel %vm9047, %v307, 0.0
        %v9136 = vsel %vm9047, %v308, 0.0
        %v9137 = vsel %vm9047, %v309, 0.0
        %v9138 = vsel %vm9047, %v310, 0.0
        %v9139 = vsel %vm9047, %v311, 0.0
        %v9140 = vsel %vm9047, %v312, 0.0
        %v9141 = vsel %vm9047, %v313, 0.0
        %v9142 = vsel %vm9047, %v314, 0.0
        %v9143 = vsel %vm9047, %v315, 0.0
        %v9144 = vadd.f32 %v9048, %v9080
        %vm9145 = vcmask 1043456
        %v9146 = vsel %vm9145, %v9112, 0.0
        %v9147 = vadd.f32 %v9144, %v9146
        %v9148 = vrot.slane %v9147, 4
        %v9149 = vadd.f32 %v9147, %v9148
        %v9150 = vrot.slane %v9149, 2
        %v9151 = vadd.f32 %v9149, %v9150
        %v9152 = vrot.slane %v9151, 1
        %v9153 = vadd.f32 %v9151, %v9152
        %v9154 = vadd.f32 %v9049, %v9081
        %v9155 = vsel %vm9145, %v9113, 0.0
        %v9156 = vadd.f32 %v9154, %v9155
        %v9157 = vrot.slane %v9156, 4
        %v9158 = vadd.f32 %v9156, %v9157
        %v9159 = vrot.slane %v9158, 2
        %v9160 = vadd.f32 %v9158, %v9159
        %v9161 = vrot.slane %v9160, 1
        %v9162 = vadd.f32 %v9160, %v9161
        %v9163 = vadd.f32 %v9050, %v9082
        %v9164 = vsel %vm9145, %v9114, 0.0
        %v9165 = vadd.f32 %v9163, %v9164
        %v9166 = vrot.slane %v9165, 4
        %v9167 = vadd.f32 %v9165, %v9166
        %v9168 = vrot.slane %v9167, 2
        %v9169 = vadd.f32 %v9167, %v9168
        %v9170 = vrot.slane %v9169, 1
        %v9171 = vadd.f32 %v9169, %v9170
        %v9172 = vadd.f32 %v9051, %v9083
        %v9173 = vsel %vm9145, %v9115, 0.0
        %v9174 = vadd.f32 %v9172, %v9173
        %v9175 = vrot.slane %v9174, 4
        %v9176 = vadd.f32 %v9174, %v9175
        %v9177 = vrot.slane %v9176, 2
        %v9178 = vadd.f32 %v9176, %v9177
        %v9179 = vrot.slane %v9178, 1
        %v9180 = vadd.f32 %v9178, %v9179
        %v9181 = vadd.f32 %v9052, %v9084
        %v9182 = vsel %vm9145, %v9116, 0.0
        %v9183 = vadd.f32 %v9181, %v9182
        %v9184 = vrot.slane %v9183, 4
        %v9185 = vadd.f32 %v9183, %v9184
        %v9186 = vrot.slane %v9185, 2
        %v9187 = vadd.f32 %v9185, %v9186
        %v9188 = vrot.slane %v9187, 1
        %v9189 = vadd.f32 %v9187, %v9188
        %v9190 = vadd.f32 %v9053, %v9085
        %v9191 = vsel %vm9145, %v9117, 0.0
        %v9192 = vadd.f32 %v9190, %v9191
        %v9193 = vrot.slane %v9192, 4
        %v9194 = vadd.f32 %v9192, %v9193
        %v9195 = vrot.slane %v9194, 2
        %v9196 = vadd.f32 %v9194, %v9195
        %v9197 = vrot.slane %v9196, 1
        %v9198 = vadd.f32 %v9196, %v9197
        %v9199 = vadd.f32 %v9054, %v9086
        %v9200 = vsel %vm9145, %v9118, 0.0
        %v9201 = vadd.f32 %v9199, %v9200
        %v9202 = vrot.slane %v9201, 4
        %v9203 = vadd.f32 %v9201, %v9202
        %v9204 = vrot.slane %v9203, 2
        %v9205 = vadd.f32 %v9203, %v9204
        %v9206 = vrot.slane %v9205, 1
        %v9207 = vadd.f32 %v9205, %v9206
        %v9208 = vadd.f32 %v9055, %v9087
        %v9209 = vsel %vm9145, %v9119, 0.0
        %v9210 = vadd.f32 %v9208, %v9209
        %v9211 = vrot.slane %v9210, 4
        %v9212 = vadd.f32 %v9210, %v9211
        %v9213 = vrot.slane %v9212, 2
        %v9214 = vadd.f32 %v9212, %v9213
        %v9215 = vrot.slane %v9214, 1
        %v9216 = vadd.f32 %v9214, %v9215
        %v9217 = vadd.f32 %v9056, %v9088
        %v9218 = vsel %vm9145, %v9120, 0.0
        %v9219 = vadd.f32 %v9217, %v9218
        %v9220 = vrot.slane %v9219, 4
        %v9221 = vadd.f32 %v9219, %v9220
        %v9222 = vrot.slane %v9221, 2
        %v9223 = vadd.f32 %v9221, %v9222
        %v9224 = vrot.slane %v9223, 1
        %v9225 = vadd.f32 %v9223, %v9224
        %v9226 = vadd.f32 %v9057, %v9089
        %v9227 = vsel %vm9145, %v9121, 0.0
        %v9228 = vadd.f32 %v9226, %v9227
        %v9229 = vrot.slane %v9228, 4
        %v9230 = vadd.f32 %v9228, %v9229
        %v9231 = vrot.slane %v9230, 2
        %v9232 = vadd.f32 %v9230, %v9231
        %v9233 = vrot.slane %v9232, 1
        %v9234 = vadd.f32 %v9232, %v9233
        %v9235 = vadd.f32 %v9058, %v9090
        %v9236 = vsel %vm9145, %v9122, 0.0
        %v9237 = vadd.f32 %v9235, %v9236
        %v9238 = vrot.slane %v9237, 4
        %v9239 = vadd.f32 %v9237, %v9238
        %v9240 = vrot.slane %v9239, 2
        %v9241 = vadd.f32 %v9239, %v9240
        %v9242 = vrot.slane %v9241, 1
        %v9243 = vadd.f32 %v9241, %v9242
        %v9244 = vadd.f32 %v9059, %v9091
        %v9245 = vsel %vm9145, %v9123, 0.0
        %v9246 = vadd.f32 %v9244, %v9245
        %v9247 = vrot.slane %v9246, 4
        %v9248 = vadd.f32 %v9246, %v9247
        %v9249 = vrot.slane %v9248, 2
        %v9250 = vadd.f32 %v9248, %v9249
        %v9251 = vrot.slane %v9250, 1
        %v9252 = vadd.f32 %v9250, %v9251
        %v9253 = vadd.f32 %v9060, %v9092
        %v9254 = vsel %vm9145, %v9124, 0.0
        %v9255 = vadd.f32 %v9253, %v9254
        %v9256 = vrot.slane %v9255, 4
        %v9257 = vadd.f32 %v9255, %v9256
        %v9258 = vrot.slane %v9257, 2
        %v9259 = vadd.f32 %v9257, %v9258
        %v9260 = vrot.slane %v9259, 1
        %v9261 = vadd.f32 %v9259, %v9260
        %v9262 = vadd.f32 %v9061, %v9093
        %v9263 = vsel %vm9145, %v9125, 0.0
        %v9264 = vadd.f32 %v9262, %v9263
        %v9265 = vrot.slane %v9264, 4
        %v9266 = vadd.f32 %v9264, %v9265
        %v9267 = vrot.slane %v9266, 2
        %v9268 = vadd.f32 %v9266, %v9267
        %v9269 = vrot.slane %v9268, 1
        %v9270 = vadd.f32 %v9268, %v9269
        %v9271 = vadd.f32 %v9062, %v9094
        %v9272 = vsel %vm9145, %v9126, 0.0
        %v9273 = vadd.f32 %v9271, %v9272
        %v9274 = vrot.slane %v9273, 4
        %v9275 = vadd.f32 %v9273, %v9274
        %v9276 = vrot.slane %v9275, 2
        %v9277 = vadd.f32 %v9275, %v9276
        %v9278 = vrot.slane %v9277, 1
        %v9279 = vadd.f32 %v9277, %v9278
        %v9280 = vadd.f32 %v9063, %v9095
        %v9281 = vsel %vm9145, %v9127, 0.0
        %v9282 = vadd.f32 %v9280, %v9281
        %v9283 = vrot.slane %v9282, 4
        %v9284 = vadd.f32 %v9282, %v9283
        %v9285 = vrot.slane %v9284, 2
        %v9286 = vadd.f32 %v9284, %v9285
        %v9287 = vrot.slane %v9286, 1
        %v9288 = vadd.f32 %v9286, %v9287
        %v9289 = vadd.f32 %v9064, %v9096
        %v9290 = vsel %vm9145, %v9128, 0.0
        %v9291 = vadd.f32 %v9289, %v9290
        %v9292 = vrot.slane %v9291, 4
        %v9293 = vadd.f32 %v9291, %v9292
        %v9294 = vrot.slane %v9293, 2
        %v9295 = vadd.f32 %v9293, %v9294
        %v9296 = vrot.slane %v9295, 1
        %v9297 = vadd.f32 %v9295, %v9296
        %v9298 = vadd.f32 %v9065, %v9097
        %v9299 = vsel %vm9145, %v9129, 0.0
        %v9300 = vadd.f32 %v9298, %v9299
        %v9301 = vrot.slane %v9300, 4
        %v9302 = vadd.f32 %v9300, %v9301
        %v9303 = vrot.slane %v9302, 2
        %v9304 = vadd.f32 %v9302, %v9303
        %v9305 = vrot.slane %v9304, 1
        %v9306 = vadd.f32 %v9304, %v9305
        %v9307 = vadd.f32 %v9066, %v9098
        %v9308 = vsel %vm9145, %v9130, 0.0
        %v9309 = vadd.f32 %v9307, %v9308
        %v9310 = vrot.slane %v9309, 4
        %v9311 = vadd.f32 %v9309, %v9310
        %v9312 = vrot.slane %v9311, 2
        %v9313 = vadd.f32 %v9311, %v9312
        %v9314 = vrot.slane %v9313, 1
        %v9315 = vadd.f32 %v9313, %v9314
        %v9316 = vadd.f32 %v9067, %v9099
        %v9317 = vsel %vm9145, %v9131, 0.0
        %v9318 = vadd.f32 %v9316, %v9317
        %v9319 = vrot.slane %v9318, 4
        %v9320 = vadd.f32 %v9318, %v9319
        %v9321 = vrot.slane %v9320, 2
        %v9322 = vadd.f32 %v9320, %v9321
        %v9323 = vrot.slane %v9322, 1
        %v9324 = vadd.f32 %v9322, %v9323
        %v9325 = vadd.f32 %v9068, %v9100
        %v9326 = vsel %vm9145, %v9132, 0.0
        %v9327 = vadd.f32 %v9325, %v9326
        %v9328 = vrot.slane %v9327, 4
        %v9329 = vadd.f32 %v9327, %v9328
        %v9330 = vrot.slane %v9329, 2
        %v9331 = vadd.f32 %v9329, %v9330
        %v9332 = vrot.slane %v9331, 1
        %v9333 = vadd.f32 %v9331, %v9332
        %v9334 = vadd.f32 %v9069, %v9101
        %v9335 = vsel %vm9145, %v9133, 0.0
        %v9336 = vadd.f32 %v9334, %v9335
        %v9337 = vrot.slane %v9336, 4
        %v9338 = vadd.f32 %v9336, %v9337
        %v9339 = vrot.slane %v9338, 2
        %v9340 = vadd.f32 %v9338, %v9339
        %v9341 = vrot.slane %v9340, 1
        %v9342 = vadd.f32 %v9340, %v9341
        %v9343 = vadd.f32 %v9070, %v9102
        %v9344 = vsel %vm9145, %v9134, 0.0
        %v9345 = vadd.f32 %v9343, %v9344
        %v9346 = vrot.slane %v9345, 4
        %v9347 = vadd.f32 %v9345, %v9346
        %v9348 = vrot.slane %v9347, 2
        %v9349 = vadd.f32 %v9347, %v9348
        %v9350 = vrot.slane %v9349, 1
        %v9351 = vadd.f32 %v9349, %v9350
        %v9352 = vadd.f32 %v9071, %v9103
        %v9353 = vsel %vm9145, %v9135, 0.0
        %v9354 = vadd.f32 %v9352, %v9353
        %v9355 = vrot.slane %v9354, 4
        %v9356 = vadd.f32 %v9354, %v9355
        %v9357 = vrot.slane %v9356, 2
        %v9358 = vadd.f32 %v9356, %v9357
        %v9359 = vrot.slane %v9358, 1
        %v9360 = vadd.f32 %v9358, %v9359
        %v9361 = vadd.f32 %v9072, %v9104
        %v9362 = vsel %vm9145, %v9136, 0.0
        %v9363 = vadd.f32 %v9361, %v9362
        %v9364 = vrot.slane %v9363, 4
        %v9365 = vadd.f32 %v9363, %v9364
        %v9366 = vrot.slane %v9365, 2
        %v9367 = vadd.f32 %v9365, %v9366
        %v9368 = vrot.slane %v9367, 1
        %v9369 = vadd.f32 %v9367, %v9368
        %v9370 = vadd.f32 %v9073, %v9105
        %v9371 = vsel %vm9145, %v9137, 0.0
        %v9372 = vadd.f32 %v9370, %v9371
        %v9373 = vrot.slane %v9372, 4
        %v9374 = vadd.f32 %v9372, %v9373
        %v9375 = vrot.slane %v9374, 2
        %v9376 = vadd.f32 %v9374, %v9375
        %v9377 = vrot.slane %v9376, 1
        %v9378 = vadd.f32 %v9376, %v9377
        %v9379 = vadd.f32 %v9074, %v9106
        %v9380 = vsel %vm9145, %v9138, 0.0
        %v9381 = vadd.f32 %v9379, %v9380
        %v9382 = vrot.slane %v9381, 4
        %v9383 = vadd.f32 %v9381, %v9382
        %v9384 = vrot.slane %v9383, 2
        %v9385 = vadd.f32 %v9383, %v9384
        %v9386 = vrot.slane %v9385, 1
        %v9387 = vadd.f32 %v9385, %v9386
        %v9388 = vadd.f32 %v9075, %v9107
        %v9389 = vsel %vm9145, %v9139, 0.0
        %v9390 = vadd.f32 %v9388, %v9389
        %v9391 = vrot.slane %v9390, 4
        %v9392 = vadd.f32 %v9390, %v9391
        %v9393 = vrot.slane %v9392, 2
        %v9394 = vadd.f32 %v9392, %v9393
        %v9395 = vrot.slane %v9394, 1
        %v9396 = vadd.f32 %v9394, %v9395
        %v9397 = vadd.f32 %v9076, %v9108
        %v9398 = vsel %vm9145, %v9140, 0.0
        %v9399 = vadd.f32 %v9397, %v9398
        %v9400 = vrot.slane %v9399, 4
        %v9401 = vadd.f32 %v9399, %v9400
        %v9402 = vrot.slane %v9401, 2
        %v9403 = vadd.f32 %v9401, %v9402
        %v9404 = vrot.slane %v9403, 1
        %v9405 = vadd.f32 %v9403, %v9404
        %v9406 = vadd.f32 %v9077, %v9109
        %v9407 = vsel %vm9145, %v9141, 0.0
        %v9408 = vadd.f32 %v9406, %v9407
        %v9409 = vrot.slane %v9408, 4
        %v9410 = vadd.f32 %v9408, %v9409
        %v9411 = vrot.slane %v9410, 2
        %v9412 = vadd.f32 %v9410, %v9411
        %v9413 = vrot.slane %v9412, 1
        %v9414 = vadd.f32 %v9412, %v9413
        %v9415 = vadd.f32 %v9078, %v9110
        %v9416 = vsel %vm9145, %v9142, 0.0
        %v9417 = vadd.f32 %v9415, %v9416
        %v9418 = vrot.slane %v9417, 4
        %v9419 = vadd.f32 %v9417, %v9418
        %v9420 = vrot.slane %v9419, 2
        %v9421 = vadd.f32 %v9419, %v9420
        %v9422 = vrot.slane %v9421, 1
        %v9423 = vadd.f32 %v9421, %v9422
        %v9424 = vsel %vm606, %v9079, 0.0
        %v9425 = vsel %vm606, %v9111, 0.0
        %v9426 = vadd.f32 %v9424, %v9425
        %vm9427 = vcmask 257024
        %v9428 = vsel %vm9427, %v9143, 0.0
        %v9429 = vadd.f32 %v9426, %v9428
        %v9430 = vrot.slane %v9429, 4
        %v9431 = vadd.f32 %v9429, %v9430
        %v9432 = vrot.slane %v9431, 2
        %v9433 = vadd.f32 %v9431, %v9432
        %v9434 = vrot.slane %v9433, 1
        %v9435 = vadd.f32 %v9433, %v9434
        %v9468 = vcombine.low %v9153, %v9162
        %v9469 = vcombine.low %v9171, %v9180
        %v9470 = vcombine.low %v9189, %v9198
        %v9471 = vcombine.low %v9207, %v9216
        %v9473 = vunpack.c.l.s4 1966171168
        %v9474 = vunpack.c.0.s8 %v9473
        %v9475 = vlaneseq
        %v9476 = vshrl.u32 %v9475, 7
        %v9477 = vsub.s32 %v9474, %v9476
        %v9478 = vrot.slane %v9468, %v9477
        %v9480 = vunpack.c.l.s4 1966171168
        %v9481 = vunpack.c.0.s8 %v9480
        %v9482 = vlaneseq
        %v9483 = vshrl.u32 %v9482, 7
        %v9484 = vsub.s32 %v9481, %v9483
        %v9485 = vrot.slane %v9469, %v9484
        %v9487 = vunpack.c.l.s4 1966171168
        %v9488 = vunpack.c.0.s8 %v9487
        %v9489 = vlaneseq
        %v9490 = vshrl.u32 %v9489, 7
        %v9491 = vsub.s32 %v9488, %v9490
        %v9492 = vrot.slane %v9470, %v9491
        %v9494 = vunpack.c.l.s4 1966171168
        %v9495 = vunpack.c.0.s8 %v9494
        %v9496 = vlaneseq
        %v9497 = vshrl.u32 %v9496, 7
        %v9498 = vsub.s32 %v9495, %v9497
        %v9499 = vrot.slane %v9471, %v9498
        %v9500 = vcombine.low %v9478, %v9485
        %v9501 = vcombine.low %v9492, %v9499
        %v9503 = vunpack.c.l.s4 1966171168
        %v9504 = vunpack.c.0.s8 %v9503
        %v9505 = vlaneseq
        %v9506 = vshrl.u32 %v9505, 7
        %v9507 = vsub.s32 %v9504, %v9506
        %v9508 = vrot.slane %v9500, %v9507
        %v9510 = vunpack.c.l.s4 1966171168
        %v9511 = vunpack.c.0.s8 %v9510
        %v9512 = vlaneseq
        %v9513 = vshrl.u32 %v9512, 7
        %v9514 = vsub.s32 %v9511, %v9513
        %v9515 = vrot.slane %v9501, %v9514
        %v9516 = vcombine.low %v9508, %v9515
        %v9517 = vcombine.low %v9225, %v9234
        %v9518 = vcombine.low %v9243, %v9252
        %v9519 = vcombine.low %v9261, %v9270
        %v9520 = vcombine.low %v9279, %v9288
        %v9522 = vunpack.c.l.s4 1966171168
        %v9523 = vunpack.c.0.s8 %v9522
        %v9524 = vlaneseq
        %v9525 = vshrl.u32 %v9524, 7
        %v9526 = vsub.s32 %v9523, %v9525
        %v9527 = vrot.slane %v9517, %v9526
        %v9529 = vunpack.c.l.s4 1966171168
        %v9530 = vunpack.c.0.s8 %v9529
        %v9531 = vlaneseq
        %v9532 = vshrl.u32 %v9531, 7
        %v9533 = vsub.s32 %v9530, %v9532
        %v9534 = vrot.slane %v9518, %v9533
        %v9536 = vunpack.c.l.s4 1966171168
        %v9537 = vunpack.c.0.s8 %v9536
        %v9538 = vlaneseq
        %v9539 = vshrl.u32 %v9538, 7
        %v9540 = vsub.s32 %v9537, %v9539
        %v9541 = vrot.slane %v9519, %v9540
        %v9543 = vunpack.c.l.s4 1966171168
        %v9544 = vunpack.c.0.s8 %v9543
        %v9545 = vlaneseq
        %v9546 = vshrl.u32 %v9545, 7
        %v9547 = vsub.s32 %v9544, %v9546
        %v9548 = vrot.slane %v9520, %v9547
        %v9549 = vcombine.low %v9527, %v9534
        %v9550 = vcombine.low %v9541, %v9548
        %v9552 = vunpack.c.l.s4 1966171168
        %v9553 = vunpack.c.0.s8 %v9552
        %v9554 = vlaneseq
        %v9555 = vshrl.u32 %v9554, 7
        %v9556 = vsub.s32 %v9553, %v9555
        %v9557 = vrot.slane %v9549, %v9556
        %v9559 = vunpack.c.l.s4 1966171168
        %v9560 = vunpack.c.0.s8 %v9559
        %v9561 = vlaneseq
        %v9562 = vshrl.u32 %v9561, 7
        %v9563 = vsub.s32 %v9560, %v9562
        %v9564 = vrot.slane %v9550, %v9563
        %v9565 = vcombine.low %v9557, %v9564
        %v9566 = vcombine.low %v9297, %v9306
        %v9567 = vcombine.low %v9315, %v9324
        %v9568 = vcombine.low %v9333, %v9342
        %v9569 = vcombine.low %v9351, %v9360
        %v9571 = vunpack.c.l.s4 1966171168
        %v9572 = vunpack.c.0.s8 %v9571
        %v9573 = vlaneseq
        %v9574 = vshrl.u32 %v9573, 7
        %v9575 = vsub.s32 %v9572, %v9574
        %v9576 = vrot.slane %v9566, %v9575
        %v9578 = vunpack.c.l.s4 1966171168
        %v9579 = vunpack.c.0.s8 %v9578
        %v9580 = vlaneseq
        %v9581 = vshrl.u32 %v9580, 7
        %v9582 = vsub.s32 %v9579, %v9581
        %v9583 = vrot.slane %v9567, %v9582
        %v9585 = vunpack.c.l.s4 1966171168
        %v9586 = vunpack.c.0.s8 %v9585
        %v9587 = vlaneseq
        %v9588 = vshrl.u32 %v9587, 7
        %v9589 = vsub.s32 %v9586, %v9588
        %v9590 = vrot.slane %v9568, %v9589
        %v9592 = vunpack.c.l.s4 1966171168
        %v9593 = vunpack.c.0.s8 %v9592
        %v9594 = vlaneseq
        %v9595 = vshrl.u32 %v9594, 7
        %v9596 = vsub.s32 %v9593, %v9595
        %v9597 = vrot.slane %v9569, %v9596
        %v9598 = vcombine.low %v9576, %v9583
        %v9599 = vcombine.low %v9590, %v9597
        %v9601 = vunpack.c.l.s4 1966171168
        %v9602 = vunpack.c.0.s8 %v9601
        %v9603 = vlaneseq
        %v9604 = vshrl.u32 %v9603, 7
        %v9605 = vsub.s32 %v9602, %v9604
        %v9606 = vrot.slane %v9598, %v9605
        %v9608 = vunpack.c.l.s4 1966171168
        %v9609 = vunpack.c.0.s8 %v9608
        %v9610 = vlaneseq
        %v9611 = vshrl.u32 %v9610, 7
        %v9612 = vsub.s32 %v9609, %v9611
        %v9613 = vrot.slane %v9599, %v9612
        %v9614 = vcombine.low %v9606, %v9613
        %v9615 = vcombine.low %v9369, %v9378
        %v9616 = vcombine.low %v9387, %v9396
        %v9617 = vcombine.low %v9405, %v9414
        %v9618 = vcombine.low %v9423, %v9435
        %v9620 = vunpack.c.l.s4 1966171168
        %v9621 = vunpack.c.0.s8 %v9620
        %v9622 = vlaneseq
        %v9623 = vshrl.u32 %v9622, 7
        %v9624 = vsub.s32 %v9621, %v9623
        %v9625 = vrot.slane %v9615, %v9624
        %v9627 = vunpack.c.l.s4 1966171168
        %v9628 = vunpack.c.0.s8 %v9627
        %v9629 = vlaneseq
        %v9630 = vshrl.u32 %v9629, 7
        %v9631 = vsub.s32 %v9628, %v9630
        %v9632 = vrot.slane %v9616, %v9631
        %v9634 = vunpack.c.l.s4 1966171168
        %v9635 = vunpack.c.0.s8 %v9634
        %v9636 = vlaneseq
        %v9637 = vshrl.u32 %v9636, 7
        %v9638 = vsub.s32 %v9635, %v9637
        %v9639 = vrot.slane %v9617, %v9638
        %v9641 = vunpack.c.l.s4 1966171168
        %v9642 = vunpack.c.0.s8 %v9641
        %v9643 = vlaneseq
        %v9644 = vshrl.u32 %v9643, 7
        %v9645 = vsub.s32 %v9642, %v9644
        %v9646 = vrot.slane %v9618, %v9645
        %v9647 = vcombine.low %v9625, %v9632
        %v9648 = vcombine.low %v9639, %v9646
        %v9650 = vunpack.c.l.s4 1966171168
        %v9651 = vunpack.c.0.s8 %v9650
        %v9652 = vlaneseq
        %v9653 = vshrl.u32 %v9652, 7
        %v9654 = vsub.s32 %v9651, %v9653
        %v9655 = vrot.slane %v9647, %v9654
        %v9657 = vunpack.c.l.s4 1966171168
        %v9658 = vunpack.c.0.s8 %v9657
        %v9659 = vlaneseq
        %v9660 = vshrl.u32 %v9659, 7
        %v9661 = vsub.s32 %v9658, %v9660
        %v9662 = vrot.slane %v9648, %v9661
        %v9663 = vcombine.low %v9655, %v9662
        %9668 = vst [vmem:[%s216] sm:$0xff] %v9516
        %9669 = vst [vmem:[%s216 + $0x8] sm:$0xff] %v9565
        %9670 = vst [vmem:[%s216 + $0x10] sm:$0xff] %v9614
        %v9671 = vlaneseq
        %vm9672 = vcmp.ge.s32.totalorder %v9671, 0
        %vm9673 = vcmp.lt.s32.totalorder %v9671, 928
        %vm9674 = vmand %vm9672, %vm9673
        %9675 = vst.msk [vmem:[%s216 + $0x18] sm:$0xff] %vm9674, %v9663
        %vm9676 = vcmask 0
        %9677 = vst.msk [vmem:[%s219] sm:$0x1] %vm9676, %v9030
        %p9678 = scmp.lt.s32.totalorder %s17, 1
        %s9679 = scalar_select %p9678, %s17, 1
        %s9680 = smul.addr %s9679, 32
        %s9681 = scalar_lea.vmem %s3, %s9680
        %p9682 = scmp.lt.s32.totalorder %s17, 1
        %s9683 = scalar_select %p9682, %s17, 1
        %s9684 = scalar_lea.vmem %s4, %s9683
        // Predicated region
        $region37: #{nearest_embed_forward.1} parent=31 // pred_check
          %p9685 = pneg %p103
        $region38: #{nearest_embed_forward.1} parent=31 // pred_check_branch
          %9687 = sbr.rel (%p9685) target = $region40
        $region39: #{nearest_embed_forward.1} parent=31 // pred_region
          _
        $region40: #{nearest_embed_forward.1} parent=31 // pred_fallthru
          _
        // Predicated region
        $region41: #{nearest_embed_forward.1} parent=31 // pred_check
          %p9688 = pneg %p129
        $region42: #{nearest_embed_forward.1} parent=31 // pred_check_branch
          %9690 = sbr.rel (%p9688) target = $region44
        $region43: #{nearest_embed_forward.1} parent=31 // pred_region
          _
        $region44: #{nearest_embed_forward.1} parent=31 // pred_fallthru
          _
      $region32: #{nearest_embed_forward.1} parent=5 // pred_fallthru
        _
      %p9691 = scmp.le.s32.totalorder 2, %s12
      // Predicated region
      $region45: #{nearest_embed_forward.1} parent=5 // pred_check
        %p9692 = pneg %p9691
      $region46: #{nearest_embed_forward.1} parent=5 // pred_check_branch
        %9694 = sbr.rel (%p9692) target = $region48
      $region47: #{nearest_embed_forward.1} parent=5 // pred_region
        %s9695 = ssub.s32 %s12, 2
        // Predicated region
        $region49: #{nearest_embed_forward.1} parent=47 // pred_check
          %p9696 = pneg %p109
        $region50: #{nearest_embed_forward.1} parent=47 // pred_check_branch
          %9698 = sbr.rel (%p9696) target = $region52
        $region51: #{nearest_embed_forward.1} parent=47 // pred_region
          %p9699 = scmp.lt.s32.totalorder %s18, 1
          %s9700 = scalar_select %p9699, %s18, 1
          %s9701 = smul.addr %s9700, 32
          %s9702 = scalar_lea.vmem %s3, %s9701
        $region52: #{nearest_embed_forward.1} parent=47 // pred_fallthru
          _
        // Predicated region
        $region53: #{nearest_embed_forward.1} parent=47 // pred_check
          %p9703 = pneg %p135
        $region54: #{nearest_embed_forward.1} parent=47 // pred_check_branch
          %9705 = sbr.rel (%p9703) target = $region56
        $region55: #{nearest_embed_forward.1} parent=47 // pred_region
          %p9706 = scmp.lt.s32.totalorder %s18, 1
          %s9707 = scalar_select %p9706, %s18, 1
          %s9708 = scalar_lea.vmem %s4, %s9707
        $region56: #{nearest_embed_forward.1} parent=47 // pred_fallthru
          _
      $region48: #{nearest_embed_forward.1} parent=5 // pred_fallthru
        _
    $region6: #{nearest_embed_forward.1} parent=1 // loop_footer
      %s16 = sadd.s32 1, %s12
    $region7: #{nearest_embed_forward.1} parent=1 // loop_footer_branch
      %11 = sbr.rel target = $region3
    $region8: #{nearest_embed_forward.1} parent=1 // loop_exit
      _
    %9709 = vsyncpa [#allocation3], 1
    %s9710 = scalar_lea.sflag [#allocation3], 1
    %9711 = vsyncpa %s9710, 1

</llo_original>
